<compile_context>
chip_gen: v5e
topology: v5e:2x2
jax: 0.10.0
libtpu: 0.0.40
codegen_flags: <defaults>
</compile_context>

<pallas_src>
import functools

import jax
import jax.numpy as jnp
from jax.experimental import pallas as pl
from jax.experimental.pallas import tpu as pltpu

_VMEM_LIMIT = 32 * 1024 * 1024  # safe scoped limit on v5e/v6e/v7x (kernel uses ~1.5 MB)


# ----------------------------- fused Pallas kernel ---------------------------

def _cnn_kernel(p1_ref, w1_ref, b1_ref, w2_ref, b2_ref,
                fw1_ref, fb1_ref, fw2_ref, fb2_ref,
                o_ref, y1_ref, pm_ref, flat_ref, *, tb):
    """Whole CNN forward for `tb` images; all activations stay in VMEM.

    p1 rows are ordered cls*49 + u*7 + v with cls = e*4 + f encoding the
    conv1 output pixel (h, w) = (4u + e, 4v + f); this lets the pooled output
    be assembled by parity with only static unit-stride slices/stores.
    """
    w1 = w1_ref[...]                      # (9, 32)    bf16
    b1 = b1_ref[...]                      # (1, 32)    f32
    w2 = w2_ref[...]                      # (288, 64)  bf16
    b2 = b2_ref[...]                      # (1, 64)    f32

    for bi in range(tb):
        # ---------------- conv1 + bias + ReLU + maxpool 2x2 ------------------
        # one MXU matmul covers all 28x28 output pixels (16 phase classes).
        res1 = jnp.dot(p1_ref[bi], w1,
                       preferred_element_type=jnp.float32)          # (784, 32)

        # conv2 input buffer: zero padding ring must stay zero.
        y1_ref[...] = jnp.zeros(y1_ref.shape, y1_ref.dtype)

        for a in range(2):             # parity of pooled row  i = 2u + a
            for b_ in range(2):        # parity of pooled col  j = 2v + b_
                m = None
                for dy in range(2):
                    for dx in range(2):
                        cls = (2 * a + dy) * 4 + (2 * b_ + dx)
                        blk = res1[cls * 49:(cls + 1) * 49, :]       # (49, 32)
                        m = blk if m is None else jnp.maximum(m, blk)
                v = jnp.maximum(m + b1, 0.0)                         # (49, 32)
                # pooled row i=2u+a -> padded row i+1 = 2(u+a) + (1-a)
                for u in range(7):
                    y1_ref[1 - a, 1 - b_, u + a, b_:b_ + 7, :] = \
                        v[u * 7:(u + 1) * 7, :]

        # ---------------- conv2 + bias + ReLU + maxpool 2x2 ------------------
        # Build the im2col matrix (4 pool phases stacked along M) in VMEM from
        # the phase-split padded conv1 output; every tap is a static slice.
        for ph, (dy, dx) in enumerate(((0, 0), (0, 1), (1, 0), (1, 1))):
            taps = []
            for ky in range(3):
                for kx in range(3):
                    pr, r0 = (dy + ky) % 2, (dy + ky) // 2
                    pc, c0 = (dx + kx) % 2, (dx + kx) // 2
                    taps.append(y1_ref[pr, pc, r0:r0 + 7, c0:c0 + 7, :])
            ptch = jnp.concatenate(taps, axis=-1)                    # (7, 7, 288)
            for h in range(7):
                base = ph * 49 + h * 7
                pm_ref[base:base + 7, :] = ptch[h]                   # (7, 288)

        res2 = jnp.dot(pm_ref[...].astype(jnp.bfloat16), w2,
                       preferred_element_type=jnp.float32)           # (196, 64)
        m2 = jnp.maximum(jnp.maximum(res2[0:49], res2[49:98]),
                         jnp.maximum(res2[98:147], res2[147:196]))   # (49, 64)
        y2 = jnp.maximum(m2 + b2, 0.0)                               # rows h*7+w

        # NHWC flatten into the fc input row (lane offset (h*7+w)*64).
        for p in range(49):
            flat_ref[bi, p * 64:(p + 1) * 64] = y2[p]

    # ---------------- fc1 + ReLU + fc2 + log_softmax --------------------------
    xf = flat_ref[...].astype(jnp.bfloat16)                          # (tb, 3136)
    h1 = jnp.dot(xf, fw1_ref[...],
                 preferred_element_type=jnp.float32) + fb1_ref[...]
    h1 = jnp.maximum(h1, 0.0)
    lg = jnp.dot(h1.astype(jnp.bfloat16), fw2_ref[...],
                 preferred_element_type=jnp.float32) + fb2_ref[...]  # (tb, 128)
    mx = jnp.max(lg, axis=-1, keepdims=True)
    ex = jnp.exp(lg - mx)
    o_ref[0] = lg - mx - jnp.log(jnp.sum(ex, axis=-1, keepdims=True))


# ------------------------------- wrappers -------------------------------------

def _conv1_patches(x_bhw):
    """Tiny XLA pre-step: 3x3 'same' patches of the raw input, phase-ordered.

    Output (B, 784, 9): row = cls*49 + u*7 + v, cls = e*4 + f, output pixel
    (h, w) = (4u + e, 4v + f); column k = ky*3 + kx."""
    B = x_bhw.shape[0]
    xp = jnp.pad(x_bhw, ((0, 0), (1, 1), (1, 1)))                    # (B, 30, 30)
    taps = [xp[:, ky:ky + 28, kx:kx + 28]
            for ky in range(3) for kx in range(3)]
    t = jnp.stack(taps, axis=-1)                                     # (B, 28, 28, 9)
    t = t.reshape(B, 7, 4, 7, 4, 9)                                  # (b, u, e, v, f, k)
    t = jnp.transpose(t, (0, 2, 4, 1, 3, 5))                         # (b, e, f, u, v, k)
    return t.reshape(B, 16 * 49, 9).astype(jnp.bfloat16)


def cnn_forward(x_nchw, params, *, tb=1):
    B = x_nchw.shape[0]
    assert x_nchw.shape[1:] == (1, 28, 28), x_nchw.shape
    x = x_nchw.reshape(B, 28, 28)            # C == 1: transpose is a relabel
    p1 = _conv1_patches(x)                   # (B, 784, 9) bf16

    g = pl.cdiv(B, tb)
    bp = g * tb
    if bp != B:
        p1 = jnp.pad(p1, ((0, bp - B), (0, 0), (0, 0)))

    kernel = functools.partial(_cnn_kernel, tb=tb)
    out = pl.pallas_call(
        kernel,
        grid=(g,),
        in_specs=[
            pl.BlockSpec((tb, 784, 9), lambda i: (i, 0, 0)),   # conv1 patches
            pl.BlockSpec((9, 32), lambda i: (0, 0)),           # w1 (resident)
            pl.BlockSpec((1, 32), lambda i: (0, 0)),           # b1
            pl.BlockSpec((288, 64), lambda i: (0, 0)),         # w2
            pl.BlockSpec((1, 64), lambda i: (0, 0)),           # b2
            pl.BlockSpec((3136, 128), lambda i: (0, 0)),       # fc1 w
            pl.BlockSpec((1, 128), lambda i: (0, 0)),          # fc1 b
            pl.BlockSpec((128, 128), lambda i: (0, 0)),        # fc2 w (padded)
            pl.BlockSpec((1, 128), lambda i: (0, 0)),          # fc2 b (padded)
        ],
        out_specs=pl.BlockSpec((1, tb, 128), lambda i: (i, 0, 0)),
        out_shape=jax.ShapeDtypeStruct((g, tb, 128), jnp.float32),
        scratch_shapes=[
            pltpu.VMEM((2, 2, 8, 8, 32), jnp.float32),   # phase-split conv1 out
            pltpu.VMEM((196, 288), jnp.float32),         # conv2 im2col matrix
            pltpu.VMEM((tb, 3136), jnp.float32),         # flattened fc input
        ],
        compiler_params=pltpu.CompilerParams(
            dimension_semantics=("parallel",),
            vmem_limit_bytes=_VMEM_LIMIT),
    )(p1, params['w1'], params['b1'], params['w2'], params['b2'],
      params['fw1'], params['fb1'], params['fw2'], params['fb2'])

    return out.reshape(bp, 128)[:B, :10]


# ------------------------------- model params ---------------------------------

def init_params(key):
    ks = jax.random.split(key, 8)

    def winit(k, shape, fan_in):
        return jax.random.normal(k, shape, jnp.float32) / jnp.sqrt(float(fan_in))

    # conv weights stored (ky, kx, cin, cout) flattened -> matches patch columns
    w1 = winit(ks[0], (3, 3, 1, 32), 9).reshape(9, 32)
    b1 = winit(ks[1], (1, 32), 9)
    w2 = winit(ks[2], (3, 3, 32, 64), 288).reshape(288, 64)
    b2 = winit(ks[3], (1, 64), 288)

    # fc1 rows permuted ONCE at init to NHWC (h, w, c) flatten order.
    fw1 = winit(ks[4], (64, 7, 7, 128), 3136)
    fw1 = jnp.transpose(fw1, (1, 2, 0, 3)).reshape(3136, 128)
    fb1 = winit(ks[5], (1, 128), 3136)

    # fc2 padded to a lane-dense 128-wide output; padded logits are masked
    # with a large negative bias so they vanish in the log-softmax.
    fw2 = winit(ks[6], (128, 10), 128)
    fb2 = winit(ks[7], (1, 10), 128)
    fw2p = jnp.pad(fw2, ((0, 0), (0, 118)))
    fb2p = jnp.pad(fb2, ((0, 0), (0, 118)), constant_values=-1e30)

    return dict(
        w1=w1.astype(jnp.bfloat16), b1=b1,
        w2=w2.astype(jnp.bfloat16), b2=b2,
        fw1=fw1.astype(jnp.bfloat16), fb1=fb1,
        fw2=fw2p.astype(jnp.bfloat16), fb2=fb2p,
    )


# --------------------------- pure-JAX reference --------------------------------

def cnn_reference(x_nchw, params):
    B = x_nchw.shape[0]
    x = x_nchw.reshape(B, 28, 28, 1)

    def conv(xn, wf, b, cin, cout):
        w = wf.astype(jnp.float32).reshape(3, 3, cin, cout)
        y = jax.lax.conv_general_dilated(
            xn, w, (1, 1), "SAME",
            dimension_numbers=("NHWC", "HWIO", "NHWC"))
        return y + b.reshape(1, 1, 1, cout)

    def pool(xn):
        return jax.lax.reduce_window(xn, -jnp.inf, jax.lax.max,
                                     (1, 2, 2, 1), (1, 2, 2, 1), "VALID")

    y = pool(jax.nn.relu(conv(x, params['w1'], params['b1'], 1, 32)))
    y = pool(jax.nn.relu(conv(y, params['w2'], params['b2'], 32, 64)))
    y = y.reshape(B, 3136)
    h = jax.nn.relu(y @ params['fw1'].astype(jnp.float32) + params['fb1'])
    logits = h @ params['fw2'].astype(jnp.float32)[:, :10] + params['fb2'][:, :10]
    return jax.nn.log_softmax(logits, axis=-1)


# ----------------------------------- main ---------------------------------------

if __name__ == "__main__":
    key = jax.random.PRNGKey(0)
    k_x, k_p = jax.random.split(key)

    # MNIST-like input: batch=2, 1 channel, 28x28 (required by the 64*7*7 fc1)
    x = jax.random.normal(k_x, (2, 1, 28, 28), jnp.float32)
    params = init_params(k_p)

    out = jax.jit(cnn_forward)(x, params)
    out = jax.block_until_ready(out)

    assert out.shape == (2, 10), out.shape
    # log-softmax rows must exponentiate-sum to 1
    probs_sum = jnp.sum(jnp.exp(out), axis=-1)
    assert jnp.allclose(probs_sum, 1.0, atol=2e-3), probs_sum
    # check against a pure-JAX f32 reference (kernel runs bf16 MXU matmuls)
    ref = cnn_reference(x, params)
    assert jnp.allclose(out, ref, atol=0.2), jnp.max(jnp.abs(out - ref))

    print("KERNEL_OK")
</pallas_src>

<mosaic_0001>
module attributes {stable_mosaic.version = 11 : i64} {
  func.func @_cnn_kernel(%arg0: i32, %arg1: memref<1x784x9xbf16, #tpu.memory_space<vmem>>, %arg2: memref<9x32xbf16, #tpu.memory_space<vmem>>, %arg3: memref<1x32xf32, #tpu.memory_space<vmem>>, %arg4: memref<288x64xbf16, #tpu.memory_space<vmem>>, %arg5: memref<1x64xf32, #tpu.memory_space<vmem>>, %arg6: memref<3136x128xbf16, #tpu.memory_space<vmem>>, %arg7: memref<1x128xf32, #tpu.memory_space<vmem>>, %arg8: memref<128x128xbf16, #tpu.memory_space<vmem>>, %arg9: memref<1x128xf32, #tpu.memory_space<vmem>>, %arg10: memref<1x1x128xf32, #tpu.memory_space<vmem>>, %arg11: memref<2x2x8x8x32xf32, #tpu.memory_space<vmem>>, %arg12: memref<196x288xf32, #tpu.memory_space<vmem>>, %arg13: memref<1x3136xf32, #tpu.memory_space<vmem>>) attributes {dimension_semantics = [#tpu.dimension_semantics<parallel>], iteration_bounds = array<i64: 2>, scalar_prefetch = 0 : i64, scratch_operands = 3 : i64, tpu.core_type = #tpu.core_type<tc>, window_params = [{transform_indices = @transform_0, window_bounds = array<i64: 1, 784, 9>}, {pipeline_mode = #tpu.pipeline_mode<synchronous>, transform_indices = @transform_1, window_bounds = array<i64: 9, 32>}, {pipeline_mode = #tpu.pipeline_mode<synchronous>, transform_indices = @transform_2, window_bounds = array<i64: 1, 32>}, {pipeline_mode = #tpu.pipeline_mode<synchronous>, transform_indices = @transform_3, window_bounds = array<i64: 288, 64>}, {pipeline_mode = #tpu.pipeline_mode<synchronous>, transform_indices = @transform_4, window_bounds = array<i64: 1, 64>}, {pipeline_mode = #tpu.pipeline_mode<synchronous>, transform_indices = @transform_5, window_bounds = array<i64: 3136, 128>}, {pipeline_mode = #tpu.pipeline_mode<synchronous>, transform_indices = @transform_6, window_bounds = array<i64: 1, 128>}, {pipeline_mode = #tpu.pipeline_mode<synchronous>, transform_indices = @transform_7, window_bounds = array<i64: 128, 128>}, {pipeline_mode = #tpu.pipeline_mode<synchronous>, transform_indices = @transform_8, window_bounds = array<i64: 1, 128>}, {transform_indices = @transform_9, window_bounds = array<i64: 1, 1, 128>}]} {
    %c0 = arith.constant 0 : index
    %c0_0 = arith.constant 0 : index
    %0 = vector.load %arg2[%c0, %c0_0] : memref<9x32xbf16, #tpu.memory_space<vmem>>, vector<9x32xbf16>
    %c0_1 = arith.constant 0 : index
    %c0_2 = arith.constant 0 : index
    %1 = vector.load %arg3[%c0_1, %c0_2] : memref<1x32xf32, #tpu.memory_space<vmem>>, vector<1x32xf32>
    %c0_3 = arith.constant 0 : index
    %c0_4 = arith.constant 0 : index
    %2 = vector.load %arg4[%c0_3, %c0_4] : memref<288x64xbf16, #tpu.memory_space<vmem>>, vector<288x64xbf16>
    %c0_5 = arith.constant 0 : index
    %c0_6 = arith.constant 0 : index
    %3 = vector.load %arg5[%c0_5, %c0_6] : memref<1x64xf32, #tpu.memory_space<vmem>>, vector<1x64xf32>
    %c0_7 = arith.constant 0 : index
    %c0_8 = arith.constant 0 : index
    %c0_9 = arith.constant 0 : index
    %4 = vector.load %arg1[%c0_7, %c0_8, %c0_9] : memref<1x784x9xbf16, #tpu.memory_space<vmem>>, vector<1x784x9xbf16>
    %5 = vector.shape_cast %4 : vector<1x784x9xbf16> to vector<784x9xbf16>
    %cst = arith.constant dense<0.000000e+00> : vector<784x32xf32>
    %6 = tpu.matmul %5, %0, %cst {dimension_numbers = #tpu.dot_dimension_numbers<[1], [0], [0], [1], [0, 0, 1, 1], [], []>} : vector<784x9xbf16>, vector<9x32xbf16>, vector<784x32xf32> -> vector<784x32xf32>
    %cst_10 = arith.constant 0.000000e+00 : f32
    %7 = vector.broadcast %cst_10 : f32 to vector<2x2x8x8x32xf32>
    %c0_11 = arith.constant 0 : index
    %c0_12 = arith.constant 0 : index
    %c0_13 = arith.constant 0 : index
    %c0_14 = arith.constant 0 : index
    %c0_15 = arith.constant 0 : index
    %8 = vector.load %arg11[%c0_11, %c0_12, %c0_13, %c0_14, %c0_15] : memref<2x2x8x8x32xf32, #tpu.memory_space<vmem>>, vector<2x2x8x8x32xf32>
    tpu.vector_store %arg11[%c0_11, %c0_12, %c0_13, %c0_14, %c0_15], %7 {strides = array<i32>} : memref<2x2x8x8x32xf32, #tpu.memory_space<vmem>>, vector<2x2x8x8x32xf32>,
    %9 = vector.extract_strided_slice %6 {offsets = [0, 0], sizes = [49, 32], strides = [1, 1]} : vector<784x32xf32> to vector<49x32xf32>
    %10 = vector.extract_strided_slice %6 {offsets = [49, 0], sizes = [49, 32], strides = [1, 1]} : vector<784x32xf32> to vector<49x32xf32>
    %11 = arith.maximumf %9, %10 : vector<49x32xf32>
    %12 = vector.extract_strided_slice %6 {offsets = [196, 0], sizes = [49, 32], strides = [1, 1]} : vector<784x32xf32> to vector<49x32xf32>
    %13 = arith.maximumf %11, %12 : vector<49x32xf32>
    %14 = vector.extract_strided_slice %6 {offsets = [245, 0], sizes = [49, 32], strides = [1, 1]} : vector<784x32xf32> to vector<49x32xf32>
    %15 = arith.maximumf %13, %14 : vector<49x32xf32>
    %16 = vector.broadcast %1 : vector<1x32xf32> to vector<49x32xf32>
    %17 = arith.addf %15, %16 : vector<49x32xf32>
    %cst_16 = arith.constant 0.000000e+00 : f32
    %18 = vector.broadcast %cst_16 : f32 to vector<49x32xf32>
    %19 = arith.maximumf %17, %18 : vector<49x32xf32>
    %20 = vector.extract_strided_slice %19 {offsets = [0, 0], sizes = [7, 32], strides = [1, 1]} : vector<49x32xf32> to vector<7x32xf32>
    %c1 = arith.constant 1 : index
    %c1_17 = arith.constant 1 : index
    %c0_18 = arith.constant 0 : index
    %c0_19 = arith.constant 0 : index
    %c0_20 = arith.constant 0 : index
    %21 = vector.load %arg11[%c1, %c1_17, %c0_18, %c0_19, %c0_20] : memref<2x2x8x8x32xf32, #tpu.memory_space<vmem>>, vector<1x1x1x7x32xf32>
    %22 = vector.shape_cast %21 : vector<1x1x1x7x32xf32> to vector<7x32xf32>
    %23 = vector.shape_cast %20 : vector<7x32xf32> to vector<1x1x1x7x32xf32>
    tpu.vector_store %arg11[%c1, %c1_17, %c0_18, %c0_19, %c0_20], %23 {strides = array<i32>} : memref<2x2x8x8x32xf32, #tpu.memory_space<vmem>>, vector<1x1x1x7x32xf32>,
    %24 = vector.extract_strided_slice %19 {offsets = [7, 0], sizes = [7, 32], strides = [1, 1]} : vector<49x32xf32> to vector<7x32xf32>
    %c1_21 = arith.constant 1 : index
    %c1_22 = arith.constant 1 : index
    %c1_23 = arith.constant 1 : index
    %c0_24 = arith.constant 0 : index
    %c0_25 = arith.constant 0 : index
    %25 = vector.load %arg11[%c1_21, %c1_22, %c1_23, %c0_24, %c0_25] : memref<2x2x8x8x32xf32, #tpu.memory_space<vmem>>, vector<1x1x1x7x32xf32>
    %26 = vector.shape_cast %25 : vector<1x1x1x7x32xf32> to vector<7x32xf32>
    %27 = vector.shape_cast %24 : vector<7x32xf32> to vector<1x1x1x7x32xf32>
    tpu.vector_store %arg11[%c1_21, %c1_22, %c1_23, %c0_24, %c0_25], %27 {strides = array<i32>} : memref<2x2x8x8x32xf32, #tpu.memory_space<vmem>>, vector<1x1x1x7x32xf32>,
    %28 = vector.extract_strided_slice %19 {offsets = [14, 0], sizes = [7, 32], strides = [1, 1]} : vector<49x32xf32> to vector<7x32xf32>
    %c1_26 = arith.constant 1 : index
    %c1_27 = arith.constant 1 : index
    %c2 = arith.constant 2 : index
    %c0_28 = arith.constant 0 : index
    %c0_29 = arith.constant 0 : index
    %29 = vector.load %arg11[%c1_26, %c1_27, %c2, %c0_28, %c0_29] : memref<2x2x8x8x32xf32, #tpu.memory_space<vmem>>, vector<1x1x1x7x32xf32>
    %30 = vector.shape_cast %29 : vector<1x1x1x7x32xf32> to vector<7x32xf32>
    %31 = vector.shape_cast %28 : vector<7x32xf32> to vector<1x1x1x7x32xf32>
    tpu.vector_store %arg11[%c1_26, %c1_27, %c2, %c0_28, %c0_29], %31 {strides = array<i32>} : memref<2x2x8x8x32xf32, #tpu.memory_space<vmem>>, vector<1x1x1x7x32xf32>,
    %32 = vector.extract_strided_slice %19 {offsets = [21, 0], sizes = [7, 32], strides = [1, 1]} : vector<49x32xf32> to vector<7x32xf32>
    %c1_30 = arith.constant 1 : index
    %c1_31 = arith.constant 1 : index
    %c3 = arith.constant 3 : index
    %c0_32 = arith.constant 0 : index
    %c0_33 = arith.constant 0 : index
    %33 = vector.load %arg11[%c1_30, %c1_31, %c3, %c0_32, %c0_33] : memref<2x2x8x8x32xf32, #tpu.memory_space<vmem>>, vector<1x1x1x7x32xf32>
    %34 = vector.shape_cast %33 : vector<1x1x1x7x32xf32> to vector<7x32xf32>
    %35 = vector.shape_cast %32 : vector<7x32xf32> to vector<1x1x1x7x32xf32>
    tpu.vector_store %arg11[%c1_30, %c1_31, %c3, %c0_32, %c0_33], %35 {strides = array<i32>} : memref<2x2x8x8x32xf32, #tpu.memory_space<vmem>>, vector<1x1x1x7x32xf32>,
    %36 = vector.extract_strided_slice %19 {offsets = [28, 0], sizes = [7, 32], strides = [1, 1]} : vector<49x32xf32> to vector<7x32xf32>
    %c1_34 = arith.constant 1 : index
    %c1_35 = arith.constant 1 : index
    %c4 = arith.constant 4 : index
    %c0_36 = arith.constant 0 : index
    %c0_37 = arith.constant 0 : index
    %37 = vector.load %arg11[%c1_34, %c1_35, %c4, %c0_36, %c0_37] : memref<2x2x8x8x32xf32, #tpu.memory_space<vmem>>, vector<1x1x1x7x32xf32>
    %38 = vector.shape_cast %37 : vector<1x1x1x7x32xf32> to vector<7x32xf32>
    %39 = vector.shape_cast %36 : vector<7x32xf32> to vector<1x1x1x7x32xf32>
    tpu.vector_store %arg11[%c1_34, %c1_35, %c4, %c0_36, %c0_37], %39 {strides = array<i32>} : memref<2x2x8x8x32xf32, #tpu.memory_space<vmem>>, vector<1x1x1x7x32xf32>,
    %40 = vector.extract_strided_slice %19 {offsets = [35, 0], sizes = [7, 32], strides = [1, 1]} : vector<49x32xf32> to vector<7x32xf32>
    %c1_38 = arith.constant 1 : index
    %c1_39 = arith.constant 1 : index
    %c5 = arith.constant 5 : index
    %c0_40 = arith.constant 0 : index
    %c0_41 = arith.constant 0 : index
    %41 = vector.load %arg11[%c1_38, %c1_39, %c5, %c0_40, %c0_41] : memref<2x2x8x8x32xf32, #tpu.memory_space<vmem>>, vector<1x1x1x7x32xf32>
    %42 = vector.shape_cast %41 : vector<1x1x1x7x32xf32> to vector<7x32xf32>
    %43 = vector.shape_cast %40 : vector<7x32xf32> to vector<1x1x1x7x32xf32>
    tpu.vector_store %arg11[%c1_38, %c1_39, %c5, %c0_40, %c0_41], %43 {strides = array<i32>} : memref<2x2x8x8x32xf32, #tpu.memory_space<vmem>>, vector<1x1x1x7x32xf32>,
    %44 = vector.extract_strided_slice %19 {offsets = [42, 0], sizes = [7, 32], strides = [1, 1]} : vector<49x32xf32> to vector<7x32xf32>
    %c1_42 = arith.constant 1 : index
    %c1_43 = arith.constant 1 : index
    %c6 = arith.constant 6 : index
    %c0_44 = arith.constant 0 : index
    %c0_45 = arith.constant 0 : index
    %45 = vector.load %arg11[%c1_42, %c1_43, %c6, %c0_44, %c0_45] : memref<2x2x8x8x32xf32, #tpu.memory_space<vmem>>, vector<1x1x1x7x32xf32>
    %46 = vector.shape_cast %45 : vector<1x1x1x7x32xf32> to vector<7x32xf32>
    %47 = vector.shape_cast %44 : vector<7x32xf32> to vector<1x1x1x7x32xf32>
    tpu.vector_store %arg11[%c1_42, %c1_43, %c6, %c0_44, %c0_45], %47 {strides = array<i32>} : memref<2x2x8x8x32xf32, #tpu.memory_space<vmem>>, vector<1x1x1x7x32xf32>,
    %48 = vector.extract_strided_slice %6 {offsets = [98, 0], sizes = [49, 32], strides = [1, 1]} : vector<784x32xf32> to vector<49x32xf32>
    %49 = vector.extract_strided_slice %6 {offsets = [147, 0], sizes = [49, 32], strides = [1, 1]} : vector<784x32xf32> to vector<49x32xf32>
    %50 = arith.maximumf %48, %49 : vector<49x32xf32>
    %51 = vector.extract_strided_slice %6 {offsets = [294, 0], sizes = [49, 32], strides = [1, 1]} : vector<784x32xf32> to vector<49x32xf32>
    %52 = arith.maximumf %50, %51 : vector<49x32xf32>
    %53 = vector.extract_strided_slice %6 {offsets = [343, 0], sizes = [49, 32], strides = [1, 1]} : vector<784x32xf32> to vector<49x32xf32>
    %54 = arith.maximumf %52, %53 : vector<49x32xf32>
    %55 = vector.broadcast %1 : vector<1x32xf32> to vector<49x32xf32>
    %56 = arith.addf %54, %55 : vector<49x32xf32>
    %cst_46 = arith.constant 0.000000e+00 : f32
    %57 = vector.broadcast %cst_46 : f32 to vector<49x32xf32>
    %58 = arith.maximumf %56, %57 : vector<49x32xf32>
    %59 = vector.extract_strided_slice %58 {offsets = [0, 0], sizes = [7, 32], strides = [1, 1]} : vector<49x32xf32> to vector<7x32xf32>
    %c1_47 = arith.constant 1 : index
    %c0_48 = arith.constant 0 : index
    %c0_49 = arith.constant 0 : index
    %c1_50 = arith.constant 1 : index
    %c0_51 = arith.constant 0 : index
    %60 = vector.load %arg11[%c1_47, %c0_48, %c0_49, %c1_50, %c0_51] : memref<2x2x8x8x32xf32, #tpu.memory_space<vmem>>, vector<1x1x1x7x32xf32>
    %61 = vector.shape_cast %60 : vector<1x1x1x7x32xf32> to vector<7x32xf32>
    %62 = vector.shape_cast %59 : vector<7x32xf32> to vector<1x1x1x7x32xf32>
    tpu.vector_store %arg11[%c1_47, %c0_48, %c0_49, %c1_50, %c0_51], %62 {strides = array<i32>} : memref<2x2x8x8x32xf32, #tpu.memory_space<vmem>>, vector<1x1x1x7x32xf32>,
    %63 = vector.extract_strided_slice %58 {offsets = [7, 0], sizes = [7, 32], strides = [1, 1]} : vector<49x32xf32> to vector<7x32xf32>
    %c1_52 = arith.constant 1 : index
    %c0_53 = arith.constant 0 : index
    %c1_54 = arith.constant 1 : index
    %c1_55 = arith.constant 1 : index
    %c0_56 = arith.constant 0 : index
    %64 = vector.load %arg11[%c1_52, %c0_53, %c1_54, %c1_55, %c0_56] : memref<2x2x8x8x32xf32, #tpu.memory_space<vmem>>, vector<1x1x1x7x32xf32>
    %65 = vector.shape_cast %64 : vector<1x1x1x7x32xf32> to vector<7x32xf32>
    %66 = vector.shape_cast %63 : vector<7x32xf32> to vector<1x1x1x7x32xf32>
    tpu.vector_store %arg11[%c1_52, %c0_53, %c1_54, %c1_55, %c0_56], %66 {strides = array<i32>} : memref<2x2x8x8x32xf32, #tpu.memory_space<vmem>>, vector<1x1x1x7x32xf32>,
    %67 = vector.extract_strided_slice %58 {offsets = [14, 0], sizes = [7, 32], strides = [1, 1]} : vector<49x32xf32> to vector<7x32xf32>
    %c1_57 = arith.constant 1 : index
    %c0_58 = arith.constant 0 : index
    %c2_59 = arith.constant 2 : index
    %c1_60 = arith.constant 1 : index
    %c0_61 = arith.constant 0 : index
    %68 = vector.load %arg11[%c1_57, %c0_58, %c2_59, %c1_60, %c0_61] : memref<2x2x8x8x32xf32, #tpu.memory_space<vmem>>, vector<1x1x1x7x32xf32>
    %69 = vector.shape_cast %68 : vector<1x1x1x7x32xf32> to vector<7x32xf32>
    %70 = vector.shape_cast %67 : vector<7x32xf32> to vector<1x1x1x7x32xf32>
    tpu.vector_store %arg11[%c1_57, %c0_58, %c2_59, %c1_60, %c0_61], %70 {strides = array<i32>} : memref<2x2x8x8x32xf32, #tpu.memory_space<vmem>>, vector<1x1x1x7x32xf32>,
    %71 = vector.extract_strided_slice %58 {offsets = [21, 0], sizes = [7, 32], strides = [1, 1]} : vector<49x32xf32> to vector<7x32xf32>
    %c1_62 = arith.constant 1 : index
    %c0_63 = arith.constant 0 : index
    %c3_64 = arith.constant 3 : index
    %c1_65 = arith.constant 1 : index
    %c0_66 = arith.constant 0 : index
    %72 = vector.load %arg11[%c1_62, %c0_63, %c3_64, %c1_65, %c0_66] : memref<2x2x8x8x32xf32, #tpu.memory_space<vmem>>, vector<1x1x1x7x32xf32>
    %73 = vector.shape_cast %72 : vector<1x1x1x7x32xf32> to vector<7x32xf32>
    %74 = vector.shape_cast %71 : vector<7x32xf32> to vector<1x1x1x7x32xf32>
    tpu.vector_store %arg11[%c1_62, %c0_63, %c3_64, %c1_65, %c0_66], %74 {strides = array<i32>} : memref<2x2x8x8x32xf32, #tpu.memory_space<vmem>>, vector<1x1x1x7x32xf32>,
    %75 = vector.extract_strided_slice %58 {offsets = [28, 0], sizes = [7, 32], strides = [1, 1]} : vector<49x32xf32> to vector<7x32xf32>
    %c1_67 = arith.constant 1 : index
    %c0_68 = arith.constant 0 : index
    %c4_69 = arith.constant 4 : index
    %c1_70 = arith.constant 1 : index
    %c0_71 = arith.constant 0 : index
    %76 = vector.load %arg11[%c1_67, %c0_68, %c4_69, %c1_70, %c0_71] : memref<2x2x8x8x32xf32, #tpu.memory_space<vmem>>, vector<1x1x1x7x32xf32>
    %77 = vector.shape_cast %76 : vector<1x1x1x7x32xf32> to vector<7x32xf32>
    %78 = vector.shape_cast %75 : vector<7x32xf32> to vector<1x1x1x7x32xf32>
    tpu.vector_store %arg11[%c1_67, %c0_68, %c4_69, %c1_70, %c0_71], %78 {strides = array<i32>} : memref<2x2x8x8x32xf32, #tpu.memory_space<vmem>>, vector<1x1x1x7x32xf32>,
    %79 = vector.extract_strided_slice %58 {offsets = [35, 0], sizes = [7, 32], strides = [1, 1]} : vector<49x32xf32> to vector<7x32xf32>
    %c1_72 = arith.constant 1 : index
    %c0_73 = arith.constant 0 : index
    %c5_74 = arith.constant 5 : index
    %c1_75 = arith.constant 1 : index
    %c0_76 = arith.constant 0 : index
    %80 = vector.load %arg11[%c1_72, %c0_73, %c5_74, %c1_75, %c0_76] : memref<2x2x8x8x32xf32, #tpu.memory_space<vmem>>, vector<1x1x1x7x32xf32>
    %81 = vector.shape_cast %80 : vector<1x1x1x7x32xf32> to vector<7x32xf32>
    %82 = vector.shape_cast %79 : vector<7x32xf32> to vector<1x1x1x7x32xf32>
    tpu.vector_store %arg11[%c1_72, %c0_73, %c5_74, %c1_75, %c0_76], %82 {strides = array<i32>} : memref<2x2x8x8x32xf32, #tpu.memory_space<vmem>>, vector<1x1x1x7x32xf32>,
    %83 = vector.extract_strided_slice %58 {offsets = [42, 0], sizes = [7, 32], strides = [1, 1]} : vector<49x32xf32> to vector<7x32xf32>
    %c1_77 = arith.constant 1 : index
    %c0_78 = arith.constant 0 : index
    %c6_79 = arith.constant 6 : index
    %c1_80 = arith.constant 1 : index
    %c0_81 = arith.constant 0 : index
    %84 = vector.load %arg11[%c1_77, %c0_78, %c6_79, %c1_80, %c0_81] : memref<2x2x8x8x32xf32, #tpu.memory_space<vmem>>, vector<1x1x1x7x32xf32>
    %85 = vector.shape_cast %84 : vector<1x1x1x7x32xf32> to vector<7x32xf32>
    %86 = vector.shape_cast %83 : vector<7x32xf32> to vector<1x1x1x7x32xf32>
    tpu.vector_store %arg11[%c1_77, %c0_78, %c6_79, %c1_80, %c0_81], %86 {strides = array<i32>} : memref<2x2x8x8x32xf32, #tpu.memory_space<vmem>>, vector<1x1x1x7x32xf32>,
    %87 = vector.extract_strided_slice %6 {offsets = [392, 0], sizes = [49, 32], strides = [1, 1]} : vector<784x32xf32> to vector<49x32xf32>
    %88 = vector.extract_strided_slice %6 {offsets = [441, 0], sizes = [49, 32], strides = [1, 1]} : vector<784x32xf32> to vector<49x32xf32>
    %89 = arith.maximumf %87, %88 : vector<49x32xf32>
    %90 = vector.extract_strided_slice %6 {offsets = [588, 0], sizes = [49, 32], strides = [1, 1]} : vector<784x32xf32> to vector<49x32xf32>
    %91 = arith.maximumf %89, %90 : vector<49x32xf32>
    %92 = vector.extract_strided_slice %6 {offsets = [637, 0], sizes = [49, 32], strides = [1, 1]} : vector<784x32xf32> to vector<49x32xf32>
    %93 = arith.maximumf %91, %92 : vector<49x32xf32>
    %94 = vector.broadcast %1 : vector<1x32xf32> to vector<49x32xf32>
    %95 = arith.addf %93, %94 : vector<49x32xf32>
    %cst_82 = arith.constant 0.000000e+00 : f32
    %96 = vector.broadcast %cst_82 : f32 to vector<49x32xf32>
    %97 = arith.maximumf %95, %96 : vector<49x32xf32>
    %98 = vector.extract_strided_slice %97 {offsets = [0, 0], sizes = [7, 32], strides = [1, 1]} : vector<49x32xf32> to vector<7x32xf32>
    %c0_83 = arith.constant 0 : index
    %c1_84 = arith.constant 1 : index
    %c1_85 = arith.constant 1 : index
    %c0_86 = arith.constant 0 : index
    %c0_87 = arith.constant 0 : index
    %99 = vector.load %arg11[%c0_83, %c1_84, %c1_85, %c0_86, %c0_87] : memref<2x2x8x8x32xf32, #tpu.memory_space<vmem>>, vector<1x1x1x7x32xf32>
    %100 = vector.shape_cast %99 : vector<1x1x1x7x32xf32> to vector<7x32xf32>
    %101 = vector.shape_cast %98 : vector<7x32xf32> to vector<1x1x1x7x32xf32>
    tpu.vector_store %arg11[%c0_83, %c1_84, %c1_85, %c0_86, %c0_87], %101 {strides = array<i32>} : memref<2x2x8x8x32xf32, #tpu.memory_space<vmem>>, vector<1x1x1x7x32xf32>,
    %102 = vector.extract_strided_slice %97 {offsets = [7, 0], sizes = [7, 32], strides = [1, 1]} : vector<49x32xf32> to vector<7x32xf32>
    %c0_88 = arith.constant 0 : index
    %c1_89 = arith.constant 1 : index
    %c2_90 = arith.constant 2 : index
    %c0_91 = arith.constant 0 : index
    %c0_92 = arith.constant 0 : index
    %103 = vector.load %arg11[%c0_88, %c1_89, %c2_90, %c0_91, %c0_92] : memref<2x2x8x8x32xf32, #tpu.memory_space<vmem>>, vector<1x1x1x7x32xf32>
    %104 = vector.shape_cast %103 : vector<1x1x1x7x32xf32> to vector<7x32xf32>
    %105 = vector.shape_cast %102 : vector<7x32xf32> to vector<1x1x1x7x32xf32>
    tpu.vector_store %arg11[%c0_88, %c1_89, %c2_90, %c0_91, %c0_92], %105 {strides = array<i32>} : memref<2x2x8x8x32xf32, #tpu.memory_space<vmem>>, vector<1x1x1x7x32xf32>,
    %106 = vector.extract_strided_slice %97 {offsets = [14, 0], sizes = [7, 32], strides = [1, 1]} : vector<49x32xf32> to vector<7x32xf32>
    %c0_93 = arith.constant 0 : index
    %c1_94 = arith.constant 1 : index
    %c3_95 = arith.constant 3 : index
    %c0_96 = arith.constant 0 : index
    %c0_97 = arith.constant 0 : index
    %107 = vector.load %arg11[%c0_93, %c1_94, %c3_95, %c0_96, %c0_97] : memref<2x2x8x8x32xf32, #tpu.memory_space<vmem>>, vector<1x1x1x7x32xf32>
    %108 = vector.shape_cast %107 : vector<1x1x1x7x32xf32> to vector<7x32xf32>
    %109 = vector.shape_cast %106 : vector<7x32xf32> to vector<1x1x1x7x32xf32>
    tpu.vector_store %arg11[%c0_93, %c1_94, %c3_95, %c0_96, %c0_97], %109 {strides = array<i32>} : memref<2x2x8x8x32xf32, #tpu.memory_space<vmem>>, vector<1x1x1x7x32xf32>,
    %110 = vector.extract_strided_slice %97 {offsets = [21, 0], sizes = [7, 32], strides = [1, 1]} : vector<49x32xf32> to vector<7x32xf32>
    %c0_98 = arith.constant 0 : index
    %c1_99 = arith.constant 1 : index
    %c4_100 = arith.constant 4 : index
    %c0_101 = arith.constant 0 : index
    %c0_102 = arith.constant 0 : index
    %111 = vector.load %arg11[%c0_98, %c1_99, %c4_100, %c0_101, %c0_102] : memref<2x2x8x8x32xf32, #tpu.memory_space<vmem>>, vector<1x1x1x7x32xf32>
    %112 = vector.shape_cast %111 : vector<1x1x1x7x32xf32> to vector<7x32xf32>
    %113 = vector.shape_cast %110 : vector<7x32xf32> to vector<1x1x1x7x32xf32>
    tpu.vector_store %arg11[%c0_98, %c1_99, %c4_100, %c0_101, %c0_102], %113 {strides = array<i32>} : memref<2x2x8x8x32xf32, #tpu.memory_space<vmem>>, vector<1x1x1x7x32xf32>,
    %114 = vector.extract_strided_slice %97 {offsets = [28, 0], sizes = [7, 32], strides = [1, 1]} : vector<49x32xf32> to vector<7x32xf32>
    %c0_103 = arith.constant 0 : index
    %c1_104 = arith.constant 1 : index
    %c5_105 = arith.constant 5 : index
    %c0_106 = arith.constant 0 : index
    %c0_107 = arith.constant 0 : index
    %115 = vector.load %arg11[%c0_103, %c1_104, %c5_105, %c0_106, %c0_107] : memref<2x2x8x8x32xf32, #tpu.memory_space<vmem>>, vector<1x1x1x7x32xf32>
    %116 = vector.shape_cast %115 : vector<1x1x1x7x32xf32> to vector<7x32xf32>
    %117 = vector.shape_cast %114 : vector<7x32xf32> to vector<1x1x1x7x32xf32>
    tpu.vector_store %arg11[%c0_103, %c1_104, %c5_105, %c0_106, %c0_107], %117 {strides = array<i32>} : memref<2x2x8x8x32xf32, #tpu.memory_space<vmem>>, vector<1x1x1x7x32xf32>,
    %118 = vector.extract_strided_slice %97 {offsets = [35, 0], sizes = [7, 32], strides = [1, 1]} : vector<49x32xf32> to vector<7x32xf32>
    %c0_108 = arith.constant 0 : index
    %c1_109 = arith.constant 1 : index
    %c6_110 = arith.constant 6 : index
    %c0_111 = arith.constant 0 : index
    %c0_112 = arith.constant 0 : index
    %119 = vector.load %arg11[%c0_108, %c1_109, %c6_110, %c0_111, %c0_112] : memref<2x2x8x8x32xf32, #tpu.memory_space<vmem>>, vector<1x1x1x7x32xf32>
    %120 = vector.shape_cast %119 : vector<1x1x1x7x32xf32> to vector<7x32xf32>
    %121 = vector.shape_cast %118 : vector<7x32xf32> to vector<1x1x1x7x32xf32>
    tpu.vector_store %arg11[%c0_108, %c1_109, %c6_110, %c0_111, %c0_112], %121 {strides = array<i32>} : memref<2x2x8x8x32xf32, #tpu.memory_space<vmem>>, vector<1x1x1x7x32xf32>,
    %122 = vector.extract_strided_slice %97 {offsets = [42, 0], sizes = [7, 32], strides = [1, 1]} : vector<49x32xf32> to vector<7x32xf32>
    %c0_113 = arith.constant 0 : index
    %c1_114 = arith.constant 1 : index
    %c7 = arith.constant 7 : index
    %c0_115 = arith.constant 0 : index
    %c0_116 = arith.constant 0 : index
    %123 = vector.load %arg11[%c0_113, %c1_114, %c7, %c0_115, %c0_116] : memref<2x2x8x8x32xf32, #tpu.memory_space<vmem>>, vector<1x1x1x7x32xf32>
    %124 = vector.shape_cast %123 : vector<1x1x1x7x32xf32> to vector<7x32xf32>
    %125 = vector.shape_cast %122 : vector<7x32xf32> to vector<1x1x1x7x32xf32>
    tpu.vector_store %arg11[%c0_113, %c1_114, %c7, %c0_115, %c0_116], %125 {strides = array<i32>} : memref<2x2x8x8x32xf32, #tpu.memory_space<vmem>>, vector<1x1x1x7x32xf32>,
    %126 = vector.extract_strided_slice %6 {offsets = [490, 0], sizes = [49, 32], strides = [1, 1]} : vector<784x32xf32> to vector<49x32xf32>
    %127 = vector.extract_strided_slice %6 {offsets = [539, 0], sizes = [49, 32], strides = [1, 1]} : vector<784x32xf32> to vector<49x32xf32>
    %128 = arith.maximumf %126, %127 : vector<49x32xf32>
    %129 = vector.extract_strided_slice %6 {offsets = [686, 0], sizes = [49, 32], strides = [1, 1]} : vector<784x32xf32> to vector<49x32xf32>
    %130 = arith.maximumf %128, %129 : vector<49x32xf32>
    %131 = vector.extract_strided_slice %6 {offsets = [735, 0], sizes = [49, 32], strides = [1, 1]} : vector<784x32xf32> to vector<49x32xf32>
    %132 = arith.maximumf %130, %131 : vector<49x32xf32>
    %133 = vector.broadcast %1 : vector<1x32xf32> to vector<49x32xf32>
    %134 = arith.addf %132, %133 : vector<49x32xf32>
    %cst_117 = arith.constant 0.000000e+00 : f32
    %135 = vector.broadcast %cst_117 : f32 to vector<49x32xf32>
    %136 = arith.maximumf %134, %135 : vector<49x32xf32>
    %137 = vector.extract_strided_slice %136 {offsets = [0, 0], sizes = [7, 32], strides = [1, 1]} : vector<49x32xf32> to vector<7x32xf32>
    %c0_118 = arith.constant 0 : index
    %c0_119 = arith.constant 0 : index
    %c1_120 = arith.constant 1 : index
    %c1_121 = arith.constant 1 : index
    %c0_122 = arith.constant 0 : index
    %138 = vector.load %arg11[%c0_118, %c0_119, %c1_120, %c1_121, %c0_122] : memref<2x2x8x8x32xf32, #tpu.memory_space<vmem>>, vector<1x1x1x7x32xf32>
    %139 = vector.shape_cast %138 : vector<1x1x1x7x32xf32> to vector<7x32xf32>
    %140 = vector.shape_cast %137 : vector<7x32xf32> to vector<1x1x1x7x32xf32>
    tpu.vector_store %arg11[%c0_118, %c0_119, %c1_120, %c1_121, %c0_122], %140 {strides = array<i32>} : memref<2x2x8x8x32xf32, #tpu.memory_space<vmem>>, vector<1x1x1x7x32xf32>,
    %141 = vector.extract_strided_slice %136 {offsets = [7, 0], sizes = [7, 32], strides = [1, 1]} : vector<49x32xf32> to vector<7x32xf32>
    %c0_123 = arith.constant 0 : index
    %c0_124 = arith.constant 0 : index
    %c2_125 = arith.constant 2 : index
    %c1_126 = arith.constant 1 : index
    %c0_127 = arith.constant 0 : index
    %142 = vector.load %arg11[%c0_123, %c0_124, %c2_125, %c1_126, %c0_127] : memref<2x2x8x8x32xf32, #tpu.memory_space<vmem>>, vector<1x1x1x7x32xf32>
    %143 = vector.shape_cast %142 : vector<1x1x1x7x32xf32> to vector<7x32xf32>
    %144 = vector.shape_cast %141 : vector<7x32xf32> to vector<1x1x1x7x32xf32>
    tpu.vector_store %arg11[%c0_123, %c0_124, %c2_125, %c1_126, %c0_127], %144 {strides = array<i32>} : memref<2x2x8x8x32xf32, #tpu.memory_space<vmem>>, vector<1x1x1x7x32xf32>,
    %145 = vector.extract_strided_slice %136 {offsets = [14, 0], sizes = [7, 32], strides = [1, 1]} : vector<49x32xf32> to vector<7x32xf32>
    %c0_128 = arith.constant 0 : index
    %c0_129 = arith.constant 0 : index
    %c3_130 = arith.constant 3 : index
    %c1_131 = arith.constant 1 : index
    %c0_132 = arith.constant 0 : index
    %146 = vector.load %arg11[%c0_128, %c0_129, %c3_130, %c1_131, %c0_132] : memref<2x2x8x8x32xf32, #tpu.memory_space<vmem>>, vector<1x1x1x7x32xf32>
    %147 = vector.shape_cast %146 : vector<1x1x1x7x32xf32> to vector<7x32xf32>
    %148 = vector.shape_cast %145 : vector<7x32xf32> to vector<1x1x1x7x32xf32>
    tpu.vector_store %arg11[%c0_128, %c0_129, %c3_130, %c1_131, %c0_132], %148 {strides = array<i32>} : memref<2x2x8x8x32xf32, #tpu.memory_space<vmem>>, vector<1x1x1x7x32xf32>,
    %149 = vector.extract_strided_slice %136 {offsets = [21, 0], sizes = [7, 32], strides = [1, 1]} : vector<49x32xf32> to vector<7x32xf32>
    %c0_133 = arith.constant 0 : index
    %c0_134 = arith.constant 0 : index
    %c4_135 = arith.constant 4 : index
    %c1_136 = arith.constant 1 : index
    %c0_137 = arith.constant 0 : index
    %150 = vector.load %arg11[%c0_133, %c0_134, %c4_135, %c1_136, %c0_137] : memref<2x2x8x8x32xf32, #tpu.memory_space<vmem>>, vector<1x1x1x7x32xf32>
    %151 = vector.shape_cast %150 : vector<1x1x1x7x32xf32> to vector<7x32xf32>
    %152 = vector.shape_cast %149 : vector<7x32xf32> to vector<1x1x1x7x32xf32>
    tpu.vector_store %arg11[%c0_133, %c0_134, %c4_135, %c1_136, %c0_137], %152 {strides = array<i32>} : memref<2x2x8x8x32xf32, #tpu.memory_space<vmem>>, vector<1x1x1x7x32xf32>,
    %153 = vector.extract_strided_slice %136 {offsets = [28, 0], sizes = [7, 32], strides = [1, 1]} : vector<49x32xf32> to vector<7x32xf32>
    %c0_138 = arith.constant 0 : index
    %c0_139 = arith.constant 0 : index
    %c5_140 = arith.constant 5 : index
    %c1_141 = arith.constant 1 : index
    %c0_142 = arith.constant 0 : index
    %154 = vector.load %arg11[%c0_138, %c0_139, %c5_140, %c1_141, %c0_142] : memref<2x2x8x8x32xf32, #tpu.memory_space<vmem>>, vector<1x1x1x7x32xf32>
    %155 = vector.shape_cast %154 : vector<1x1x1x7x32xf32> to vector<7x32xf32>
    %156 = vector.shape_cast %153 : vector<7x32xf32> to vector<1x1x1x7x32xf32>
    tpu.vector_store %arg11[%c0_138, %c0_139, %c5_140, %c1_141, %c0_142], %156 {strides = array<i32>} : memref<2x2x8x8x32xf32, #tpu.memory_space<vmem>>, vector<1x1x1x7x32xf32>,
    %157 = vector.extract_strided_slice %136 {offsets = [35, 0], sizes = [7, 32], strides = [1, 1]} : vector<49x32xf32> to vector<7x32xf32>
    %c0_143 = arith.constant 0 : index
    %c0_144 = arith.constant 0 : index
    %c6_145 = arith.constant 6 : index
    %c1_146 = arith.constant 1 : index
    %c0_147 = arith.constant 0 : index
    %158 = vector.load %arg11[%c0_143, %c0_144, %c6_145, %c1_146, %c0_147] : memref<2x2x8x8x32xf32, #tpu.memory_space<vmem>>, vector<1x1x1x7x32xf32>
    %159 = vector.shape_cast %158 : vector<1x1x1x7x32xf32> to vector<7x32xf32>
    %160 = vector.shape_cast %157 : vector<7x32xf32> to vector<1x1x1x7x32xf32>
    tpu.vector_store %arg11[%c0_143, %c0_144, %c6_145, %c1_146, %c0_147], %160 {strides = array<i32>} : memref<2x2x8x8x32xf32, #tpu.memory_space<vmem>>, vector<1x1x1x7x32xf32>,
    %161 = vector.extract_strided_slice %136 {offsets = [42, 0], sizes = [7, 32], strides = [1, 1]} : vector<49x32xf32> to vector<7x32xf32>
    %c0_148 = arith.constant 0 : index
    %c0_149 = arith.constant 0 : index
    %c7_150 = arith.constant 7 : index
    %c1_151 = arith.constant 1 : index
    %c0_152 = arith.constant 0 : index
    %162 = vector.load %arg11[%c0_148, %c0_149, %c7_150, %c1_151, %c0_152] : memref<2x2x8x8x32xf32, #tpu.memory_space<vmem>>, vector<1x1x1x7x32xf32>
    %163 = vector.shape_cast %162 : vector<1x1x1x7x32xf32> to vector<7x32xf32>
    %164 = vector.shape_cast %161 : vector<7x32xf32> to vector<1x1x1x7x32xf32>
    tpu.vector_store %arg11[%c0_148, %c0_149, %c7_150, %c1_151, %c0_152], %164 {strides = array<i32>} : memref<2x2x8x8x32xf32, #tpu.memory_space<vmem>>, vector<1x1x1x7x32xf32>,
    %c0_153 = arith.constant 0 : index
    %c0_154 = arith.constant 0 : index
    %c0_155 = arith.constant 0 : index
    %c0_156 = arith.constant 0 : index
    %c0_157 = arith.constant 0 : index
    %165 = vector.load %arg11[%c0_153, %c0_154, %c0_155, %c0_156, %c0_157] : memref<2x2x8x8x32xf32, #tpu.memory_space<vmem>>, vector<1x1x7x7x32xf32>
    %166 = vector.shape_cast %165 : vector<1x1x7x7x32xf32> to vector<7x7x32xf32>
    %c0_158 = arith.constant 0 : index
    %c1_159 = arith.constant 1 : index
    %c0_160 = arith.constant 0 : index
    %c0_161 = arith.constant 0 : index
    %c0_162 = arith.constant 0 : index
    %167 = vector.load %arg11[%c0_158, %c1_159, %c0_160, %c0_161, %c0_162] : memref<2x2x8x8x32xf32, #tpu.memory_space<vmem>>, vector<1x1x7x7x32xf32>
    %168 = vector.shape_cast %167 : vector<1x1x7x7x32xf32> to vector<7x7x32xf32>
    %c0_163 = arith.constant 0 : index
    %c0_164 = arith.constant 0 : index
    %c0_165 = arith.constant 0 : index
    %c1_166 = arith.constant 1 : index
    %c0_167 = arith.constant 0 : index
    %169 = vector.load %arg11[%c0_163, %c0_164, %c0_165, %c1_166, %c0_167] : memref<2x2x8x8x32xf32, #tpu.memory_space<vmem>>, vector<1x1x7x7x32xf32>
    %170 = vector.shape_cast %169 : vector<1x1x7x7x32xf32> to vector<7x7x32xf32>
    %c1_168 = arith.constant 1 : index
    %c0_169 = arith.constant 0 : index
    %c0_170 = arith.constant 0 : index
    %c0_171 = arith.constant 0 : index
    %c0_172 = arith.constant 0 : index
    %171 = vector.load %arg11[%c1_168, %c0_169, %c0_170, %c0_171, %c0_172] : memref<2x2x8x8x32xf32, #tpu.memory_space<vmem>>, vector<1x1x7x7x32xf32>
    %172 = vector.shape_cast %171 : vector<1x1x7x7x32xf32> to vector<7x7x32xf32>
    %c1_173 = arith.constant 1 : index
    %c1_174 = arith.constant 1 : index
    %c0_175 = arith.constant 0 : index
    %c0_176 = arith.constant 0 : index
    %c0_177 = arith.constant 0 : index
    %173 = vector.load %arg11[%c1_173, %c1_174, %c0_175, %c0_176, %c0_177] : memref<2x2x8x8x32xf32, #tpu.memory_space<vmem>>, vector<1x1x7x7x32xf32>
    %174 = vector.shape_cast %173 : vector<1x1x7x7x32xf32> to vector<7x7x32xf32>
    %c1_178 = arith.constant 1 : index
    %c0_179 = arith.constant 0 : index
    %c0_180 = arith.constant 0 : index
    %c1_181 = arith.constant 1 : index
    %c0_182 = arith.constant 0 : index
    %175 = vector.load %arg11[%c1_178, %c0_179, %c0_180, %c1_181, %c0_182] : memref<2x2x8x8x32xf32, #tpu.memory_space<vmem>>, vector<1x1x7x7x32xf32>
    %176 = vector.shape_cast %175 : vector<1x1x7x7x32xf32> to vector<7x7x32xf32>
    %c0_183 = arith.constant 0 : index
    %c0_184 = arith.constant 0 : index
    %c1_185 = arith.constant 1 : index
    %c0_186 = arith.constant 0 : index
    %c0_187 = arith.constant 0 : index
    %177 = vector.load %arg11[%c0_183, %c0_184, %c1_185, %c0_186, %c0_187] : memref<2x2x8x8x32xf32, #tpu.memory_space<vmem>>, vector<1x1x7x7x32xf32>
    %178 = vector.shape_cast %177 : vector<1x1x7x7x32xf32> to vector<7x7x32xf32>
    %c0_188 = arith.constant 0 : index
    %c1_189 = arith.constant 1 : index
    %c1_190 = arith.constant 1 : index
    %c0_191 = arith.constant 0 : index
    %c0_192 = arith.constant 0 : index
    %179 = vector.load %arg11[%c0_188, %c1_189, %c1_190, %c0_191, %c0_192] : memref<2x2x8x8x32xf32, #tpu.memory_space<vmem>>, vector<1x1x7x7x32xf32>
    %180 = vector.shape_cast %179 : vector<1x1x7x7x32xf32> to vector<7x7x32xf32>
    %c0_193 = arith.constant 0 : index
    %c0_194 = arith.constant 0 : index
    %c1_195 = arith.constant 1 : index
    %c1_196 = arith.constant 1 : index
    %c0_197 = arith.constant 0 : index
    %181 = vector.load %arg11[%c0_193, %c0_194, %c1_195, %c1_196, %c0_197] : memref<2x2x8x8x32xf32, #tpu.memory_space<vmem>>, vector<1x1x7x7x32xf32>
    %182 = vector.shape_cast %181 : vector<1x1x7x7x32xf32> to vector<7x7x32xf32>
    %183 = tpu.concatenate %166, %168, %170, %172, %174, %176, %178, %180, %182 in 2 : vector<7x7x32xf32>, vector<7x7x32xf32>, vector<7x7x32xf32>, vector<7x7x32xf32>, vector<7x7x32xf32>, vector<7x7x32xf32>, vector<7x7x32xf32>, vector<7x7x32xf32>, vector<7x7x32xf32> -> vector<7x7x288xf32>
    %184 = vector.extract_strided_slice %183 {offsets = [0, 0, 0], sizes = [1, 7, 288], strides = [1, 1, 1]} : vector<7x7x288xf32> to vector<1x7x288xf32>
    %185 = vector.shape_cast %184 : vector<1x7x288xf32> to vector<7x288xf32>
    %c0_198 = arith.constant 0 : index
    %c0_199 = arith.constant 0 : index
    %186 = vector.load %arg12[%c0_198, %c0_199] : memref<196x288xf32, #tpu.memory_space<vmem>>, vector<7x288xf32>
    tpu.vector_store %arg12[%c0_198, %c0_199], %185 {strides = array<i32>} : memref<196x288xf32, #tpu.memory_space<vmem>>, vector<7x288xf32>,
    %187 = vector.extract_strided_slice %183 {offsets = [1, 0, 0], sizes = [1, 7, 288], strides = [1, 1, 1]} : vector<7x7x288xf32> to vector<1x7x288xf32>
    %188 = vector.shape_cast %187 : vector<1x7x288xf32> to vector<7x288xf32>
    %c7_200 = arith.constant 7 : index
    %c0_201 = arith.constant 0 : index
    %189 = vector.load %arg12[%c7_200, %c0_201] : memref<196x288xf32, #tpu.memory_space<vmem>>, vector<7x288xf32>
    tpu.vector_store %arg12[%c7_200, %c0_201], %188 {strides = array<i32>} : memref<196x288xf32, #tpu.memory_space<vmem>>, vector<7x288xf32>,
    %190 = vector.extract_strided_slice %183 {offsets = [2, 0, 0], sizes = [1, 7, 288], strides = [1, 1, 1]} : vector<7x7x288xf32> to vector<1x7x288xf32>
    %191 = vector.shape_cast %190 : vector<1x7x288xf32> to vector<7x288xf32>
    %c14 = arith.constant 14 : index
    %c0_202 = arith.constant 0 : index
    %192 = vector.load %arg12[%c14, %c0_202] : memref<196x288xf32, #tpu.memory_space<vmem>>, vector<7x288xf32>
    tpu.vector_store %arg12[%c14, %c0_202], %191 {strides = array<i32>} : memref<196x288xf32, #tpu.memory_space<vmem>>, vector<7x288xf32>,
    %193 = vector.extract_strided_slice %183 {offsets = [3, 0, 0], sizes = [1, 7, 288], strides = [1, 1, 1]} : vector<7x7x288xf32> to vector<1x7x288xf32>
    %194 = vector.shape_cast %193 : vector<1x7x288xf32> to vector<7x288xf32>
    %c21 = arith.constant 21 : index
    %c0_203 = arith.constant 0 : index
    %195 = vector.load %arg12[%c21, %c0_203] : memref<196x288xf32, #tpu.memory_space<vmem>>, vector<7x288xf32>
    tpu.vector_store %arg12[%c21, %c0_203], %194 {strides = array<i32>} : memref<196x288xf32, #tpu.memory_space<vmem>>, vector<7x288xf32>,
    %196 = vector.extract_strided_slice %183 {offsets = [4, 0, 0], sizes = [1, 7, 288], strides = [1, 1, 1]} : vector<7x7x288xf32> to vector<1x7x288xf32>
    %197 = vector.shape_cast %196 : vector<1x7x288xf32> to vector<7x288xf32>
    %c28 = arith.constant 28 : index
    %c0_204 = arith.constant 0 : index
    %198 = vector.load %arg12[%c28, %c0_204] : memref<196x288xf32, #tpu.memory_space<vmem>>, vector<7x288xf32>
    tpu.vector_store %arg12[%c28, %c0_204], %197 {strides = array<i32>} : memref<196x288xf32, #tpu.memory_space<vmem>>, vector<7x288xf32>,
    %199 = vector.extract_strided_slice %183 {offsets = [5, 0, 0], sizes = [1, 7, 288], strides = [1, 1, 1]} : vector<7x7x288xf32> to vector<1x7x288xf32>
    %200 = vector.shape_cast %199 : vector<1x7x288xf32> to vector<7x288xf32>
    %c35 = arith.constant 35 : index
    %c0_205 = arith.constant 0 : index
    %201 = vector.load %arg12[%c35, %c0_205] : memref<196x288xf32, #tpu.memory_space<vmem>>, vector<7x288xf32>
    tpu.vector_store %arg12[%c35, %c0_205], %200 {strides = array<i32>} : memref<196x288xf32, #tpu.memory_space<vmem>>, vector<7x288xf32>,
    %202 = vector.extract_strided_slice %183 {offsets = [6, 0, 0], sizes = [1, 7, 288], strides = [1, 1, 1]} : vector<7x7x288xf32> to vector<1x7x288xf32>
    %203 = vector.shape_cast %202 : vector<1x7x288xf32> to vector<7x288xf32>
    %c42 = arith.constant 42 : index
    %c0_206 = arith.constant 0 : index
    %204 = vector.load %arg12[%c42, %c0_206] : memref<196x288xf32, #tpu.memory_space<vmem>>, vector<7x288xf32>
    tpu.vector_store %arg12[%c42, %c0_206], %203 {strides = array<i32>} : memref<196x288xf32, #tpu.memory_space<vmem>>, vector<7x288xf32>,
    %c0_207 = arith.constant 0 : index
    %c1_208 = arith.constant 1 : index
    %c0_209 = arith.constant 0 : index
    %c0_210 = arith.constant 0 : index
    %c0_211 = arith.constant 0 : index
    %205 = vector.load %arg11[%c0_207, %c1_208, %c0_209, %c0_210, %c0_211] : memref<2x2x8x8x32xf32, #tpu.memory_space<vmem>>, vector<1x1x7x7x32xf32>
    %206 = vector.shape_cast %205 : vector<1x1x7x7x32xf32> to vector<7x7x32xf32>
    %c0_212 = arith.constant 0 : index
    %c0_213 = arith.constant 0 : index
    %c0_214 = arith.constant 0 : index
    %c1_215 = arith.constant 1 : index
    %c0_216 = arith.constant 0 : index
    %207 = vector.load %arg11[%c0_212, %c0_213, %c0_214, %c1_215, %c0_216] : memref<2x2x8x8x32xf32, #tpu.memory_space<vmem>>, vector<1x1x7x7x32xf32>
    %208 = vector.shape_cast %207 : vector<1x1x7x7x32xf32> to vector<7x7x32xf32>
    %c0_217 = arith.constant 0 : index
    %c1_218 = arith.constant 1 : index
    %c0_219 = arith.constant 0 : index
    %c1_220 = arith.constant 1 : index
    %c0_221 = arith.constant 0 : index
    %209 = vector.load %arg11[%c0_217, %c1_218, %c0_219, %c1_220, %c0_221] : memref<2x2x8x8x32xf32, #tpu.memory_space<vmem>>, vector<1x1x7x7x32xf32>
    %210 = vector.shape_cast %209 : vector<1x1x7x7x32xf32> to vector<7x7x32xf32>
    %c1_222 = arith.constant 1 : index
    %c1_223 = arith.constant 1 : index
    %c0_224 = arith.constant 0 : index
    %c0_225 = arith.constant 0 : index
    %c0_226 = arith.constant 0 : index
    %211 = vector.load %arg11[%c1_222, %c1_223, %c0_224, %c0_225, %c0_226] : memref<2x2x8x8x32xf32, #tpu.memory_space<vmem>>, vector<1x1x7x7x32xf32>
    %212 = vector.shape_cast %211 : vector<1x1x7x7x32xf32> to vector<7x7x32xf32>
    %c1_227 = arith.constant 1 : index
    %c0_228 = arith.constant 0 : index
    %c0_229 = arith.constant 0 : index
    %c1_230 = arith.constant 1 : index
    %c0_231 = arith.constant 0 : index
    %213 = vector.load %arg11[%c1_227, %c0_228, %c0_229, %c1_230, %c0_231] : memref<2x2x8x8x32xf32, #tpu.memory_space<vmem>>, vector<1x1x7x7x32xf32>
    %214 = vector.shape_cast %213 : vector<1x1x7x7x32xf32> to vector<7x7x32xf32>
    %c1_232 = arith.constant 1 : index
    %c1_233 = arith.constant 1 : index
    %c0_234 = arith.constant 0 : index
    %c1_235 = arith.constant 1 : index
    %c0_236 = arith.constant 0 : index
    %215 = vector.load %arg11[%c1_232, %c1_233, %c0_234, %c1_235, %c0_236] : memref<2x2x8x8x32xf32, #tpu.memory_space<vmem>>, vector<1x1x7x7x32xf32>
    %216 = vector.shape_cast %215 : vector<1x1x7x7x32xf32> to vector<7x7x32xf32>
    %c0_237 = arith.constant 0 : index
    %c1_238 = arith.constant 1 : index
    %c1_239 = arith.constant 1 : index
    %c0_240 = arith.constant 0 : index
    %c0_241 = arith.constant 0 : index
    %217 = vector.load %arg11[%c0_237, %c1_238, %c1_239, %c0_240, %c0_241] : memref<2x2x8x8x32xf32, #tpu.memory_space<vmem>>, vector<1x1x7x7x32xf32>
    %218 = vector.shape_cast %217 : vector<1x1x7x7x32xf32> to vector<7x7x32xf32>
    %c0_242 = arith.constant 0 : index
    %c0_243 = arith.constant 0 : index
    %c1_244 = arith.constant 1 : index
    %c1_245 = arith.constant 1 : index
    %c0_246 = arith.constant 0 : index
    %219 = vector.load %arg11[%c0_242, %c0_243, %c1_244, %c1_245, %c0_246] : memref<2x2x8x8x32xf32, #tpu.memory_space<vmem>>, vector<1x1x7x7x32xf32>
    %220 = vector.shape_cast %219 : vector<1x1x7x7x32xf32> to vector<7x7x32xf32>
    %c0_247 = arith.constant 0 : index
    %c1_248 = arith.constant 1 : index
    %c1_249 = arith.constant 1 : index
    %c1_250 = arith.constant 1 : index
    %c0_251 = arith.constant 0 : index
    %221 = vector.load %arg11[%c0_247, %c1_248, %c1_249, %c1_250, %c0_251] : memref<2x2x8x8x32xf32, #tpu.memory_space<vmem>>, vector<1x1x7x7x32xf32>
    %222 = vector.shape_cast %221 : vector<1x1x7x7x32xf32> to vector<7x7x32xf32>
    %223 = tpu.concatenate %206, %208, %210, %212, %214, %216, %218, %220, %222 in 2 : vector<7x7x32xf32>, vector<7x7x32xf32>, vector<7x7x32xf32>, vector<7x7x32xf32>, vector<7x7x32xf32>, vector<7x7x32xf32>, vector<7x7x32xf32>, vector<7x7x32xf32>, vector<7x7x32xf32> -> vector<7x7x288xf32>
    %224 = vector.extract_strided_slice %223 {offsets = [0, 0, 0], sizes = [1, 7, 288], strides = [1, 1, 1]} : vector<7x7x288xf32> to vector<1x7x288xf32>
    %225 = vector.shape_cast %224 : vector<1x7x288xf32> to vector<7x288xf32>
    %c49 = arith.constant 49 : index
    %c0_252 = arith.constant 0 : index
    %226 = vector.load %arg12[%c49, %c0_252] : memref<196x288xf32, #tpu.memory_space<vmem>>, vector<7x288xf32>
    tpu.vector_store %arg12[%c49, %c0_252], %225 {strides = array<i32>} : memref<196x288xf32, #tpu.memory_space<vmem>>, vector<7x288xf32>,
    %227 = vector.extract_strided_slice %223 {offsets = [1, 0, 0], sizes = [1, 7, 288], strides = [1, 1, 1]} : vector<7x7x288xf32> to vector<1x7x288xf32>
    %228 = vector.shape_cast %227 : vector<1x7x288xf32> to vector<7x288xf32>
    %c56 = arith.constant 56 : index
    %c0_253 = arith.constant 0 : index
    %229 = vector.load %arg12[%c56, %c0_253] : memref<196x288xf32, #tpu.memory_space<vmem>>, vector<7x288xf32>
    tpu.vector_store %arg12[%c56, %c0_253], %228 {strides = array<i32>} : memref<196x288xf32, #tpu.memory_space<vmem>>, vector<7x288xf32>,
    %230 = vector.extract_strided_slice %223 {offsets = [2, 0, 0], sizes = [1, 7, 288], strides = [1, 1, 1]} : vector<7x7x288xf32> to vector<1x7x288xf32>
    %231 = vector.shape_cast %230 : vector<1x7x288xf32> to vector<7x288xf32>
    %c63 = arith.constant 63 : index
    %c0_254 = arith.constant 0 : index
    %232 = vector.load %arg12[%c63, %c0_254] : memref<196x288xf32, #tpu.memory_space<vmem>>, vector<7x288xf32>
    tpu.vector_store %arg12[%c63, %c0_254], %231 {strides = array<i32>} : memref<196x288xf32, #tpu.memory_space<vmem>>, vector<7x288xf32>,
    %233 = vector.extract_strided_slice %223 {offsets = [3, 0, 0], sizes = [1, 7, 288], strides = [1, 1, 1]} : vector<7x7x288xf32> to vector<1x7x288xf32>
    %234 = vector.shape_cast %233 : vector<1x7x288xf32> to vector<7x288xf32>
    %c70 = arith.constant 70 : index
    %c0_255 = arith.constant 0 : index
    %235 = vector.load %arg12[%c70, %c0_255] : memref<196x288xf32, #tpu.memory_space<vmem>>, vector<7x288xf32>
    tpu.vector_store %arg12[%c70, %c0_255], %234 {strides = array<i32>} : memref<196x288xf32, #tpu.memory_space<vmem>>, vector<7x288xf32>,
    %236 = vector.extract_strided_slice %223 {offsets = [4, 0, 0], sizes = [1, 7, 288], strides = [1, 1, 1]} : vector<7x7x288xf32> to vector<1x7x288xf32>
    %237 = vector.shape_cast %236 : vector<1x7x288xf32> to vector<7x288xf32>
    %c77 = arith.constant 77 : index
    %c0_256 = arith.constant 0 : index
    %238 = vector.load %arg12[%c77, %c0_256] : memref<196x288xf32, #tpu.memory_space<vmem>>, vector<7x288xf32>
    tpu.vector_store %arg12[%c77, %c0_256], %237 {strides = array<i32>} : memref<196x288xf32, #tpu.memory_space<vmem>>, vector<7x288xf32>,
    %239 = vector.extract_strided_slice %223 {offsets = [5, 0, 0], sizes = [1, 7, 288], strides = [1, 1, 1]} : vector<7x7x288xf32> to vector<1x7x288xf32>
    %240 = vector.shape_cast %239 : vector<1x7x288xf32> to vector<7x288xf32>
    %c84 = arith.constant 84 : index
    %c0_257 = arith.constant 0 : index
    %241 = vector.load %arg12[%c84, %c0_257] : memref<196x288xf32, #tpu.memory_space<vmem>>, vector<7x288xf32>
    tpu.vector_store %arg12[%c84, %c0_257], %240 {strides = array<i32>} : memref<196x288xf32, #tpu.memory_space<vmem>>, vector<7x288xf32>,
    %242 = vector.extract_strided_slice %223 {offsets = [6, 0, 0], sizes = [1, 7, 288], strides = [1, 1, 1]} : vector<7x7x288xf32> to vector<1x7x288xf32>
    %243 = vector.shape_cast %242 : vector<1x7x288xf32> to vector<7x288xf32>
    %c91 = arith.constant 91 : index
    %c0_258 = arith.constant 0 : index
    %244 = vector.load %arg12[%c91, %c0_258] : memref<196x288xf32, #tpu.memory_space<vmem>>, vector<7x288xf32>
    tpu.vector_store %arg12[%c91, %c0_258], %243 {strides = array<i32>} : memref<196x288xf32, #tpu.memory_space<vmem>>, vector<7x288xf32>,
    %c1_259 = arith.constant 1 : index
    %c0_260 = arith.constant 0 : index
    %c0_261 = arith.constant 0 : index
    %c0_262 = arith.constant 0 : index
    %c0_263 = arith.constant 0 : index
    %245 = vector.load %arg11[%c1_259, %c0_260, %c0_261, %c0_262, %c0_263] : memref<2x2x8x8x32xf32, #tpu.memory_space<vmem>>, vector<1x1x7x7x32xf32>
    %246 = vector.shape_cast %245 : vector<1x1x7x7x32xf32> to vector<7x7x32xf32>
    %c1_264 = arith.constant 1 : index
    %c1_265 = arith.constant 1 : index
    %c0_266 = arith.constant 0 : index
    %c0_267 = arith.constant 0 : index
    %c0_268 = arith.constant 0 : index
    %247 = vector.load %arg11[%c1_264, %c1_265, %c0_266, %c0_267, %c0_268] : memref<2x2x8x8x32xf32, #tpu.memory_space<vmem>>, vector<1x1x7x7x32xf32>
    %248 = vector.shape_cast %247 : vector<1x1x7x7x32xf32> to vector<7x7x32xf32>
    %c1_269 = arith.constant 1 : index
    %c0_270 = arith.constant 0 : index
    %c0_271 = arith.constant 0 : index
    %c1_272 = arith.constant 1 : index
    %c0_273 = arith.constant 0 : index
    %249 = vector.load %arg11[%c1_269, %c0_270, %c0_271, %c1_272, %c0_273] : memref<2x2x8x8x32xf32, #tpu.memory_space<vmem>>, vector<1x1x7x7x32xf32>
    %250 = vector.shape_cast %249 : vector<1x1x7x7x32xf32> to vector<7x7x32xf32>
    %c0_274 = arith.constant 0 : index
    %c0_275 = arith.constant 0 : index
    %c1_276 = arith.constant 1 : index
    %c0_277 = arith.constant 0 : index
    %c0_278 = arith.constant 0 : index
    %251 = vector.load %arg11[%c0_274, %c0_275, %c1_276, %c0_277, %c0_278] : memref<2x2x8x8x32xf32, #tpu.memory_space<vmem>>, vector<1x1x7x7x32xf32>
    %252 = vector.shape_cast %251 : vector<1x1x7x7x32xf32> to vector<7x7x32xf32>
    %c0_279 = arith.constant 0 : index
    %c1_280 = arith.constant 1 : index
    %c1_281 = arith.constant 1 : index
    %c0_282 = arith.constant 0 : index
    %c0_283 = arith.constant 0 : index
    %253 = vector.load %arg11[%c0_279, %c1_280, %c1_281, %c0_282, %c0_283] : memref<2x2x8x8x32xf32, #tpu.memory_space<vmem>>, vector<1x1x7x7x32xf32>
    %254 = vector.shape_cast %253 : vector<1x1x7x7x32xf32> to vector<7x7x32xf32>
    %c0_284 = arith.constant 0 : index
    %c0_285 = arith.constant 0 : index
    %c1_286 = arith.constant 1 : index
    %c1_287 = arith.constant 1 : index
    %c0_288 = arith.constant 0 : index
    %255 = vector.load %arg11[%c0_284, %c0_285, %c1_286, %c1_287, %c0_288] : memref<2x2x8x8x32xf32, #tpu.memory_space<vmem>>, vector<1x1x7x7x32xf32>
    %256 = vector.shape_cast %255 : vector<1x1x7x7x32xf32> to vector<7x7x32xf32>
    %c1_289 = arith.constant 1 : index
    %c0_290 = arith.constant 0 : index
    %c1_291 = arith.constant 1 : index
    %c0_292 = arith.constant 0 : index
    %c0_293 = arith.constant 0 : index
    %257 = vector.load %arg11[%c1_289, %c0_290, %c1_291, %c0_292, %c0_293] : memref<2x2x8x8x32xf32, #tpu.memory_space<vmem>>, vector<1x1x7x7x32xf32>
    %258 = vector.shape_cast %257 : vector<1x1x7x7x32xf32> to vector<7x7x32xf32>
    %c1_294 = arith.constant 1 : index
    %c1_295 = arith.constant 1 : index
    %c1_296 = arith.constant 1 : index
    %c0_297 = arith.constant 0 : index
    %c0_298 = arith.constant 0 : index
    %259 = vector.load %arg11[%c1_294, %c1_295, %c1_296, %c0_297, %c0_298] : memref<2x2x8x8x32xf32, #tpu.memory_space<vmem>>, vector<1x1x7x7x32xf32>
    %260 = vector.shape_cast %259 : vector<1x1x7x7x32xf32> to vector<7x7x32xf32>
    %c1_299 = arith.constant 1 : index
    %c0_300 = arith.constant 0 : index
    %c1_301 = arith.constant 1 : index
    %c1_302 = arith.constant 1 : index
    %c0_303 = arith.constant 0 : index
    %261 = vector.load %arg11[%c1_299, %c0_300, %c1_301, %c1_302, %c0_303] : memref<2x2x8x8x32xf32, #tpu.memory_space<vmem>>, vector<1x1x7x7x32xf32>
    %262 = vector.shape_cast %261 : vector<1x1x7x7x32xf32> to vector<7x7x32xf32>
    %263 = tpu.concatenate %246, %248, %250, %252, %254, %256, %258, %260, %262 in 2 : vector<7x7x32xf32>, vector<7x7x32xf32>, vector<7x7x32xf32>, vector<7x7x32xf32>, vector<7x7x32xf32>, vector<7x7x32xf32>, vector<7x7x32xf32>, vector<7x7x32xf32>, vector<7x7x32xf32> -> vector<7x7x288xf32>
    %264 = vector.extract_strided_slice %263 {offsets = [0, 0, 0], sizes = [1, 7, 288], strides = [1, 1, 1]} : vector<7x7x288xf32> to vector<1x7x288xf32>
    %265 = vector.shape_cast %264 : vector<1x7x288xf32> to vector<7x288xf32>
    %c98 = arith.constant 98 : index
    %c0_304 = arith.constant 0 : index
    %266 = vector.load %arg12[%c98, %c0_304] : memref<196x288xf32, #tpu.memory_space<vmem>>, vector<7x288xf32>
    tpu.vector_store %arg12[%c98, %c0_304], %265 {strides = array<i32>} : memref<196x288xf32, #tpu.memory_space<vmem>>, vector<7x288xf32>,
    %267 = vector.extract_strided_slice %263 {offsets = [1, 0, 0], sizes = [1, 7, 288], strides = [1, 1, 1]} : vector<7x7x288xf32> to vector<1x7x288xf32>
    %268 = vector.shape_cast %267 : vector<1x7x288xf32> to vector<7x288xf32>
    %c105 = arith.constant 105 : index
    %c0_305 = arith.constant 0 : index
    %269 = vector.load %arg12[%c105, %c0_305] : memref<196x288xf32, #tpu.memory_space<vmem>>, vector<7x288xf32>
    tpu.vector_store %arg12[%c105, %c0_305], %268 {strides = array<i32>} : memref<196x288xf32, #tpu.memory_space<vmem>>, vector<7x288xf32>,
    %270 = vector.extract_strided_slice %263 {offsets = [2, 0, 0], sizes = [1, 7, 288], strides = [1, 1, 1]} : vector<7x7x288xf32> to vector<1x7x288xf32>
    %271 = vector.shape_cast %270 : vector<1x7x288xf32> to vector<7x288xf32>
    %c112 = arith.constant 112 : index
    %c0_306 = arith.constant 0 : index
    %272 = vector.load %arg12[%c112, %c0_306] : memref<196x288xf32, #tpu.memory_space<vmem>>, vector<7x288xf32>
    tpu.vector_store %arg12[%c112, %c0_306], %271 {strides = array<i32>} : memref<196x288xf32, #tpu.memory_space<vmem>>, vector<7x288xf32>,
    %273 = vector.extract_strided_slice %263 {offsets = [3, 0, 0], sizes = [1, 7, 288], strides = [1, 1, 1]} : vector<7x7x288xf32> to vector<1x7x288xf32>
    %274 = vector.shape_cast %273 : vector<1x7x288xf32> to vector<7x288xf32>
    %c119 = arith.constant 119 : index
    %c0_307 = arith.constant 0 : index
    %275 = vector.load %arg12[%c119, %c0_307] : memref<196x288xf32, #tpu.memory_space<vmem>>, vector<7x288xf32>
    tpu.vector_store %arg12[%c119, %c0_307], %274 {strides = array<i32>} : memref<196x288xf32, #tpu.memory_space<vmem>>, vector<7x288xf32>,
    %276 = vector.extract_strided_slice %263 {offsets = [4, 0, 0], sizes = [1, 7, 288], strides = [1, 1, 1]} : vector<7x7x288xf32> to vector<1x7x288xf32>
    %277 = vector.shape_cast %276 : vector<1x7x288xf32> to vector<7x288xf32>
    %c126 = arith.constant 126 : index
    %c0_308 = arith.constant 0 : index
    %278 = vector.load %arg12[%c126, %c0_308] : memref<196x288xf32, #tpu.memory_space<vmem>>, vector<7x288xf32>
    tpu.vector_store %arg12[%c126, %c0_308], %277 {strides = array<i32>} : memref<196x288xf32, #tpu.memory_space<vmem>>, vector<7x288xf32>,
    %279 = vector.extract_strided_slice %263 {offsets = [5, 0, 0], sizes = [1, 7, 288], strides = [1, 1, 1]} : vector<7x7x288xf32> to vector<1x7x288xf32>
    %280 = vector.shape_cast %279 : vector<1x7x288xf32> to vector<7x288xf32>
    %c133 = arith.constant 133 : index
    %c0_309 = arith.constant 0 : index
    %281 = vector.load %arg12[%c133, %c0_309] : memref<196x288xf32, #tpu.memory_space<vmem>>, vector<7x288xf32>
    tpu.vector_store %arg12[%c133, %c0_309], %280 {strides = array<i32>} : memref<196x288xf32, #tpu.memory_space<vmem>>, vector<7x288xf32>,
    %282 = vector.extract_strided_slice %263 {offsets = [6, 0, 0], sizes = [1, 7, 288], strides = [1, 1, 1]} : vector<7x7x288xf32> to vector<1x7x288xf32>
    %283 = vector.shape_cast %282 : vector<1x7x288xf32> to vector<7x288xf32>
    %c140 = arith.constant 140 : index
    %c0_310 = arith.constant 0 : index
    %284 = vector.load %arg12[%c140, %c0_310] : memref<196x288xf32, #tpu.memory_space<vmem>>, vector<7x288xf32>
    tpu.vector_store %arg12[%c140, %c0_310], %283 {strides = array<i32>} : memref<196x288xf32, #tpu.memory_space<vmem>>, vector<7x288xf32>,
    %c1_311 = arith.constant 1 : index
    %c1_312 = arith.constant 1 : index
    %c0_313 = arith.constant 0 : index
    %c0_314 = arith.constant 0 : index
    %c0_315 = arith.constant 0 : index
    %285 = vector.load %arg11[%c1_311, %c1_312, %c0_313, %c0_314, %c0_315] : memref<2x2x8x8x32xf32, #tpu.memory_space<vmem>>, vector<1x1x7x7x32xf32>
    %286 = vector.shape_cast %285 : vector<1x1x7x7x32xf32> to vector<7x7x32xf32>
    %c1_316 = arith.constant 1 : index
    %c0_317 = arith.constant 0 : index
    %c0_318 = arith.constant 0 : index
    %c1_319 = arith.constant 1 : index
    %c0_320 = arith.constant 0 : index
    %287 = vector.load %arg11[%c1_316, %c0_317, %c0_318, %c1_319, %c0_320] : memref<2x2x8x8x32xf32, #tpu.memory_space<vmem>>, vector<1x1x7x7x32xf32>
    %288 = vector.shape_cast %287 : vector<1x1x7x7x32xf32> to vector<7x7x32xf32>
    %c1_321 = arith.constant 1 : index
    %c1_322 = arith.constant 1 : index
    %c0_323 = arith.constant 0 : index
    %c1_324 = arith.constant 1 : index
    %c0_325 = arith.constant 0 : index
    %289 = vector.load %arg11[%c1_321, %c1_322, %c0_323, %c1_324, %c0_325] : memref<2x2x8x8x32xf32, #tpu.memory_space<vmem>>, vector<1x1x7x7x32xf32>
    %290 = vector.shape_cast %289 : vector<1x1x7x7x32xf32> to vector<7x7x32xf32>
    %c0_326 = arith.constant 0 : index
    %c1_327 = arith.constant 1 : index
    %c1_328 = arith.constant 1 : index
    %c0_329 = arith.constant 0 : index
    %c0_330 = arith.constant 0 : index
    %291 = vector.load %arg11[%c0_326, %c1_327, %c1_328, %c0_329, %c0_330] : memref<2x2x8x8x32xf32, #tpu.memory_space<vmem>>, vector<1x1x7x7x32xf32>
    %292 = vector.shape_cast %291 : vector<1x1x7x7x32xf32> to vector<7x7x32xf32>
    %c0_331 = arith.constant 0 : index
    %c0_332 = arith.constant 0 : index
    %c1_333 = arith.constant 1 : index
    %c1_334 = arith.constant 1 : index
    %c0_335 = arith.constant 0 : index
    %293 = vector.load %arg11[%c0_331, %c0_332, %c1_333, %c1_334, %c0_335] : memref<2x2x8x8x32xf32, #tpu.memory_space<vmem>>, vector<1x1x7x7x32xf32>
    %294 = vector.shape_cast %293 : vector<1x1x7x7x32xf32> to vector<7x7x32xf32>
    %c0_336 = arith.constant 0 : index
    %c1_337 = arith.constant 1 : index
    %c1_338 = arith.constant 1 : index
    %c1_339 = arith.constant 1 : index
    %c0_340 = arith.constant 0 : index
    %295 = vector.load %arg11[%c0_336, %c1_337, %c1_338, %c1_339, %c0_340] : memref<2x2x8x8x32xf32, #tpu.memory_space<vmem>>, vector<1x1x7x7x32xf32>
    %296 = vector.shape_cast %295 : vector<1x1x7x7x32xf32> to vector<7x7x32xf32>
    %c1_341 = arith.constant 1 : index
    %c1_342 = arith.constant 1 : index
    %c1_343 = arith.constant 1 : index
    %c0_344 = arith.constant 0 : index
    %c0_345 = arith.constant 0 : index
    %297 = vector.load %arg11[%c1_341, %c1_342, %c1_343, %c0_344, %c0_345] : memref<2x2x8x8x32xf32, #tpu.memory_space<vmem>>, vector<1x1x7x7x32xf32>
    %298 = vector.shape_cast %297 : vector<1x1x7x7x32xf32> to vector<7x7x32xf32>
    %c1_346 = arith.constant 1 : index
    %c0_347 = arith.constant 0 : index
    %c1_348 = arith.constant 1 : index
    %c1_349 = arith.constant 1 : index
    %c0_350 = arith.constant 0 : index
    %299 = vector.load %arg11[%c1_346, %c0_347, %c1_348, %c1_349, %c0_350] : memref<2x2x8x8x32xf32, #tpu.memory_space<vmem>>, vector<1x1x7x7x32xf32>
    %300 = vector.shape_cast %299 : vector<1x1x7x7x32xf32> to vector<7x7x32xf32>
    %c1_351 = arith.constant 1 : index
    %c1_352 = arith.constant 1 : index
    %c1_353 = arith.constant 1 : index
    %c1_354 = arith.constant 1 : index
    %c0_355 = arith.constant 0 : index
    %301 = vector.load %arg11[%c1_351, %c1_352, %c1_353, %c1_354, %c0_355] : memref<2x2x8x8x32xf32, #tpu.memory_space<vmem>>, vector<1x1x7x7x32xf32>
    %302 = vector.shape_cast %301 : vector<1x1x7x7x32xf32> to vector<7x7x32xf32>
    %303 = tpu.concatenate %286, %288, %290, %292, %294, %296, %298, %300, %302 in 2 : vector<7x7x32xf32>, vector<7x7x32xf32>, vector<7x7x32xf32>, vector<7x7x32xf32>, vector<7x7x32xf32>, vector<7x7x32xf32>, vector<7x7x32xf32>, vector<7x7x32xf32>, vector<7x7x32xf32> -> vector<7x7x288xf32>
    %304 = vector.extract_strided_slice %303 {offsets = [0, 0, 0], sizes = [1, 7, 288], strides = [1, 1, 1]} : vector<7x7x288xf32> to vector<1x7x288xf32>
    %305 = vector.shape_cast %304 : vector<1x7x288xf32> to vector<7x288xf32>
    %c147 = arith.constant 147 : index
    %c0_356 = arith.constant 0 : index
    %306 = vector.load %arg12[%c147, %c0_356] : memref<196x288xf32, #tpu.memory_space<vmem>>, vector<7x288xf32>
    tpu.vector_store %arg12[%c147, %c0_356], %305 {strides = array<i32>} : memref<196x288xf32, #tpu.memory_space<vmem>>, vector<7x288xf32>,
    %307 = vector.extract_strided_slice %303 {offsets = [1, 0, 0], sizes = [1, 7, 288], strides = [1, 1, 1]} : vector<7x7x288xf32> to vector<1x7x288xf32>
    %308 = vector.shape_cast %307 : vector<1x7x288xf32> to vector<7x288xf32>
    %c154 = arith.constant 154 : index
    %c0_357 = arith.constant 0 : index
    %309 = vector.load %arg12[%c154, %c0_357] : memref<196x288xf32, #tpu.memory_space<vmem>>, vector<7x288xf32>
    tpu.vector_store %arg12[%c154, %c0_357], %308 {strides = array<i32>} : memref<196x288xf32, #tpu.memory_space<vmem>>, vector<7x288xf32>,
    %310 = vector.extract_strided_slice %303 {offsets = [2, 0, 0], sizes = [1, 7, 288], strides = [1, 1, 1]} : vector<7x7x288xf32> to vector<1x7x288xf32>
    %311 = vector.shape_cast %310 : vector<1x7x288xf32> to vector<7x288xf32>
    %c161 = arith.constant 161 : index
    %c0_358 = arith.constant 0 : index
    %312 = vector.load %arg12[%c161, %c0_358] : memref<196x288xf32, #tpu.memory_space<vmem>>, vector<7x288xf32>
    tpu.vector_store %arg12[%c161, %c0_358], %311 {strides = array<i32>} : memref<196x288xf32, #tpu.memory_space<vmem>>, vector<7x288xf32>,
    %313 = vector.extract_strided_slice %303 {offsets = [3, 0, 0], sizes = [1, 7, 288], strides = [1, 1, 1]} : vector<7x7x288xf32> to vector<1x7x288xf32>
    %314 = vector.shape_cast %313 : vector<1x7x288xf32> to vector<7x288xf32>
    %c168 = arith.constant 168 : index
    %c0_359 = arith.constant 0 : index
    %315 = vector.load %arg12[%c168, %c0_359] : memref<196x288xf32, #tpu.memory_space<vmem>>, vector<7x288xf32>
    tpu.vector_store %arg12[%c168, %c0_359], %314 {strides = array<i32>} : memref<196x288xf32, #tpu.memory_space<vmem>>, vector<7x288xf32>,
    %316 = vector.extract_strided_slice %303 {offsets = [4, 0, 0], sizes = [1, 7, 288], strides = [1, 1, 1]} : vector<7x7x288xf32> to vector<1x7x288xf32>
    %317 = vector.shape_cast %316 : vector<1x7x288xf32> to vector<7x288xf32>
    %c175 = arith.constant 175 : index
    %c0_360 = arith.constant 0 : index
    %318 = vector.load %arg12[%c175, %c0_360] : memref<196x288xf32, #tpu.memory_space<vmem>>, vector<7x288xf32>
    tpu.vector_store %arg12[%c175, %c0_360], %317 {strides = array<i32>} : memref<196x288xf32, #tpu.memory_space<vmem>>, vector<7x288xf32>,
    %319 = vector.extract_strided_slice %303 {offsets = [5, 0, 0], sizes = [1, 7, 288], strides = [1, 1, 1]} : vector<7x7x288xf32> to vector<1x7x288xf32>
    %320 = vector.shape_cast %319 : vector<1x7x288xf32> to vector<7x288xf32>
    %c182 = arith.constant 182 : index
    %c0_361 = arith.constant 0 : index
    %321 = vector.load %arg12[%c182, %c0_361] : memref<196x288xf32, #tpu.memory_space<vmem>>, vector<7x288xf32>
    tpu.vector_store %arg12[%c182, %c0_361], %320 {strides = array<i32>} : memref<196x288xf32, #tpu.memory_space<vmem>>, vector<7x288xf32>,
    %322 = vector.extract_strided_slice %303 {offsets = [6, 0, 0], sizes = [1, 7, 288], strides = [1, 1, 1]} : vector<7x7x288xf32> to vector<1x7x288xf32>
    %323 = vector.shape_cast %322 : vector<1x7x288xf32> to vector<7x288xf32>
    %c189 = arith.constant 189 : index
    %c0_362 = arith.constant 0 : index
    %324 = vector.load %arg12[%c189, %c0_362] : memref<196x288xf32, #tpu.memory_space<vmem>>, vector<7x288xf32>
    tpu.vector_store %arg12[%c189, %c0_362], %323 {strides = array<i32>} : memref<196x288xf32, #tpu.memory_space<vmem>>, vector<7x288xf32>,
    %c0_363 = arith.constant 0 : index
    %c0_364 = arith.constant 0 : index
    %325 = vector.load %arg12[%c0_363, %c0_364] : memref<196x288xf32, #tpu.memory_space<vmem>>, vector<196x288xf32>
    %326 = arith.truncf %325 : vector<196x288xf32> to vector<196x288xbf16>
    %cst_365 = arith.constant dense<0.000000e+00> : vector<196x64xf32>
    %327 = tpu.matmul %326, %2, %cst_365 {dimension_numbers = #tpu.dot_dimension_numbers<[1], [0], [0], [1], [0, 0, 1, 1], [], []>} : vector<196x288xbf16>, vector<288x64xbf16>, vector<196x64xf32> -> vector<196x64xf32>
    %328 = vector.extract_strided_slice %327 {offsets = [0, 0], sizes = [49, 64], strides = [1, 1]} : vector<196x64xf32> to vector<49x64xf32>
    %329 = vector.extract_strided_slice %327 {offsets = [49, 0], sizes = [49, 64], strides = [1, 1]} : vector<196x64xf32> to vector<49x64xf32>
    %330 = arith.maximumf %328, %329 : vector<49x64xf32>
    %331 = vector.extract_strided_slice %327 {offsets = [98, 0], sizes = [49, 64], strides = [1, 1]} : vector<196x64xf32> to vector<49x64xf32>
    %332 = vector.extract_strided_slice %327 {offsets = [147, 0], sizes = [49, 64], strides = [1, 1]} : vector<196x64xf32> to vector<49x64xf32>
    %333 = arith.maximumf %331, %332 : vector<49x64xf32>
    %334 = arith.maximumf %330, %333 : vector<49x64xf32>
    %335 = vector.broadcast %3 : vector<1x64xf32> to vector<49x64xf32>
    %336 = arith.addf %334, %335 : vector<49x64xf32>
    %cst_366 = arith.constant 0.000000e+00 : f32
    %337 = vector.broadcast %cst_366 : f32 to vector<49x64xf32>
    %338 = arith.maximumf %336, %337 : vector<49x64xf32>
    %339 = vector.extract_strided_slice %338 {offsets = [0, 0], sizes = [1, 64], strides = [1, 1]} : vector<49x64xf32> to vector<1x64xf32>
    %340 = vector.shape_cast %339 : vector<1x64xf32> to vector<64xf32>
    %c0_367 = arith.constant 0 : index
    %c0_368 = arith.constant 0 : index
    %341 = vector.load %arg13[%c0_367, %c0_368] : memref<1x3136xf32, #tpu.memory_space<vmem>>, vector<1x64xf32>
    %342 = vector.shape_cast %341 : vector<1x64xf32> to vector<64xf32>
    %343 = vector.shape_cast %340 : vector<64xf32> to vector<1x64xf32>
    tpu.vector_store %arg13[%c0_367, %c0_368], %343 {strides = array<i32>} : memref<1x3136xf32, #tpu.memory_space<vmem>>, vector<1x64xf32>,
    %344 = vector.extract_strided_slice %338 {offsets = [1, 0], sizes = [1, 64], strides = [1, 1]} : vector<49x64xf32> to vector<1x64xf32>
    %345 = vector.shape_cast %344 : vector<1x64xf32> to vector<64xf32>
    %c0_369 = arith.constant 0 : index
    %c64 = arith.constant 64 : index
    %346 = vector.load %arg13[%c0_369, %c64] : memref<1x3136xf32, #tpu.memory_space<vmem>>, vector<1x64xf32>
    %347 = vector.shape_cast %346 : vector<1x64xf32> to vector<64xf32>
    %348 = vector.shape_cast %345 : vector<64xf32> to vector<1x64xf32>
    tpu.vector_store %arg13[%c0_369, %c64], %348 {strides = array<i32>} : memref<1x3136xf32, #tpu.memory_space<vmem>>, vector<1x64xf32>,
    %349 = vector.extract_strided_slice %338 {offsets = [2, 0], sizes = [1, 64], strides = [1, 1]} : vector<49x64xf32> to vector<1x64xf32>
    %350 = vector.shape_cast %349 : vector<1x64xf32> to vector<64xf32>
    %c0_370 = arith.constant 0 : index
    %c128 = arith.constant 128 : index
    %351 = vector.load %arg13[%c0_370, %c128] : memref<1x3136xf32, #tpu.memory_space<vmem>>, vector<1x64xf32>
    %352 = vector.shape_cast %351 : vector<1x64xf32> to vector<64xf32>
    %353 = vector.shape_cast %350 : vector<64xf32> to vector<1x64xf32>
    tpu.vector_store %arg13[%c0_370, %c128], %353 {strides = array<i32>} : memref<1x3136xf32, #tpu.memory_space<vmem>>, vector<1x64xf32>,
    %354 = vector.extract_strided_slice %338 {offsets = [3, 0], sizes = [1, 64], strides = [1, 1]} : vector<49x64xf32> to vector<1x64xf32>
    %355 = vector.shape_cast %354 : vector<1x64xf32> to vector<64xf32>
    %c0_371 = arith.constant 0 : index
    %c192 = arith.constant 192 : index
    %356 = vector.load %arg13[%c0_371, %c192] : memref<1x3136xf32, #tpu.memory_space<vmem>>, vector<1x64xf32>
    %357 = vector.shape_cast %356 : vector<1x64xf32> to vector<64xf32>
    %358 = vector.shape_cast %355 : vector<64xf32> to vector<1x64xf32>
    tpu.vector_store %arg13[%c0_371, %c192], %358 {strides = array<i32>} : memref<1x3136xf32, #tpu.memory_space<vmem>>, vector<1x64xf32>,
    %359 = vector.extract_strided_slice %338 {offsets = [4, 0], sizes = [1, 64], strides = [1, 1]} : vector<49x64xf32> to vector<1x64xf32>
    %360 = vector.shape_cast %359 : vector<1x64xf32> to vector<64xf32>
    %c0_372 = arith.constant 0 : index
    %c256 = arith.constant 256 : index
    %361 = vector.load %arg13[%c0_372, %c256] : memref<1x3136xf32, #tpu.memory_space<vmem>>, vector<1x64xf32>
    %362 = vector.shape_cast %361 : vector<1x64xf32> to vector<64xf32>
    %363 = vector.shape_cast %360 : vector<64xf32> to vector<1x64xf32>
    tpu.vector_store %arg13[%c0_372, %c256], %363 {strides = array<i32>} : memref<1x3136xf32, #tpu.memory_space<vmem>>, vector<1x64xf32>,
    %364 = vector.extract_strided_slice %338 {offsets = [5, 0], sizes = [1, 64], strides = [1, 1]} : vector<49x64xf32> to vector<1x64xf32>
    %365 = vector.shape_cast %364 : vector<1x64xf32> to vector<64xf32>
    %c0_373 = arith.constant 0 : index
    %c320 = arith.constant 320 : index
    %366 = vector.load %arg13[%c0_373, %c320] : memref<1x3136xf32, #tpu.memory_space<vmem>>, vector<1x64xf32>
    %367 = vector.shape_cast %366 : vector<1x64xf32> to vector<64xf32>
    %368 = vector.shape_cast %365 : vector<64xf32> to vector<1x64xf32>
    tpu.vector_store %arg13[%c0_373, %c320], %368 {strides = array<i32>} : memref<1x3136xf32, #tpu.memory_space<vmem>>, vector<1x64xf32>,
    %369 = vector.extract_strided_slice %338 {offsets = [6, 0], sizes = [1, 64], strides = [1, 1]} : vector<49x64xf32> to vector<1x64xf32>
    %370 = vector.shape_cast %369 : vector<1x64xf32> to vector<64xf32>
    %c0_374 = arith.constant 0 : index
    %c384 = arith.constant 384 : index
    %371 = vector.load %arg13[%c0_374, %c384] : memref<1x3136xf32, #tpu.memory_space<vmem>>, vector<1x64xf32>
    %372 = vector.shape_cast %371 : vector<1x64xf32> to vector<64xf32>
    %373 = vector.shape_cast %370 : vector<64xf32> to vector<1x64xf32>
    tpu.vector_store %arg13[%c0_374, %c384], %373 {strides = array<i32>} : memref<1x3136xf32, #tpu.memory_space<vmem>>, vector<1x64xf32>,
    %374 = vector.extract_strided_slice %338 {offsets = [7, 0], sizes = [1, 64], strides = [1, 1]} : vector<49x64xf32> to vector<1x64xf32>
    %375 = vector.shape_cast %374 : vector<1x64xf32> to vector<64xf32>
    %c0_375 = arith.constant 0 : index
    %c448 = arith.constant 448 : index
    %376 = vector.load %arg13[%c0_375, %c448] : memref<1x3136xf32, #tpu.memory_space<vmem>>, vector<1x64xf32>
    %377 = vector.shape_cast %376 : vector<1x64xf32> to vector<64xf32>
    %378 = vector.shape_cast %375 : vector<64xf32> to vector<1x64xf32>
    tpu.vector_store %arg13[%c0_375, %c448], %378 {strides = array<i32>} : memref<1x3136xf32, #tpu.memory_space<vmem>>, vector<1x64xf32>,
    %379 = vector.extract_strided_slice %338 {offsets = [8, 0], sizes = [1, 64], strides = [1, 1]} : vector<49x64xf32> to vector<1x64xf32>
    %380 = vector.shape_cast %379 : vector<1x64xf32> to vector<64xf32>
    %c0_376 = arith.constant 0 : index
    %c512 = arith.constant 512 : index
    %381 = vector.load %arg13[%c0_376, %c512] : memref<1x3136xf32, #tpu.memory_space<vmem>>, vector<1x64xf32>
    %382 = vector.shape_cast %381 : vector<1x64xf32> to vector<64xf32>
    %383 = vector.shape_cast %380 : vector<64xf32> to vector<1x64xf32>
    tpu.vector_store %arg13[%c0_376, %c512], %383 {strides = array<i32>} : memref<1x3136xf32, #tpu.memory_space<vmem>>, vector<1x64xf32>,
    %384 = vector.extract_strided_slice %338 {offsets = [9, 0], sizes = [1, 64], strides = [1, 1]} : vector<49x64xf32> to vector<1x64xf32>
    %385 = vector.shape_cast %384 : vector<1x64xf32> to vector<64xf32>
    %c0_377 = arith.constant 0 : index
    %c576 = arith.constant 576 : index
    %386 = vector.load %arg13[%c0_377, %c576] : memref<1x3136xf32, #tpu.memory_space<vmem>>, vector<1x64xf32>
    %387 = vector.shape_cast %386 : vector<1x64xf32> to vector<64xf32>
    %388 = vector.shape_cast %385 : vector<64xf32> to vector<1x64xf32>
    tpu.vector_store %arg13[%c0_377, %c576], %388 {strides = array<i32>} : memref<1x3136xf32, #tpu.memory_space<vmem>>, vector<1x64xf32>,
    %389 = vector.extract_strided_slice %338 {offsets = [10, 0], sizes = [1, 64], strides = [1, 1]} : vector<49x64xf32> to vector<1x64xf32>
    %390 = vector.shape_cast %389 : vector<1x64xf32> to vector<64xf32>
    %c0_378 = arith.constant 0 : index
    %c640 = arith.constant 640 : index
    %391 = vector.load %arg13[%c0_378, %c640] : memref<1x3136xf32, #tpu.memory_space<vmem>>, vector<1x64xf32>
    %392 = vector.shape_cast %391 : vector<1x64xf32> to vector<64xf32>
    %393 = vector.shape_cast %390 : vector<64xf32> to vector<1x64xf32>
    tpu.vector_store %arg13[%c0_378, %c640], %393 {strides = array<i32>} : memref<1x3136xf32, #tpu.memory_space<vmem>>, vector<1x64xf32>,
    %394 = vector.extract_strided_slice %338 {offsets = [11, 0], sizes = [1, 64], strides = [1, 1]} : vector<49x64xf32> to vector<1x64xf32>
    %395 = vector.shape_cast %394 : vector<1x64xf32> to vector<64xf32>
    %c0_379 = arith.constant 0 : index
    %c704 = arith.constant 704 : index
    %396 = vector.load %arg13[%c0_379, %c704] : memref<1x3136xf32, #tpu.memory_space<vmem>>, vector<1x64xf32>
    %397 = vector.shape_cast %396 : vector<1x64xf32> to vector<64xf32>
    %398 = vector.shape_cast %395 : vector<64xf32> to vector<1x64xf32>
    tpu.vector_store %arg13[%c0_379, %c704], %398 {strides = array<i32>} : memref<1x3136xf32, #tpu.memory_space<vmem>>, vector<1x64xf32>,
    %399 = vector.extract_strided_slice %338 {offsets = [12, 0], sizes = [1, 64], strides = [1, 1]} : vector<49x64xf32> to vector<1x64xf32>
    %400 = vector.shape_cast %399 : vector<1x64xf32> to vector<64xf32>
    %c0_380 = arith.constant 0 : index
    %c768 = arith.constant 768 : index
    %401 = vector.load %arg13[%c0_380, %c768] : memref<1x3136xf32, #tpu.memory_space<vmem>>, vector<1x64xf32>
    %402 = vector.shape_cast %401 : vector<1x64xf32> to vector<64xf32>
    %403 = vector.shape_cast %400 : vector<64xf32> to vector<1x64xf32>
    tpu.vector_store %arg13[%c0_380, %c768], %403 {strides = array<i32>} : memref<1x3136xf32, #tpu.memory_space<vmem>>, vector<1x64xf32>,
    %404 = vector.extract_strided_slice %338 {offsets = [13, 0], sizes = [1, 64], strides = [1, 1]} : vector<49x64xf32> to vector<1x64xf32>
    %405 = vector.shape_cast %404 : vector<1x64xf32> to vector<64xf32>
    %c0_381 = arith.constant 0 : index
    %c832 = arith.constant 832 : index
    %406 = vector.load %arg13[%c0_381, %c832] : memref<1x3136xf32, #tpu.memory_space<vmem>>, vector<1x64xf32>
    %407 = vector.shape_cast %406 : vector<1x64xf32> to vector<64xf32>
    %408 = vector.shape_cast %405 : vector<64xf32> to vector<1x64xf32>
    tpu.vector_store %arg13[%c0_381, %c832], %408 {strides = array<i32>} : memref<1x3136xf32, #tpu.memory_space<vmem>>, vector<1x64xf32>,
    %409 = vector.extract_strided_slice %338 {offsets = [14, 0], sizes = [1, 64], strides = [1, 1]} : vector<49x64xf32> to vector<1x64xf32>
    %410 = vector.shape_cast %409 : vector<1x64xf32> to vector<64xf32>
    %c0_382 = arith.constant 0 : index
    %c896 = arith.constant 896 : index
    %411 = vector.load %arg13[%c0_382, %c896] : memref<1x3136xf32, #tpu.memory_space<vmem>>, vector<1x64xf32>
    %412 = vector.shape_cast %411 : vector<1x64xf32> to vector<64xf32>
    %413 = vector.shape_cast %410 : vector<64xf32> to vector<1x64xf32>
    tpu.vector_store %arg13[%c0_382, %c896], %413 {strides = array<i32>} : memref<1x3136xf32, #tpu.memory_space<vmem>>, vector<1x64xf32>,
    %414 = vector.extract_strided_slice %338 {offsets = [15, 0], sizes = [1, 64], strides = [1, 1]} : vector<49x64xf32> to vector<1x64xf32>
    %415 = vector.shape_cast %414 : vector<1x64xf32> to vector<64xf32>
    %c0_383 = arith.constant 0 : index
    %c960 = arith.constant 960 : index
    %416 = vector.load %arg13[%c0_383, %c960] : memref<1x3136xf32, #tpu.memory_space<vmem>>, vector<1x64xf32>
    %417 = vector.shape_cast %416 : vector<1x64xf32> to vector<64xf32>
    %418 = vector.shape_cast %415 : vector<64xf32> to vector<1x64xf32>
    tpu.vector_store %arg13[%c0_383, %c960], %418 {strides = array<i32>} : memref<1x3136xf32, #tpu.memory_space<vmem>>, vector<1x64xf32>,
    %419 = vector.extract_strided_slice %338 {offsets = [16, 0], sizes = [1, 64], strides = [1, 1]} : vector<49x64xf32> to vector<1x64xf32>
    %420 = vector.shape_cast %419 : vector<1x64xf32> to vector<64xf32>
    %c0_384 = arith.constant 0 : index
    %c1024 = arith.constant 1024 : index
    %421 = vector.load %arg13[%c0_384, %c1024] : memref<1x3136xf32, #tpu.memory_space<vmem>>, vector<1x64xf32>
    %422 = vector.shape_cast %421 : vector<1x64xf32> to vector<64xf32>
    %423 = vector.shape_cast %420 : vector<64xf32> to vector<1x64xf32>
    tpu.vector_store %arg13[%c0_384, %c1024], %423 {strides = array<i32>} : memref<1x3136xf32, #tpu.memory_space<vmem>>, vector<1x64xf32>,
    %424 = vector.extract_strided_slice %338 {offsets = [17, 0], sizes = [1, 64], strides = [1, 1]} : vector<49x64xf32> to vector<1x64xf32>
    %425 = vector.shape_cast %424 : vector<1x64xf32> to vector<64xf32>
    %c0_385 = arith.constant 0 : index
    %c1088 = arith.constant 1088 : index
    %426 = vector.load %arg13[%c0_385, %c1088] : memref<1x3136xf32, #tpu.memory_space<vmem>>, vector<1x64xf32>
    %427 = vector.shape_cast %426 : vector<1x64xf32> to vector<64xf32>
    %428 = vector.shape_cast %425 : vector<64xf32> to vector<1x64xf32>
    tpu.vector_store %arg13[%c0_385, %c1088], %428 {strides = array<i32>} : memref<1x3136xf32, #tpu.memory_space<vmem>>, vector<1x64xf32>,
    %429 = vector.extract_strided_slice %338 {offsets = [18, 0], sizes = [1, 64], strides = [1, 1]} : vector<49x64xf32> to vector<1x64xf32>
    %430 = vector.shape_cast %429 : vector<1x64xf32> to vector<64xf32>
    %c0_386 = arith.constant 0 : index
    %c1152 = arith.constant 1152 : index
    %431 = vector.load %arg13[%c0_386, %c1152] : memref<1x3136xf32, #tpu.memory_space<vmem>>, vector<1x64xf32>
    %432 = vector.shape_cast %431 : vector<1x64xf32> to vector<64xf32>
    %433 = vector.shape_cast %430 : vector<64xf32> to vector<1x64xf32>
    tpu.vector_store %arg13[%c0_386, %c1152], %433 {strides = array<i32>} : memref<1x3136xf32, #tpu.memory_space<vmem>>, vector<1x64xf32>,
    %434 = vector.extract_strided_slice %338 {offsets = [19, 0], sizes = [1, 64], strides = [1, 1]} : vector<49x64xf32> to vector<1x64xf32>
    %435 = vector.shape_cast %434 : vector<1x64xf32> to vector<64xf32>
    %c0_387 = arith.constant 0 : index
    %c1216 = arith.constant 1216 : index
    %436 = vector.load %arg13[%c0_387, %c1216] : memref<1x3136xf32, #tpu.memory_space<vmem>>, vector<1x64xf32>
    %437 = vector.shape_cast %436 : vector<1x64xf32> to vector<64xf32>
    %438 = vector.shape_cast %435 : vector<64xf32> to vector<1x64xf32>
    tpu.vector_store %arg13[%c0_387, %c1216], %438 {strides = array<i32>} : memref<1x3136xf32, #tpu.memory_space<vmem>>, vector<1x64xf32>,
    %439 = vector.extract_strided_slice %338 {offsets = [20, 0], sizes = [1, 64], strides = [1, 1]} : vector<49x64xf32> to vector<1x64xf32>
    %440 = vector.shape_cast %439 : vector<1x64xf32> to vector<64xf32>
    %c0_388 = arith.constant 0 : index
    %c1280 = arith.constant 1280 : index
    %441 = vector.load %arg13[%c0_388, %c1280] : memref<1x3136xf32, #tpu.memory_space<vmem>>, vector<1x64xf32>
    %442 = vector.shape_cast %441 : vector<1x64xf32> to vector<64xf32>
    %443 = vector.shape_cast %440 : vector<64xf32> to vector<1x64xf32>
    tpu.vector_store %arg13[%c0_388, %c1280], %443 {strides = array<i32>} : memref<1x3136xf32, #tpu.memory_space<vmem>>, vector<1x64xf32>,
    %444 = vector.extract_strided_slice %338 {offsets = [21, 0], sizes = [1, 64], strides = [1, 1]} : vector<49x64xf32> to vector<1x64xf32>
    %445 = vector.shape_cast %444 : vector<1x64xf32> to vector<64xf32>
    %c0_389 = arith.constant 0 : index
    %c1344 = arith.constant 1344 : index
    %446 = vector.load %arg13[%c0_389, %c1344] : memref<1x3136xf32, #tpu.memory_space<vmem>>, vector<1x64xf32>
    %447 = vector.shape_cast %446 : vector<1x64xf32> to vector<64xf32>
    %448 = vector.shape_cast %445 : vector<64xf32> to vector<1x64xf32>
    tpu.vector_store %arg13[%c0_389, %c1344], %448 {strides = array<i32>} : memref<1x3136xf32, #tpu.memory_space<vmem>>, vector<1x64xf32>,
    %449 = vector.extract_strided_slice %338 {offsets = [22, 0], sizes = [1, 64], strides = [1, 1]} : vector<49x64xf32> to vector<1x64xf32>
    %450 = vector.shape_cast %449 : vector<1x64xf32> to vector<64xf32>
    %c0_390 = arith.constant 0 : index
    %c1408 = arith.constant 1408 : index
    %451 = vector.load %arg13[%c0_390, %c1408] : memref<1x3136xf32, #tpu.memory_space<vmem>>, vector<1x64xf32>
    %452 = vector.shape_cast %451 : vector<1x64xf32> to vector<64xf32>
    %453 = vector.shape_cast %450 : vector<64xf32> to vector<1x64xf32>
    tpu.vector_store %arg13[%c0_390, %c1408], %453 {strides = array<i32>} : memref<1x3136xf32, #tpu.memory_space<vmem>>, vector<1x64xf32>,
    %454 = vector.extract_strided_slice %338 {offsets = [23, 0], sizes = [1, 64], strides = [1, 1]} : vector<49x64xf32> to vector<1x64xf32>
    %455 = vector.shape_cast %454 : vector<1x64xf32> to vector<64xf32>
    %c0_391 = arith.constant 0 : index
    %c1472 = arith.constant 1472 : index
    %456 = vector.load %arg13[%c0_391, %c1472] : memref<1x3136xf32, #tpu.memory_space<vmem>>, vector<1x64xf32>
    %457 = vector.shape_cast %456 : vector<1x64xf32> to vector<64xf32>
    %458 = vector.shape_cast %455 : vector<64xf32> to vector<1x64xf32>
    tpu.vector_store %arg13[%c0_391, %c1472], %458 {strides = array<i32>} : memref<1x3136xf32, #tpu.memory_space<vmem>>, vector<1x64xf32>,
    %459 = vector.extract_strided_slice %338 {offsets = [24, 0], sizes = [1, 64], strides = [1, 1]} : vector<49x64xf32> to vector<1x64xf32>
    %460 = vector.shape_cast %459 : vector<1x64xf32> to vector<64xf32>
    %c0_392 = arith.constant 0 : index
    %c1536 = arith.constant 1536 : index
    %461 = vector.load %arg13[%c0_392, %c1536] : memref<1x3136xf32, #tpu.memory_space<vmem>>, vector<1x64xf32>
    %462 = vector.shape_cast %461 : vector<1x64xf32> to vector<64xf32>
    %463 = vector.shape_cast %460 : vector<64xf32> to vector<1x64xf32>
    tpu.vector_store %arg13[%c0_392, %c1536], %463 {strides = array<i32>} : memref<1x3136xf32, #tpu.memory_space<vmem>>, vector<1x64xf32>,
    %464 = vector.extract_strided_slice %338 {offsets = [25, 0], sizes = [1, 64], strides = [1, 1]} : vector<49x64xf32> to vector<1x64xf32>
    %465 = vector.shape_cast %464 : vector<1x64xf32> to vector<64xf32>
    %c0_393 = arith.constant 0 : index
    %c1600 = arith.constant 1600 : index
    %466 = vector.load %arg13[%c0_393, %c1600] : memref<1x3136xf32, #tpu.memory_space<vmem>>, vector<1x64xf32>
    %467 = vector.shape_cast %466 : vector<1x64xf32> to vector<64xf32>
    %468 = vector.shape_cast %465 : vector<64xf32> to vector<1x64xf32>
    tpu.vector_store %arg13[%c0_393, %c1600], %468 {strides = array<i32>} : memref<1x3136xf32, #tpu.memory_space<vmem>>, vector<1x64xf32>,
    %469 = vector.extract_strided_slice %338 {offsets = [26, 0], sizes = [1, 64], strides = [1, 1]} : vector<49x64xf32> to vector<1x64xf32>
    %470 = vector.shape_cast %469 : vector<1x64xf32> to vector<64xf32>
    %c0_394 = arith.constant 0 : index
    %c1664 = arith.constant 1664 : index
    %471 = vector.load %arg13[%c0_394, %c1664] : memref<1x3136xf32, #tpu.memory_space<vmem>>, vector<1x64xf32>
    %472 = vector.shape_cast %471 : vector<1x64xf32> to vector<64xf32>
    %473 = vector.shape_cast %470 : vector<64xf32> to vector<1x64xf32>
    tpu.vector_store %arg13[%c0_394, %c1664], %473 {strides = array<i32>} : memref<1x3136xf32, #tpu.memory_space<vmem>>, vector<1x64xf32>,
    %474 = vector.extract_strided_slice %338 {offsets = [27, 0], sizes = [1, 64], strides = [1, 1]} : vector<49x64xf32> to vector<1x64xf32>
    %475 = vector.shape_cast %474 : vector<1x64xf32> to vector<64xf32>
    %c0_395 = arith.constant 0 : index
    %c1728 = arith.constant 1728 : index
    %476 = vector.load %arg13[%c0_395, %c1728] : memref<1x3136xf32, #tpu.memory_space<vmem>>, vector<1x64xf32>
    %477 = vector.shape_cast %476 : vector<1x64xf32> to vector<64xf32>
    %478 = vector.shape_cast %475 : vector<64xf32> to vector<1x64xf32>
    tpu.vector_store %arg13[%c0_395, %c1728], %478 {strides = array<i32>} : memref<1x3136xf32, #tpu.memory_space<vmem>>, vector<1x64xf32>,
    %479 = vector.extract_strided_slice %338 {offsets = [28, 0], sizes = [1, 64], strides = [1, 1]} : vector<49x64xf32> to vector<1x64xf32>
    %480 = vector.shape_cast %479 : vector<1x64xf32> to vector<64xf32>
    %c0_396 = arith.constant 0 : index
    %c1792 = arith.constant 1792 : index
    %481 = vector.load %arg13[%c0_396, %c1792] : memref<1x3136xf32, #tpu.memory_space<vmem>>, vector<1x64xf32>
    %482 = vector.shape_cast %481 : vector<1x64xf32> to vector<64xf32>
    %483 = vector.shape_cast %480 : vector<64xf32> to vector<1x64xf32>
    tpu.vector_store %arg13[%c0_396, %c1792], %483 {strides = array<i32>} : memref<1x3136xf32, #tpu.memory_space<vmem>>, vector<1x64xf32>,
    %484 = vector.extract_strided_slice %338 {offsets = [29, 0], sizes = [1, 64], strides = [1, 1]} : vector<49x64xf32> to vector<1x64xf32>
    %485 = vector.shape_cast %484 : vector<1x64xf32> to vector<64xf32>
    %c0_397 = arith.constant 0 : index
    %c1856 = arith.constant 1856 : index
    %486 = vector.load %arg13[%c0_397, %c1856] : memref<1x3136xf32, #tpu.memory_space<vmem>>, vector<1x64xf32>
    %487 = vector.shape_cast %486 : vector<1x64xf32> to vector<64xf32>
    %488 = vector.shape_cast %485 : vector<64xf32> to vector<1x64xf32>
    tpu.vector_store %arg13[%c0_397, %c1856], %488 {strides = array<i32>} : memref<1x3136xf32, #tpu.memory_space<vmem>>, vector<1x64xf32>,
    %489 = vector.extract_strided_slice %338 {offsets = [30, 0], sizes = [1, 64], strides = [1, 1]} : vector<49x64xf32> to vector<1x64xf32>
    %490 = vector.shape_cast %489 : vector<1x64xf32> to vector<64xf32>
    %c0_398 = arith.constant 0 : index
    %c1920 = arith.constant 1920 : index
    %491 = vector.load %arg13[%c0_398, %c1920] : memref<1x3136xf32, #tpu.memory_space<vmem>>, vector<1x64xf32>
    %492 = vector.shape_cast %491 : vector<1x64xf32> to vector<64xf32>
    %493 = vector.shape_cast %490 : vector<64xf32> to vector<1x64xf32>
    tpu.vector_store %arg13[%c0_398, %c1920], %493 {strides = array<i32>} : memref<1x3136xf32, #tpu.memory_space<vmem>>, vector<1x64xf32>,
    %494 = vector.extract_strided_slice %338 {offsets = [31, 0], sizes = [1, 64], strides = [1, 1]} : vector<49x64xf32> to vector<1x64xf32>
    %495 = vector.shape_cast %494 : vector<1x64xf32> to vector<64xf32>
    %c0_399 = arith.constant 0 : index
    %c1984 = arith.constant 1984 : index
    %496 = vector.load %arg13[%c0_399, %c1984] : memref<1x3136xf32, #tpu.memory_space<vmem>>, vector<1x64xf32>
    %497 = vector.shape_cast %496 : vector<1x64xf32> to vector<64xf32>
    %498 = vector.shape_cast %495 : vector<64xf32> to vector<1x64xf32>
    tpu.vector_store %arg13[%c0_399, %c1984], %498 {strides = array<i32>} : memref<1x3136xf32, #tpu.memory_space<vmem>>, vector<1x64xf32>,
    %499 = vector.extract_strided_slice %338 {offsets = [32, 0], sizes = [1, 64], strides = [1, 1]} : vector<49x64xf32> to vector<1x64xf32>
    %500 = vector.shape_cast %499 : vector<1x64xf32> to vector<64xf32>
    %c0_400 = arith.constant 0 : index
    %c2048 = arith.constant 2048 : index
    %501 = vector.load %arg13[%c0_400, %c2048] : memref<1x3136xf32, #tpu.memory_space<vmem>>, vector<1x64xf32>
    %502 = vector.shape_cast %501 : vector<1x64xf32> to vector<64xf32>
    %503 = vector.shape_cast %500 : vector<64xf32> to vector<1x64xf32>
    tpu.vector_store %arg13[%c0_400, %c2048], %503 {strides = array<i32>} : memref<1x3136xf32, #tpu.memory_space<vmem>>, vector<1x64xf32>,
    %504 = vector.extract_strided_slice %338 {offsets = [33, 0], sizes = [1, 64], strides = [1, 1]} : vector<49x64xf32> to vector<1x64xf32>
    %505 = vector.shape_cast %504 : vector<1x64xf32> to vector<64xf32>
    %c0_401 = arith.constant 0 : index
    %c2112 = arith.constant 2112 : index
    %506 = vector.load %arg13[%c0_401, %c2112] : memref<1x3136xf32, #tpu.memory_space<vmem>>, vector<1x64xf32>
    %507 = vector.shape_cast %506 : vector<1x64xf32> to vector<64xf32>
    %508 = vector.shape_cast %505 : vector<64xf32> to vector<1x64xf32>
    tpu.vector_store %arg13[%c0_401, %c2112], %508 {strides = array<i32>} : memref<1x3136xf32, #tpu.memory_space<vmem>>, vector<1x64xf32>,
    %509 = vector.extract_strided_slice %338 {offsets = [34, 0], sizes = [1, 64], strides = [1, 1]} : vector<49x64xf32> to vector<1x64xf32>
    %510 = vector.shape_cast %509 : vector<1x64xf32> to vector<64xf32>
    %c0_402 = arith.constant 0 : index
    %c2176 = arith.constant 2176 : index
    %511 = vector.load %arg13[%c0_402, %c2176] : memref<1x3136xf32, #tpu.memory_space<vmem>>, vector<1x64xf32>
    %512 = vector.shape_cast %511 : vector<1x64xf32> to vector<64xf32>
    %513 = vector.shape_cast %510 : vector<64xf32> to vector<1x64xf32>
    tpu.vector_store %arg13[%c0_402, %c2176], %513 {strides = array<i32>} : memref<1x3136xf32, #tpu.memory_space<vmem>>, vector<1x64xf32>,
    %514 = vector.extract_strided_slice %338 {offsets = [35, 0], sizes = [1, 64], strides = [1, 1]} : vector<49x64xf32> to vector<1x64xf32>
    %515 = vector.shape_cast %514 : vector<1x64xf32> to vector<64xf32>
    %c0_403 = arith.constant 0 : index
    %c2240 = arith.constant 2240 : index
    %516 = vector.load %arg13[%c0_403, %c2240] : memref<1x3136xf32, #tpu.memory_space<vmem>>, vector<1x64xf32>
    %517 = vector.shape_cast %516 : vector<1x64xf32> to vector<64xf32>
    %518 = vector.shape_cast %515 : vector<64xf32> to vector<1x64xf32>
    tpu.vector_store %arg13[%c0_403, %c2240], %518 {strides = array<i32>} : memref<1x3136xf32, #tpu.memory_space<vmem>>, vector<1x64xf32>,
    %519 = vector.extract_strided_slice %338 {offsets = [36, 0], sizes = [1, 64], strides = [1, 1]} : vector<49x64xf32> to vector<1x64xf32>
    %520 = vector.shape_cast %519 : vector<1x64xf32> to vector<64xf32>
    %c0_404 = arith.constant 0 : index
    %c2304 = arith.constant 2304 : index
    %521 = vector.load %arg13[%c0_404, %c2304] : memref<1x3136xf32, #tpu.memory_space<vmem>>, vector<1x64xf32>
    %522 = vector.shape_cast %521 : vector<1x64xf32> to vector<64xf32>
    %523 = vector.shape_cast %520 : vector<64xf32> to vector<1x64xf32>
    tpu.vector_store %arg13[%c0_404, %c2304], %523 {strides = array<i32>} : memref<1x3136xf32, #tpu.memory_space<vmem>>, vector<1x64xf32>,
    %524 = vector.extract_strided_slice %338 {offsets = [37, 0], sizes = [1, 64], strides = [1, 1]} : vector<49x64xf32> to vector<1x64xf32>
    %525 = vector.shape_cast %524 : vector<1x64xf32> to vector<64xf32>
    %c0_405 = arith.constant 0 : index
    %c2368 = arith.constant 2368 : index
    %526 = vector.load %arg13[%c0_405, %c2368] : memref<1x3136xf32, #tpu.memory_space<vmem>>, vector<1x64xf32>
    %527 = vector.shape_cast %526 : vector<1x64xf32> to vector<64xf32>
    %528 = vector.shape_cast %525 : vector<64xf32> to vector<1x64xf32>
    tpu.vector_store %arg13[%c0_405, %c2368], %528 {strides = array<i32>} : memref<1x3136xf32, #tpu.memory_space<vmem>>, vector<1x64xf32>,
    %529 = vector.extract_strided_slice %338 {offsets = [38, 0], sizes = [1, 64], strides = [1, 1]} : vector<49x64xf32> to vector<1x64xf32>
    %530 = vector.shape_cast %529 : vector<1x64xf32> to vector<64xf32>
    %c0_406 = arith.constant 0 : index
    %c2432 = arith.constant 2432 : index
    %531 = vector.load %arg13[%c0_406, %c2432] : memref<1x3136xf32, #tpu.memory_space<vmem>>, vector<1x64xf32>
    %532 = vector.shape_cast %531 : vector<1x64xf32> to vector<64xf32>
    %533 = vector.shape_cast %530 : vector<64xf32> to vector<1x64xf32>
    tpu.vector_store %arg13[%c0_406, %c2432], %533 {strides = array<i32>} : memref<1x3136xf32, #tpu.memory_space<vmem>>, vector<1x64xf32>,
    %534 = vector.extract_strided_slice %338 {offsets = [39, 0], sizes = [1, 64], strides = [1, 1]} : vector<49x64xf32> to vector<1x64xf32>
    %535 = vector.shape_cast %534 : vector<1x64xf32> to vector<64xf32>
    %c0_407 = arith.constant 0 : index
    %c2496 = arith.constant 2496 : index
    %536 = vector.load %arg13[%c0_407, %c2496] : memref<1x3136xf32, #tpu.memory_space<vmem>>, vector<1x64xf32>
    %537 = vector.shape_cast %536 : vector<1x64xf32> to vector<64xf32>
    %538 = vector.shape_cast %535 : vector<64xf32> to vector<1x64xf32>
    tpu.vector_store %arg13[%c0_407, %c2496], %538 {strides = array<i32>} : memref<1x3136xf32, #tpu.memory_space<vmem>>, vector<1x64xf32>,
    %539 = vector.extract_strided_slice %338 {offsets = [40, 0], sizes = [1, 64], strides = [1, 1]} : vector<49x64xf32> to vector<1x64xf32>
    %540 = vector.shape_cast %539 : vector<1x64xf32> to vector<64xf32>
    %c0_408 = arith.constant 0 : index
    %c2560 = arith.constant 2560 : index
    %541 = vector.load %arg13[%c0_408, %c2560] : memref<1x3136xf32, #tpu.memory_space<vmem>>, vector<1x64xf32>
    %542 = vector.shape_cast %541 : vector<1x64xf32> to vector<64xf32>
    %543 = vector.shape_cast %540 : vector<64xf32> to vector<1x64xf32>
    tpu.vector_store %arg13[%c0_408, %c2560], %543 {strides = array<i32>} : memref<1x3136xf32, #tpu.memory_space<vmem>>, vector<1x64xf32>,
    %544 = vector.extract_strided_slice %338 {offsets = [41, 0], sizes = [1, 64], strides = [1, 1]} : vector<49x64xf32> to vector<1x64xf32>
    %545 = vector.shape_cast %544 : vector<1x64xf32> to vector<64xf32>
    %c0_409 = arith.constant 0 : index
    %c2624 = arith.constant 2624 : index
    %546 = vector.load %arg13[%c0_409, %c2624] : memref<1x3136xf32, #tpu.memory_space<vmem>>, vector<1x64xf32>
    %547 = vector.shape_cast %546 : vector<1x64xf32> to vector<64xf32>
    %548 = vector.shape_cast %545 : vector<64xf32> to vector<1x64xf32>
    tpu.vector_store %arg13[%c0_409, %c2624], %548 {strides = array<i32>} : memref<1x3136xf32, #tpu.memory_space<vmem>>, vector<1x64xf32>,
    %549 = vector.extract_strided_slice %338 {offsets = [42, 0], sizes = [1, 64], strides = [1, 1]} : vector<49x64xf32> to vector<1x64xf32>
    %550 = vector.shape_cast %549 : vector<1x64xf32> to vector<64xf32>
    %c0_410 = arith.constant 0 : index
    %c2688 = arith.constant 2688 : index
    %551 = vector.load %arg13[%c0_410, %c2688] : memref<1x3136xf32, #tpu.memory_space<vmem>>, vector<1x64xf32>
    %552 = vector.shape_cast %551 : vector<1x64xf32> to vector<64xf32>
    %553 = vector.shape_cast %550 : vector<64xf32> to vector<1x64xf32>
    tpu.vector_store %arg13[%c0_410, %c2688], %553 {strides = array<i32>} : memref<1x3136xf32, #tpu.memory_space<vmem>>, vector<1x64xf32>,
    %554 = vector.extract_strided_slice %338 {offsets = [43, 0], sizes = [1, 64], strides = [1, 1]} : vector<49x64xf32> to vector<1x64xf32>
    %555 = vector.shape_cast %554 : vector<1x64xf32> to vector<64xf32>
    %c0_411 = arith.constant 0 : index
    %c2752 = arith.constant 2752 : index
    %556 = vector.load %arg13[%c0_411, %c2752] : memref<1x3136xf32, #tpu.memory_space<vmem>>, vector<1x64xf32>
    %557 = vector.shape_cast %556 : vector<1x64xf32> to vector<64xf32>
    %558 = vector.shape_cast %555 : vector<64xf32> to vector<1x64xf32>
    tpu.vector_store %arg13[%c0_411, %c2752], %558 {strides = array<i32>} : memref<1x3136xf32, #tpu.memory_space<vmem>>, vector<1x64xf32>,
    %559 = vector.extract_strided_slice %338 {offsets = [44, 0], sizes = [1, 64], strides = [1, 1]} : vector<49x64xf32> to vector<1x64xf32>
    %560 = vector.shape_cast %559 : vector<1x64xf32> to vector<64xf32>
    %c0_412 = arith.constant 0 : index
    %c2816 = arith.constant 2816 : index
    %561 = vector.load %arg13[%c0_412, %c2816] : memref<1x3136xf32, #tpu.memory_space<vmem>>, vector<1x64xf32>
    %562 = vector.shape_cast %561 : vector<1x64xf32> to vector<64xf32>
    %563 = vector.shape_cast %560 : vector<64xf32> to vector<1x64xf32>
    tpu.vector_store %arg13[%c0_412, %c2816], %563 {strides = array<i32>} : memref<1x3136xf32, #tpu.memory_space<vmem>>, vector<1x64xf32>,
    %564 = vector.extract_strided_slice %338 {offsets = [45, 0], sizes = [1, 64], strides = [1, 1]} : vector<49x64xf32> to vector<1x64xf32>
    %565 = vector.shape_cast %564 : vector<1x64xf32> to vector<64xf32>
    %c0_413 = arith.constant 0 : index
    %c2880 = arith.constant 2880 : index
    %566 = vector.load %arg13[%c0_413, %c2880] : memref<1x3136xf32, #tpu.memory_space<vmem>>, vector<1x64xf32>
    %567 = vector.shape_cast %566 : vector<1x64xf32> to vector<64xf32>
    %568 = vector.shape_cast %565 : vector<64xf32> to vector<1x64xf32>
    tpu.vector_store %arg13[%c0_413, %c2880], %568 {strides = array<i32>} : memref<1x3136xf32, #tpu.memory_space<vmem>>, vector<1x64xf32>,
    %569 = vector.extract_strided_slice %338 {offsets = [46, 0], sizes = [1, 64], strides = [1, 1]} : vector<49x64xf32> to vector<1x64xf32>
    %570 = vector.shape_cast %569 : vector<1x64xf32> to vector<64xf32>
    %c0_414 = arith.constant 0 : index
    %c2944 = arith.constant 2944 : index
    %571 = vector.load %arg13[%c0_414, %c2944] : memref<1x3136xf32, #tpu.memory_space<vmem>>, vector<1x64xf32>
    %572 = vector.shape_cast %571 : vector<1x64xf32> to vector<64xf32>
    %573 = vector.shape_cast %570 : vector<64xf32> to vector<1x64xf32>
    tpu.vector_store %arg13[%c0_414, %c2944], %573 {strides = array<i32>} : memref<1x3136xf32, #tpu.memory_space<vmem>>, vector<1x64xf32>,
    %574 = vector.extract_strided_slice %338 {offsets = [47, 0], sizes = [1, 64], strides = [1, 1]} : vector<49x64xf32> to vector<1x64xf32>
    %575 = vector.shape_cast %574 : vector<1x64xf32> to vector<64xf32>
    %c0_415 = arith.constant 0 : index
    %c3008 = arith.constant 3008 : index
    %576 = vector.load %arg13[%c0_415, %c3008] : memref<1x3136xf32, #tpu.memory_space<vmem>>, vector<1x64xf32>
    %577 = vector.shape_cast %576 : vector<1x64xf32> to vector<64xf32>
    %578 = vector.shape_cast %575 : vector<64xf32> to vector<1x64xf32>
    tpu.vector_store %arg13[%c0_415, %c3008], %578 {strides = array<i32>} : memref<1x3136xf32, #tpu.memory_space<vmem>>, vector<1x64xf32>,
    %579 = vector.extract_strided_slice %338 {offsets = [48, 0], sizes = [1, 64], strides = [1, 1]} : vector<49x64xf32> to vector<1x64xf32>
    %580 = vector.shape_cast %579 : vector<1x64xf32> to vector<64xf32>
    %c0_416 = arith.constant 0 : index
    %c3072 = arith.constant 3072 : index
    %581 = vector.load %arg13[%c0_416, %c3072] : memref<1x3136xf32, #tpu.memory_space<vmem>>, vector<1x64xf32>
    %582 = vector.shape_cast %581 : vector<1x64xf32> to vector<64xf32>
    %583 = vector.shape_cast %580 : vector<64xf32> to vector<1x64xf32>
    tpu.vector_store %arg13[%c0_416, %c3072], %583 {strides = array<i32>} : memref<1x3136xf32, #tpu.memory_space<vmem>>, vector<1x64xf32>,
    %c0_417 = arith.constant 0 : index
    %c0_418 = arith.constant 0 : index
    %584 = vector.load %arg13[%c0_417, %c0_418] : memref<1x3136xf32, #tpu.memory_space<vmem>>, vector<1x3136xf32>
    %585 = arith.truncf %584 : vector<1x3136xf32> to vector<1x3136xbf16>
    %c0_419 = arith.constant 0 : index
    %c0_420 = arith.constant 0 : index
    %586 = vector.load %arg6[%c0_419, %c0_420] : memref<3136x128xbf16, #tpu.memory_space<vmem>>, vector<3136x128xbf16>
    %cst_421 = arith.constant dense<0.000000e+00> : vector<1x128xf32>
    %587 = tpu.matmul %585, %586, %cst_421 {dimension_numbers = #tpu.dot_dimension_numbers<[1], [0], [0], [1], [0, 0, 1, 1], [], []>} : vector<1x3136xbf16>, vector<3136x128xbf16>, vector<1x128xf32> -> vector<1x128xf32>
    %c0_422 = arith.constant 0 : index
    %c0_423 = arith.constant 0 : index
    %588 = vector.load %arg7[%c0_422, %c0_423] : memref<1x128xf32, #tpu.memory_space<vmem>>, vector<1x128xf32>
    %589 = arith.addf %587, %588 : vector<1x128xf32>
    %cst_424 = arith.constant 0.000000e+00 : f32
    %590 = vector.broadcast %cst_424 : f32 to vector<1x128xf32>
    %591 = arith.maximumf %589, %590 : vector<1x128xf32>
    %592 = arith.truncf %591 : vector<1x128xf32> to vector<1x128xbf16>
    %c0_425 = arith.constant 0 : index
    %c0_426 = arith.constant 0 : index
    %593 = vector.load %arg8[%c0_425, %c0_426] : memref<128x128xbf16, #tpu.memory_space<vmem>>, vector<128x128xbf16>
    %cst_427 = arith.constant dense<0.000000e+00> : vector<1x128xf32>
    %594 = tpu.matmul %592, %593, %cst_427 {dimension_numbers = #tpu.dot_dimension_numbers<[1], [0], [0], [1], [0, 0, 1, 1], [], []>} : vector<1x128xbf16>, vector<128x128xbf16>, vector<1x128xf32> -> vector<1x128xf32>
    %c0_428 = arith.constant 0 : index
    %c0_429 = arith.constant 0 : index
    %595 = vector.load %arg9[%c0_428, %c0_429] : memref<1x128xf32, #tpu.memory_space<vmem>>, vector<1x128xf32>
    %596 = arith.addf %594, %595 : vector<1x128xf32>
    %cst_430 = arith.constant dense<0xFF800000> : vector<1xf32>
    %597 = vector.multi_reduction <maximumf>, %596, %cst_430 [1] : vector<1x128xf32> to vector<1xf32>
    %598 = vector.shape_cast %597 : vector<1xf32> to vector<1x1xf32>
    %599 = vector.broadcast %598 : vector<1x1xf32> to vector<1x128xf32>
    %600 = arith.subf %596, %599 : vector<1x128xf32>
    %601 = math.exp %600 : vector<1x128xf32>
    %602 = vector.broadcast %598 : vector<1x1xf32> to vector<1x128xf32>
    %603 = arith.subf %596, %602 : vector<1x128xf32>
    %cst_431 = arith.constant dense<0.000000e+00> : vector<1xf32>
    %604 = vector.multi_reduction <add>, %601, %cst_431 [1] : vector<1x128xf32> to vector<1xf32>
    %605 = vector.shape_cast %604 : vector<1xf32> to vector<1x1xf32>
    %606 = math.log %605 : vector<1x1xf32>
    %607 = vector.broadcast %606 : vector<1x1xf32> to vector<1x128xf32>
    %608 = arith.subf %603, %607 : vector<1x128xf32>
    %c0_432 = arith.constant 0 : index
    %c0_433 = arith.constant 0 : index
    %c0_434 = arith.constant 0 : index
    %609 = vector.load %arg10[%c0_432, %c0_433, %c0_434] : memref<1x1x128xf32, #tpu.memory_space<vmem>>, vector<1x1x128xf32>
    %610 = vector.shape_cast %609 : vector<1x1x128xf32> to vector<1x128xf32>
    %611 = vector.shape_cast %608 : vector<1x128xf32> to vector<1x1x128xf32>
    tpu.vector_store %arg10[%c0_432, %c0_433, %c0_434], %611 {strides = array<i32>} : memref<1x1x128xf32, #tpu.memory_space<vmem>>, vector<1x1x128xf32>,
    return
  }
  func.func @transform_0(%arg0: i32) -> (i32, i32, i32) {
    %c0_i32 = arith.constant 0 : i32
    %c0_i32_0 = arith.constant 0 : i32
    %c0_i32_1 = arith.constant 0 : i32
    return %arg0, %c0_i32, %c0_i32_0 : i32, i32, i32
  }
  func.func @transform_1(%arg0: i32) -> (i32, i32) {
    %c0_i32 = arith.constant 0 : i32
    %c0_i32_0 = arith.constant 0 : i32
    %c0_i32_1 = arith.constant 0 : i32
    return %c0_i32, %c0_i32_0 : i32, i32
  }
  func.func @transform_2(%arg0: i32) -> (i32, i32) {
    %c0_i32 = arith.constant 0 : i32
    %c0_i32_0 = arith.constant 0 : i32
    %c0_i32_1 = arith.constant 0 : i32
    return %c0_i32, %c0_i32_0 : i32, i32
  }
  func.func @transform_3(%arg0: i32) -> (i32, i32) {
    %c0_i32 = arith.constant 0 : i32
    %c0_i32_0 = arith.constant 0 : i32
    %c0_i32_1 = arith.constant 0 : i32
    return %c0_i32, %c0_i32_0 : i32, i32
  }
  func.func @transform_4(%arg0: i32) -> (i32, i32) {
    %c0_i32 = arith.constant 0 : i32
    %c0_i32_0 = arith.constant 0 : i32
    %c0_i32_1 = arith.constant 0 : i32
    return %c0_i32, %c0_i32_0 : i32, i32
  }
  func.func @transform_5(%arg0: i32) -> (i32, i32) {
    %c0_i32 = arith.constant 0 : i32
    %c0_i32_0 = arith.constant 0 : i32
    %c0_i32_1 = arith.constant 0 : i32
    return %c0_i32, %c0_i32_0 : i32, i32
  }
  func.func @transform_6(%arg0: i32) -> (i32, i32) {
    %c0_i32 = arith.constant 0 : i32
    %c0_i32_0 = arith.constant 0 : i32
    %c0_i32_1 = arith.constant 0 : i32
    return %c0_i32, %c0_i32_0 : i32, i32
  }
  func.func @transform_7(%arg0: i32) -> (i32, i32) {
    %c0_i32 = arith.constant 0 : i32
    %c0_i32_0 = arith.constant 0 : i32
    %c0_i32_1 = arith.constant 0 : i32
    return %c0_i32, %c0_i32_0 : i32, i32
  }
  func.func @transform_8(%arg0: i32) -> (i32, i32) {
    %c0_i32 = arith.constant 0 : i32
    %c0_i32_0 = arith.constant 0 : i32
    %c0_i32_1 = arith.constant 0 : i32
    return %c0_i32, %c0_i32_0 : i32, i32
  }
  func.func @transform_9(%arg0: i32) -> (i32, i32, i32) {
    %c0_i32 = arith.constant 0 : i32
    %c0_i32_0 = arith.constant 0 : i32
    %c0_i32_1 = arith.constant 0 : i32
    return %arg0, %c0_i32, %c0_i32_0 : i32, i32, i32
  }
}

</mosaic_0001>

<llo_original>
// kernel: cnn_forward.1
$region0: #{cnn_forward.1}
  #allocation0 [shape = 'u32[]', space=smem, size = 0x4, offset = 0x4, fixed_abs, tag = 'smem constant byte address 0x4 - core index']
  #allocation1 [shape = 'u32[72,128]{1,0:T(1,128)}', space=vmem, size = 0x9000, scoped, tag = 'internal scratch']
  #allocation2 [shape = 'f32[2,2,8,8,32]{4,3,2,1,0:T(8,128)}', space=vmem, size = 0x20000, scoped, tag = 'scratch operand']
  #allocation3 [shape = 'f32[196,288]{1,0:T(8,128)}', space=vmem, size = 0x4b000, scoped, tag = 'scratch operand']
  #allocation4 [shape = 'f32[1,3136]{1,0:T(1,128)}', space=vmem, size = 0x3200, scoped, tag = 'scratch operand']
  %s0 = inlined_call_operand.vmem [shape: bf16[2,784,9], index: 0, kind: input, shape index: {}]
  %s1 = inlined_call_operand.vmem [shape: bf16[9,32], index: 1, kind: input, shape index: {}]
  %s2 = inlined_call_operand.vmem [shape: f32[1,32], index: 2, kind: input, shape index: {}]
  %s3 = inlined_call_operand.vmem [shape: bf16[288,64], index: 3, kind: input, shape index: {}]
  %s4 = inlined_call_operand.vmem [shape: f32[1,64], index: 4, kind: input, shape index: {}]
  %s5 = inlined_call_operand.vmem [shape: bf16[3136,128], index: 5, kind: input, shape index: {}]
  %s6 = inlined_call_operand.vmem [shape: f32[1,128], index: 6, kind: input, shape index: {}]
  %s7 = inlined_call_operand.vmem [shape: bf16[128,128], index: 7, kind: input, shape index: {}]
  %s8 = inlined_call_operand.vmem [shape: f32[1,128], index: 8, kind: input, shape index: {}]
  %s9 = inlined_call_operand.hbm [shape: f32[2,1,128], index: 9, kind: output, shape index: {}]
  %s10 = sld [smem:[#allocation0]]
  $region69: #{cnn_forward.1} parent=0
    _
  %s12 = ssub.s32 1, %s10
  %s13 = scalar_select 0, %s12, %s10
  $region1: #{cnn_forward.1} parent=0
    #allocation5 [shape = 'u8[1024]{0}', space=vmem, size = 0x400, scoped, tag = 'output window, operand 0']
    #allocation6 [shape = 's32[2]{0}', space=sflag, size = 0x8, scoped, tag = 'scoped memory for cnn_forward.1']
    %14 = vsyncpa [#allocation6], 0
    %s15 = scalar_lea.sflag [#allocation6], 1
    %16 = vsyncpa %s15, 0
    loop: start=0, step=1, limit=4
    $region2: #{cnn_forward.1} parent=1 // loop_pre_header
      _
    $region3: #{cnn_forward.1} parent=1 // loop_header
      %s18 = sphi 0, %s22
      %p19 = scmp.ge.s32.totalorder %s18, 4
      %s28 = sphi 0, %s30
      %s31 = sphi 0, %s28
      %s32 = sphi 0, %s31
      %s48 = sphi 0, %s32
      %s52 = sphi 0, %s52
      %s54 = sphi 0, %s52
      %s55 = sphi 0, %s54
      %s69 = sphi 0, %s55
      %s73 = sphi 0, %s73
      %s75 = sphi 0, %s73
      %s76 = sphi 0, %s75
      %s90 = sphi 0, %s76
      %s94 = sphi 0, %s94
      %s96 = sphi 0, %s94
      %s97 = sphi 0, %s96
      %s111 = sphi 0, %s97
      %s115 = sphi 0, %s115
      %s117 = sphi 0, %s115
      %s118 = sphi 0, %s117
      %s132 = sphi 0, %s118
      %s136 = sphi 0, %s136
      %s138 = sphi 0, %s136
      %s139 = sphi 0, %s138
      %s153 = sphi 0, %s139
      %s157 = sphi 0, %s157
      %s159 = sphi 0, %s157
      %s160 = sphi 0, %s159
      %s174 = sphi 0, %s160
      %s178 = sphi 0, %s178
      %s180 = sphi 0, %s178
      %s181 = sphi 0, %s180
      %s195 = sphi 0, %s181
      %s199 = sphi 0, %s199
      %s201 = sphi 0, %s199
      %s202 = sphi 0, %s201
      %s216 = sphi 0, %s202
      %s222 = sphi 0, %s224
      %s225 = sphi 0, %s222
      %s226 = sphi 0, %s225
      %s242 = sphi 0, %s226
    $region4: #{cnn_forward.1} parent=1 // loop_header_branch
      %21 = sbr.rel (%p19) target = $region8
    $region5: #{cnn_forward.1} parent=1 // loop_body
      %s23 = ssub.s32 %s18, 1
      %s24 = ssub.s32 %s18, 2
      %s25 = sadd.s32 %s18, 1
      %s26 = ssub.s32 %s18, %s25
      %p27 = scmp.eq.s32.totalorder %s26, 0
      %s29 = sadd.s32 %s28, 1
      %s30 = scalar_select %p27, %s28, %s29
      %p33 = pneg %p27
      %p34 = scmp.eq.s32.totalorder %s18, 1
      %p35 = por %p33, %p34
      %p36 = scmp.ne.s32.totalorder %s28, %s31
      %p37 = scmp.eq.s32.totalorder %s18, 0
      %p38 = por %p36, %p37
      %p39 = scmp.ne.s32.totalorder %s28, %s31
      %p40 = scmp.eq.s32.totalorder %s23, 1
      %p41 = por %p39, %p40
      %p42 = scmp.ne.s32.totalorder %s31, %s32
      %p43 = scmp.eq.s32.totalorder %s23, 0
      %p44 = por %p42, %p43
      %p45 = scmp.ne.s32.totalorder %s31, %s32
      %p46 = scmp.eq.s32.totalorder %s24, 1
      %p47 = por %p45, %p46
      %p49 = scmp.ne.s32.totalorder %s32, %s48
      %p50 = scmp.eq.s32.totalorder %s24, 0
      %p51 = por %p49, %p50
      %s53 = sadd.s32 %s52, 1
      %p56 = scmp.eq.s32.totalorder %s18, 1
      %p57 = scmp.ne.s32.totalorder %s52, %s54
      %p58 = scmp.eq.s32.totalorder %s18, 0
      %p59 = por %p57, %p58
      %p60 = scmp.ne.s32.totalorder %s52, %s54
      %p61 = scmp.eq.s32.totalorder %s23, 1
      %p62 = por %p60, %p61
      %p63 = scmp.ne.s32.totalorder %s54, %s55
      %p64 = scmp.eq.s32.totalorder %s23, 0
      %p65 = por %p63, %p64
      %p66 = scmp.ne.s32.totalorder %s54, %s55
      %p67 = scmp.eq.s32.totalorder %s24, 1
      %p68 = por %p66, %p67
      %p70 = scmp.ne.s32.totalorder %s55, %s69
      %p71 = scmp.eq.s32.totalorder %s24, 0
      %p72 = por %p70, %p71
      %s74 = sadd.s32 %s73, 1
      %p77 = scmp.eq.s32.totalorder %s18, 1
      %p78 = scmp.ne.s32.totalorder %s73, %s75
      %p79 = scmp.eq.s32.totalorder %s18, 0
      %p80 = por %p78, %p79
      %p81 = scmp.ne.s32.totalorder %s73, %s75
      %p82 = scmp.eq.s32.totalorder %s23, 1
      %p83 = por %p81, %p82
      %p84 = scmp.ne.s32.totalorder %s75, %s76
      %p85 = scmp.eq.s32.totalorder %s23, 0
      %p86 = por %p84, %p85
      %p87 = scmp.ne.s32.totalorder %s75, %s76
      %p88 = scmp.eq.s32.totalorder %s24, 1
      %p89 = por %p87, %p88
      %p91 = scmp.ne.s32.totalorder %s76, %s90
      %p92 = scmp.eq.s32.totalorder %s24, 0
      %p93 = por %p91, %p92
      %s95 = sadd.s32 %s94, 1
      %p98 = scmp.eq.s32.totalorder %s18, 1
      %p99 = scmp.ne.s32.totalorder %s94, %s96
      %p100 = scmp.eq.s32.totalorder %s18, 0
      %p101 = por %p99, %p100
      %p102 = scmp.ne.s32.totalorder %s94, %s96
      %p103 = scmp.eq.s32.totalorder %s23, 1
      %p104 = por %p102, %p103
      %p105 = scmp.ne.s32.totalorder %s96, %s97
      %p106 = scmp.eq.s32.totalorder %s23, 0
      %p107 = por %p105, %p106
      %p108 = scmp.ne.s32.totalorder %s96, %s97
      %p109 = scmp.eq.s32.totalorder %s24, 1
      %p110 = por %p108, %p109
      %p112 = scmp.ne.s32.totalorder %s97, %s111
      %p113 = scmp.eq.s32.totalorder %s24, 0
      %p114 = por %p112, %p113
      %s116 = sadd.s32 %s115, 1
      %p119 = scmp.eq.s32.totalorder %s18, 1
      %p120 = scmp.ne.s32.totalorder %s115, %s117
      %p121 = scmp.eq.s32.totalorder %s18, 0
      %p122 = por %p120, %p121
      %p123 = scmp.ne.s32.totalorder %s115, %s117
      %p124 = scmp.eq.s32.totalorder %s23, 1
      %p125 = por %p123, %p124
      %p126 = scmp.ne.s32.totalorder %s117, %s118
      %p127 = scmp.eq.s32.totalorder %s23, 0
      %p128 = por %p126, %p127
      %p129 = scmp.ne.s32.totalorder %s117, %s118
      %p130 = scmp.eq.s32.totalorder %s24, 1
      %p131 = por %p129, %p130
      %p133 = scmp.ne.s32.totalorder %s118, %s132
      %p134 = scmp.eq.s32.totalorder %s24, 0
      %p135 = por %p133, %p134
      %s137 = sadd.s32 %s136, 1
      %p140 = scmp.eq.s32.totalorder %s18, 1
      %p141 = scmp.ne.s32.totalorder %s136, %s138
      %p142 = scmp.eq.s32.totalorder %s18, 0
      %p143 = por %p141, %p142
      %p144 = scmp.ne.s32.totalorder %s136, %s138
      %p145 = scmp.eq.s32.totalorder %s23, 1
      %p146 = por %p144, %p145
      %p147 = scmp.ne.s32.totalorder %s138, %s139
      %p148 = scmp.eq.s32.totalorder %s23, 0
      %p149 = por %p147, %p148
      %p150 = scmp.ne.s32.totalorder %s138, %s139
      %p151 = scmp.eq.s32.totalorder %s24, 1
      %p152 = por %p150, %p151
      %p154 = scmp.ne.s32.totalorder %s139, %s153
      %p155 = scmp.eq.s32.totalorder %s24, 0
      %p156 = por %p154, %p155
      %s158 = sadd.s32 %s157, 1
      %p161 = scmp.eq.s32.totalorder %s18, 1
      %p162 = scmp.ne.s32.totalorder %s157, %s159
      %p163 = scmp.eq.s32.totalorder %s18, 0
      %p164 = por %p162, %p163
      %p165 = scmp.ne.s32.totalorder %s157, %s159
      %p166 = scmp.eq.s32.totalorder %s23, 1
      %p167 = por %p165, %p166
      %p168 = scmp.ne.s32.totalorder %s159, %s160
      %p169 = scmp.eq.s32.totalorder %s23, 0
      %p170 = por %p168, %p169
      %p171 = scmp.ne.s32.totalorder %s159, %s160
      %p172 = scmp.eq.s32.totalorder %s24, 1
      %p173 = por %p171, %p172
      %p175 = scmp.ne.s32.totalorder %s160, %s174
      %p176 = scmp.eq.s32.totalorder %s24, 0
      %p177 = por %p175, %p176
      %s179 = sadd.s32 %s178, 1
      %p182 = scmp.eq.s32.totalorder %s18, 1
      %p183 = scmp.ne.s32.totalorder %s178, %s180
      %p184 = scmp.eq.s32.totalorder %s18, 0
      %p185 = por %p183, %p184
      %p186 = scmp.ne.s32.totalorder %s178, %s180
      %p187 = scmp.eq.s32.totalorder %s23, 1
      %p188 = por %p186, %p187
      %p189 = scmp.ne.s32.totalorder %s180, %s181
      %p190 = scmp.eq.s32.totalorder %s23, 0
      %p191 = por %p189, %p190
      %p192 = scmp.ne.s32.totalorder %s180, %s181
      %p193 = scmp.eq.s32.totalorder %s24, 1
      %p194 = por %p192, %p193
      %p196 = scmp.ne.s32.totalorder %s181, %s195
      %p197 = scmp.eq.s32.totalorder %s24, 0
      %p198 = por %p196, %p197
      %s200 = sadd.s32 %s199, 1
      %p203 = scmp.eq.s32.totalorder %s18, 1
      %p204 = scmp.ne.s32.totalorder %s199, %s201
      %p205 = scmp.eq.s32.totalorder %s18, 0
      %p206 = por %p204, %p205
      %p207 = scmp.ne.s32.totalorder %s199, %s201
      %p208 = scmp.eq.s32.totalorder %s23, 1
      %p209 = por %p207, %p208
      %p210 = scmp.ne.s32.totalorder %s201, %s202
      %p211 = scmp.eq.s32.totalorder %s23, 0
      %p212 = por %p210, %p211
      %p213 = scmp.ne.s32.totalorder %s201, %s202
      %p214 = scmp.eq.s32.totalorder %s24, 1
      %p215 = por %p213, %p214
      %p217 = scmp.ne.s32.totalorder %s202, %s216
      %p218 = scmp.eq.s32.totalorder %s24, 0
      %p219 = por %p217, %p218
      %s220 = ssub.s32 %s18, %s25
      %p221 = scmp.eq.s32.totalorder %s220, 0
      %s223 = sadd.s32 %s222, 1
      %s224 = scalar_select %p221, %s222, %s223
      %p227 = pneg %p221
      %p228 = scmp.eq.s32.totalorder %s18, 1
      %p229 = por %p227, %p228
      %p230 = scmp.ne.s32.totalorder %s222, %s225
      %p231 = scmp.eq.s32.totalorder %s18, 0
      %p232 = por %p230, %p231
      %p233 = scmp.ne.s32.totalorder %s222, %s225
      %p234 = scmp.eq.s32.totalorder %s23, 1
      %p235 = por %p233, %p234
      %p236 = scmp.ne.s32.totalorder %s225, %s226
      %p237 = scmp.eq.s32.totalorder %s23, 0
      %p238 = por %p236, %p237
      %p239 = scmp.ne.s32.totalorder %s225, %s226
      %p240 = scmp.eq.s32.totalorder %s24, 1
      %p241 = por %p239, %p240
      %p243 = scmp.ne.s32.totalorder %s226, %s242
      %p244 = scmp.eq.s32.totalorder %s24, 0
      %p245 = por %p243, %p244
      %p246 = scmp.le.s32.totalorder 1, %s18
      %p247 = scmp.lt.s32.totalorder %s18, 3
      %p248 = pnand %p246, %p247
      %p249 = pneg %p248
      // Predicated region
      $region9: #{cnn_forward.1} parent=5 // pred_check
        _
      $region10: #{cnn_forward.1} parent=5 // pred_check_branch
        %251 = sbr.rel (%p248) target = $region12
      $region11: #{cnn_forward.1} parent=5 // pred_region
        %s252 = ssub.s32 %s18, 1
        // Predicated region
        $region13: #{cnn_forward.1} parent=11 // pred_check
          %p253 = pneg %p65
        $region14: #{cnn_forward.1} parent=11 // pred_check_branch
          %255 = sbr.rel (%p253) target = $region16
        $region15: #{cnn_forward.1} parent=11 // pred_region
          _
        $region16: #{cnn_forward.1} parent=11 // pred_fallthru
          _
        // Predicated region
        $region17: #{cnn_forward.1} parent=11 // pred_check
          %p256 = pneg %p86
        $region18: #{cnn_forward.1} parent=11 // pred_check_branch
          %258 = sbr.rel (%p256) target = $region20
        $region19: #{cnn_forward.1} parent=11 // pred_region
          _
        $region20: #{cnn_forward.1} parent=11 // pred_fallthru
          _
        // Predicated region
        $region21: #{cnn_forward.1} parent=11 // pred_check
          %p259 = pneg %p107
        $region22: #{cnn_forward.1} parent=11 // pred_check_branch
          %261 = sbr.rel (%p259) target = $region24
        $region23: #{cnn_forward.1} parent=11 // pred_region
          _
        $region24: #{cnn_forward.1} parent=11 // pred_fallthru
          _
        // Predicated region
        $region25: #{cnn_forward.1} parent=11 // pred_check
          %p262 = pneg %p128
        $region26: #{cnn_forward.1} parent=11 // pred_check_branch
          %264 = sbr.rel (%p262) target = $region28
        $region27: #{cnn_forward.1} parent=11 // pred_region
          _
        $region28: #{cnn_forward.1} parent=11 // pred_fallthru
          _
        // Predicated region
        $region29: #{cnn_forward.1} parent=11 // pred_check
          %p265 = pneg %p149
        $region30: #{cnn_forward.1} parent=11 // pred_check_branch
          %267 = sbr.rel (%p265) target = $region32
        $region31: #{cnn_forward.1} parent=11 // pred_region
          _
        $region32: #{cnn_forward.1} parent=11 // pred_fallthru
          _
        // Predicated region
        $region33: #{cnn_forward.1} parent=11 // pred_check
          %p268 = pneg %p170
        $region34: #{cnn_forward.1} parent=11 // pred_check_branch
          %270 = sbr.rel (%p268) target = $region36
        $region35: #{cnn_forward.1} parent=11 // pred_region
          _
        $region36: #{cnn_forward.1} parent=11 // pred_fallthru
          _
        // Predicated region
        $region37: #{cnn_forward.1} parent=11 // pred_check
          %p271 = pneg %p191
        $region38: #{cnn_forward.1} parent=11 // pred_check_branch
          %273 = sbr.rel (%p271) target = $region40
        $region39: #{cnn_forward.1} parent=11 // pred_region
          _
        $region40: #{cnn_forward.1} parent=11 // pred_fallthru
          _
        // Predicated region
        $region41: #{cnn_forward.1} parent=11 // pred_check
          %p274 = pneg %p212
        $region42: #{cnn_forward.1} parent=11 // pred_check_branch
          %276 = sbr.rel (%p274) target = $region44
        $region43: #{cnn_forward.1} parent=11 // pred_region
          _
        $region44: #{cnn_forward.1} parent=11 // pred_fallthru
          _
      $region12: #{cnn_forward.1} parent=5 // pred_fallthru
        _
      %p277 = scmp.lt.s32.totalorder %s18, 2
      // Predicated region
      $region45: #{cnn_forward.1} parent=5 // pred_check
        %p278 = pneg %p277
      $region46: #{cnn_forward.1} parent=5 // pred_check_branch
        %280 = sbr.rel (%p278) target = $region48
      $region47: #{cnn_forward.1} parent=5 // pred_region
        // Predicated region
        $region49: #{cnn_forward.1} parent=47 // pred_check
          %p281 = pneg %p38
        $region50: #{cnn_forward.1} parent=47 // pred_check_branch
          %283 = sbr.rel (%p281) target = $region52
        $region51: #{cnn_forward.1} parent=47 // pred_region
          %p284 = scmp.lt.s32.totalorder %s18, 1
          %s285 = scalar_select %p284, %s18, 1
          %s286 = smul.addr %s285, 98
          %s287 = smul.addr %s286, 4
          %s288 = scalar_lea.vmem %s0, %s287
        $region52: #{cnn_forward.1} parent=47 // pred_fallthru
          _
      $region48: #{cnn_forward.1} parent=5 // pred_fallthru
        _
      %p289 = scmp.le.s32.totalorder 1, %s18
      %p290 = scmp.lt.s32.totalorder %s18, 3
      %p291 = pnand %p289, %p290
      %p292 = pneg %p291
      // Predicated region
      $region53: #{cnn_forward.1} parent=5 // pred_check
        _
      $region54: #{cnn_forward.1} parent=5 // pred_check_branch
        %294 = sbr.rel (%p291) target = $region56
      $region55: #{cnn_forward.1} parent=5 // pred_region
        %s295 = ssub.s32 %s18, 1
        %p296 = scmp.lt.s32.totalorder %s23, 1
        %s297 = scalar_select %p296, %s23, 1
        %s298 = smul.addr %s297, 98
        %s299 = smul.addr %s298, 4
        %s300 = scalar_lea.vmem %s0, %s299
        %p301 = pneg %p44
        %p302 = pneg %p41
        %p303 = pneg %p65
        %p304 = pneg %p62
        %p305 = pneg %p86
        %p306 = pneg %p83
        %p307 = pneg %p107
        %p308 = pneg %p104
        %p309 = pneg %p128
        %p310 = pneg %p125
        %p311 = pneg %p149
        %p312 = pneg %p146
        %p313 = pneg %p170
        %p314 = pneg %p167
        %p315 = pneg %p191
        %p316 = pneg %p188
        %p317 = pneg %p212
        %p318 = pneg %p209
        %p319 = pneg %p238
        %p320 = pneg %p235
        %s321 = sand.u32 %s225, 1
        %s322 = scalar_lea.sflag [#allocation6], %s321
        %s323 = sand.u32 %s225, 1
        %s324 = scalar_lea.vmem [#allocation5], %s323
        %p325 = scmp.lt.s32.totalorder %s23, 1
        %s326 = scalar_select %p325, %s23, 1
        %s327 = smul.addr %s326, 98
        %s328 = smul.addr %s327, 4
        %s329 = scalar_lea.vmem %s0, %s328
        %v331 = vld [vmem:[%s1] sm:$0xf]
        %v332 = vld [vmem:[%s1 + $0x4] sm:$0x1]
        %v333 = vld [vmem:[%s2] sm:$0x1]
        %v334 = vld [vmem:[%s3] sm:$0xf]
        %v335 = vld [vmem:[%s3 + $0x4] sm:$0xf]
        %v336 = vld [vmem:[%s3 + $0x8] sm:$0xf]
        %v337 = vld [vmem:[%s3 + $0xc] sm:$0xf]
        %v338 = vld [vmem:[%s3 + $0x10] sm:$0xf]
        %v339 = vld [vmem:[%s3 + $0x14] sm:$0xf]
        %v340 = vld [vmem:[%s3 + $0x18] sm:$0xf]
        %v341 = vld [vmem:[%s3 + $0x1c] sm:$0xf]
        %v342 = vld [vmem:[%s3 + $0x20] sm:$0xf]
        %v343 = vld [vmem:[%s3 + $0x24] sm:$0xf]
        %v344 = vld [vmem:[%s3 + $0x28] sm:$0xf]
        %v345 = vld [vmem:[%s3 + $0x2c] sm:$0xf]
        %v346 = vld [vmem:[%s3 + $0x30] sm:$0xf]
        %v347 = vld [vmem:[%s3 + $0x34] sm:$0xf]
        %v348 = vld [vmem:[%s3 + $0x38] sm:$0xf]
        %v349 = vld [vmem:[%s3 + $0x3c] sm:$0xf]
        %v350 = vld [vmem:[%s3 + $0x40] sm:$0xf]
        %v351 = vld [vmem:[%s3 + $0x44] sm:$0xf]
        %v352 = vld [vmem:[%s3 + $0x48] sm:$0xf]
        %v353 = vld [vmem:[%s3 + $0x4c] sm:$0xf]
        %v354 = vld [vmem:[%s3 + $0x50] sm:$0xf]
        %v355 = vld [vmem:[%s3 + $0x54] sm:$0xf]
        %v356 = vld [vmem:[%s3 + $0x58] sm:$0xf]
        %v357 = vld [vmem:[%s3 + $0x5c] sm:$0xf]
        %v358 = vld [vmem:[%s3 + $0x60] sm:$0xf]
        %v359 = vld [vmem:[%s3 + $0x64] sm:$0xf]
        %v360 = vld [vmem:[%s3 + $0x68] sm:$0xf]
        %v361 = vld [vmem:[%s3 + $0x6c] sm:$0xf]
        %v362 = vld [vmem:[%s3 + $0x70] sm:$0xf]
        %v363 = vld [vmem:[%s3 + $0x74] sm:$0xf]
        %v364 = vld [vmem:[%s3 + $0x78] sm:$0xf]
        %v365 = vld [vmem:[%s3 + $0x7c] sm:$0xf]
        %v366 = vld [vmem:[%s3 + $0x80] sm:$0xf]
        %v367 = vld [vmem:[%s3 + $0x84] sm:$0xf]
        %v368 = vld [vmem:[%s3 + $0x88] sm:$0xf]
        %v369 = vld [vmem:[%s3 + $0x8c] sm:$0xf]
        %v370 = vld [vmem:[%s4] sm:$0x1]
        %v371 = vld [vmem:[%s329] sm:$0xf]
        %v372 = vld [vmem:[%s329 + $0x4] sm:$0xf]
        %v373 = vld [vmem:[%s329 + $0x8] sm:$0xf]
        %v374 = vld [vmem:[%s329 + $0xc] sm:$0xf]
        %v375 = vld [vmem:[%s329 + $0x10] sm:$0xf]
        %v376 = vld [vmem:[%s329 + $0x14] sm:$0xf]
        %v377 = vld [vmem:[%s329 + $0x18] sm:$0xf]
        %v378 = vld [vmem:[%s329 + $0x1c] sm:$0xf]
        %v379 = vld [vmem:[%s329 + $0x20] sm:$0xf]
        %v380 = vld [vmem:[%s329 + $0x24] sm:$0xf]
        %v381 = vld [vmem:[%s329 + $0x28] sm:$0xf]
        %v382 = vld [vmem:[%s329 + $0x2c] sm:$0xf]
        %v383 = vld [vmem:[%s329 + $0x30] sm:$0xf]
        %v384 = vld [vmem:[%s329 + $0x34] sm:$0xf]
        %v385 = vld [vmem:[%s329 + $0x38] sm:$0xf]
        %v386 = vld [vmem:[%s329 + $0x3c] sm:$0xf]
        %v387 = vld [vmem:[%s329 + $0x40] sm:$0xf]
        %v388 = vld [vmem:[%s329 + $0x44] sm:$0xf]
        %v389 = vld [vmem:[%s329 + $0x48] sm:$0xf]
        %v390 = vld [vmem:[%s329 + $0x4c] sm:$0xf]
        %v391 = vld [vmem:[%s329 + $0x50] sm:$0xf]
        %v392 = vld [vmem:[%s329 + $0x54] sm:$0xf]
        %v393 = vld [vmem:[%s329 + $0x58] sm:$0xf]
        %v394 = vld [vmem:[%s329 + $0x5c] sm:$0xf]
        %v395 = vld [vmem:[%s329 + $0x60] sm:$0xf]
        %v396 = vld [vmem:[%s329 + $0x64] sm:$0xf]
        %v397 = vld [vmem:[%s329 + $0x68] sm:$0xf]
        %v398 = vld [vmem:[%s329 + $0x6c] sm:$0xf]
        %v399 = vld [vmem:[%s329 + $0x70] sm:$0xf]
        %v400 = vld [vmem:[%s329 + $0x74] sm:$0xf]
        %v401 = vld [vmem:[%s329 + $0x78] sm:$0xf]
        %v402 = vld [vmem:[%s329 + $0x7c] sm:$0xf]
        %v403 = vld [vmem:[%s329 + $0x80] sm:$0xf]
        %v404 = vld [vmem:[%s329 + $0x84] sm:$0xf]
        %v405 = vld [vmem:[%s329 + $0x88] sm:$0xf]
        %v406 = vld [vmem:[%s329 + $0x8c] sm:$0xf]
        %v407 = vld [vmem:[%s329 + $0x90] sm:$0xf]
        %v408 = vld [vmem:[%s329 + $0x94] sm:$0xf]
        %v409 = vld [vmem:[%s329 + $0x98] sm:$0xf]
        %v410 = vld [vmem:[%s329 + $0x9c] sm:$0xf]
        %v411 = vld [vmem:[%s329 + $0xa0] sm:$0xf]
        %v412 = vld [vmem:[%s329 + $0xa4] sm:$0xf]
        %v413 = vld [vmem:[%s329 + $0xa8] sm:$0xf]
        %v414 = vld [vmem:[%s329 + $0xac] sm:$0xf]
        %v415 = vld [vmem:[%s329 + $0xb0] sm:$0xf]
        %v416 = vld [vmem:[%s329 + $0xb4] sm:$0xf]
        %v417 = vld [vmem:[%s329 + $0xb8] sm:$0xf]
        %v418 = vld [vmem:[%s329 + $0xbc] sm:$0xf]
        %v419 = vld [vmem:[%s329 + $0xc0] sm:$0xf]
        %v420 = vld [vmem:[%s329 + $0xc4] sm:$0xf]
        %v421 = vld [vmem:[%s329 + $0xc8] sm:$0xf]
        %v422 = vld [vmem:[%s329 + $0xcc] sm:$0xf]
        %v423 = vld [vmem:[%s329 + $0xd0] sm:$0xf]
        %v424 = vld [vmem:[%s329 + $0xd4] sm:$0xf]
        %v425 = vld [vmem:[%s329 + $0xd8] sm:$0xf]
        %v426 = vld [vmem:[%s329 + $0xdc] sm:$0xf]
        %v427 = vld [vmem:[%s329 + $0xe0] sm:$0xf]
        %v428 = vld [vmem:[%s329 + $0xe4] sm:$0xf]
        %v429 = vld [vmem:[%s329 + $0xe8] sm:$0xf]
        %v430 = vld [vmem:[%s329 + $0xec] sm:$0xf]
        %v431 = vld [vmem:[%s329 + $0xf0] sm:$0xf]
        %v432 = vld [vmem:[%s329 + $0xf4] sm:$0xf]
        %v433 = vld [vmem:[%s329 + $0xf8] sm:$0xf]
        %v434 = vld [vmem:[%s329 + $0xfc] sm:$0xf]
        %v435 = vld [vmem:[%s329 + $0x100] sm:$0xf]
        %v436 = vld [vmem:[%s329 + $0x104] sm:$0xf]
        %v437 = vld [vmem:[%s329 + $0x108] sm:$0xf]
        %v438 = vld [vmem:[%s329 + $0x10c] sm:$0xf]
        %v439 = vld [vmem:[%s329 + $0x110] sm:$0xf]
        %v440 = vld [vmem:[%s329 + $0x114] sm:$0xf]
        %v441 = vld [vmem:[%s329 + $0x118] sm:$0xf]
        %v442 = vld [vmem:[%s329 + $0x11c] sm:$0xf]
        %v443 = vld [vmem:[%s329 + $0x120] sm:$0xf]
        %v444 = vld [vmem:[%s329 + $0x124] sm:$0xf]
        %v445 = vld [vmem:[%s329 + $0x128] sm:$0xf]
        %v446 = vld [vmem:[%s329 + $0x12c] sm:$0xf]
        %v447 = vld [vmem:[%s329 + $0x130] sm:$0xf]
        %v448 = vld [vmem:[%s329 + $0x134] sm:$0xf]
        %v449 = vld [vmem:[%s329 + $0x138] sm:$0xf]
        %v450 = vld [vmem:[%s329 + $0x13c] sm:$0xf]
        %v451 = vld [vmem:[%s329 + $0x140] sm:$0xf]
        %v452 = vld [vmem:[%s329 + $0x144] sm:$0xf]
        %v453 = vld [vmem:[%s329 + $0x148] sm:$0xf]
        %v454 = vld [vmem:[%s329 + $0x14c] sm:$0xf]
        %v455 = vld [vmem:[%s329 + $0x150] sm:$0xf]
        %v456 = vld [vmem:[%s329 + $0x154] sm:$0xf]
        %v457 = vld [vmem:[%s329 + $0x158] sm:$0xf]
        %v458 = vld [vmem:[%s329 + $0x15c] sm:$0xf]
        %v459 = vld [vmem:[%s329 + $0x160] sm:$0xf]
        %v460 = vld [vmem:[%s329 + $0x164] sm:$0xf]
        %v461 = vld [vmem:[%s329 + $0x168] sm:$0xf]
        %v462 = vld [vmem:[%s329 + $0x16c] sm:$0xf]
        %v463 = vld [vmem:[%s329 + $0x170] sm:$0xf]
        %v464 = vld [vmem:[%s329 + $0x174] sm:$0xf]
        %v465 = vld [vmem:[%s329 + $0x178] sm:$0xf]
        %v466 = vld [vmem:[%s329 + $0x17c] sm:$0xf]
        %v467 = vld [vmem:[%s329 + $0x180] sm:$0xf]
        %v468 = vld [vmem:[%s329 + $0x184] sm:$0xf]
        %v567 = vunpack.c.l.b16 %v371
        %v568 = vunpack.c.l.b16 %v372
        %v569 = vunpack.c.l.b16 %v373
        %v570 = vunpack.c.l.b16 %v374
        %v571 = vunpack.c.l.b16 %v375
        %v572 = vunpack.c.l.b16 %v376
        %v573 = vunpack.c.l.b16 %v377
        %v574 = vunpack.c.l.b16 %v378
        %v575 = vunpack.c.l.b16 %v379
        %v576 = vunpack.c.l.b16 %v380
        %v577 = vunpack.c.l.b16 %v381
        %v578 = vunpack.c.l.b16 %v382
        %v579 = vunpack.c.l.b16 %v383
        %v580 = vunpack.c.l.b16 %v384
        %v581 = vunpack.c.l.b16 %v385
        %v582 = vunpack.c.l.b16 %v386
        %v583 = vunpack.c.l.b16 %v387
        %v584 = vunpack.c.l.b16 %v388
        %v585 = vunpack.c.l.b16 %v389
        %v586 = vunpack.c.l.b16 %v390
        %v587 = vunpack.c.l.b16 %v391
        %v588 = vunpack.c.l.b16 %v392
        %v589 = vunpack.c.l.b16 %v393
        %v590 = vunpack.c.l.b16 %v394
        %v591 = vunpack.c.l.b16 %v395
        %v592 = vunpack.c.l.b16 %v396
        %v593 = vunpack.c.l.b16 %v397
        %v594 = vunpack.c.l.b16 %v398
        %v595 = vunpack.c.l.b16 %v399
        %v596 = vunpack.c.l.b16 %v400
        %v597 = vunpack.c.l.b16 %v401
        %v598 = vunpack.c.l.b16 %v402
        %v599 = vunpack.c.l.b16 %v403
        %v600 = vunpack.c.l.b16 %v404
        %v601 = vunpack.c.l.b16 %v405
        %v602 = vunpack.c.l.b16 %v406
        %v603 = vunpack.c.l.b16 %v407
        %v604 = vunpack.c.l.b16 %v408
        %v605 = vunpack.c.l.b16 %v409
        %v606 = vunpack.c.l.b16 %v410
        %v607 = vunpack.c.l.b16 %v411
        %v608 = vunpack.c.l.b16 %v412
        %v609 = vunpack.c.l.b16 %v413
        %v610 = vunpack.c.l.b16 %v414
        %v611 = vunpack.c.l.b16 %v415
        %v612 = vunpack.c.l.b16 %v416
        %v613 = vunpack.c.l.b16 %v417
        %v614 = vunpack.c.l.b16 %v418
        %v615 = vunpack.c.l.b16 %v419
        %v616 = vunpack.c.l.b16 %v420
        %v617 = vunpack.c.l.b16 %v421
        %v618 = vunpack.c.l.b16 %v422
        %v619 = vunpack.c.l.b16 %v423
        %v620 = vunpack.c.l.b16 %v424
        %v621 = vunpack.c.l.b16 %v425
        %v622 = vunpack.c.l.b16 %v426
        %v623 = vunpack.c.l.b16 %v427
        %v624 = vunpack.c.l.b16 %v428
        %v625 = vunpack.c.l.b16 %v429
        %v626 = vunpack.c.l.b16 %v430
        %v627 = vunpack.c.l.b16 %v431
        %v628 = vunpack.c.l.b16 %v432
        %v629 = vunpack.c.l.b16 %v433
        %v630 = vunpack.c.l.b16 %v434
        %v631 = vunpack.c.l.b16 %v435
        %v632 = vunpack.c.l.b16 %v436
        %v633 = vunpack.c.l.b16 %v437
        %v634 = vunpack.c.l.b16 %v438
        %v635 = vunpack.c.l.b16 %v439
        %v636 = vunpack.c.l.b16 %v440
        %v637 = vunpack.c.l.b16 %v441
        %v638 = vunpack.c.l.b16 %v442
        %v639 = vunpack.c.l.b16 %v443
        %v640 = vunpack.c.l.b16 %v444
        %v641 = vunpack.c.l.b16 %v445
        %v642 = vunpack.c.l.b16 %v446
        %v643 = vunpack.c.l.b16 %v447
        %v644 = vunpack.c.l.b16 %v448
        %v645 = vunpack.c.l.b16 %v449
        %v646 = vunpack.c.l.b16 %v450
        %v647 = vunpack.c.l.b16 %v451
        %v648 = vunpack.c.l.b16 %v452
        %v649 = vunpack.c.l.b16 %v453
        %v650 = vunpack.c.l.b16 %v454
        %v651 = vunpack.c.l.b16 %v455
        %v652 = vunpack.c.l.b16 %v456
        %v653 = vunpack.c.l.b16 %v457
        %v654 = vunpack.c.l.b16 %v458
        %v655 = vunpack.c.l.b16 %v459
        %v656 = vunpack.c.l.b16 %v460
        %v657 = vunpack.c.l.b16 %v461
        %v658 = vunpack.c.l.b16 %v462
        %v659 = vunpack.c.l.b16 %v463
        %v660 = vunpack.c.l.b16 %v464
        %v661 = vunpack.c.l.b16 %v465
        %v662 = vunpack.c.l.b16 %v466
        %v663 = vunpack.c.l.b16 %v467
        %v664 = vunpack.c.l.b16 %v468
        %v665 = vpack.c.b16 %v568, %v567
        %v666 = vpack.c.b16 %v570, %v569
        %v667 = vpack.c.b16 %v572, %v571
        %v668 = vpack.c.b16 %v574, %v573
        %v669 = vpack.c.b16 %v576, %v575
        %v670 = vpack.c.b16 %v578, %v577
        %v671 = vpack.c.b16 %v580, %v579
        %v672 = vpack.c.b16 %v582, %v581
        %v673 = vpack.c.b16 %v584, %v583
        %v674 = vpack.c.b16 %v586, %v585
        %v675 = vpack.c.b16 %v588, %v587
        %v676 = vpack.c.b16 %v590, %v589
        %v677 = vpack.c.b16 %v592, %v591
        %v678 = vpack.c.b16 %v594, %v593
        %v679 = vpack.c.b16 %v596, %v595
        %v680 = vpack.c.b16 %v598, %v597
        %v681 = vpack.c.b16 %v600, %v599
        %v682 = vpack.c.b16 %v602, %v601
        %v683 = vpack.c.b16 %v604, %v603
        %v684 = vpack.c.b16 %v606, %v605
        %v685 = vpack.c.b16 %v608, %v607
        %v686 = vpack.c.b16 %v610, %v609
        %v687 = vpack.c.b16 %v612, %v611
        %v688 = vpack.c.b16 %v614, %v613
        %v689 = vpack.c.b16 %v616, %v615
        %v690 = vpack.c.b16 %v618, %v617
        %v691 = vpack.c.b16 %v620, %v619
        %v692 = vpack.c.b16 %v622, %v621
        %v693 = vpack.c.b16 %v624, %v623
        %v694 = vpack.c.b16 %v626, %v625
        %v695 = vpack.c.b16 %v628, %v627
        %v696 = vpack.c.b16 %v630, %v629
        %v697 = vpack.c.b16 %v632, %v631
        %v698 = vpack.c.b16 %v634, %v633
        %v699 = vpack.c.b16 %v636, %v635
        %v700 = vpack.c.b16 %v638, %v637
        %v701 = vpack.c.b16 %v640, %v639
        %v702 = vpack.c.b16 %v642, %v641
        %v703 = vpack.c.b16 %v644, %v643
        %v704 = vpack.c.b16 %v646, %v645
        %v705 = vpack.c.b16 %v648, %v647
        %v706 = vpack.c.b16 %v650, %v649
        %v707 = vpack.c.b16 %v652, %v651
        %v708 = vpack.c.b16 %v654, %v653
        %v709 = vpack.c.b16 %v656, %v655
        %v710 = vpack.c.b16 %v658, %v657
        %v711 = vpack.c.b16 %v660, %v659
        %v712 = vpack.c.b16 %v662, %v661
        %v713 = vpack.c.b16 %v664, %v663
        %v716 = vunpack.c.l.b16 %v331
        %v717 = vunpack.c.l.b16 %v332
        %v718 = vpack.c.b16 %v717, %v716
        %vm719 = vcmask 72704
        %v721 = vsel %vm719, %v665, 0
        %v724 = vsel %vm719, %v666, 0
        %v727 = vsel %vm719, %v667, 0
        %v730 = vsel %vm719, %v668, 0
        %v733 = vsel %vm719, %v669, 0
        %v736 = vsel %vm719, %v670, 0
        %v739 = vsel %vm719, %v671, 0
        %v742 = vsel %vm719, %v672, 0
        %v745 = vsel %vm719, %v673, 0
        %v748 = vsel %vm719, %v674, 0
        %v751 = vsel %vm719, %v675, 0
        %v754 = vsel %vm719, %v676, 0
        %v757 = vsel %vm719, %v677, 0
        %v760 = vsel %vm719, %v678, 0
        %v763 = vsel %vm719, %v679, 0
        %v766 = vsel %vm719, %v680, 0
        %v769 = vsel %vm719, %v681, 0
        %v772 = vsel %vm719, %v682, 0
        %v775 = vsel %vm719, %v683, 0
        %v778 = vsel %vm719, %v684, 0
        %v781 = vsel %vm719, %v685, 0
        %v784 = vsel %vm719, %v686, 0
        %v787 = vsel %vm719, %v687, 0
        %v790 = vsel %vm719, %v688, 0
        %v793 = vsel %vm719, %v689, 0
        %v796 = vsel %vm719, %v690, 0
        %v799 = vsel %vm719, %v691, 0
        %v802 = vsel %vm719, %v692, 0
        %v805 = vsel %vm719, %v693, 0
        %v808 = vsel %vm719, %v694, 0
        %v811 = vsel %vm719, %v695, 0
        %v814 = vsel %vm719, %v696, 0
        %v817 = vsel %vm719, %v697, 0
        %v820 = vsel %vm719, %v698, 0
        %v823 = vsel %vm719, %v699, 0
        %v826 = vsel %vm719, %v700, 0
        %v829 = vsel %vm719, %v701, 0
        %v832 = vsel %vm719, %v702, 0
        %v835 = vsel %vm719, %v703, 0
        %v838 = vsel %vm719, %v704, 0
        %v841 = vsel %vm719, %v705, 0
        %v844 = vsel %vm719, %v706, 0
        %v847 = vsel %vm719, %v707, 0
        %v850 = vsel %vm719, %v708, 0
        %v853 = vsel %vm719, %v709, 0
        %v856 = vsel %vm719, %v710, 0
        %v859 = vsel %vm719, %v711, 0
        %v862 = vsel %vm719, %v712, 0
        %v865 = vsel %vm719, %v713, 0
        %vm867 = vcmask 1043456
        %vm868 = vcmask 1044480
        %v869 = vsel %vm867, 4294967295, 65535
        %v870 = vsel %vm868, %v869, 0
        %v872 = vand.u32 %v718, %v870
        %874 = vmatpush.bf16.msra.mxu0 0
        %875 = vmatpush.bf16.msra.mxu0 0
        %876 = vmatpush.bf16.msra.mxu0 0
        %877 = vmatpush.bf16.msra.mxu0 0
        %878 = vmatpush.bf16.msra.mxu0 0
        %879 = vmatpush.bf16.msra.mxu0 0
        %880 = vmatpush.bf16.msra.mxu0 0
        %881 = vmatpush.bf16.msra.mxu0 %v872
        %882 = vmatmul.bf16.gmra.mxu0 %v721
        %v883 = vpop.f32.mrf.mxu0
        %v884 = vadd.f32 0.0, %v883
        %v885 = vpop.f32.mrf.mxu0
        %v886 = vadd.f32 0.0, %v885
        %887 = vmatmul.bf16.gmra.mxu0 %v724
        %v888 = vpop.f32.mrf.mxu0
        %v889 = vadd.f32 0.0, %v888
        %v890 = vpop.f32.mrf.mxu0
        %v891 = vadd.f32 0.0, %v890
        %892 = vmatmul.bf16.gmra.mxu0 %v727
        %v893 = vpop.f32.mrf.mxu0
        %v894 = vadd.f32 0.0, %v893
        %v895 = vpop.f32.mrf.mxu0
        %v896 = vadd.f32 0.0, %v895
        %897 = vmatmul.bf16.gmra.mxu0 %v730
        %v898 = vpop.f32.mrf.mxu0
        %v899 = vadd.f32 0.0, %v898
        %v900 = vpop.f32.mrf.mxu0
        %v901 = vadd.f32 0.0, %v900
        %902 = vmatmul.bf16.gmra.mxu0 %v733
        %v903 = vpop.f32.mrf.mxu0
        %v904 = vadd.f32 0.0, %v903
        %v905 = vpop.f32.mrf.mxu0
        %v906 = vadd.f32 0.0, %v905
        %907 = vmatmul.bf16.gmra.mxu0 %v736
        %v908 = vpop.f32.mrf.mxu0
        %v909 = vadd.f32 0.0, %v908
        %v910 = vpop.f32.mrf.mxu0
        %v911 = vadd.f32 0.0, %v910
        %912 = vmatmul.bf16.gmra.mxu0 %v739
        %v913 = vpop.f32.mrf.mxu0
        %v914 = vadd.f32 0.0, %v913
        %v915 = vpop.f32.mrf.mxu0
        %v916 = vadd.f32 0.0, %v915
        %917 = vmatmul.bf16.gmra.mxu0 %v742
        %v918 = vpop.f32.mrf.mxu0
        %v919 = vadd.f32 0.0, %v918
        %v920 = vpop.f32.mrf.mxu0
        %v921 = vadd.f32 0.0, %v920
        %922 = vmatmul.bf16.gmra.mxu0 %v745
        %v923 = vpop.f32.mrf.mxu0
        %v924 = vadd.f32 0.0, %v923
        %v925 = vpop.f32.mrf.mxu0
        %v926 = vadd.f32 0.0, %v925
        %927 = vmatmul.bf16.gmra.mxu0 %v748
        %v928 = vpop.f32.mrf.mxu0
        %v929 = vadd.f32 0.0, %v928
        %v930 = vpop.f32.mrf.mxu0
        %v931 = vadd.f32 0.0, %v930
        %932 = vmatmul.bf16.gmra.mxu0 %v751
        %v933 = vpop.f32.mrf.mxu0
        %v934 = vadd.f32 0.0, %v933
        %v935 = vpop.f32.mrf.mxu0
        %v936 = vadd.f32 0.0, %v935
        %937 = vmatmul.bf16.gmra.mxu0 %v754
        %v938 = vpop.f32.mrf.mxu0
        %v939 = vadd.f32 0.0, %v938
        %v940 = vpop.f32.mrf.mxu0
        %v941 = vadd.f32 0.0, %v940
        %942 = vmatmul.bf16.gmra.mxu0 %v757
        %v943 = vpop.f32.mrf.mxu0
        %v944 = vadd.f32 0.0, %v943
        %v945 = vpop.f32.mrf.mxu0
        %v946 = vadd.f32 0.0, %v945
        %947 = vmatmul.bf16.gmra.mxu0 %v760
        %v948 = vpop.f32.mrf.mxu0
        %v949 = vadd.f32 0.0, %v948
        %v950 = vpop.f32.mrf.mxu0
        %v951 = vadd.f32 0.0, %v950
        %952 = vmatmul.bf16.gmra.mxu0 %v763
        %v953 = vpop.f32.mrf.mxu0
        %v954 = vadd.f32 0.0, %v953
        %v955 = vpop.f32.mrf.mxu0
        %v956 = vadd.f32 0.0, %v955
        %957 = vmatmul.bf16.gmra.mxu0 %v766
        %v958 = vpop.f32.mrf.mxu0
        %v959 = vadd.f32 0.0, %v958
        %v960 = vpop.f32.mrf.mxu0
        %v961 = vadd.f32 0.0, %v960
        %962 = vmatmul.bf16.gmra.mxu0 %v769
        %v963 = vpop.f32.mrf.mxu0
        %v964 = vadd.f32 0.0, %v963
        %v965 = vpop.f32.mrf.mxu0
        %v966 = vadd.f32 0.0, %v965
        %967 = vmatmul.bf16.gmra.mxu0 %v772
        %v968 = vpop.f32.mrf.mxu0
        %v969 = vadd.f32 0.0, %v968
        %v970 = vpop.f32.mrf.mxu0
        %v971 = vadd.f32 0.0, %v970
        %972 = vmatmul.bf16.gmra.mxu0 %v775
        %v973 = vpop.f32.mrf.mxu0
        %v974 = vadd.f32 0.0, %v973
        %v975 = vpop.f32.mrf.mxu0
        %v976 = vadd.f32 0.0, %v975
        %977 = vmatmul.bf16.gmra.mxu0 %v778
        %v978 = vpop.f32.mrf.mxu0
        %v979 = vadd.f32 0.0, %v978
        %v980 = vpop.f32.mrf.mxu0
        %v981 = vadd.f32 0.0, %v980
        %982 = vmatmul.bf16.gmra.mxu0 %v781
        %v983 = vpop.f32.mrf.mxu0
        %v984 = vadd.f32 0.0, %v983
        %v985 = vpop.f32.mrf.mxu0
        %v986 = vadd.f32 0.0, %v985
        %987 = vmatmul.bf16.gmra.mxu0 %v784
        %v988 = vpop.f32.mrf.mxu0
        %v989 = vadd.f32 0.0, %v988
        %v990 = vpop.f32.mrf.mxu0
        %v991 = vadd.f32 0.0, %v990
        %992 = vmatmul.bf16.gmra.mxu0 %v787
        %v993 = vpop.f32.mrf.mxu0
        %v994 = vadd.f32 0.0, %v993
        %v995 = vpop.f32.mrf.mxu0
        %v996 = vadd.f32 0.0, %v995
        %997 = vmatmul.bf16.gmra.mxu0 %v790
        %v998 = vpop.f32.mrf.mxu0
        %v999 = vadd.f32 0.0, %v998
        %v1000 = vpop.f32.mrf.mxu0
        %v1001 = vadd.f32 0.0, %v1000
        %1002 = vmatmul.bf16.gmra.mxu0 %v793
        %v1003 = vpop.f32.mrf.mxu0
        %v1004 = vadd.f32 0.0, %v1003
        %v1005 = vpop.f32.mrf.mxu0
        %v1006 = vadd.f32 0.0, %v1005
        %1007 = vmatmul.bf16.gmra.mxu0 %v796
        %v1008 = vpop.f32.mrf.mxu0
        %v1009 = vadd.f32 0.0, %v1008
        %v1010 = vpop.f32.mrf.mxu0
        %v1011 = vadd.f32 0.0, %v1010
        %1012 = vmatmul.bf16.gmra.mxu0 %v799
        %v1013 = vpop.f32.mrf.mxu0
        %v1014 = vadd.f32 0.0, %v1013
        %v1015 = vpop.f32.mrf.mxu0
        %v1016 = vadd.f32 0.0, %v1015
        %1017 = vmatmul.bf16.gmra.mxu0 %v802
        %v1018 = vpop.f32.mrf.mxu0
        %v1019 = vadd.f32 0.0, %v1018
        %v1020 = vpop.f32.mrf.mxu0
        %v1021 = vadd.f32 0.0, %v1020
        %1022 = vmatmul.bf16.gmra.mxu0 %v805
        %v1023 = vpop.f32.mrf.mxu0
        %v1024 = vadd.f32 0.0, %v1023
        %v1025 = vpop.f32.mrf.mxu0
        %v1026 = vadd.f32 0.0, %v1025
        %1027 = vmatmul.bf16.gmra.mxu0 %v808
        %v1028 = vpop.f32.mrf.mxu0
        %v1029 = vadd.f32 0.0, %v1028
        %v1030 = vpop.f32.mrf.mxu0
        %v1031 = vadd.f32 0.0, %v1030
        %1032 = vmatmul.bf16.gmra.mxu0 %v811
        %v1033 = vpop.f32.mrf.mxu0
        %v1034 = vadd.f32 0.0, %v1033
        %v1035 = vpop.f32.mrf.mxu0
        %v1036 = vadd.f32 0.0, %v1035
        %1037 = vmatmul.bf16.gmra.mxu0 %v814
        %v1038 = vpop.f32.mrf.mxu0
        %v1039 = vadd.f32 0.0, %v1038
        %v1040 = vpop.f32.mrf.mxu0
        %v1041 = vadd.f32 0.0, %v1040
        %1042 = vmatmul.bf16.gmra.mxu0 %v817
        %v1043 = vpop.f32.mrf.mxu0
        %v1044 = vadd.f32 0.0, %v1043
        %v1045 = vpop.f32.mrf.mxu0
        %v1046 = vadd.f32 0.0, %v1045
        %1047 = vmatmul.bf16.gmra.mxu0 %v820
        %v1048 = vpop.f32.mrf.mxu0
        %v1049 = vadd.f32 0.0, %v1048
        %v1050 = vpop.f32.mrf.mxu0
        %v1051 = vadd.f32 0.0, %v1050
        %1052 = vmatmul.bf16.gmra.mxu0 %v823
        %v1053 = vpop.f32.mrf.mxu0
        %v1054 = vadd.f32 0.0, %v1053
        %v1055 = vpop.f32.mrf.mxu0
        %v1056 = vadd.f32 0.0, %v1055
        %1057 = vmatmul.bf16.gmra.mxu0 %v826
        %v1058 = vpop.f32.mrf.mxu0
        %v1059 = vadd.f32 0.0, %v1058
        %v1060 = vpop.f32.mrf.mxu0
        %v1061 = vadd.f32 0.0, %v1060
        %1062 = vmatmul.bf16.gmra.mxu0 %v829
        %v1063 = vpop.f32.mrf.mxu0
        %v1064 = vadd.f32 0.0, %v1063
        %v1065 = vpop.f32.mrf.mxu0
        %v1066 = vadd.f32 0.0, %v1065
        %1067 = vmatmul.bf16.gmra.mxu0 %v832
        %v1068 = vpop.f32.mrf.mxu0
        %v1069 = vadd.f32 0.0, %v1068
        %v1070 = vpop.f32.mrf.mxu0
        %v1071 = vadd.f32 0.0, %v1070
        %1072 = vmatmul.bf16.gmra.mxu0 %v835
        %v1073 = vpop.f32.mrf.mxu0
        %v1074 = vadd.f32 0.0, %v1073
        %v1075 = vpop.f32.mrf.mxu0
        %v1076 = vadd.f32 0.0, %v1075
        %1077 = vmatmul.bf16.gmra.mxu0 %v838
        %v1078 = vpop.f32.mrf.mxu0
        %v1079 = vadd.f32 0.0, %v1078
        %v1080 = vpop.f32.mrf.mxu0
        %v1081 = vadd.f32 0.0, %v1080
        %1082 = vmatmul.bf16.gmra.mxu0 %v841
        %v1083 = vpop.f32.mrf.mxu0
        %v1084 = vadd.f32 0.0, %v1083
        %v1085 = vpop.f32.mrf.mxu0
        %v1086 = vadd.f32 0.0, %v1085
        %1087 = vmatmul.bf16.gmra.mxu0 %v844
        %v1088 = vpop.f32.mrf.mxu0
        %v1089 = vadd.f32 0.0, %v1088
        %v1090 = vpop.f32.mrf.mxu0
        %v1091 = vadd.f32 0.0, %v1090
        %1092 = vmatmul.bf16.gmra.mxu0 %v847
        %v1093 = vpop.f32.mrf.mxu0
        %v1094 = vadd.f32 0.0, %v1093
        %v1095 = vpop.f32.mrf.mxu0
        %v1096 = vadd.f32 0.0, %v1095
        %1097 = vmatmul.bf16.gmra.mxu0 %v850
        %v1098 = vpop.f32.mrf.mxu0
        %v1099 = vadd.f32 0.0, %v1098
        %v1100 = vpop.f32.mrf.mxu0
        %v1101 = vadd.f32 0.0, %v1100
        %1102 = vmatmul.bf16.gmra.mxu0 %v853
        %v1103 = vpop.f32.mrf.mxu0
        %v1104 = vadd.f32 0.0, %v1103
        %v1105 = vpop.f32.mrf.mxu0
        %v1106 = vadd.f32 0.0, %v1105
        %1107 = vmatmul.bf16.gmra.mxu0 %v856
        %v1108 = vpop.f32.mrf.mxu0
        %v1109 = vadd.f32 0.0, %v1108
        %v1110 = vpop.f32.mrf.mxu0
        %v1111 = vadd.f32 0.0, %v1110
        %1112 = vmatmul.bf16.gmra.mxu0 %v859
        %v1113 = vpop.f32.mrf.mxu0
        %v1114 = vadd.f32 0.0, %v1113
        %v1115 = vpop.f32.mrf.mxu0
        %v1116 = vadd.f32 0.0, %v1115
        %1117 = vmatmul.bf16.gmra.mxu0 %v862
        %v1118 = vpop.f32.mrf.mxu0
        %v1119 = vadd.f32 0.0, %v1118
        %v1120 = vpop.f32.mrf.mxu0
        %v1121 = vadd.f32 0.0, %v1120
        %1122 = vmatmul.bf16.gmra.mxu0 %v865
        %v1123 = vpop.f32.mrf.mxu0
        %v1124 = vadd.f32 0.0, %v1123
        %v1125 = vpop.f32.mrf.mxu0
        %v1126 = vadd.f32 0.0, %v1125
        %1127 = vdwg.mxu0
        %vm1128 = vcmask 261120
        %1129 = vst.msk [vmem:[#allocation2] sm:$0xff] %vm1128, 0.0
        %1130 = vst.msk [vmem:[#allocation2 + $0x8] sm:$0xff] %vm1128, 0.0
        %1131 = vst.msk [vmem:[#allocation2 + $0x10] sm:$0xff] %vm1128, 0.0
        %1132 = vst.msk [vmem:[#allocation2 + $0x18] sm:$0xff] %vm1128, 0.0
        %1133 = vst.msk [vmem:[#allocation2 + $0x20] sm:$0xff] %vm1128, 0.0
        %1134 = vst.msk [vmem:[#allocation2 + $0x28] sm:$0xff] %vm1128, 0.0
        %1135 = vst.msk [vmem:[#allocation2 + $0x30] sm:$0xff] %vm1128, 0.0
        %1136 = vst.msk [vmem:[#allocation2 + $0x38] sm:$0xff] %vm1128, 0.0
        %1137 = vst.msk [vmem:[#allocation2 + $0x40] sm:$0xff] %vm1128, 0.0
        %1138 = vst.msk [vmem:[#allocation2 + $0x48] sm:$0xff] %vm1128, 0.0
        %1139 = vst.msk [vmem:[#allocation2 + $0x50] sm:$0xff] %vm1128, 0.0
        %1140 = vst.msk [vmem:[#allocation2 + $0x58] sm:$0xff] %vm1128, 0.0
        %1141 = vst.msk [vmem:[#allocation2 + $0x60] sm:$0xff] %vm1128, 0.0
        %1142 = vst.msk [vmem:[#allocation2 + $0x68] sm:$0xff] %vm1128, 0.0
        %1143 = vst.msk [vmem:[#allocation2 + $0x70] sm:$0xff] %vm1128, 0.0
        %1144 = vst.msk [vmem:[#allocation2 + $0x78] sm:$0xff] %vm1128, 0.0
        %1145 = vst.msk [vmem:[#allocation2 + $0x80] sm:$0xff] %vm1128, 0.0
        %1146 = vst.msk [vmem:[#allocation2 + $0x88] sm:$0xff] %vm1128, 0.0
        %1147 = vst.msk [vmem:[#allocation2 + $0x90] sm:$0xff] %vm1128, 0.0
        %1148 = vst.msk [vmem:[#allocation2 + $0x98] sm:$0xff] %vm1128, 0.0
        %1149 = vst.msk [vmem:[#allocation2 + $0xa0] sm:$0xff] %vm1128, 0.0
        %1150 = vst.msk [vmem:[#allocation2 + $0xa8] sm:$0xff] %vm1128, 0.0
        %1151 = vst.msk [vmem:[#allocation2 + $0xb0] sm:$0xff] %vm1128, 0.0
        %1152 = vst.msk [vmem:[#allocation2 + $0xb8] sm:$0xff] %vm1128, 0.0
        %1153 = vst.msk [vmem:[#allocation2 + $0xc0] sm:$0xff] %vm1128, 0.0
        %1154 = vst.msk [vmem:[#allocation2 + $0xc8] sm:$0xff] %vm1128, 0.0
        %1155 = vst.msk [vmem:[#allocation2 + $0xd0] sm:$0xff] %vm1128, 0.0
        %1156 = vst.msk [vmem:[#allocation2 + $0xd8] sm:$0xff] %vm1128, 0.0
        %1157 = vst.msk [vmem:[#allocation2 + $0xe0] sm:$0xff] %vm1128, 0.0
        %1158 = vst.msk [vmem:[#allocation2 + $0xe8] sm:$0xff] %vm1128, 0.0
        %1159 = vst.msk [vmem:[#allocation2 + $0xf0] sm:$0xff] %vm1128, 0.0
        %1160 = vst.msk [vmem:[#allocation2 + $0xf8] sm:$0xff] %vm1128, 0.0
        %vm1168 = vcmask 1046528
        %v1169 = vrot.slane %v899, 1
        %v1170 = vrot.slane %v901, 1
        %v1171 = vsel %vm1168, %v1169, %v1170
        %v1172 = vrot.slane %v904, 1
        %v1173 = vsel %vm1168, %v1170, %v1172
        %v1174 = vrot.slane %v906, 1
        %v1175 = vsel %vm1168, %v1172, %v1174
        %v1176 = vrot.slane %v909, 1
        %v1177 = vsel %vm1168, %v1174, %v1176
        %v1178 = vrot.slane %v911, 1
        %v1179 = vsel %vm1168, %v1176, %v1178
        %v1180 = vrot.slane %v914, 1
        %v1181 = vsel %vm1168, %v1178, %v1180
        %v1189 = vmax.f32 %v884, %v1171
        %v1190 = vmax.f32 %v886, %v1173
        %v1191 = vmax.f32 %v889, %v1175
        %v1192 = vmax.f32 %v891, %v1177
        %v1193 = vmax.f32 %v894, %v1179
        %v1194 = vmax.f32 %v896, %v1181
        %v1195 = vmax.f32 %v899, %v1180
        %v1203 = vrot.slane %v944, 4
        %v1204 = vrot.slane %v946, 4
        %v1205 = vsel %vm867, %v1203, %v1204
        %v1206 = vrot.slane %v949, 4
        %v1207 = vsel %vm867, %v1204, %v1206
        %v1208 = vrot.slane %v951, 4
        %v1209 = vsel %vm867, %v1206, %v1208
        %v1210 = vrot.slane %v954, 4
        %v1211 = vsel %vm867, %v1208, %v1210
        %v1212 = vrot.slane %v956, 4
        %v1213 = vsel %vm867, %v1210, %v1212
        %v1214 = vrot.slane %v959, 4
        %v1215 = vsel %vm867, %v1212, %v1214
        %v1223 = vmax.f32 %v1189, %v1205
        %v1224 = vmax.f32 %v1190, %v1207
        %v1225 = vmax.f32 %v1191, %v1209
        %v1226 = vmax.f32 %v1192, %v1211
        %v1227 = vmax.f32 %v1193, %v1213
        %v1228 = vmax.f32 %v1194, %v1215
        %v1229 = vmax.f32 %v1195, %v1214
        %vm1236 = vcmask 1042432
        %v1237 = vrot.slane %v959, 5
        %v1238 = vrot.slane %v961, 5
        %v1239 = vsel %vm1236, %v1237, %v1238
        %v1240 = vrot.slane %v964, 5
        %v1241 = vsel %vm1236, %v1238, %v1240
        %v1242 = vrot.slane %v966, 5
        %v1243 = vsel %vm1236, %v1240, %v1242
        %v1244 = vrot.slane %v969, 5
        %v1245 = vsel %vm1236, %v1242, %v1244
        %v1246 = vrot.slane %v971, 5
        %v1247 = vsel %vm1236, %v1244, %v1246
        %v1248 = vrot.slane %v974, 5
        %v1249 = vsel %vm1236, %v1246, %v1248
        %v1257 = vmax.f32 %v1223, %v1239
        %v1258 = vmax.f32 %v1224, %v1241
        %v1259 = vmax.f32 %v1225, %v1243
        %v1260 = vmax.f32 %v1226, %v1245
        %v1261 = vmax.f32 %v1227, %v1247
        %v1262 = vmax.f32 %v1228, %v1249
        %v1263 = vmax.f32 %v1229, %v1248
        %v1265 = vperm.slane %v333, 0
        %v1267 = vadd.f32 %v1257, %v1265
        %v1268 = vadd.f32 %v1258, %v1265
        %v1269 = vadd.f32 %v1259, %v1265
        %v1270 = vadd.f32 %v1260, %v1265
        %v1271 = vadd.f32 %v1261, %v1265
        %v1272 = vadd.f32 %v1262, %v1265
        %v1273 = vadd.f32 %v1263, %v1265
        %v1274 = vmax.f32 %v1267, 0.0
        %v1275 = vmax.f32 %v1268, 0.0
        %v1276 = vmax.f32 %v1269, 0.0
        %v1277 = vmax.f32 %v1270, 0.0
        %v1278 = vmax.f32 %v1271, 0.0
        %v1279 = vmax.f32 %v1272, 0.0
        %v1280 = vmax.f32 %v1273, 0.0
        %s1281 = scalar_lea.vmem [#allocation2], 192
        %vm1282 = vcmask 260096
        %1283 = vst.msk [vmem:[%s1281] sm:$0x7f] %vm1282, %v1274
        %s1284 = scalar_lea.vmem [#allocation2], 200
        %vm1285 = vcmask 261127
        %1286 = vst.msk [vmem:[%s1284 - $0x7] sm:$0x80] %vm1285, %v1274
        %vm1287 = vcmask 259072
        %1288 = vst.msk [vmem:[%s1284 + $0x1] sm:$0x3f] %vm1287, %v1275
        %s1289 = scalar_lea.vmem [#allocation2], 208
        %vm1290 = vcmask 261126
        %1291 = vst.msk [vmem:[%s1289 - $0x6] sm:$0xc0] %vm1290, %v1275
        %vm1292 = vcmask 258048
        %1293 = vst.msk [vmem:[%s1289 + $0x2] sm:$0x1f] %vm1292, %v1276
        %s1294 = scalar_lea.vmem [#allocation2], 216
        %vm1295 = vcmask 261125
        %1296 = vst.msk [vmem:[%s1294 - $0x5] sm:$0xe0] %vm1295, %v1276
        %vm1297 = vcmask 257024
        %1298 = vst.msk [vmem:[%s1294 + $0x3] sm:$0xf] %vm1297, %v1277
        %s1299 = scalar_lea.vmem [#allocation2], 224
        %vm1300 = vcmask 261124
        %1301 = vst.msk [vmem:[%s1299 - $0x4] sm:$0xf0] %vm1300, %v1277
        %vm1302 = vcmask 256000
        %1303 = vst.msk [vmem:[%s1299 + $0x4] sm:$0x7] %vm1302, %v1278
        %s1304 = scalar_lea.vmem [#allocation2], 232
        %vm1305 = vcmask 261123
        %1306 = vst.msk [vmem:[%s1304 - $0x3] sm:$0xf8] %vm1305, %v1278
        %vm1307 = vcmask 254976
        %1308 = vst.msk [vmem:[%s1304 + $0x5] sm:$0x3] %vm1307, %v1279
        %s1309 = scalar_lea.vmem [#allocation2], 240
        %vm1310 = vcmask 261122
        %1311 = vst.msk [vmem:[%s1309 - $0x2] sm:$0xfc] %vm1310, %v1279
        %vm1312 = vcmask 253952
        %1313 = vst.msk [vmem:[%s1309 + $0x6] sm:$0x1] %vm1312, %v1280
        %v1320 = vrot.slane %v929, 1
        %v1321 = vrot.slane %v931, 1
        %v1322 = vsel %vm1168, %v1320, %v1321
        %v1323 = vrot.slane %v934, 1
        %v1324 = vsel %vm1168, %v1321, %v1323
        %v1325 = vrot.slane %v936, 1
        %v1326 = vsel %vm1168, %v1323, %v1325
        %v1327 = vrot.slane %v939, 1
        %v1328 = vsel %vm1168, %v1325, %v1327
        %v1329 = vrot.slane %v941, 1
        %v1330 = vsel %vm1168, %v1327, %v1329
        %v1331 = vrot.slane %v944, 1
        %v1332 = vsel %vm1168, %v1329, %v1331
        %v1340 = vmax.f32 %v914, %v1322
        %v1341 = vmax.f32 %v916, %v1324
        %v1342 = vmax.f32 %v919, %v1326
        %v1343 = vmax.f32 %v921, %v1328
        %v1344 = vmax.f32 %v924, %v1330
        %v1345 = vmax.f32 %v926, %v1332
        %v1346 = vmax.f32 %v929, %v1331
        %v1353 = vrot.slane %v974, 4
        %v1354 = vrot.slane %v976, 4
        %v1355 = vsel %vm867, %v1353, %v1354
        %v1356 = vrot.slane %v979, 4
        %v1357 = vsel %vm867, %v1354, %v1356
        %v1358 = vrot.slane %v981, 4
        %v1359 = vsel %vm867, %v1356, %v1358
        %v1360 = vrot.slane %v984, 4
        %v1361 = vsel %vm867, %v1358, %v1360
        %v1362 = vrot.slane %v986, 4
        %v1363 = vsel %vm867, %v1360, %v1362
        %v1364 = vrot.slane %v989, 4
        %v1365 = vsel %vm867, %v1362, %v1364
        %v1373 = vmax.f32 %v1340, %v1355
        %v1374 = vmax.f32 %v1341, %v1357
        %v1375 = vmax.f32 %v1342, %v1359
        %v1376 = vmax.f32 %v1343, %v1361
        %v1377 = vmax.f32 %v1344, %v1363
        %v1378 = vmax.f32 %v1345, %v1365
        %v1379 = vmax.f32 %v1346, %v1364
        %v1386 = vrot.slane %v989, 5
        %v1387 = vrot.slane %v991, 5
        %v1388 = vsel %vm1236, %v1386, %v1387
        %v1389 = vrot.slane %v994, 5
        %v1390 = vsel %vm1236, %v1387, %v1389
        %v1391 = vrot.slane %v996, 5
        %v1392 = vsel %vm1236, %v1389, %v1391
        %v1393 = vrot.slane %v999, 5
        %v1394 = vsel %vm1236, %v1391, %v1393
        %v1395 = vrot.slane %v1001, 5
        %v1396 = vsel %vm1236, %v1393, %v1395
        %v1397 = vrot.slane %v1004, 5
        %v1398 = vsel %vm1236, %v1395, %v1397
        %v1406 = vmax.f32 %v1373, %v1388
        %v1407 = vmax.f32 %v1374, %v1390
        %v1408 = vmax.f32 %v1375, %v1392
        %v1409 = vmax.f32 %v1376, %v1394
        %v1410 = vmax.f32 %v1377, %v1396
        %v1411 = vmax.f32 %v1378, %v1398
        %v1412 = vmax.f32 %v1379, %v1397
        %v1413 = vadd.f32 %v1406, %v1265
        %v1414 = vadd.f32 %v1407, %v1265
        %v1415 = vadd.f32 %v1408, %v1265
        %v1416 = vadd.f32 %v1409, %v1265
        %v1417 = vadd.f32 %v1410, %v1265
        %v1418 = vadd.f32 %v1411, %v1265
        %v1419 = vadd.f32 %v1412, %v1265
        %v1420 = vmax.f32 %v1413, 0.0
        %v1421 = vmax.f32 %v1414, 0.0
        %v1422 = vmax.f32 %v1415, 0.0
        %v1423 = vmax.f32 %v1416, 0.0
        %v1424 = vmax.f32 %v1417, 0.0
        %v1425 = vmax.f32 %v1418, 0.0
        %v1426 = vmax.f32 %v1419, 0.0
        %s1427 = scalar_lea.vmem [#allocation2], 128
        %1428 = vst.msk [vmem:[%s1427 - $0x1] sm:$0xfc] %vm1310, %v1420
        %1429 = vst.msk [vmem:[%s1427 + $0x7] sm:$0x1] %vm1312, %v1421
        %s1430 = scalar_lea.vmem [#allocation2], 136
        %vm1431 = vcmask 261121
        %1432 = vst.msk [vmem:[%s1430] sm:$0xfe] %vm1431, %v1421
        %s1433 = scalar_lea.vmem [#allocation2], 144
        %1434 = vst.msk [vmem:[%s1433 + $0x1] sm:$0x7f] %vm1282, %v1422
        %s1435 = scalar_lea.vmem [#allocation2], 152
        %1436 = vst.msk [vmem:[%s1435 - $0x6] sm:$0x80] %vm1285, %v1422
        %1437 = vst.msk [vmem:[%s1435 + $0x2] sm:$0x3f] %vm1287, %v1423
        %s1438 = scalar_lea.vmem [#allocation2], 160
        %1439 = vst.msk [vmem:[%s1438 - $0x5] sm:$0xc0] %vm1290, %v1423
        %1440 = vst.msk [vmem:[%s1438 + $0x3] sm:$0x1f] %vm1292, %v1424
        %s1441 = scalar_lea.vmem [#allocation2], 168
        %1442 = vst.msk [vmem:[%s1441 - $0x4] sm:$0xe0] %vm1295, %v1424
        %1443 = vst.msk [vmem:[%s1441 + $0x4] sm:$0xf] %vm1297, %v1425
        %s1444 = scalar_lea.vmem [#allocation2], 176
        %1445 = vst.msk [vmem:[%s1444 - $0x3] sm:$0xf0] %vm1300, %v1425
        %1446 = vst.msk [vmem:[%s1444 + $0x5] sm:$0x7] %vm1302, %v1426
        %v1454 = vrot.slane %v1021, 1
        %v1455 = vrot.slane %v1024, 1
        %v1456 = vsel %vm1168, %v1454, %v1455
        %v1457 = vrot.slane %v1026, 1
        %v1458 = vsel %vm1168, %v1455, %v1457
        %v1459 = vrot.slane %v1029, 1
        %v1460 = vsel %vm1168, %v1457, %v1459
        %v1461 = vrot.slane %v1031, 1
        %v1462 = vsel %vm1168, %v1459, %v1461
        %v1463 = vrot.slane %v1034, 1
        %v1464 = vsel %vm1168, %v1461, %v1463
        %v1465 = vrot.slane %v1036, 1
        %v1466 = vsel %vm1168, %v1463, %v1465
        %v1474 = vmax.f32 %v1006, %v1456
        %v1475 = vmax.f32 %v1009, %v1458
        %v1476 = vmax.f32 %v1011, %v1460
        %v1477 = vmax.f32 %v1014, %v1462
        %v1478 = vmax.f32 %v1016, %v1464
        %v1479 = vmax.f32 %v1019, %v1466
        %v1480 = vmax.f32 %v1021, %v1465
        %v1488 = vrot.slane %v1066, 4
        %v1489 = vrot.slane %v1069, 4
        %v1490 = vsel %vm867, %v1488, %v1489
        %v1491 = vrot.slane %v1071, 4
        %v1492 = vsel %vm867, %v1489, %v1491
        %v1493 = vrot.slane %v1074, 4
        %v1494 = vsel %vm867, %v1491, %v1493
        %v1495 = vrot.slane %v1076, 4
        %v1496 = vsel %vm867, %v1493, %v1495
        %v1497 = vrot.slane %v1079, 4
        %v1498 = vsel %vm867, %v1495, %v1497
        %v1499 = vrot.slane %v1081, 4
        %v1500 = vsel %vm867, %v1497, %v1499
        %v1508 = vmax.f32 %v1474, %v1490
        %v1509 = vmax.f32 %v1475, %v1492
        %v1510 = vmax.f32 %v1476, %v1494
        %v1511 = vmax.f32 %v1477, %v1496
        %v1512 = vmax.f32 %v1478, %v1498
        %v1513 = vmax.f32 %v1479, %v1500
        %v1514 = vmax.f32 %v1480, %v1499
        %v1521 = vrot.slane %v1081, 5
        %v1522 = vrot.slane %v1084, 5
        %v1523 = vsel %vm1236, %v1521, %v1522
        %v1524 = vrot.slane %v1086, 5
        %v1525 = vsel %vm1236, %v1522, %v1524
        %v1526 = vrot.slane %v1089, 5
        %v1527 = vsel %vm1236, %v1524, %v1526
        %v1528 = vrot.slane %v1091, 5
        %v1529 = vsel %vm1236, %v1526, %v1528
        %v1530 = vrot.slane %v1094, 5
        %v1531 = vsel %vm1236, %v1528, %v1530
        %v1532 = vrot.slane %v1096, 5
        %v1533 = vsel %vm1236, %v1530, %v1532
        %v1541 = vmax.f32 %v1508, %v1523
        %v1542 = vmax.f32 %v1509, %v1525
        %v1543 = vmax.f32 %v1510, %v1527
        %v1544 = vmax.f32 %v1511, %v1529
        %v1545 = vmax.f32 %v1512, %v1531
        %v1546 = vmax.f32 %v1513, %v1533
        %v1547 = vmax.f32 %v1514, %v1532
        %v1548 = vadd.f32 %v1541, %v1265
        %v1549 = vadd.f32 %v1542, %v1265
        %v1550 = vadd.f32 %v1543, %v1265
        %v1551 = vadd.f32 %v1544, %v1265
        %v1552 = vadd.f32 %v1545, %v1265
        %v1553 = vadd.f32 %v1546, %v1265
        %v1554 = vadd.f32 %v1547, %v1265
        %v1555 = vmax.f32 %v1548, 0.0
        %v1556 = vmax.f32 %v1549, 0.0
        %v1557 = vmax.f32 %v1550, 0.0
        %v1558 = vmax.f32 %v1551, 0.0
        %v1559 = vmax.f32 %v1552, 0.0
        %v1560 = vmax.f32 %v1553, 0.0
        %v1561 = vmax.f32 %v1554, 0.0
        %s1562 = scalar_lea.vmem [#allocation2], 72
        %1563 = vst.msk [vmem:[%s1562] sm:$0x7f] %vm1282, %v1555
        %s1564 = scalar_lea.vmem [#allocation2], 80
        %1565 = vst.msk [vmem:[%s1564 - $0x7] sm:$0x80] %vm1285, %v1555
        %1566 = vst.msk [vmem:[%s1564 + $0x1] sm:$0x3f] %vm1287, %v1556
        %s1567 = scalar_lea.vmem [#allocation2], 88
        %1568 = vst.msk [vmem:[%s1567 - $0x6] sm:$0xc0] %vm1290, %v1556
        %1569 = vst.msk [vmem:[%s1567 + $0x2] sm:$0x1f] %vm1292, %v1557
        %s1570 = scalar_lea.vmem [#allocation2], 96
        %1571 = vst.msk [vmem:[%s1570 - $0x5] sm:$0xe0] %vm1295, %v1557
        %1572 = vst.msk [vmem:[%s1570 + $0x3] sm:$0xf] %vm1297, %v1558
        %s1573 = scalar_lea.vmem [#allocation2], 104
        %1574 = vst.msk [vmem:[%s1573 - $0x4] sm:$0xf0] %vm1300, %v1558
        %1575 = vst.msk [vmem:[%s1573 + $0x4] sm:$0x7] %vm1302, %v1559
        %s1576 = scalar_lea.vmem [#allocation2], 112
        %1577 = vst.msk [vmem:[%s1576 - $0x3] sm:$0xf8] %vm1305, %v1559
        %1578 = vst.msk [vmem:[%s1576 + $0x5] sm:$0x3] %vm1307, %v1560
        %s1579 = scalar_lea.vmem [#allocation2], 120
        %1580 = vst.msk [vmem:[%s1579 - $0x2] sm:$0xfc] %vm1310, %v1560
        %1581 = vst.msk [vmem:[%s1579 + $0x6] sm:$0x1] %vm1312, %v1561
        %v1588 = vrot.slane %v1051, 1
        %v1589 = vrot.slane %v1054, 1
        %v1590 = vsel %vm1168, %v1588, %v1589
        %v1591 = vrot.slane %v1056, 1
        %v1592 = vsel %vm1168, %v1589, %v1591
        %v1593 = vrot.slane %v1059, 1
        %v1594 = vsel %vm1168, %v1591, %v1593
        %v1595 = vrot.slane %v1061, 1
        %v1596 = vsel %vm1168, %v1593, %v1595
        %v1597 = vrot.slane %v1064, 1
        %v1598 = vsel %vm1168, %v1595, %v1597
        %v1599 = vrot.slane %v1066, 1
        %v1600 = vsel %vm1168, %v1597, %v1599
        %v1608 = vmax.f32 %v1036, %v1590
        %v1609 = vmax.f32 %v1039, %v1592
        %v1610 = vmax.f32 %v1041, %v1594
        %v1611 = vmax.f32 %v1044, %v1596
        %v1612 = vmax.f32 %v1046, %v1598
        %v1613 = vmax.f32 %v1049, %v1600
        %v1614 = vmax.f32 %v1051, %v1599
        %v1621 = vrot.slane %v1096, 4
        %v1622 = vrot.slane %v1099, 4
        %v1623 = vsel %vm867, %v1621, %v1622
        %v1624 = vrot.slane %v1101, 4
        %v1625 = vsel %vm867, %v1622, %v1624
        %v1626 = vrot.slane %v1104, 4
        %v1627 = vsel %vm867, %v1624, %v1626
        %v1628 = vrot.slane %v1106, 4
        %v1629 = vsel %vm867, %v1626, %v1628
        %v1630 = vrot.slane %v1109, 4
        %v1631 = vsel %vm867, %v1628, %v1630
        %v1632 = vrot.slane %v1111, 4
        %v1633 = vsel %vm867, %v1630, %v1632
        %v1641 = vmax.f32 %v1608, %v1623
        %v1642 = vmax.f32 %v1609, %v1625
        %v1643 = vmax.f32 %v1610, %v1627
        %v1644 = vmax.f32 %v1611, %v1629
        %v1645 = vmax.f32 %v1612, %v1631
        %v1646 = vmax.f32 %v1613, %v1633
        %v1647 = vmax.f32 %v1614, %v1632
        %v1654 = vrot.slane %v1111, 5
        %v1655 = vrot.slane %v1114, 5
        %v1656 = vsel %vm1236, %v1654, %v1655
        %v1657 = vrot.slane %v1116, 5
        %v1658 = vsel %vm1236, %v1655, %v1657
        %v1659 = vrot.slane %v1119, 5
        %v1660 = vsel %vm1236, %v1657, %v1659
        %v1661 = vrot.slane %v1121, 5
        %v1662 = vsel %vm1236, %v1659, %v1661
        %v1663 = vrot.slane %v1124, 5
        %v1664 = vsel %vm1236, %v1661, %v1663
        %v1665 = vrot.slane %v1126, 5
        %v1666 = vsel %vm1236, %v1663, %v1665
        %v1674 = vmax.f32 %v1641, %v1656
        %v1675 = vmax.f32 %v1642, %v1658
        %v1676 = vmax.f32 %v1643, %v1660
        %v1677 = vmax.f32 %v1644, %v1662
        %v1678 = vmax.f32 %v1645, %v1664
        %v1679 = vmax.f32 %v1646, %v1666
        %v1680 = vmax.f32 %v1647, %v1665
        %v1681 = vadd.f32 %v1674, %v1265
        %v1682 = vadd.f32 %v1675, %v1265
        %v1683 = vadd.f32 %v1676, %v1265
        %v1684 = vadd.f32 %v1677, %v1265
        %v1685 = vadd.f32 %v1678, %v1265
        %v1686 = vadd.f32 %v1679, %v1265
        %v1687 = vadd.f32 %v1680, %v1265
        %v1688 = vmax.f32 %v1681, 0.0
        %v1689 = vmax.f32 %v1682, 0.0
        %v1690 = vmax.f32 %v1683, 0.0
        %v1691 = vmax.f32 %v1684, 0.0
        %v1692 = vmax.f32 %v1685, 0.0
        %v1693 = vmax.f32 %v1686, 0.0
        %v1694 = vmax.f32 %v1687, 0.0
        %s1695 = scalar_lea.vmem [#allocation2], 8
        %1696 = vst.msk [vmem:[%s1695 - $0x1] sm:$0xfc] %vm1310, %v1688
        %1697 = vst.msk [vmem:[%s1695 + $0x7] sm:$0x1] %vm1312, %v1689
        %s1698 = scalar_lea.vmem [#allocation2], 16
        %1699 = vst.msk [vmem:[%s1698] sm:$0xfe] %vm1431, %v1689
        %s1700 = scalar_lea.vmem [#allocation2], 24
        %1701 = vst.msk [vmem:[%s1700 + $0x1] sm:$0x7f] %vm1282, %v1690
        %s1702 = scalar_lea.vmem [#allocation2], 32
        %1703 = vst.msk [vmem:[%s1702 - $0x6] sm:$0x80] %vm1285, %v1690
        %1704 = vst.msk [vmem:[%s1702 + $0x2] sm:$0x3f] %vm1287, %v1691
        %s1705 = scalar_lea.vmem [#allocation2], 40
        %1706 = vst.msk [vmem:[%s1705 - $0x5] sm:$0xc0] %vm1290, %v1691
        %1707 = vst.msk [vmem:[%s1705 + $0x3] sm:$0x1f] %vm1292, %v1692
        %s1708 = scalar_lea.vmem [#allocation2], 48
        %1709 = vst.msk [vmem:[%s1708 - $0x4] sm:$0xe0] %vm1295, %v1692
        %1710 = vst.msk [vmem:[%s1708 + $0x4] sm:$0xf] %vm1297, %v1693
        %s1711 = scalar_lea.vmem [#allocation2], 56
        %1712 = vst.msk [vmem:[%s1711 - $0x3] sm:$0xf0] %vm1300, %v1693
        %1713 = vst.msk [vmem:[%s1711 + $0x5] sm:$0x7] %vm1302, %v1694
        %v1714 = vld [vmem:[#allocation2] sm:$0x7f]
        %v1715 = vld [vmem:[#allocation2 + $0x8] sm:$0x7f]
        %v1716 = vld [vmem:[#allocation2 + $0x10] sm:$0x7f]
        %v1717 = vld [vmem:[#allocation2 + $0x18] sm:$0x7f]
        %v1718 = vld [vmem:[#allocation2 + $0x20] sm:$0x7f]
        %v1719 = vld [vmem:[#allocation2 + $0x28] sm:$0x7f]
        %v1720 = vld [vmem:[#allocation2 + $0x30] sm:$0x7f]
        %s1721 = scalar_lea.vmem [#allocation2], 64
        %v1722 = vld [vmem:[%s1721] sm:$0x7f]
        %v1723 = vld [vmem:[%s1721 + $0x8] sm:$0x7f]
        %v1724 = vld [vmem:[%s1721 + $0x10] sm:$0x7f]
        %v1725 = vld [vmem:[%s1721 + $0x18] sm:$0x7f]
        %v1726 = vld [vmem:[%s1721 + $0x20] sm:$0x7f]
        %v1727 = vld [vmem:[%s1721 + $0x28] sm:$0x7f]
        %v1728 = vld [vmem:[%s1721 + $0x30] sm:$0x7f]
        %v1729 = vld [vmem:[#allocation2 + $0x1] sm:$0x7f]
        %v1730 = vld [vmem:[#allocation2 + $0x9] sm:$0x7f]
        %v1731 = vld [vmem:[#allocation2 + $0x11] sm:$0x7f]
        %v1732 = vld [vmem:[#allocation2 + $0x19] sm:$0x7f]
        %v1733 = vld [vmem:[#allocation2 + $0x21] sm:$0x7f]
        %v1734 = vld [vmem:[#allocation2 + $0x29] sm:$0x7f]
        %v1735 = vld [vmem:[#allocation2 + $0x31] sm:$0x7f]
        %v1736 = vld [vmem:[%s1427] sm:$0x7f]
        %v1737 = vld [vmem:[%s1427 + $0x8] sm:$0x7f]
        %v1738 = vld [vmem:[%s1427 + $0x10] sm:$0x7f]
        %v1739 = vld [vmem:[%s1427 + $0x18] sm:$0x7f]
        %v1740 = vld [vmem:[%s1427 + $0x20] sm:$0x7f]
        %v1741 = vld [vmem:[%s1427 + $0x28] sm:$0x7f]
        %v1742 = vld [vmem:[%s1427 + $0x30] sm:$0x7f]
        %v1743 = vld [vmem:[%s1281] sm:$0x7f]
        %v1744 = vld [vmem:[%s1281 + $0x8] sm:$0x7f]
        %v1745 = vld [vmem:[%s1281 + $0x10] sm:$0x7f]
        %v1746 = vld [vmem:[%s1281 + $0x18] sm:$0x7f]
        %v1747 = vld [vmem:[%s1281 + $0x20] sm:$0x7f]
        %v1748 = vld [vmem:[%s1281 + $0x28] sm:$0x7f]
        %v1749 = vld [vmem:[%s1281 + $0x30] sm:$0x7f]
        %v1750 = vld [vmem:[%s1427 + $0x1] sm:$0x7f]
        %v1751 = vld [vmem:[%s1427 + $0x9] sm:$0x7f]
        %v1752 = vld [vmem:[%s1427 + $0x11] sm:$0x7f]
        %v1753 = vld [vmem:[%s1427 + $0x19] sm:$0x7f]
        %v1754 = vld [vmem:[%s1427 + $0x21] sm:$0x7f]
        %v1755 = vld [vmem:[%s1427 + $0x29] sm:$0x7f]
        %v1756 = vld [vmem:[%s1427 + $0x31] sm:$0x7f]
        %v1757 = vld [vmem:[%s1695] sm:$0x7f]
        %v1758 = vld [vmem:[%s1695 + $0x8] sm:$0x7f]
        %v1759 = vld [vmem:[%s1695 + $0x10] sm:$0x7f]
        %v1760 = vld [vmem:[%s1695 + $0x18] sm:$0x7f]
        %v1761 = vld [vmem:[%s1695 + $0x20] sm:$0x7f]
        %v1762 = vld [vmem:[%s1695 + $0x28] sm:$0x7f]
        %v1763 = vld [vmem:[%s1695 + $0x30] sm:$0x7f]
        %v1764 = vld [vmem:[%s1562] sm:$0x7f]
        %v1765 = vld [vmem:[%s1562 + $0x8] sm:$0x7f]
        %v1766 = vld [vmem:[%s1562 + $0x10] sm:$0x7f]
        %v1767 = vld [vmem:[%s1562 + $0x18] sm:$0x7f]
        %v1768 = vld [vmem:[%s1562 + $0x20] sm:$0x7f]
        %v1769 = vld [vmem:[%s1562 + $0x28] sm:$0x7f]
        %v1770 = vld [vmem:[%s1562 + $0x30] sm:$0x7f]
        %v1771 = vld [vmem:[%s1695 + $0x1] sm:$0x7f]
        %v1772 = vld [vmem:[%s1695 + $0x9] sm:$0x7f]
        %v1773 = vld [vmem:[%s1695 + $0x11] sm:$0x7f]
        %v1774 = vld [vmem:[%s1695 + $0x19] sm:$0x7f]
        %v1775 = vld [vmem:[%s1695 + $0x21] sm:$0x7f]
        %v1776 = vld [vmem:[%s1695 + $0x29] sm:$0x7f]
        %v1777 = vld [vmem:[%s1695 + $0x31] sm:$0x7f]
        %1785 = vrot.lane.b32.xlu0 %v1722, 32
        %v1786 = vpop.permute.xlu0 %1785
        %1787 = vrot.lane.b32.xlu0 %v1723, 32
        %v1788 = vpop.permute.xlu0 %1787
        %1789 = vrot.lane.b32.xlu0 %v1724, 32
        %v1790 = vpop.permute.xlu0 %1789
        %1791 = vrot.lane.b32.xlu0 %v1725, 32
        %v1792 = vpop.permute.xlu0 %1791
        %1793 = vrot.lane.b32.xlu0 %v1726, 32
        %v1794 = vpop.permute.xlu0 %1793
        %1795 = vrot.lane.b32.xlu0 %v1727, 32
        %v1796 = vpop.permute.xlu0 %1795
        %1797 = vrot.lane.b32.xlu0 %v1728, 32
        %v1798 = vpop.permute.xlu0 %1797
        %1813 = vrot.lane.b32.xlu0 %v1729, 64
        %v1814 = vpop.permute.xlu0 %1813
        %1815 = vrot.lane.b32.xlu0 %v1730, 64
        %v1816 = vpop.permute.xlu0 %1815
        %1817 = vrot.lane.b32.xlu0 %v1731, 64
        %v1818 = vpop.permute.xlu0 %1817
        %1819 = vrot.lane.b32.xlu0 %v1732, 64
        %v1820 = vpop.permute.xlu0 %1819
        %1821 = vrot.lane.b32.xlu0 %v1733, 64
        %v1822 = vpop.permute.xlu0 %1821
        %1823 = vrot.lane.b32.xlu0 %v1734, 64
        %v1824 = vpop.permute.xlu0 %1823
        %1825 = vrot.lane.b32.xlu0 %v1735, 64
        %v1826 = vpop.permute.xlu0 %1825
        %1841 = vrot.lane.b32.xlu0 %v1736, 96
        %v1842 = vpop.permute.xlu0 %1841
        %1843 = vrot.lane.b32.xlu0 %v1737, 96
        %v1844 = vpop.permute.xlu0 %1843
        %1845 = vrot.lane.b32.xlu0 %v1738, 96
        %v1846 = vpop.permute.xlu0 %1845
        %1847 = vrot.lane.b32.xlu0 %v1739, 96
        %v1848 = vpop.permute.xlu0 %1847
        %1849 = vrot.lane.b32.xlu0 %v1740, 96
        %v1850 = vpop.permute.xlu0 %1849
        %1851 = vrot.lane.b32.xlu0 %v1741, 96
        %v1852 = vpop.permute.xlu0 %1851
        %1853 = vrot.lane.b32.xlu0 %v1742, 96
        %v1854 = vpop.permute.xlu0 %1853
        %1869 = vrot.lane.b32.xlu0 %v1750, 32
        %v1870 = vpop.permute.xlu0 %1869
        %1871 = vrot.lane.b32.xlu0 %v1751, 32
        %v1872 = vpop.permute.xlu0 %1871
        %1873 = vrot.lane.b32.xlu0 %v1752, 32
        %v1874 = vpop.permute.xlu0 %1873
        %1875 = vrot.lane.b32.xlu0 %v1753, 32
        %v1876 = vpop.permute.xlu0 %1875
        %1877 = vrot.lane.b32.xlu0 %v1754, 32
        %v1878 = vpop.permute.xlu0 %1877
        %1879 = vrot.lane.b32.xlu0 %v1755, 32
        %v1880 = vpop.permute.xlu0 %1879
        %1881 = vrot.lane.b32.xlu0 %v1756, 32
        %v1882 = vpop.permute.xlu0 %1881
        %1897 = vrot.lane.b32.xlu0 %v1757, 64
        %v1898 = vpop.permute.xlu0 %1897
        %1899 = vrot.lane.b32.xlu0 %v1758, 64
        %v1900 = vpop.permute.xlu0 %1899
        %1901 = vrot.lane.b32.xlu0 %v1759, 64
        %v1902 = vpop.permute.xlu0 %1901
        %1903 = vrot.lane.b32.xlu0 %v1760, 64
        %v1904 = vpop.permute.xlu0 %1903
        %1905 = vrot.lane.b32.xlu0 %v1761, 64
        %v1906 = vpop.permute.xlu0 %1905
        %1907 = vrot.lane.b32.xlu0 %v1762, 64
        %v1908 = vpop.permute.xlu0 %1907
        %1909 = vrot.lane.b32.xlu0 %v1763, 64
        %v1910 = vpop.permute.xlu0 %1909
        %1925 = vrot.lane.b32.xlu0 %v1764, 96
        %v1926 = vpop.permute.xlu0 %1925
        %1927 = vrot.lane.b32.xlu0 %v1765, 96
        %v1928 = vpop.permute.xlu0 %1927
        %1929 = vrot.lane.b32.xlu0 %v1766, 96
        %v1930 = vpop.permute.xlu0 %1929
        %1931 = vrot.lane.b32.xlu0 %v1767, 96
        %v1932 = vpop.permute.xlu0 %1931
        %1933 = vrot.lane.b32.xlu0 %v1768, 96
        %v1934 = vpop.permute.xlu0 %1933
        %1935 = vrot.lane.b32.xlu0 %v1769, 96
        %v1936 = vpop.permute.xlu0 %1935
        %1937 = vrot.lane.b32.xlu0 %v1770, 96
        %v1938 = vpop.permute.xlu0 %1937
        %v1946 = vsel %vm1128, %v1714, %v1786
        %v1947 = vsel %vm1128, %v1715, %v1788
        %v1948 = vsel %vm1128, %v1716, %v1790
        %v1949 = vsel %vm1128, %v1717, %v1792
        %v1950 = vsel %vm1128, %v1718, %v1794
        %v1951 = vsel %vm1128, %v1719, %v1796
        %v1952 = vsel %vm1128, %v1720, %v1798
        %vm1953 = vcmask 523264
        %v1954 = vsel %vm1953, %v1946, %v1814
        %v1955 = vsel %vm1953, %v1947, %v1816
        %v1956 = vsel %vm1953, %v1948, %v1818
        %v1957 = vsel %vm1953, %v1949, %v1820
        %v1958 = vsel %vm1953, %v1950, %v1822
        %v1959 = vsel %vm1953, %v1951, %v1824
        %v1960 = vsel %vm1953, %v1952, %v1826
        %vm1961 = vcmask 785408
        %v1962 = vsel %vm1961, %v1954, %v1842
        %v1963 = vsel %vm1961, %v1955, %v1844
        %v1964 = vsel %vm1961, %v1956, %v1846
        %v1965 = vsel %vm1961, %v1957, %v1848
        %v1966 = vsel %vm1961, %v1958, %v1850
        %v1967 = vsel %vm1961, %v1959, %v1852
        %v1968 = vsel %vm1961, %v1960, %v1854
        %v1969 = vsel %vm1128, %v1743, %v1870
        %v1970 = vsel %vm1128, %v1744, %v1872
        %v1971 = vsel %vm1128, %v1745, %v1874
        %v1972 = vsel %vm1128, %v1746, %v1876
        %v1973 = vsel %vm1128, %v1747, %v1878
        %v1974 = vsel %vm1128, %v1748, %v1880
        %v1975 = vsel %vm1128, %v1749, %v1882
        %v1976 = vsel %vm1953, %v1969, %v1898
        %v1977 = vsel %vm1953, %v1970, %v1900
        %v1978 = vsel %vm1953, %v1971, %v1902
        %v1979 = vsel %vm1953, %v1972, %v1904
        %v1980 = vsel %vm1953, %v1973, %v1906
        %v1981 = vsel %vm1953, %v1974, %v1908
        %v1982 = vsel %vm1953, %v1975, %v1910
        %v1983 = vsel %vm1961, %v1976, %v1926
        %v1984 = vsel %vm1961, %v1977, %v1928
        %v1985 = vsel %vm1961, %v1978, %v1930
        %v1986 = vsel %vm1961, %v1979, %v1932
        %v1987 = vsel %vm1961, %v1980, %v1934
        %v1988 = vsel %vm1961, %v1981, %v1936
        %v1989 = vsel %vm1961, %v1982, %v1938
        %1990 = vst [vmem:[#allocation3] sm:$0x7f] %v1962
        %1991 = vst [vmem:[#allocation3 + $0x8] sm:$0x7f] %v1983
        %1992 = vst.msk [vmem:[#allocation3 + $0x10] sm:$0x7f] %vm1282, %v1771
        %v1996 = vrot.slane %v1963, 1
        %v1997 = vrot.slane %v1984, 1
        %v1998 = vrot.slane %v1772, 1
        %2002 = vst [vmem:[#allocation3] sm:$0x80] %v1996
        %2003 = vst [vmem:[#allocation3 + $0x8] sm:$0x80] %v1997
        %2004 = vst.msk [vmem:[#allocation3 + $0x10] sm:$0x80] %vm1285, %v1998
        %2005 = vst [vmem:[#allocation3 + $0x18] sm:$0x3f] %v1996
        %2006 = vst [vmem:[#allocation3 + $0x20] sm:$0x3f] %v1997
        %2007 = vst.msk [vmem:[#allocation3 + $0x28] sm:$0x3f] %vm1287, %v1998
        %v2011 = vrot.slane %v1964, 2
        %v2012 = vrot.slane %v1985, 2
        %v2013 = vrot.slane %v1773, 2
        %2017 = vst [vmem:[#allocation3 + $0x18] sm:$0xc0] %v2011
        %2018 = vst [vmem:[#allocation3 + $0x20] sm:$0xc0] %v2012
        %2019 = vst.msk [vmem:[#allocation3 + $0x28] sm:$0xc0] %vm1290, %v2013
        %2020 = vst [vmem:[#allocation3 + $0x30] sm:$0x1f] %v2011
        %2021 = vst [vmem:[#allocation3 + $0x38] sm:$0x1f] %v2012
        %2022 = vst.msk [vmem:[#allocation3 + $0x40] sm:$0x1f] %vm1292, %v2013
        %v2026 = vrot.slane %v1965, 3
        %v2027 = vrot.slane %v1986, 3
        %v2028 = vrot.slane %v1774, 3
        %2032 = vst [vmem:[#allocation3 + $0x30] sm:$0xe0] %v2026
        %2033 = vst [vmem:[#allocation3 + $0x38] sm:$0xe0] %v2027
        %2034 = vst.msk [vmem:[#allocation3 + $0x40] sm:$0xe0] %vm1295, %v2028
        %2035 = vst [vmem:[#allocation3 + $0x48] sm:$0xf] %v2026
        %2036 = vst [vmem:[#allocation3 + $0x50] sm:$0xf] %v2027
        %2037 = vst.msk [vmem:[#allocation3 + $0x58] sm:$0xf] %vm1297, %v2028
        %v2041 = vrot.slane %v1966, 4
        %v2042 = vrot.slane %v1987, 4
        %v2043 = vrot.slane %v1775, 4
        %2047 = vst [vmem:[#allocation3 + $0x48] sm:$0xf0] %v2041
        %2048 = vst [vmem:[#allocation3 + $0x50] sm:$0xf0] %v2042
        %2049 = vst.msk [vmem:[#allocation3 + $0x58] sm:$0xf0] %vm1300, %v2043
        %2050 = vst [vmem:[#allocation3 + $0x60] sm:$0x7] %v2041
        %2051 = vst [vmem:[#allocation3 + $0x68] sm:$0x7] %v2042
        %2052 = vst.msk [vmem:[#allocation3 + $0x70] sm:$0x7] %vm1302, %v2043
        %v2056 = vrot.slane %v1967, 5
        %v2057 = vrot.slane %v1988, 5
        %v2058 = vrot.slane %v1776, 5
        %2062 = vst [vmem:[#allocation3 + $0x60] sm:$0xf8] %v2056
        %2063 = vst [vmem:[#allocation3 + $0x68] sm:$0xf8] %v2057
        %2064 = vst.msk [vmem:[#allocation3 + $0x70] sm:$0xf8] %vm1305, %v2058
        %2065 = vst [vmem:[#allocation3 + $0x78] sm:$0x3] %v2056
        %2066 = vst [vmem:[#allocation3 + $0x80] sm:$0x3] %v2057
        %2067 = vst.msk [vmem:[#allocation3 + $0x88] sm:$0x3] %vm1307, %v2058
        %v2071 = vrot.slane %v1968, 6
        %v2072 = vrot.slane %v1989, 6
        %v2073 = vrot.slane %v1777, 6
        %2077 = vst [vmem:[#allocation3 + $0x78] sm:$0xfc] %v2071
        %2078 = vst [vmem:[#allocation3 + $0x80] sm:$0xfc] %v2072
        %2079 = vst.msk [vmem:[#allocation3 + $0x88] sm:$0xfc] %vm1310, %v2073
        %2080 = vst [vmem:[#allocation3 + $0x90] sm:$0x1] %v2071
        %2081 = vst [vmem:[#allocation3 + $0x98] sm:$0x1] %v2072
        %2082 = vst.msk [vmem:[#allocation3 + $0xa0] sm:$0x1] %vm1312, %v2073
        %v2083 = vld [vmem:[%s1721] sm:$0x7f]
        %v2084 = vld [vmem:[%s1721 + $0x8] sm:$0x7f]
        %v2085 = vld [vmem:[%s1721 + $0x10] sm:$0x7f]
        %v2086 = vld [vmem:[%s1721 + $0x18] sm:$0x7f]
        %v2087 = vld [vmem:[%s1721 + $0x20] sm:$0x7f]
        %v2088 = vld [vmem:[%s1721 + $0x28] sm:$0x7f]
        %v2089 = vld [vmem:[%s1721 + $0x30] sm:$0x7f]
        %v2090 = vld [vmem:[#allocation2 + $0x1] sm:$0x7f]
        %v2091 = vld [vmem:[#allocation2 + $0x9] sm:$0x7f]
        %v2092 = vld [vmem:[#allocation2 + $0x11] sm:$0x7f]
        %v2093 = vld [vmem:[#allocation2 + $0x19] sm:$0x7f]
        %v2094 = vld [vmem:[#allocation2 + $0x21] sm:$0x7f]
        %v2095 = vld [vmem:[#allocation2 + $0x29] sm:$0x7f]
        %v2096 = vld [vmem:[#allocation2 + $0x31] sm:$0x7f]
        %v2097 = vld [vmem:[%s1721 + $0x1] sm:$0x7f]
        %v2098 = vld [vmem:[%s1721 + $0x9] sm:$0x7f]
        %v2099 = vld [vmem:[%s1721 + $0x11] sm:$0x7f]
        %v2100 = vld [vmem:[%s1721 + $0x19] sm:$0x7f]
        %v2101 = vld [vmem:[%s1721 + $0x21] sm:$0x7f]
        %v2102 = vld [vmem:[%s1721 + $0x29] sm:$0x7f]
        %v2103 = vld [vmem:[%s1721 + $0x31] sm:$0x7f]
        %v2104 = vld [vmem:[%s1281] sm:$0x7f]
        %v2105 = vld [vmem:[%s1281 + $0x8] sm:$0x7f]
        %v2106 = vld [vmem:[%s1281 + $0x10] sm:$0x7f]
        %v2107 = vld [vmem:[%s1281 + $0x18] sm:$0x7f]
        %v2108 = vld [vmem:[%s1281 + $0x20] sm:$0x7f]
        %v2109 = vld [vmem:[%s1281 + $0x28] sm:$0x7f]
        %v2110 = vld [vmem:[%s1281 + $0x30] sm:$0x7f]
        %v2111 = vld [vmem:[%s1427 + $0x1] sm:$0x7f]
        %v2112 = vld [vmem:[%s1427 + $0x9] sm:$0x7f]
        %v2113 = vld [vmem:[%s1427 + $0x11] sm:$0x7f]
        %v2114 = vld [vmem:[%s1427 + $0x19] sm:$0x7f]
        %v2115 = vld [vmem:[%s1427 + $0x21] sm:$0x7f]
        %v2116 = vld [vmem:[%s1427 + $0x29] sm:$0x7f]
        %v2117 = vld [vmem:[%s1427 + $0x31] sm:$0x7f]
        %v2118 = vld [vmem:[%s1281 + $0x1] sm:$0x7f]
        %v2119 = vld [vmem:[%s1281 + $0x9] sm:$0x7f]
        %v2120 = vld [vmem:[%s1281 + $0x11] sm:$0x7f]
        %v2121 = vld [vmem:[%s1281 + $0x19] sm:$0x7f]
        %v2122 = vld [vmem:[%s1281 + $0x21] sm:$0x7f]
        %v2123 = vld [vmem:[%s1281 + $0x29] sm:$0x7f]
        %v2124 = vld [vmem:[%s1281 + $0x31] sm:$0x7f]
        %v2125 = vld [vmem:[%s1562] sm:$0x7f]
        %v2126 = vld [vmem:[%s1562 + $0x8] sm:$0x7f]
        %v2127 = vld [vmem:[%s1562 + $0x10] sm:$0x7f]
        %v2128 = vld [vmem:[%s1562 + $0x18] sm:$0x7f]
        %v2129 = vld [vmem:[%s1562 + $0x20] sm:$0x7f]
        %v2130 = vld [vmem:[%s1562 + $0x28] sm:$0x7f]
        %v2131 = vld [vmem:[%s1562 + $0x30] sm:$0x7f]
        %v2132 = vld [vmem:[%s1695 + $0x1] sm:$0x7f]
        %v2133 = vld [vmem:[%s1695 + $0x9] sm:$0x7f]
        %v2134 = vld [vmem:[%s1695 + $0x11] sm:$0x7f]
        %v2135 = vld [vmem:[%s1695 + $0x19] sm:$0x7f]
        %v2136 = vld [vmem:[%s1695 + $0x21] sm:$0x7f]
        %v2137 = vld [vmem:[%s1695 + $0x29] sm:$0x7f]
        %v2138 = vld [vmem:[%s1695 + $0x31] sm:$0x7f]
        %v2139 = vld [vmem:[%s1562 + $0x1] sm:$0x7f]
        %v2140 = vld [vmem:[%s1562 + $0x9] sm:$0x7f]
        %v2141 = vld [vmem:[%s1562 + $0x11] sm:$0x7f]
        %v2142 = vld [vmem:[%s1562 + $0x19] sm:$0x7f]
        %v2143 = vld [vmem:[%s1562 + $0x21] sm:$0x7f]
        %v2144 = vld [vmem:[%s1562 + $0x29] sm:$0x7f]
        %v2145 = vld [vmem:[%s1562 + $0x31] sm:$0x7f]
        %2153 = vrot.lane.b32.xlu0 %v2090, 32
        %v2154 = vpop.permute.xlu0 %2153
        %2155 = vrot.lane.b32.xlu0 %v2091, 32
        %v2156 = vpop.permute.xlu0 %2155
        %2157 = vrot.lane.b32.xlu0 %v2092, 32
        %v2158 = vpop.permute.xlu0 %2157
        %2159 = vrot.lane.b32.xlu0 %v2093, 32
        %v2160 = vpop.permute.xlu0 %2159
        %2161 = vrot.lane.b32.xlu0 %v2094, 32
        %v2162 = vpop.permute.xlu0 %2161
        %2163 = vrot.lane.b32.xlu0 %v2095, 32
        %v2164 = vpop.permute.xlu0 %2163
        %2165 = vrot.lane.b32.xlu0 %v2096, 32
        %v2166 = vpop.permute.xlu0 %2165
        %2181 = vrot.lane.b32.xlu0 %v2097, 64
        %v2182 = vpop.permute.xlu0 %2181
        %2183 = vrot.lane.b32.xlu0 %v2098, 64
        %v2184 = vpop.permute.xlu0 %2183
        %2185 = vrot.lane.b32.xlu0 %v2099, 64
        %v2186 = vpop.permute.xlu0 %2185
        %2187 = vrot.lane.b32.xlu0 %v2100, 64
        %v2188 = vpop.permute.xlu0 %2187
        %2189 = vrot.lane.b32.xlu0 %v2101, 64
        %v2190 = vpop.permute.xlu0 %2189
        %2191 = vrot.lane.b32.xlu0 %v2102, 64
        %v2192 = vpop.permute.xlu0 %2191
        %2193 = vrot.lane.b32.xlu0 %v2103, 64
        %v2194 = vpop.permute.xlu0 %2193
        %2209 = vrot.lane.b32.xlu0 %v2104, 96
        %v2210 = vpop.permute.xlu0 %2209
        %2211 = vrot.lane.b32.xlu0 %v2105, 96
        %v2212 = vpop.permute.xlu0 %2211
        %2213 = vrot.lane.b32.xlu0 %v2106, 96
        %v2214 = vpop.permute.xlu0 %2213
        %2215 = vrot.lane.b32.xlu0 %v2107, 96
        %v2216 = vpop.permute.xlu0 %2215
        %2217 = vrot.lane.b32.xlu0 %v2108, 96
        %v2218 = vpop.permute.xlu0 %2217
        %2219 = vrot.lane.b32.xlu0 %v2109, 96
        %v2220 = vpop.permute.xlu0 %2219
        %2221 = vrot.lane.b32.xlu0 %v2110, 96
        %v2222 = vpop.permute.xlu0 %2221
        %2237 = vrot.lane.b32.xlu0 %v2118, 32
        %v2238 = vpop.permute.xlu0 %2237
        %2239 = vrot.lane.b32.xlu0 %v2119, 32
        %v2240 = vpop.permute.xlu0 %2239
        %2241 = vrot.lane.b32.xlu0 %v2120, 32
        %v2242 = vpop.permute.xlu0 %2241
        %2243 = vrot.lane.b32.xlu0 %v2121, 32
        %v2244 = vpop.permute.xlu0 %2243
        %2245 = vrot.lane.b32.xlu0 %v2122, 32
        %v2246 = vpop.permute.xlu0 %2245
        %2247 = vrot.lane.b32.xlu0 %v2123, 32
        %v2248 = vpop.permute.xlu0 %2247
        %2249 = vrot.lane.b32.xlu0 %v2124, 32
        %v2250 = vpop.permute.xlu0 %2249
        %2265 = vrot.lane.b32.xlu0 %v2125, 64
        %v2266 = vpop.permute.xlu0 %2265
        %2267 = vrot.lane.b32.xlu0 %v2126, 64
        %v2268 = vpop.permute.xlu0 %2267
        %2269 = vrot.lane.b32.xlu0 %v2127, 64
        %v2270 = vpop.permute.xlu0 %2269
        %2271 = vrot.lane.b32.xlu0 %v2128, 64
        %v2272 = vpop.permute.xlu0 %2271
        %2273 = vrot.lane.b32.xlu0 %v2129, 64
        %v2274 = vpop.permute.xlu0 %2273
        %2275 = vrot.lane.b32.xlu0 %v2130, 64
        %v2276 = vpop.permute.xlu0 %2275
        %2277 = vrot.lane.b32.xlu0 %v2131, 64
        %v2278 = vpop.permute.xlu0 %2277
        %2293 = vrot.lane.b32.xlu0 %v2132, 96
        %v2294 = vpop.permute.xlu0 %2293
        %2295 = vrot.lane.b32.xlu0 %v2133, 96
        %v2296 = vpop.permute.xlu0 %2295
        %2297 = vrot.lane.b32.xlu0 %v2134, 96
        %v2298 = vpop.permute.xlu0 %2297
        %2299 = vrot.lane.b32.xlu0 %v2135, 96
        %v2300 = vpop.permute.xlu0 %2299
        %2301 = vrot.lane.b32.xlu0 %v2136, 96
        %v2302 = vpop.permute.xlu0 %2301
        %2303 = vrot.lane.b32.xlu0 %v2137, 96
        %v2304 = vpop.permute.xlu0 %2303
        %2305 = vrot.lane.b32.xlu0 %v2138, 96
        %v2306 = vpop.permute.xlu0 %2305
        %v2314 = vsel %vm1128, %v2083, %v2154
        %v2315 = vsel %vm1128, %v2084, %v2156
        %v2316 = vsel %vm1128, %v2085, %v2158
        %v2317 = vsel %vm1128, %v2086, %v2160
        %v2318 = vsel %vm1128, %v2087, %v2162
        %v2319 = vsel %vm1128, %v2088, %v2164
        %v2320 = vsel %vm1128, %v2089, %v2166
        %v2321 = vsel %vm1953, %v2314, %v2182
        %v2322 = vsel %vm1953, %v2315, %v2184
        %v2323 = vsel %vm1953, %v2316, %v2186
        %v2324 = vsel %vm1953, %v2317, %v2188
        %v2325 = vsel %vm1953, %v2318, %v2190
        %v2326 = vsel %vm1953, %v2319, %v2192
        %v2327 = vsel %vm1953, %v2320, %v2194
        %v2328 = vsel %vm1961, %v2321, %v2210
        %v2329 = vsel %vm1961, %v2322, %v2212
        %v2330 = vsel %vm1961, %v2323, %v2214
        %v2331 = vsel %vm1961, %v2324, %v2216
        %v2332 = vsel %vm1961, %v2325, %v2218
        %v2333 = vsel %vm1961, %v2326, %v2220
        %v2334 = vsel %vm1961, %v2327, %v2222
        %v2335 = vsel %vm1128, %v2111, %v2238
        %v2336 = vsel %vm1128, %v2112, %v2240
        %v2337 = vsel %vm1128, %v2113, %v2242
        %v2338 = vsel %vm1128, %v2114, %v2244
        %v2339 = vsel %vm1128, %v2115, %v2246
        %v2340 = vsel %vm1128, %v2116, %v2248
        %v2341 = vsel %vm1128, %v2117, %v2250
        %v2342 = vsel %vm1953, %v2335, %v2266
        %v2343 = vsel %vm1953, %v2336, %v2268
        %v2344 = vsel %vm1953, %v2337, %v2270
        %v2345 = vsel %vm1953, %v2338, %v2272
        %v2346 = vsel %vm1953, %v2339, %v2274
        %v2347 = vsel %vm1953, %v2340, %v2276
        %v2348 = vsel %vm1953, %v2341, %v2278
        %v2349 = vsel %vm1961, %v2342, %v2294
        %v2350 = vsel %vm1961, %v2343, %v2296
        %v2351 = vsel %vm1961, %v2344, %v2298
        %v2352 = vsel %vm1961, %v2345, %v2300
        %v2353 = vsel %vm1961, %v2346, %v2302
        %v2354 = vsel %vm1961, %v2347, %v2304
        %v2355 = vsel %vm1961, %v2348, %v2306
        %v2359 = vrot.slane %v2328, 7
        %v2360 = vrot.slane %v2349, 7
        %v2361 = vrot.slane %v2139, 7
        %2365 = vst [vmem:[#allocation3 + $0x90] sm:$0xfe] %v2359
        %2366 = vst [vmem:[#allocation3 + $0x98] sm:$0xfe] %v2360
        %2367 = vst.msk [vmem:[#allocation3 + $0xa0] sm:$0xfe] %vm1431, %v2361
        %2368 = vst [vmem:[#allocation3 + $0xa8] sm:$0x7f] %v2329
        %2369 = vst [vmem:[#allocation3 + $0xb0] sm:$0x7f] %v2350
        %2370 = vst.msk [vmem:[#allocation3 + $0xb8] sm:$0x7f] %vm1282, %v2140
        %v2374 = vrot.slane %v2330, 1
        %v2375 = vrot.slane %v2351, 1
        %v2376 = vrot.slane %v2141, 1
        %2380 = vst [vmem:[#allocation3 + $0xa8] sm:$0x80] %v2374
        %2381 = vst [vmem:[#allocation3 + $0xb0] sm:$0x80] %v2375
        %2382 = vst.msk [vmem:[#allocation3 + $0xb8] sm:$0x80] %vm1285, %v2376
        %2383 = vst [vmem:[#allocation3 + $0xc0] sm:$0x3f] %v2374
        %2384 = vst [vmem:[#allocation3 + $0xc8] sm:$0x3f] %v2375
        %2385 = vst.msk [vmem:[#allocation3 + $0xd0] sm:$0x3f] %vm1287, %v2376
        %v2389 = vrot.slane %v2331, 2
        %v2390 = vrot.slane %v2352, 2
        %v2391 = vrot.slane %v2142, 2
        %2395 = vst [vmem:[#allocation3 + $0xc0] sm:$0xc0] %v2389
        %2396 = vst [vmem:[#allocation3 + $0xc8] sm:$0xc0] %v2390
        %2397 = vst.msk [vmem:[#allocation3 + $0xd0] sm:$0xc0] %vm1290, %v2391
        %2398 = vst [vmem:[#allocation3 + $0xd8] sm:$0x1f] %v2389
        %2399 = vst [vmem:[#allocation3 + $0xe0] sm:$0x1f] %v2390
        %2400 = vst.msk [vmem:[#allocation3 + $0xe8] sm:$0x1f] %vm1292, %v2391
        %v2404 = vrot.slane %v2332, 3
        %v2405 = vrot.slane %v2353, 3
        %v2406 = vrot.slane %v2143, 3
        %2410 = vst [vmem:[#allocation3 + $0xd8] sm:$0xe0] %v2404
        %2411 = vst [vmem:[#allocation3 + $0xe0] sm:$0xe0] %v2405
        %2412 = vst.msk [vmem:[#allocation3 + $0xe8] sm:$0xe0] %vm1295, %v2406
        %2413 = vst [vmem:[#allocation3 + $0xf0] sm:$0xf] %v2404
        %2414 = vst [vmem:[#allocation3 + $0xf8] sm:$0xf] %v2405
        %2415 = vst.msk [vmem:[#allocation3 + $0x100] sm:$0xf] %vm1297, %v2406
        %v2419 = vrot.slane %v2333, 4
        %v2420 = vrot.slane %v2354, 4
        %v2421 = vrot.slane %v2144, 4
        %2425 = vst [vmem:[#allocation3 + $0xf0] sm:$0xf0] %v2419
        %2426 = vst [vmem:[#allocation3 + $0xf8] sm:$0xf0] %v2420
        %2427 = vst.msk [vmem:[#allocation3 + $0x100] sm:$0xf0] %vm1300, %v2421
        %2428 = vst [vmem:[#allocation3 + $0x108] sm:$0x7] %v2419
        %2429 = vst [vmem:[#allocation3 + $0x110] sm:$0x7] %v2420
        %2430 = vst.msk [vmem:[#allocation3 + $0x118] sm:$0x7] %vm1302, %v2421
        %v2434 = vrot.slane %v2334, 5
        %v2435 = vrot.slane %v2355, 5
        %v2436 = vrot.slane %v2145, 5
        %2440 = vst [vmem:[#allocation3 + $0x108] sm:$0xf8] %v2434
        %2441 = vst [vmem:[#allocation3 + $0x110] sm:$0xf8] %v2435
        %2442 = vst.msk [vmem:[#allocation3 + $0x118] sm:$0xf8] %vm1305, %v2436
        %2443 = vst [vmem:[#allocation3 + $0x120] sm:$0x3] %v2434
        %2444 = vst [vmem:[#allocation3 + $0x128] sm:$0x3] %v2435
        %2445 = vst.msk [vmem:[#allocation3 + $0x130] sm:$0x3] %vm1307, %v2436
        %v2446 = vld [vmem:[%s1427] sm:$0x7f]
        %v2447 = vld [vmem:[%s1427 + $0x8] sm:$0x7f]
        %v2448 = vld [vmem:[%s1427 + $0x10] sm:$0x7f]
        %v2449 = vld [vmem:[%s1427 + $0x18] sm:$0x7f]
        %v2450 = vld [vmem:[%s1427 + $0x20] sm:$0x7f]
        %v2451 = vld [vmem:[%s1427 + $0x28] sm:$0x7f]
        %v2452 = vld [vmem:[%s1427 + $0x30] sm:$0x7f]
        %v2453 = vld [vmem:[%s1281] sm:$0x7f]
        %v2454 = vld [vmem:[%s1281 + $0x8] sm:$0x7f]
        %v2455 = vld [vmem:[%s1281 + $0x10] sm:$0x7f]
        %v2456 = vld [vmem:[%s1281 + $0x18] sm:$0x7f]
        %v2457 = vld [vmem:[%s1281 + $0x20] sm:$0x7f]
        %v2458 = vld [vmem:[%s1281 + $0x28] sm:$0x7f]
        %v2459 = vld [vmem:[%s1281 + $0x30] sm:$0x7f]
        %v2460 = vld [vmem:[%s1427 + $0x1] sm:$0x7f]
        %v2461 = vld [vmem:[%s1427 + $0x9] sm:$0x7f]
        %v2462 = vld [vmem:[%s1427 + $0x11] sm:$0x7f]
        %v2463 = vld [vmem:[%s1427 + $0x19] sm:$0x7f]
        %v2464 = vld [vmem:[%s1427 + $0x21] sm:$0x7f]
        %v2465 = vld [vmem:[%s1427 + $0x29] sm:$0x7f]
        %v2466 = vld [vmem:[%s1427 + $0x31] sm:$0x7f]
        %v2467 = vld [vmem:[%s1695] sm:$0x7f]
        %v2468 = vld [vmem:[%s1695 + $0x8] sm:$0x7f]
        %v2469 = vld [vmem:[%s1695 + $0x10] sm:$0x7f]
        %v2470 = vld [vmem:[%s1695 + $0x18] sm:$0x7f]
        %v2471 = vld [vmem:[%s1695 + $0x20] sm:$0x7f]
        %v2472 = vld [vmem:[%s1695 + $0x28] sm:$0x7f]
        %v2473 = vld [vmem:[%s1695 + $0x30] sm:$0x7f]
        %v2474 = vld [vmem:[%s1562] sm:$0x7f]
        %v2475 = vld [vmem:[%s1562 + $0x8] sm:$0x7f]
        %v2476 = vld [vmem:[%s1562 + $0x10] sm:$0x7f]
        %v2477 = vld [vmem:[%s1562 + $0x18] sm:$0x7f]
        %v2478 = vld [vmem:[%s1562 + $0x20] sm:$0x7f]
        %v2479 = vld [vmem:[%s1562 + $0x28] sm:$0x7f]
        %v2480 = vld [vmem:[%s1562 + $0x30] sm:$0x7f]
        %v2481 = vld [vmem:[%s1695 + $0x1] sm:$0x7f]
        %v2482 = vld [vmem:[%s1695 + $0x9] sm:$0x7f]
        %v2483 = vld [vmem:[%s1695 + $0x11] sm:$0x7f]
        %v2484 = vld [vmem:[%s1695 + $0x19] sm:$0x7f]
        %v2485 = vld [vmem:[%s1695 + $0x21] sm:$0x7f]
        %v2486 = vld [vmem:[%s1695 + $0x29] sm:$0x7f]
        %v2487 = vld [vmem:[%s1695 + $0x31] sm:$0x7f]
        %v2488 = vld [vmem:[%s1430] sm:$0x7f]
        %v2489 = vld [vmem:[%s1430 + $0x8] sm:$0x7f]
        %v2490 = vld [vmem:[%s1430 + $0x10] sm:$0x7f]
        %v2491 = vld [vmem:[%s1430 + $0x18] sm:$0x7f]
        %v2492 = vld [vmem:[%s1430 + $0x20] sm:$0x7f]
        %v2493 = vld [vmem:[%s1430 + $0x28] sm:$0x7f]
        %v2494 = vld [vmem:[%s1430 + $0x30] sm:$0x7f]
        %v2495 = vld [vmem:[%s1284] sm:$0x7f]
        %v2496 = vld [vmem:[%s1284 + $0x8] sm:$0x7f]
        %v2497 = vld [vmem:[%s1284 + $0x10] sm:$0x7f]
        %v2498 = vld [vmem:[%s1284 + $0x18] sm:$0x7f]
        %v2499 = vld [vmem:[%s1284 + $0x20] sm:$0x7f]
        %v2500 = vld [vmem:[%s1284 + $0x28] sm:$0x7f]
        %v2501 = vld [vmem:[%s1284 + $0x30] sm:$0x7f]
        %v2502 = vld [vmem:[%s1430 + $0x1] sm:$0x7f]
        %v2503 = vld [vmem:[%s1430 + $0x9] sm:$0x7f]
        %v2504 = vld [vmem:[%s1430 + $0x11] sm:$0x7f]
        %v2505 = vld [vmem:[%s1430 + $0x19] sm:$0x7f]
        %v2506 = vld [vmem:[%s1430 + $0x21] sm:$0x7f]
        %v2507 = vld [vmem:[%s1430 + $0x29] sm:$0x7f]
        %v2508 = vld [vmem:[%s1430 + $0x31] sm:$0x7f]
        %2516 = vrot.lane.b32.xlu0 %v2453, 32
        %v2517 = vpop.permute.xlu0 %2516
        %2518 = vrot.lane.b32.xlu0 %v2454, 32
        %v2519 = vpop.permute.xlu0 %2518
        %2520 = vrot.lane.b32.xlu0 %v2455, 32
        %v2521 = vpop.permute.xlu0 %2520
        %2522 = vrot.lane.b32.xlu0 %v2456, 32
        %v2523 = vpop.permute.xlu0 %2522
        %2524 = vrot.lane.b32.xlu0 %v2457, 32
        %v2525 = vpop.permute.xlu0 %2524
        %2526 = vrot.lane.b32.xlu0 %v2458, 32
        %v2527 = vpop.permute.xlu0 %2526
        %2528 = vrot.lane.b32.xlu0 %v2459, 32
        %v2529 = vpop.permute.xlu0 %2528
        %2544 = vrot.lane.b32.xlu0 %v2460, 64
        %v2545 = vpop.permute.xlu0 %2544
        %2546 = vrot.lane.b32.xlu0 %v2461, 64
        %v2547 = vpop.permute.xlu0 %2546
        %2548 = vrot.lane.b32.xlu0 %v2462, 64
        %v2549 = vpop.permute.xlu0 %2548
        %2550 = vrot.lane.b32.xlu0 %v2463, 64
        %v2551 = vpop.permute.xlu0 %2550
        %2552 = vrot.lane.b32.xlu0 %v2464, 64
        %v2553 = vpop.permute.xlu0 %2552
        %2554 = vrot.lane.b32.xlu0 %v2465, 64
        %v2555 = vpop.permute.xlu0 %2554
        %2556 = vrot.lane.b32.xlu0 %v2466, 64
        %v2557 = vpop.permute.xlu0 %2556
        %2572 = vrot.lane.b32.xlu0 %v2467, 96
        %v2573 = vpop.permute.xlu0 %2572
        %2574 = vrot.lane.b32.xlu0 %v2468, 96
        %v2575 = vpop.permute.xlu0 %2574
        %2576 = vrot.lane.b32.xlu0 %v2469, 96
        %v2577 = vpop.permute.xlu0 %2576
        %2578 = vrot.lane.b32.xlu0 %v2470, 96
        %v2579 = vpop.permute.xlu0 %2578
        %2580 = vrot.lane.b32.xlu0 %v2471, 96
        %v2581 = vpop.permute.xlu0 %2580
        %2582 = vrot.lane.b32.xlu0 %v2472, 96
        %v2583 = vpop.permute.xlu0 %2582
        %2584 = vrot.lane.b32.xlu0 %v2473, 96
        %v2585 = vpop.permute.xlu0 %2584
        %2600 = vrot.lane.b32.xlu0 %v2481, 32
        %v2601 = vpop.permute.xlu0 %2600
        %2602 = vrot.lane.b32.xlu0 %v2482, 32
        %v2603 = vpop.permute.xlu0 %2602
        %2604 = vrot.lane.b32.xlu0 %v2483, 32
        %v2605 = vpop.permute.xlu0 %2604
        %2606 = vrot.lane.b32.xlu0 %v2484, 32
        %v2607 = vpop.permute.xlu0 %2606
        %2608 = vrot.lane.b32.xlu0 %v2485, 32
        %v2609 = vpop.permute.xlu0 %2608
        %2610 = vrot.lane.b32.xlu0 %v2486, 32
        %v2611 = vpop.permute.xlu0 %2610
        %2612 = vrot.lane.b32.xlu0 %v2487, 32
        %v2613 = vpop.permute.xlu0 %2612
        %2628 = vrot.lane.b32.xlu0 %v2488, 64
        %v2629 = vpop.permute.xlu0 %2628
        %2630 = vrot.lane.b32.xlu0 %v2489, 64
        %v2631 = vpop.permute.xlu0 %2630
        %2632 = vrot.lane.b32.xlu0 %v2490, 64
        %v2633 = vpop.permute.xlu0 %2632
        %2634 = vrot.lane.b32.xlu0 %v2491, 64
        %v2635 = vpop.permute.xlu0 %2634
        %2636 = vrot.lane.b32.xlu0 %v2492, 64
        %v2637 = vpop.permute.xlu0 %2636
        %2638 = vrot.lane.b32.xlu0 %v2493, 64
        %v2639 = vpop.permute.xlu0 %2638
        %2640 = vrot.lane.b32.xlu0 %v2494, 64
        %v2641 = vpop.permute.xlu0 %2640
        %2656 = vrot.lane.b32.xlu0 %v2495, 96
        %v2657 = vpop.permute.xlu0 %2656
        %2658 = vrot.lane.b32.xlu0 %v2496, 96
        %v2659 = vpop.permute.xlu0 %2658
        %2660 = vrot.lane.b32.xlu0 %v2497, 96
        %v2661 = vpop.permute.xlu0 %2660
        %2662 = vrot.lane.b32.xlu0 %v2498, 96
        %v2663 = vpop.permute.xlu0 %2662
        %2664 = vrot.lane.b32.xlu0 %v2499, 96
        %v2665 = vpop.permute.xlu0 %2664
        %2666 = vrot.lane.b32.xlu0 %v2500, 96
        %v2667 = vpop.permute.xlu0 %2666
        %2668 = vrot.lane.b32.xlu0 %v2501, 96
        %v2669 = vpop.permute.xlu0 %2668
        %v2677 = vsel %vm1128, %v2446, %v2517
        %v2678 = vsel %vm1128, %v2447, %v2519
        %v2679 = vsel %vm1128, %v2448, %v2521
        %v2680 = vsel %vm1128, %v2449, %v2523
        %v2681 = vsel %vm1128, %v2450, %v2525
        %v2682 = vsel %vm1128, %v2451, %v2527
        %v2683 = vsel %vm1128, %v2452, %v2529
        %v2684 = vsel %vm1953, %v2677, %v2545
        %v2685 = vsel %vm1953, %v2678, %v2547
        %v2686 = vsel %vm1953, %v2679, %v2549
        %v2687 = vsel %vm1953, %v2680, %v2551
        %v2688 = vsel %vm1953, %v2681, %v2553
        %v2689 = vsel %vm1953, %v2682, %v2555
        %v2690 = vsel %vm1953, %v2683, %v2557
        %v2691 = vsel %vm1961, %v2684, %v2573
        %v2692 = vsel %vm1961, %v2685, %v2575
        %v2693 = vsel %vm1961, %v2686, %v2577
        %v2694 = vsel %vm1961, %v2687, %v2579
        %v2695 = vsel %vm1961, %v2688, %v2581
        %v2696 = vsel %vm1961, %v2689, %v2583
        %v2697 = vsel %vm1961, %v2690, %v2585
        %v2698 = vsel %vm1128, %v2474, %v2601
        %v2699 = vsel %vm1128, %v2475, %v2603
        %v2700 = vsel %vm1128, %v2476, %v2605
        %v2701 = vsel %vm1128, %v2477, %v2607
        %v2702 = vsel %vm1128, %v2478, %v2609
        %v2703 = vsel %vm1128, %v2479, %v2611
        %v2704 = vsel %vm1128, %v2480, %v2613
        %v2705 = vsel %vm1953, %v2698, %v2629
        %v2706 = vsel %vm1953, %v2699, %v2631
        %v2707 = vsel %vm1953, %v2700, %v2633
        %v2708 = vsel %vm1953, %v2701, %v2635
        %v2709 = vsel %vm1953, %v2702, %v2637
        %v2710 = vsel %vm1953, %v2703, %v2639
        %v2711 = vsel %vm1953, %v2704, %v2641
        %v2712 = vsel %vm1961, %v2705, %v2657
        %v2713 = vsel %vm1961, %v2706, %v2659
        %v2714 = vsel %vm1961, %v2707, %v2661
        %v2715 = vsel %vm1961, %v2708, %v2663
        %v2716 = vsel %vm1961, %v2709, %v2665
        %v2717 = vsel %vm1961, %v2710, %v2667
        %v2718 = vsel %vm1961, %v2711, %v2669
        %v2722 = vrot.slane %v2691, 6
        %v2723 = vrot.slane %v2712, 6
        %v2724 = vrot.slane %v2502, 6
        %2728 = vst [vmem:[#allocation3 + $0x120] sm:$0xfc] %v2722
        %2729 = vst [vmem:[#allocation3 + $0x128] sm:$0xfc] %v2723
        %2730 = vst.msk [vmem:[#allocation3 + $0x130] sm:$0xfc] %vm1310, %v2724
        %2731 = vst [vmem:[#allocation3 + $0x138] sm:$0x1] %v2722
        %2732 = vst [vmem:[#allocation3 + $0x140] sm:$0x1] %v2723
        %2733 = vst.msk [vmem:[#allocation3 + $0x148] sm:$0x1] %vm1312, %v2724
        %v2737 = vrot.slane %v2692, 7
        %v2738 = vrot.slane %v2713, 7
        %v2739 = vrot.slane %v2503, 7
        %2743 = vst [vmem:[#allocation3 + $0x138] sm:$0xfe] %v2737
        %2744 = vst [vmem:[#allocation3 + $0x140] sm:$0xfe] %v2738
        %2745 = vst.msk [vmem:[#allocation3 + $0x148] sm:$0xfe] %vm1431, %v2739
        %2746 = vst [vmem:[#allocation3 + $0x150] sm:$0x7f] %v2693
        %2747 = vst [vmem:[#allocation3 + $0x158] sm:$0x7f] %v2714
        %2748 = vst.msk [vmem:[#allocation3 + $0x160] sm:$0x7f] %vm1282, %v2504
        %v2752 = vrot.slane %v2694, 1
        %v2753 = vrot.slane %v2715, 1
        %v2754 = vrot.slane %v2505, 1
        %2758 = vst [vmem:[#allocation3 + $0x150] sm:$0x80] %v2752
        %2759 = vst [vmem:[#allocation3 + $0x158] sm:$0x80] %v2753
        %2760 = vst.msk [vmem:[#allocation3 + $0x160] sm:$0x80] %vm1285, %v2754
        %2761 = vst [vmem:[#allocation3 + $0x168] sm:$0x3f] %v2752
        %2762 = vst [vmem:[#allocation3 + $0x170] sm:$0x3f] %v2753
        %2763 = vst.msk [vmem:[#allocation3 + $0x178] sm:$0x3f] %vm1287, %v2754
        %v2767 = vrot.slane %v2695, 2
        %v2768 = vrot.slane %v2716, 2
        %v2769 = vrot.slane %v2506, 2
        %2773 = vst [vmem:[#allocation3 + $0x168] sm:$0xc0] %v2767
        %2774 = vst [vmem:[#allocation3 + $0x170] sm:$0xc0] %v2768
        %2775 = vst.msk [vmem:[#allocation3 + $0x178] sm:$0xc0] %vm1290, %v2769
        %2776 = vst [vmem:[#allocation3 + $0x180] sm:$0x1f] %v2767
        %2777 = vst [vmem:[#allocation3 + $0x188] sm:$0x1f] %v2768
        %2778 = vst.msk [vmem:[#allocation3 + $0x190] sm:$0x1f] %vm1292, %v2769
        %v2782 = vrot.slane %v2696, 3
        %v2783 = vrot.slane %v2717, 3
        %v2784 = vrot.slane %v2507, 3
        %2788 = vst [vmem:[#allocation3 + $0x180] sm:$0xe0] %v2782
        %2789 = vst [vmem:[#allocation3 + $0x188] sm:$0xe0] %v2783
        %2790 = vst.msk [vmem:[#allocation3 + $0x190] sm:$0xe0] %vm1295, %v2784
        %2791 = vst [vmem:[#allocation3 + $0x198] sm:$0xf] %v2782
        %2792 = vst [vmem:[#allocation3 + $0x1a0] sm:$0xf] %v2783
        %2793 = vst.msk [vmem:[#allocation3 + $0x1a8] sm:$0xf] %vm1297, %v2784
        %v2797 = vrot.slane %v2697, 4
        %v2798 = vrot.slane %v2718, 4
        %v2799 = vrot.slane %v2508, 4
        %2803 = vst [vmem:[#allocation3 + $0x198] sm:$0xf0] %v2797
        %2804 = vst [vmem:[#allocation3 + $0x1a0] sm:$0xf0] %v2798
        %2805 = vst.msk [vmem:[#allocation3 + $0x1a8] sm:$0xf0] %vm1300, %v2799
        %2806 = vst [vmem:[#allocation3 + $0x1b0] sm:$0x7] %v2797
        %2807 = vst [vmem:[#allocation3 + $0x1b8] sm:$0x7] %v2798
        %2808 = vst.msk [vmem:[#allocation3 + $0x1c0] sm:$0x7] %vm1302, %v2799
        %v2809 = vld [vmem:[%s1281] sm:$0x7f]
        %v2810 = vld [vmem:[%s1281 + $0x8] sm:$0x7f]
        %v2811 = vld [vmem:[%s1281 + $0x10] sm:$0x7f]
        %v2812 = vld [vmem:[%s1281 + $0x18] sm:$0x7f]
        %v2813 = vld [vmem:[%s1281 + $0x20] sm:$0x7f]
        %v2814 = vld [vmem:[%s1281 + $0x28] sm:$0x7f]
        %v2815 = vld [vmem:[%s1281 + $0x30] sm:$0x7f]
        %v2816 = vld [vmem:[%s1427 + $0x1] sm:$0x7f]
        %v2817 = vld [vmem:[%s1427 + $0x9] sm:$0x7f]
        %v2818 = vld [vmem:[%s1427 + $0x11] sm:$0x7f]
        %v2819 = vld [vmem:[%s1427 + $0x19] sm:$0x7f]
        %v2820 = vld [vmem:[%s1427 + $0x21] sm:$0x7f]
        %v2821 = vld [vmem:[%s1427 + $0x29] sm:$0x7f]
        %v2822 = vld [vmem:[%s1427 + $0x31] sm:$0x7f]
        %v2823 = vld [vmem:[%s1281 + $0x1] sm:$0x7f]
        %v2824 = vld [vmem:[%s1281 + $0x9] sm:$0x7f]
        %v2825 = vld [vmem:[%s1281 + $0x11] sm:$0x7f]
        %v2826 = vld [vmem:[%s1281 + $0x19] sm:$0x7f]
        %v2827 = vld [vmem:[%s1281 + $0x21] sm:$0x7f]
        %v2828 = vld [vmem:[%s1281 + $0x29] sm:$0x7f]
        %v2829 = vld [vmem:[%s1281 + $0x31] sm:$0x7f]
        %v2830 = vld [vmem:[%s1562] sm:$0x7f]
        %v2831 = vld [vmem:[%s1562 + $0x8] sm:$0x7f]
        %v2832 = vld [vmem:[%s1562 + $0x10] sm:$0x7f]
        %v2833 = vld [vmem:[%s1562 + $0x18] sm:$0x7f]
        %v2834 = vld [vmem:[%s1562 + $0x20] sm:$0x7f]
        %v2835 = vld [vmem:[%s1562 + $0x28] sm:$0x7f]
        %v2836 = vld [vmem:[%s1562 + $0x30] sm:$0x7f]
        %v2837 = vld [vmem:[%s1695 + $0x1] sm:$0x7f]
        %v2838 = vld [vmem:[%s1695 + $0x9] sm:$0x7f]
        %v2839 = vld [vmem:[%s1695 + $0x11] sm:$0x7f]
        %v2840 = vld [vmem:[%s1695 + $0x19] sm:$0x7f]
        %v2841 = vld [vmem:[%s1695 + $0x21] sm:$0x7f]
        %v2842 = vld [vmem:[%s1695 + $0x29] sm:$0x7f]
        %v2843 = vld [vmem:[%s1695 + $0x31] sm:$0x7f]
        %v2844 = vld [vmem:[%s1562 + $0x1] sm:$0x7f]
        %v2845 = vld [vmem:[%s1562 + $0x9] sm:$0x7f]
        %v2846 = vld [vmem:[%s1562 + $0x11] sm:$0x7f]
        %v2847 = vld [vmem:[%s1562 + $0x19] sm:$0x7f]
        %v2848 = vld [vmem:[%s1562 + $0x21] sm:$0x7f]
        %v2849 = vld [vmem:[%s1562 + $0x29] sm:$0x7f]
        %v2850 = vld [vmem:[%s1562 + $0x31] sm:$0x7f]
        %v2851 = vld [vmem:[%s1284] sm:$0x7f]
        %v2852 = vld [vmem:[%s1284 + $0x8] sm:$0x7f]
        %v2853 = vld [vmem:[%s1284 + $0x10] sm:$0x7f]
        %v2854 = vld [vmem:[%s1284 + $0x18] sm:$0x7f]
        %v2855 = vld [vmem:[%s1284 + $0x20] sm:$0x7f]
        %v2856 = vld [vmem:[%s1284 + $0x28] sm:$0x7f]
        %v2857 = vld [vmem:[%s1284 + $0x30] sm:$0x7f]
        %v2858 = vld [vmem:[%s1430 + $0x1] sm:$0x7f]
        %v2859 = vld [vmem:[%s1430 + $0x9] sm:$0x7f]
        %v2860 = vld [vmem:[%s1430 + $0x11] sm:$0x7f]
        %v2861 = vld [vmem:[%s1430 + $0x19] sm:$0x7f]
        %v2862 = vld [vmem:[%s1430 + $0x21] sm:$0x7f]
        %v2863 = vld [vmem:[%s1430 + $0x29] sm:$0x7f]
        %v2864 = vld [vmem:[%s1430 + $0x31] sm:$0x7f]
        %v2865 = vld [vmem:[%s1284 + $0x1] sm:$0x7f]
        %v2866 = vld [vmem:[%s1284 + $0x9] sm:$0x7f]
        %v2867 = vld [vmem:[%s1284 + $0x11] sm:$0x7f]
        %v2868 = vld [vmem:[%s1284 + $0x19] sm:$0x7f]
        %v2869 = vld [vmem:[%s1284 + $0x21] sm:$0x7f]
        %v2870 = vld [vmem:[%s1284 + $0x29] sm:$0x7f]
        %v2871 = vld [vmem:[%s1284 + $0x31] sm:$0x7f]
        %2879 = vrot.lane.b32.xlu0 %v2816, 32
        %v2880 = vpop.permute.xlu0 %2879
        %2881 = vrot.lane.b32.xlu0 %v2817, 32
        %v2882 = vpop.permute.xlu0 %2881
        %2883 = vrot.lane.b32.xlu0 %v2818, 32
        %v2884 = vpop.permute.xlu0 %2883
        %2885 = vrot.lane.b32.xlu0 %v2819, 32
        %v2886 = vpop.permute.xlu0 %2885
        %2887 = vrot.lane.b32.xlu0 %v2820, 32
        %v2888 = vpop.permute.xlu0 %2887
        %2889 = vrot.lane.b32.xlu0 %v2821, 32
        %v2890 = vpop.permute.xlu0 %2889
        %2891 = vrot.lane.b32.xlu0 %v2822, 32
        %v2892 = vpop.permute.xlu0 %2891
        %2907 = vrot.lane.b32.xlu0 %v2823, 64
        %v2908 = vpop.permute.xlu0 %2907
        %2909 = vrot.lane.b32.xlu0 %v2824, 64
        %v2910 = vpop.permute.xlu0 %2909
        %2911 = vrot.lane.b32.xlu0 %v2825, 64
        %v2912 = vpop.permute.xlu0 %2911
        %2913 = vrot.lane.b32.xlu0 %v2826, 64
        %v2914 = vpop.permute.xlu0 %2913
        %2915 = vrot.lane.b32.xlu0 %v2827, 64
        %v2916 = vpop.permute.xlu0 %2915
        %2917 = vrot.lane.b32.xlu0 %v2828, 64
        %v2918 = vpop.permute.xlu0 %2917
        %2919 = vrot.lane.b32.xlu0 %v2829, 64
        %v2920 = vpop.permute.xlu0 %2919
        %2935 = vrot.lane.b32.xlu0 %v2830, 96
        %v2936 = vpop.permute.xlu0 %2935
        %2937 = vrot.lane.b32.xlu0 %v2831, 96
        %v2938 = vpop.permute.xlu0 %2937
        %2939 = vrot.lane.b32.xlu0 %v2832, 96
        %v2940 = vpop.permute.xlu0 %2939
        %2941 = vrot.lane.b32.xlu0 %v2833, 96
        %v2942 = vpop.permute.xlu0 %2941
        %2943 = vrot.lane.b32.xlu0 %v2834, 96
        %v2944 = vpop.permute.xlu0 %2943
        %2945 = vrot.lane.b32.xlu0 %v2835, 96
        %v2946 = vpop.permute.xlu0 %2945
        %2947 = vrot.lane.b32.xlu0 %v2836, 96
        %v2948 = vpop.permute.xlu0 %2947
        %2963 = vrot.lane.b32.xlu0 %v2844, 32
        %v2964 = vpop.permute.xlu0 %2963
        %2965 = vrot.lane.b32.xlu0 %v2845, 32
        %v2966 = vpop.permute.xlu0 %2965
        %2967 = vrot.lane.b32.xlu0 %v2846, 32
        %v2968 = vpop.permute.xlu0 %2967
        %2969 = vrot.lane.b32.xlu0 %v2847, 32
        %v2970 = vpop.permute.xlu0 %2969
        %2971 = vrot.lane.b32.xlu0 %v2848, 32
        %v2972 = vpop.permute.xlu0 %2971
        %2973 = vrot.lane.b32.xlu0 %v2849, 32
        %v2974 = vpop.permute.xlu0 %2973
        %2975 = vrot.lane.b32.xlu0 %v2850, 32
        %v2976 = vpop.permute.xlu0 %2975
        %2991 = vrot.lane.b32.xlu0 %v2851, 64
        %v2992 = vpop.permute.xlu0 %2991
        %2993 = vrot.lane.b32.xlu0 %v2852, 64
        %v2994 = vpop.permute.xlu0 %2993
        %2995 = vrot.lane.b32.xlu0 %v2853, 64
        %v2996 = vpop.permute.xlu0 %2995
        %2997 = vrot.lane.b32.xlu0 %v2854, 64
        %v2998 = vpop.permute.xlu0 %2997
        %2999 = vrot.lane.b32.xlu0 %v2855, 64
        %v3000 = vpop.permute.xlu0 %2999
        %3001 = vrot.lane.b32.xlu0 %v2856, 64
        %v3002 = vpop.permute.xlu0 %3001
        %3003 = vrot.lane.b32.xlu0 %v2857, 64
        %v3004 = vpop.permute.xlu0 %3003
        %3019 = vrot.lane.b32.xlu0 %v2858, 96
        %v3020 = vpop.permute.xlu0 %3019
        %3021 = vrot.lane.b32.xlu0 %v2859, 96
        %v3022 = vpop.permute.xlu0 %3021
        %3023 = vrot.lane.b32.xlu0 %v2860, 96
        %v3024 = vpop.permute.xlu0 %3023
        %3025 = vrot.lane.b32.xlu0 %v2861, 96
        %v3026 = vpop.permute.xlu0 %3025
        %3027 = vrot.lane.b32.xlu0 %v2862, 96
        %v3028 = vpop.permute.xlu0 %3027
        %3029 = vrot.lane.b32.xlu0 %v2863, 96
        %v3030 = vpop.permute.xlu0 %3029
        %3031 = vrot.lane.b32.xlu0 %v2864, 96
        %v3032 = vpop.permute.xlu0 %3031
        %v3040 = vsel %vm1128, %v2809, %v2880
        %v3041 = vsel %vm1128, %v2810, %v2882
        %v3042 = vsel %vm1128, %v2811, %v2884
        %v3043 = vsel %vm1128, %v2812, %v2886
        %v3044 = vsel %vm1128, %v2813, %v2888
        %v3045 = vsel %vm1128, %v2814, %v2890
        %v3046 = vsel %vm1128, %v2815, %v2892
        %v3047 = vsel %vm1953, %v3040, %v2908
        %v3048 = vsel %vm1953, %v3041, %v2910
        %v3049 = vsel %vm1953, %v3042, %v2912
        %v3050 = vsel %vm1953, %v3043, %v2914
        %v3051 = vsel %vm1953, %v3044, %v2916
        %v3052 = vsel %vm1953, %v3045, %v2918
        %v3053 = vsel %vm1953, %v3046, %v2920
        %v3054 = vsel %vm1961, %v3047, %v2936
        %v3055 = vsel %vm1961, %v3048, %v2938
        %v3056 = vsel %vm1961, %v3049, %v2940
        %v3057 = vsel %vm1961, %v3050, %v2942
        %v3058 = vsel %vm1961, %v3051, %v2944
        %v3059 = vsel %vm1961, %v3052, %v2946
        %v3060 = vsel %vm1961, %v3053, %v2948
        %v3061 = vsel %vm1128, %v2837, %v2964
        %v3062 = vsel %vm1128, %v2838, %v2966
        %v3063 = vsel %vm1128, %v2839, %v2968
        %v3064 = vsel %vm1128, %v2840, %v2970
        %v3065 = vsel %vm1128, %v2841, %v2972
        %v3066 = vsel %vm1128, %v2842, %v2974
        %v3067 = vsel %vm1128, %v2843, %v2976
        %v3068 = vsel %vm1953, %v3061, %v2992
        %v3069 = vsel %vm1953, %v3062, %v2994
        %v3070 = vsel %vm1953, %v3063, %v2996
        %v3071 = vsel %vm1953, %v3064, %v2998
        %v3072 = vsel %vm1953, %v3065, %v3000
        %v3073 = vsel %vm1953, %v3066, %v3002
        %v3074 = vsel %vm1953, %v3067, %v3004
        %v3075 = vsel %vm1961, %v3068, %v3020
        %v3076 = vsel %vm1961, %v3069, %v3022
        %v3077 = vsel %vm1961, %v3070, %v3024
        %v3078 = vsel %vm1961, %v3071, %v3026
        %v3079 = vsel %vm1961, %v3072, %v3028
        %v3080 = vsel %vm1961, %v3073, %v3030
        %v3081 = vsel %vm1961, %v3074, %v3032
        %v3085 = vrot.slane %v3054, 5
        %v3086 = vrot.slane %v3075, 5
        %v3087 = vrot.slane %v2865, 5
        %3091 = vst [vmem:[#allocation3 + $0x1b0] sm:$0xf8] %v3085
        %3092 = vst [vmem:[#allocation3 + $0x1b8] sm:$0xf8] %v3086
        %3093 = vst.msk [vmem:[#allocation3 + $0x1c0] sm:$0xf8] %vm1305, %v3087
        %3094 = vst [vmem:[#allocation3 + $0x1c8] sm:$0x3] %v3085
        %3095 = vst [vmem:[#allocation3 + $0x1d0] sm:$0x3] %v3086
        %3096 = vst.msk [vmem:[#allocation3 + $0x1d8] sm:$0x3] %vm1307, %v3087
        %v3100 = vrot.slane %v3055, 6
        %v3101 = vrot.slane %v3076, 6
        %v3102 = vrot.slane %v2866, 6
        %3106 = vst [vmem:[#allocation3 + $0x1c8] sm:$0xfc] %v3100
        %3107 = vst [vmem:[#allocation3 + $0x1d0] sm:$0xfc] %v3101
        %3108 = vst.msk [vmem:[#allocation3 + $0x1d8] sm:$0xfc] %vm1310, %v3102
        %3109 = vst [vmem:[#allocation3 + $0x1e0] sm:$0x1] %v3100
        %3110 = vst [vmem:[#allocation3 + $0x1e8] sm:$0x1] %v3101
        %3111 = vst.msk [vmem:[#allocation3 + $0x1f0] sm:$0x1] %vm1312, %v3102
        %v3115 = vrot.slane %v3056, 7
        %v3116 = vrot.slane %v3077, 7
        %v3117 = vrot.slane %v2867, 7
        %3121 = vst [vmem:[#allocation3 + $0x1e0] sm:$0xfe] %v3115
        %3122 = vst [vmem:[#allocation3 + $0x1e8] sm:$0xfe] %v3116
        %3123 = vst.msk [vmem:[#allocation3 + $0x1f0] sm:$0xfe] %vm1431, %v3117
        %3124 = vst [vmem:[#allocation3 + $0x1f8] sm:$0x7f] %v3057
        %3125 = vst [vmem:[#allocation3 + $0x200] sm:$0x7f] %v3078
        %3126 = vst.msk [vmem:[#allocation3 + $0x208] sm:$0x7f] %vm1282, %v2868
        %v3130 = vrot.slane %v3058, 1
        %v3131 = vrot.slane %v3079, 1
        %v3132 = vrot.slane %v2869, 1
        %3136 = vst [vmem:[#allocation3 + $0x1f8] sm:$0x80] %v3130
        %3137 = vst [vmem:[#allocation3 + $0x200] sm:$0x80] %v3131
        %3138 = vst.msk [vmem:[#allocation3 + $0x208] sm:$0x80] %vm1285, %v3132
        %3139 = vst [vmem:[#allocation3 + $0x210] sm:$0x3f] %v3130
        %3140 = vst [vmem:[#allocation3 + $0x218] sm:$0x3f] %v3131
        %3141 = vst.msk [vmem:[#allocation3 + $0x220] sm:$0x3f] %vm1287, %v3132
        %v3145 = vrot.slane %v3059, 2
        %v3146 = vrot.slane %v3080, 2
        %v3147 = vrot.slane %v2870, 2
        %3151 = vst [vmem:[#allocation3 + $0x210] sm:$0xc0] %v3145
        %3152 = vst [vmem:[#allocation3 + $0x218] sm:$0xc0] %v3146
        %3153 = vst.msk [vmem:[#allocation3 + $0x220] sm:$0xc0] %vm1290, %v3147
        %3154 = vst [vmem:[#allocation3 + $0x228] sm:$0x1f] %v3145
        %3155 = vst [vmem:[#allocation3 + $0x230] sm:$0x1f] %v3146
        %3156 = vst.msk [vmem:[#allocation3 + $0x238] sm:$0x1f] %vm1292, %v3147
        %v3160 = vrot.slane %v3060, 3
        %v3161 = vrot.slane %v3081, 3
        %v3162 = vrot.slane %v2871, 3
        %3166 = vst [vmem:[#allocation3 + $0x228] sm:$0xe0] %v3160
        %3167 = vst [vmem:[#allocation3 + $0x230] sm:$0xe0] %v3161
        %3168 = vst.msk [vmem:[#allocation3 + $0x238] sm:$0xe0] %vm1295, %v3162
        %3169 = vst [vmem:[#allocation3 + $0x240] sm:$0xf] %v3160
        %3170 = vst [vmem:[#allocation3 + $0x248] sm:$0xf] %v3161
        %3171 = vst.msk [vmem:[#allocation3 + $0x250] sm:$0xf] %vm1297, %v3162
        %v3172 = vld [vmem:[#allocation3] sm:$0xff]
        %v3173 = vld [vmem:[#allocation3 + $0x8] sm:$0xff]
        %v3174 = vld [vmem:[#allocation3 + $0x10] sm:$0xff]
        %v3175 = vld [vmem:[#allocation3 + $0x18] sm:$0xff]
        %v3176 = vld [vmem:[#allocation3 + $0x20] sm:$0xff]
        %v3177 = vld [vmem:[#allocation3 + $0x28] sm:$0xff]
        %v3178 = vld [vmem:[#allocation3 + $0x30] sm:$0xff]
        %v3179 = vld [vmem:[#allocation3 + $0x38] sm:$0xff]
        %v3180 = vld [vmem:[#allocation3 + $0x40] sm:$0xff]
        %v3181 = vld [vmem:[#allocation3 + $0x48] sm:$0xff]
        %v3182 = vld [vmem:[#allocation3 + $0x50] sm:$0xff]
        %v3183 = vld [vmem:[#allocation3 + $0x58] sm:$0xff]
        %v3184 = vld [vmem:[#allocation3 + $0x60] sm:$0xff]
        %v3185 = vld [vmem:[#allocation3 + $0x68] sm:$0xff]
        %v3186 = vld [vmem:[#allocation3 + $0x70] sm:$0xff]
        %v3187 = vld [vmem:[#allocation3 + $0x78] sm:$0xff]
        %v3188 = vld [vmem:[#allocation3 + $0x80] sm:$0xff]
        %v3189 = vld [vmem:[#allocation3 + $0x88] sm:$0xff]
        %v3190 = vld [vmem:[#allocation3 + $0x90] sm:$0xff]
        %v3191 = vld [vmem:[#allocation3 + $0x98] sm:$0xff]
        %v3192 = vld [vmem:[#allocation3 + $0xa0] sm:$0xff]
        %v3193 = vld [vmem:[#allocation3 + $0xa8] sm:$0xff]
        %v3194 = vld [vmem:[#allocation3 + $0xb0] sm:$0xff]
        %v3195 = vld [vmem:[#allocation3 + $0xb8] sm:$0xff]
        %v3196 = vld [vmem:[#allocation3 + $0xc0] sm:$0xff]
        %v3197 = vld [vmem:[#allocation3 + $0xc8] sm:$0xff]
        %v3198 = vld [vmem:[#allocation3 + $0xd0] sm:$0xff]
        %v3199 = vld [vmem:[#allocation3 + $0xd8] sm:$0xff]
        %v3200 = vld [vmem:[#allocation3 + $0xe0] sm:$0xff]
        %v3201 = vld [vmem:[#allocation3 + $0xe8] sm:$0xff]
        %v3202 = vld [vmem:[#allocation3 + $0xf0] sm:$0xff]
        %v3203 = vld [vmem:[#allocation3 + $0xf8] sm:$0xff]
        %v3204 = vld [vmem:[#allocation3 + $0x100] sm:$0xff]
        %v3205 = vld [vmem:[#allocation3 + $0x108] sm:$0xff]
        %v3206 = vld [vmem:[#allocation3 + $0x110] sm:$0xff]
        %v3207 = vld [vmem:[#allocation3 + $0x118] sm:$0xff]
        %v3208 = vld [vmem:[#allocation3 + $0x120] sm:$0xff]
        %v3209 = vld [vmem:[#allocation3 + $0x128] sm:$0xff]
        %v3210 = vld [vmem:[#allocation3 + $0x130] sm:$0xff]
        %v3211 = vld [vmem:[#allocation3 + $0x138] sm:$0xff]
        %v3212 = vld [vmem:[#allocation3 + $0x140] sm:$0xff]
        %v3213 = vld [vmem:[#allocation3 + $0x148] sm:$0xff]
        %v3214 = vld [vmem:[#allocation3 + $0x150] sm:$0xff]
        %v3215 = vld [vmem:[#allocation3 + $0x158] sm:$0xff]
        %v3216 = vld [vmem:[#allocation3 + $0x160] sm:$0xff]
        %v3217 = vld [vmem:[#allocation3 + $0x168] sm:$0xff]
        %v3218 = vld [vmem:[#allocation3 + $0x170] sm:$0xff]
        %v3219 = vld [vmem:[#allocation3 + $0x178] sm:$0xff]
        %v3220 = vld [vmem:[#allocation3 + $0x180] sm:$0xff]
        %v3221 = vld [vmem:[#allocation3 + $0x188] sm:$0xff]
        %v3222 = vld [vmem:[#allocation3 + $0x190] sm:$0xff]
        %v3223 = vld [vmem:[#allocation3 + $0x198] sm:$0xff]
        %v3224 = vld [vmem:[#allocation3 + $0x1a0] sm:$0xff]
        %v3225 = vld [vmem:[#allocation3 + $0x1a8] sm:$0xff]
        %v3226 = vld [vmem:[#allocation3 + $0x1b0] sm:$0xff]
        %v3227 = vld [vmem:[#allocation3 + $0x1b8] sm:$0xff]
        %v3228 = vld [vmem:[#allocation3 + $0x1c0] sm:$0xff]
        %v3229 = vld [vmem:[#allocation3 + $0x1c8] sm:$0xff]
        %v3230 = vld [vmem:[#allocation3 + $0x1d0] sm:$0xff]
        %v3231 = vld [vmem:[#allocation3 + $0x1d8] sm:$0xff]
        %v3232 = vld [vmem:[#allocation3 + $0x1e0] sm:$0xff]
        %v3233 = vld [vmem:[#allocation3 + $0x1e8] sm:$0xff]
        %v3234 = vld [vmem:[#allocation3 + $0x1f0] sm:$0xff]
        %v3235 = vld [vmem:[#allocation3 + $0x1f8] sm:$0xff]
        %v3236 = vld [vmem:[#allocation3 + $0x200] sm:$0xff]
        %v3237 = vld [vmem:[#allocation3 + $0x208] sm:$0xff]
        %v3238 = vld [vmem:[#allocation3 + $0x210] sm:$0xff]
        %v3239 = vld [vmem:[#allocation3 + $0x218] sm:$0xff]
        %v3240 = vld [vmem:[#allocation3 + $0x220] sm:$0xff]
        %v3241 = vld [vmem:[#allocation3 + $0x228] sm:$0xff]
        %v3242 = vld [vmem:[#allocation3 + $0x230] sm:$0xff]
        %v3243 = vld [vmem:[#allocation3 + $0x238] sm:$0xff]
        %v3244 = vld [vmem:[#allocation3 + $0x240] sm:$0xf]
        %v3245 = vld [vmem:[#allocation3 + $0x248] sm:$0xf]
        %v3246 = vld [vmem:[#allocation3 + $0x250] sm:$0xf]
        %v3247 = vpack.c.bf16 %v3175, %v3172
        %v3248 = vpack.c.bf16 %v3176, %v3173
        %v3249 = vpack.c.bf16 %v3177, %v3174
        %v3250 = vpack.c.bf16 %v3181, %v3178
        %v3251 = vpack.c.bf16 %v3182, %v3179
        %v3252 = vpack.c.bf16 %v3183, %v3180
        %v3253 = vpack.c.bf16 %v3187, %v3184
        %v3254 = vpack.c.bf16 %v3188, %v3185
        %v3255 = vpack.c.bf16 %v3189, %v3186
        %v3256 = vpack.c.bf16 %v3193, %v3190
        %v3257 = vpack.c.bf16 %v3194, %v3191
        %v3258 = vpack.c.bf16 %v3195, %v3192
        %v3259 = vpack.c.bf16 %v3199, %v3196
        %v3260 = vpack.c.bf16 %v3200, %v3197
        %v3261 = vpack.c.bf16 %v3201, %v3198
        %v3262 = vpack.c.bf16 %v3205, %v3202
        %v3263 = vpack.c.bf16 %v3206, %v3203
        %v3264 = vpack.c.bf16 %v3207, %v3204
        %v3265 = vpack.c.bf16 %v3211, %v3208
        %v3266 = vpack.c.bf16 %v3212, %v3209
        %v3267 = vpack.c.bf16 %v3213, %v3210
        %v3268 = vpack.c.bf16 %v3217, %v3214
        %v3269 = vpack.c.bf16 %v3218, %v3215
        %v3270 = vpack.c.bf16 %v3219, %v3216
        %v3271 = vpack.c.bf16 %v3223, %v3220
        %v3272 = vpack.c.bf16 %v3224, %v3221
        %v3273 = vpack.c.bf16 %v3225, %v3222
        %v3274 = vpack.c.bf16 %v3229, %v3226
        %v3275 = vpack.c.bf16 %v3230, %v3227
        %v3276 = vpack.c.bf16 %v3231, %v3228
        %v3277 = vpack.c.bf16 %v3235, %v3232
        %v3278 = vpack.c.bf16 %v3236, %v3233
        %v3279 = vpack.c.bf16 %v3237, %v3234
        %v3280 = vpack.c.bf16 %v3241, %v3238
        %v3281 = vpack.c.bf16 %v3242, %v3239
        %v3282 = vpack.c.bf16 %v3243, %v3240
        %v3283 = vpack.c.bf16 %v3244, %v3244
        %v3284 = vpack.c.bf16 %v3245, %v3245
        %v3285 = vpack.c.bf16 %v3246, %v3246
        %v3322 = vunpack.c.l.b16 %v334
        %v3323 = vunpack.c.l.b16 %v335
        %v3324 = vunpack.c.l.b16 %v336
        %v3325 = vunpack.c.l.b16 %v337
        %v3326 = vunpack.c.l.b16 %v338
        %v3327 = vunpack.c.l.b16 %v339
        %v3328 = vunpack.c.l.b16 %v340
        %v3329 = vunpack.c.l.b16 %v341
        %v3330 = vunpack.c.l.b16 %v342
        %v3331 = vunpack.c.l.b16 %v343
        %v3332 = vunpack.c.l.b16 %v344
        %v3333 = vunpack.c.l.b16 %v345
        %v3334 = vunpack.c.l.b16 %v346
        %v3335 = vunpack.c.l.b16 %v347
        %v3336 = vunpack.c.l.b16 %v348
        %v3337 = vunpack.c.l.b16 %v349
        %v3338 = vunpack.c.l.b16 %v350
        %v3339 = vunpack.c.l.b16 %v351
        %v3340 = vunpack.c.l.b16 %v352
        %v3341 = vunpack.c.l.b16 %v353
        %v3342 = vunpack.c.l.b16 %v354
        %v3343 = vunpack.c.l.b16 %v355
        %v3344 = vunpack.c.l.b16 %v356
        %v3345 = vunpack.c.l.b16 %v357
        %v3346 = vunpack.c.l.b16 %v358
        %v3347 = vunpack.c.l.b16 %v359
        %v3348 = vunpack.c.l.b16 %v360
        %v3349 = vunpack.c.l.b16 %v361
        %v3350 = vunpack.c.l.b16 %v362
        %v3351 = vunpack.c.l.b16 %v363
        %v3352 = vunpack.c.l.b16 %v364
        %v3353 = vunpack.c.l.b16 %v365
        %v3354 = vunpack.c.l.b16 %v366
        %v3355 = vunpack.c.l.b16 %v367
        %v3356 = vunpack.c.l.b16 %v368
        %v3357 = vunpack.c.l.b16 %v369
        %v3358 = vpack.c.b16 %v3323, %v3322
        %v3359 = vpack.c.b16 %v3325, %v3324
        %v3360 = vpack.c.b16 %v3327, %v3326
        %v3361 = vpack.c.b16 %v3329, %v3328
        %v3362 = vpack.c.b16 %v3331, %v3330
        %v3363 = vpack.c.b16 %v3333, %v3332
        %v3364 = vpack.c.b16 %v3335, %v3334
        %v3365 = vpack.c.b16 %v3337, %v3336
        %v3366 = vpack.c.b16 %v3339, %v3338
        %v3367 = vpack.c.b16 %v3341, %v3340
        %v3368 = vpack.c.b16 %v3343, %v3342
        %v3369 = vpack.c.b16 %v3345, %v3344
        %v3370 = vpack.c.b16 %v3347, %v3346
        %v3371 = vpack.c.b16 %v3349, %v3348
        %v3372 = vpack.c.b16 %v3351, %v3350
        %v3373 = vpack.c.b16 %v3353, %v3352
        %v3374 = vpack.c.b16 %v3355, %v3354
        %v3375 = vpack.c.b16 %v3357, %v3356
        %v3395 = vsel %vm1128, %v3249, 0
        %v3398 = vsel %vm1128, %v3252, 0
        %v3401 = vsel %vm1128, %v3255, 0
        %v3404 = vsel %vm1128, %v3258, 0
        %v3407 = vsel %vm1128, %v3261, 0
        %v3410 = vsel %vm1128, %v3264, 0
        %v3413 = vsel %vm1128, %v3267, 0
        %v3416 = vsel %vm1128, %v3270, 0
        %v3419 = vsel %vm1128, %v3273, 0
        %v3422 = vsel %vm1128, %v3276, 0
        %v3425 = vsel %vm1128, %v3279, 0
        %v3428 = vsel %vm1128, %v3282, 0
        %v3431 = vsel %vm1128, %v3285, 0
        %3433 = vmatpush.bf16.msra.mxu0 %v3365
        %3434 = vmatpush.bf16.msra.mxu0 %v3364
        %3435 = vmatpush.bf16.msra.mxu0 %v3363
        %3436 = vmatpush.bf16.msra.mxu0 %v3362
        %3437 = vmatpush.bf16.msra.mxu0 %v3361
        %3438 = vmatpush.bf16.msra.mxu0 %v3360
        %3439 = vmatpush.bf16.msra.mxu0 %v3359
        %3440 = vmatpush.bf16.msra.mxu0 %v3358
        %3441 = vmatmul.bf16.gmra.mxu0 %v3247
        %v3442 = vpop.f32.mrf.mxu0
        %v3443 = vadd.f32 0.0, %v3442
        %v3444 = vpop.f32.mrf.mxu0
        %v3445 = vadd.f32 0.0, %v3444
        %3446 = vmatmul.bf16.gmra.mxu0 %v3250
        %v3447 = vpop.f32.mrf.mxu0
        %v3448 = vadd.f32 0.0, %v3447
        %v3449 = vpop.f32.mrf.mxu0
        %v3450 = vadd.f32 0.0, %v3449
        %3451 = vmatmul.bf16.gmra.mxu0 %v3253
        %v3452 = vpop.f32.mrf.mxu0
        %v3453 = vadd.f32 0.0, %v3452
        %v3454 = vpop.f32.mrf.mxu0
        %v3455 = vadd.f32 0.0, %v3454
        %3456 = vmatmul.bf16.gmra.mxu0 %v3256
        %v3457 = vpop.f32.mrf.mxu0
        %v3458 = vadd.f32 0.0, %v3457
        %v3459 = vpop.f32.mrf.mxu0
        %v3460 = vadd.f32 0.0, %v3459
        %3461 = vmatmul.bf16.gmra.mxu0 %v3259
        %v3462 = vpop.f32.mrf.mxu0
        %v3463 = vadd.f32 0.0, %v3462
        %v3464 = vpop.f32.mrf.mxu0
        %v3465 = vadd.f32 0.0, %v3464
        %3466 = vmatmul.bf16.gmra.mxu0 %v3262
        %v3467 = vpop.f32.mrf.mxu0
        %v3468 = vadd.f32 0.0, %v3467
        %v3469 = vpop.f32.mrf.mxu0
        %v3470 = vadd.f32 0.0, %v3469
        %3471 = vmatmul.bf16.gmra.mxu0 %v3265
        %v3472 = vpop.f32.mrf.mxu0
        %v3473 = vadd.f32 0.0, %v3472
        %v3474 = vpop.f32.mrf.mxu0
        %v3475 = vadd.f32 0.0, %v3474
        %3476 = vmatmul.bf16.gmra.mxu0 %v3268
        %v3477 = vpop.f32.mrf.mxu0
        %v3478 = vadd.f32 0.0, %v3477
        %v3479 = vpop.f32.mrf.mxu0
        %v3480 = vadd.f32 0.0, %v3479
        %3481 = vmatmul.bf16.gmra.mxu0 %v3271
        %v3482 = vpop.f32.mrf.mxu0
        %v3483 = vadd.f32 0.0, %v3482
        %v3484 = vpop.f32.mrf.mxu0
        %v3485 = vadd.f32 0.0, %v3484
        %3486 = vmatmul.bf16.gmra.mxu0 %v3274
        %v3487 = vpop.f32.mrf.mxu0
        %v3488 = vadd.f32 0.0, %v3487
        %v3489 = vpop.f32.mrf.mxu0
        %v3490 = vadd.f32 0.0, %v3489
        %3491 = vmatmul.bf16.gmra.mxu0 %v3277
        %v3492 = vpop.f32.mrf.mxu0
        %v3493 = vadd.f32 0.0, %v3492
        %v3494 = vpop.f32.mrf.mxu0
        %v3495 = vadd.f32 0.0, %v3494
        %3496 = vmatmul.bf16.gmra.mxu0 %v3280
        %v3497 = vpop.f32.mrf.mxu0
        %v3498 = vadd.f32 0.0, %v3497
        %v3499 = vpop.f32.mrf.mxu0
        %v3500 = vadd.f32 0.0, %v3499
        %3501 = vmatmul.bf16.gmra.mxu0 %v3283
        %v3502 = vpop.f32.mrf.mxu0
        %v3503 = vadd.f32 0.0, %v3502
        %v3504 = vpop.f32.mrf.mxu0
        %3505 = vdwg.mxu0
        %3506 = vmatpush.bf16.msra.mxu0 %v3373
        %3507 = vmatpush.bf16.msra.mxu0 %v3372
        %3508 = vmatpush.bf16.msra.mxu0 %v3371
        %3509 = vmatpush.bf16.msra.mxu0 %v3370
        %3510 = vmatpush.bf16.msra.mxu0 %v3369
        %3511 = vmatpush.bf16.msra.mxu0 %v3368
        %3512 = vmatpush.bf16.msra.mxu0 %v3367
        %3513 = vmatpush.bf16.msra.mxu0 %v3366
        %3514 = vmatmul.bf16.gmra.mxu0 %v3248
        %v3515 = vpop.f32.mrf.mxu0
        %v3516 = vadd.f32 %v3443, %v3515
        %v3517 = vpop.f32.mrf.mxu0
        %v3518 = vadd.f32 %v3445, %v3517
        %3519 = vmatmul.bf16.gmra.mxu0 %v3251
        %v3520 = vpop.f32.mrf.mxu0
        %v3521 = vadd.f32 %v3448, %v3520
        %v3522 = vpop.f32.mrf.mxu0
        %v3523 = vadd.f32 %v3450, %v3522
        %3524 = vmatmul.bf16.gmra.mxu0 %v3254
        %v3525 = vpop.f32.mrf.mxu0
        %v3526 = vadd.f32 %v3453, %v3525
        %v3527 = vpop.f32.mrf.mxu0
        %v3528 = vadd.f32 %v3455, %v3527
        %3529 = vmatmul.bf16.gmra.mxu0 %v3257
        %v3530 = vpop.f32.mrf.mxu0
        %v3531 = vadd.f32 %v3458, %v3530
        %v3532 = vpop.f32.mrf.mxu0
        %v3533 = vadd.f32 %v3460, %v3532
        %3534 = vmatmul.bf16.gmra.mxu0 %v3260
        %v3535 = vpop.f32.mrf.mxu0
        %v3536 = vadd.f32 %v3463, %v3535
        %v3537 = vpop.f32.mrf.mxu0
        %v3538 = vadd.f32 %v3465, %v3537
        %3539 = vmatmul.bf16.gmra.mxu0 %v3263
        %v3540 = vpop.f32.mrf.mxu0
        %v3541 = vadd.f32 %v3468, %v3540
        %v3542 = vpop.f32.mrf.mxu0
        %v3543 = vadd.f32 %v3470, %v3542
        %3544 = vmatmul.bf16.gmra.mxu0 %v3266
        %v3545 = vpop.f32.mrf.mxu0
        %v3546 = vadd.f32 %v3473, %v3545
        %v3547 = vpop.f32.mrf.mxu0
        %v3548 = vadd.f32 %v3475, %v3547
        %3549 = vmatmul.bf16.gmra.mxu0 %v3269
        %v3550 = vpop.f32.mrf.mxu0
        %v3551 = vadd.f32 %v3478, %v3550
        %v3552 = vpop.f32.mrf.mxu0
        %v3553 = vadd.f32 %v3480, %v3552
        %3554 = vmatmul.bf16.gmra.mxu0 %v3272
        %v3555 = vpop.f32.mrf.mxu0
        %v3556 = vadd.f32 %v3483, %v3555
        %v3557 = vpop.f32.mrf.mxu0
        %v3558 = vadd.f32 %v3485, %v3557
        %3559 = vmatmul.bf16.gmra.mxu0 %v3275
        %v3560 = vpop.f32.mrf.mxu0
        %v3561 = vadd.f32 %v3488, %v3560
        %v3562 = vpop.f32.mrf.mxu0
        %v3563 = vadd.f32 %v3490, %v3562
        %3564 = vmatmul.bf16.gmra.mxu0 %v3278
        %v3565 = vpop.f32.mrf.mxu0
        %v3566 = vadd.f32 %v3493, %v3565
        %v3567 = vpop.f32.mrf.mxu0
        %v3568 = vadd.f32 %v3495, %v3567
        %3569 = vmatmul.bf16.gmra.mxu0 %v3281
        %v3570 = vpop.f32.mrf.mxu0
        %v3571 = vadd.f32 %v3498, %v3570
        %v3572 = vpop.f32.mrf.mxu0
        %v3573 = vadd.f32 %v3500, %v3572
        %3574 = vmatmul.bf16.gmra.mxu0 %v3284
        %v3575 = vpop.f32.mrf.mxu0
        %v3576 = vadd.f32 %v3503, %v3575
        %v3577 = vpop.f32.mrf.mxu0
        %3578 = vdwg.mxu0
        %3579 = vmatpush.bf16.msra.mxu0 0
        %3580 = vmatpush.bf16.msra.mxu0 0
        %3581 = vmatpush.bf16.msra.mxu0 0
        %3582 = vmatpush.bf16.msra.mxu0 0
        %3583 = vmatpush.bf16.msra.mxu0 0
        %3584 = vmatpush.bf16.msra.mxu0 0
        %3585 = vmatpush.bf16.msra.mxu0 %v3375
        %3586 = vmatpush.bf16.msra.mxu0 %v3374
        %3587 = vmatmul.bf16.gmra.mxu0 %v3395
        %v3588 = vpop.f32.mrf.mxu0
        %v3589 = vadd.f32 %v3516, %v3588
        %v3590 = vpop.f32.mrf.mxu0
        %v3591 = vadd.f32 %v3518, %v3590
        %3592 = vmatmul.bf16.gmra.mxu0 %v3398
        %v3593 = vpop.f32.mrf.mxu0
        %v3594 = vadd.f32 %v3521, %v3593
        %v3595 = vpop.f32.mrf.mxu0
        %v3596 = vadd.f32 %v3523, %v3595
        %3597 = vmatmul.bf16.gmra.mxu0 %v3401
        %v3598 = vpop.f32.mrf.mxu0
        %v3599 = vadd.f32 %v3526, %v3598
        %v3600 = vpop.f32.mrf.mxu0
        %v3601 = vadd.f32 %v3528, %v3600
        %3602 = vmatmul.bf16.gmra.mxu0 %v3404
        %v3603 = vpop.f32.mrf.mxu0
        %v3604 = vadd.f32 %v3531, %v3603
        %v3605 = vpop.f32.mrf.mxu0
        %v3606 = vadd.f32 %v3533, %v3605
        %3607 = vmatmul.bf16.gmra.mxu0 %v3407
        %v3608 = vpop.f32.mrf.mxu0
        %v3609 = vadd.f32 %v3536, %v3608
        %v3610 = vpop.f32.mrf.mxu0
        %v3611 = vadd.f32 %v3538, %v3610
        %3612 = vmatmul.bf16.gmra.mxu0 %v3410
        %v3613 = vpop.f32.mrf.mxu0
        %v3614 = vadd.f32 %v3541, %v3613
        %v3615 = vpop.f32.mrf.mxu0
        %v3616 = vadd.f32 %v3543, %v3615
        %3617 = vmatmul.bf16.gmra.mxu0 %v3413
        %v3618 = vpop.f32.mrf.mxu0
        %v3619 = vadd.f32 %v3546, %v3618
        %v3620 = vpop.f32.mrf.mxu0
        %v3621 = vadd.f32 %v3548, %v3620
        %3622 = vmatmul.bf16.gmra.mxu0 %v3416
        %v3623 = vpop.f32.mrf.mxu0
        %v3624 = vadd.f32 %v3551, %v3623
        %v3625 = vpop.f32.mrf.mxu0
        %v3626 = vadd.f32 %v3553, %v3625
        %3627 = vmatmul.bf16.gmra.mxu0 %v3419
        %v3628 = vpop.f32.mrf.mxu0
        %v3629 = vadd.f32 %v3556, %v3628
        %v3630 = vpop.f32.mrf.mxu0
        %v3631 = vadd.f32 %v3558, %v3630
        %3632 = vmatmul.bf16.gmra.mxu0 %v3422
        %v3633 = vpop.f32.mrf.mxu0
        %v3634 = vadd.f32 %v3561, %v3633
        %v3635 = vpop.f32.mrf.mxu0
        %v3636 = vadd.f32 %v3563, %v3635
        %3637 = vmatmul.bf16.gmra.mxu0 %v3425
        %v3638 = vpop.f32.mrf.mxu0
        %v3639 = vadd.f32 %v3566, %v3638
        %v3640 = vpop.f32.mrf.mxu0
        %v3641 = vadd.f32 %v3568, %v3640
        %3642 = vmatmul.bf16.gmra.mxu0 %v3428
        %v3643 = vpop.f32.mrf.mxu0
        %v3644 = vadd.f32 %v3571, %v3643
        %v3645 = vpop.f32.mrf.mxu0
        %v3646 = vadd.f32 %v3573, %v3645
        %3647 = vmatmul.bf16.gmra.mxu0 %v3431
        %v3648 = vpop.f32.mrf.mxu0
        %v3649 = vadd.f32 %v3576, %v3648
        %v3650 = vpop.f32.mrf.mxu0
        %3651 = vdwg.mxu0
        %v3659 = vrot.slane %v3604, 1
        %v3660 = vrot.slane %v3606, 1
        %v3661 = vsel %vm1168, %v3659, %v3660
        %v3662 = vrot.slane %v3609, 1
        %v3663 = vsel %vm1168, %v3660, %v3662
        %v3664 = vrot.slane %v3611, 1
        %v3665 = vsel %vm1168, %v3662, %v3664
        %v3666 = vrot.slane %v3614, 1
        %v3667 = vsel %vm1168, %v3664, %v3666
        %v3668 = vrot.slane %v3616, 1
        %v3669 = vsel %vm1168, %v3666, %v3668
        %v3670 = vrot.slane %v3619, 1
        %v3671 = vsel %vm1168, %v3668, %v3670
        %v3679 = vmax.f32 %v3589, %v3661
        %v3680 = vmax.f32 %v3591, %v3663
        %v3681 = vmax.f32 %v3594, %v3665
        %v3682 = vmax.f32 %v3596, %v3667
        %v3683 = vmax.f32 %v3599, %v3669
        %v3684 = vmax.f32 %v3601, %v3671
        %v3685 = vmax.f32 %v3604, %v3670
        %v3693 = vrot.slane %v3634, 1
        %v3694 = vrot.slane %v3636, 1
        %v3695 = vsel %vm1168, %v3693, %v3694
        %v3696 = vrot.slane %v3639, 1
        %v3697 = vsel %vm1168, %v3694, %v3696
        %v3698 = vrot.slane %v3641, 1
        %v3699 = vsel %vm1168, %v3696, %v3698
        %v3700 = vrot.slane %v3644, 1
        %v3701 = vsel %vm1168, %v3698, %v3700
        %v3702 = vrot.slane %v3646, 1
        %v3703 = vsel %vm1168, %v3700, %v3702
        %v3704 = vrot.slane %v3649, 1
        %v3705 = vsel %vm1168, %v3702, %v3704
        %v3713 = vmax.f32 %v3619, %v3695
        %v3714 = vmax.f32 %v3621, %v3697
        %v3715 = vmax.f32 %v3624, %v3699
        %v3716 = vmax.f32 %v3626, %v3701
        %v3717 = vmax.f32 %v3629, %v3703
        %v3718 = vmax.f32 %v3631, %v3705
        %v3719 = vmax.f32 %v3634, %v3704
        %vm3727 = vcmask 1045504
        %v3728 = vrot.slane %v3713, 2
        %v3729 = vrot.slane %v3714, 2
        %v3730 = vsel %vm3727, %v3728, %v3729
        %v3731 = vrot.slane %v3715, 2
        %v3732 = vsel %vm3727, %v3729, %v3731
        %v3733 = vrot.slane %v3716, 2
        %v3734 = vsel %vm3727, %v3731, %v3733
        %v3735 = vrot.slane %v3717, 2
        %v3736 = vsel %vm3727, %v3733, %v3735
        %v3737 = vrot.slane %v3718, 2
        %v3738 = vsel %vm3727, %v3735, %v3737
        %v3739 = vrot.slane %v3719, 2
        %v3740 = vsel %vm3727, %v3737, %v3739
        %v3748 = vmax.f32 %v3679, %v3730
        %v3749 = vmax.f32 %v3680, %v3732
        %v3750 = vmax.f32 %v3681, %v3734
        %v3751 = vmax.f32 %v3682, %v3736
        %v3752 = vmax.f32 %v3683, %v3738
        %v3753 = vmax.f32 %v3684, %v3740
        %v3754 = vmax.f32 %v3685, %v3739
        %v3756 = vperm.slane %v370, 0
        %v3758 = vadd.f32 %v3748, %v3756
        %v3759 = vadd.f32 %v3749, %v3756
        %v3760 = vadd.f32 %v3750, %v3756
        %v3761 = vadd.f32 %v3751, %v3756
        %v3762 = vadd.f32 %v3752, %v3756
        %v3763 = vadd.f32 %v3753, %v3756
        %v3764 = vadd.f32 %v3754, %v3756
        %v3765 = vmax.f32 %v3758, 0.0
        %v3766 = vmax.f32 %v3759, 0.0
        %v3767 = vmax.f32 %v3760, 0.0
        %v3768 = vmax.f32 %v3761, 0.0
        %v3769 = vmax.f32 %v3762, 0.0
        %v3770 = vmax.f32 %v3763, 0.0
        %v3771 = vmax.f32 %v3764, 0.0
        %v3772 = vlaneseq
        %vm3773 = vcmp.ge.s32.totalorder %v3772, 0
        %vm3774 = vcmp.lt.s32.totalorder %v3772, 64
        %vm3775 = vmand %vm3773, %vm3774
        %3776 = vst.msk [vmem:[#allocation4] sm:$0x1] %vm3775, %v3765
        %3778 = vst [vmem:[#allocation1] sm:$0xff] %v3765
        %s3779 = scalar_lea.vmem [#allocation1], 1
        %v3780 = vld [vmem:[%s3779] ss:$9 sm:$0xff]
        %3781 = vrot.lane.b32.xlu0 %v3780, 64
        %v3782 = vpop.permute.xlu0 %3781
        %vm3784 = vcmp.ge.s32.totalorder %v3772, 64
        %vm3785 = vcmp.lt.s32.totalorder %v3772, 128
        %vm3786 = vmand %vm3784, %vm3785
        %3787 = vst.msk [vmem:[#allocation4] sm:$0x1] %vm3786, %v3782
        %3788 = vst [vmem:[#allocation1] sm:$0xff] %v3765
        %s3789 = scalar_lea.vmem [#allocation1], 2
        %v3790 = vld [vmem:[%s3789] ss:$9 sm:$0xff]
        %3792 = vst.msk [vmem:[#allocation4 + $0x1] sm:$0x1] %vm3775, %v3790
        %3793 = vst [vmem:[#allocation1] sm:$0xff] %v3765
        %s3794 = scalar_lea.vmem [#allocation1], 3
        %v3795 = vld [vmem:[%s3794] ss:$9 sm:$0xff]
        %3796 = vrot.lane.b32.xlu0 %v3795, 64
        %v3797 = vpop.permute.xlu0 %3796
        %3799 = vst.msk [vmem:[#allocation4 + $0x1] sm:$0x1] %vm3786, %v3797
        %3800 = vst [vmem:[#allocation1] sm:$0xff] %v3765
        %s3801 = scalar_lea.vmem [#allocation1], 4
        %v3802 = vld [vmem:[%s3801] ss:$9 sm:$0xff]
        %3804 = vst.msk [vmem:[#allocation4 + $0x2] sm:$0x1] %vm3775, %v3802
        %3805 = vst [vmem:[#allocation1] sm:$0xff] %v3765
        %s3806 = scalar_lea.vmem [#allocation1], 5
        %v3807 = vld [vmem:[%s3806] ss:$9 sm:$0xff]
        %3808 = vrot.lane.b32.xlu0 %v3807, 64
        %v3809 = vpop.permute.xlu0 %3808
        %3811 = vst.msk [vmem:[#allocation4 + $0x2] sm:$0x1] %vm3786, %v3809
        %3812 = vst [vmem:[#allocation1] sm:$0xff] %v3765
        %s3813 = scalar_lea.vmem [#allocation1], 6
        %v3814 = vld [vmem:[%s3813] ss:$9 sm:$0xff]
        %3816 = vst.msk [vmem:[#allocation4 + $0x3] sm:$0x1] %vm3775, %v3814
        %3817 = vst [vmem:[#allocation1] sm:$0xff] %v3765
        %s3818 = scalar_lea.vmem [#allocation1], 7
        %v3819 = vld [vmem:[%s3818] ss:$9 sm:$0xff]
        %3820 = vrot.lane.b32.xlu0 %v3819, 64
        %v3821 = vpop.permute.xlu0 %3820
        %3823 = vst.msk [vmem:[#allocation4 + $0x3] sm:$0x1] %vm3786, %v3821
        %3824 = vst.msk [vmem:[#allocation4 + $0x4] sm:$0x1] %vm3775, %v3766
        %3826 = vst [vmem:[#allocation1] sm:$0xff] %v3766
        %s3827 = scalar_lea.vmem [#allocation1], 1
        %v3828 = vld [vmem:[%s3827] ss:$9 sm:$0xff]
        %3829 = vrot.lane.b32.xlu0 %v3828, 64
        %v3830 = vpop.permute.xlu0 %3829
        %3832 = vst.msk [vmem:[#allocation4 + $0x4] sm:$0x1] %vm3786, %v3830
        %3833 = vst [vmem:[#allocation1] sm:$0xff] %v3766
        %s3834 = scalar_lea.vmem [#allocation1], 2
        %v3835 = vld [vmem:[%s3834] ss:$9 sm:$0xff]
        %3837 = vst.msk [vmem:[#allocation4 + $0x5] sm:$0x1] %vm3775, %v3835
        %3838 = vst [vmem:[#allocation1] sm:$0xff] %v3766
        %s3839 = scalar_lea.vmem [#allocation1], 3
        %v3840 = vld [vmem:[%s3839] ss:$9 sm:$0xff]
        %3841 = vrot.lane.b32.xlu0 %v3840, 64
        %v3842 = vpop.permute.xlu0 %3841
        %3844 = vst.msk [vmem:[#allocation4 + $0x5] sm:$0x1] %vm3786, %v3842
        %3845 = vst [vmem:[#allocation1] sm:$0xff] %v3766
        %s3846 = scalar_lea.vmem [#allocation1], 4
        %v3847 = vld [vmem:[%s3846] ss:$9 sm:$0xff]
        %3849 = vst.msk [vmem:[#allocation4 + $0x6] sm:$0x1] %vm3775, %v3847
        %3850 = vst [vmem:[#allocation1] sm:$0xff] %v3766
        %s3851 = scalar_lea.vmem [#allocation1], 5
        %v3852 = vld [vmem:[%s3851] ss:$9 sm:$0xff]
        %3853 = vrot.lane.b32.xlu0 %v3852, 64
        %v3854 = vpop.permute.xlu0 %3853
        %3856 = vst.msk [vmem:[#allocation4 + $0x6] sm:$0x1] %vm3786, %v3854
        %3857 = vst [vmem:[#allocation1] sm:$0xff] %v3766
        %s3858 = scalar_lea.vmem [#allocation1], 6
        %v3859 = vld [vmem:[%s3858] ss:$9 sm:$0xff]
        %3861 = vst.msk [vmem:[#allocation4 + $0x7] sm:$0x1] %vm3775, %v3859
        %3862 = vst [vmem:[#allocation1] sm:$0xff] %v3766
        %s3863 = scalar_lea.vmem [#allocation1], 7
        %v3864 = vld [vmem:[%s3863] ss:$9 sm:$0xff]
        %3865 = vrot.lane.b32.xlu0 %v3864, 64
        %v3866 = vpop.permute.xlu0 %3865
        %3868 = vst.msk [vmem:[#allocation4 + $0x7] sm:$0x1] %vm3786, %v3866
        %3869 = vst.msk [vmem:[#allocation4 + $0x8] sm:$0x1] %vm3775, %v3767
        %3871 = vst [vmem:[#allocation1] sm:$0xff] %v3767
        %s3872 = scalar_lea.vmem [#allocation1], 1
        %v3873 = vld [vmem:[%s3872] ss:$9 sm:$0xff]
        %3874 = vrot.lane.b32.xlu0 %v3873, 64
        %v3875 = vpop.permute.xlu0 %3874
        %3877 = vst.msk [vmem:[#allocation4 + $0x8] sm:$0x1] %vm3786, %v3875
        %3878 = vst [vmem:[#allocation1] sm:$0xff] %v3767
        %s3879 = scalar_lea.vmem [#allocation1], 2
        %v3880 = vld [vmem:[%s3879] ss:$9 sm:$0xff]
        %3882 = vst.msk [vmem:[#allocation4 + $0x9] sm:$0x1] %vm3775, %v3880
        %3883 = vst [vmem:[#allocation1] sm:$0xff] %v3767
        %s3884 = scalar_lea.vmem [#allocation1], 3
        %v3885 = vld [vmem:[%s3884] ss:$9 sm:$0xff]
        %3886 = vrot.lane.b32.xlu0 %v3885, 64
        %v3887 = vpop.permute.xlu0 %3886
        %3889 = vst.msk [vmem:[#allocation4 + $0x9] sm:$0x1] %vm3786, %v3887
        %3890 = vst [vmem:[#allocation1] sm:$0xff] %v3767
        %s3891 = scalar_lea.vmem [#allocation1], 4
        %v3892 = vld [vmem:[%s3891] ss:$9 sm:$0xff]
        %3894 = vst.msk [vmem:[#allocation4 + $0xa] sm:$0x1] %vm3775, %v3892
        %3895 = vst [vmem:[#allocation1] sm:$0xff] %v3767
        %s3896 = scalar_lea.vmem [#allocation1], 5
        %v3897 = vld [vmem:[%s3896] ss:$9 sm:$0xff]
        %3898 = vrot.lane.b32.xlu0 %v3897, 64
        %v3899 = vpop.permute.xlu0 %3898
        %3901 = vst.msk [vmem:[#allocation4 + $0xa] sm:$0x1] %vm3786, %v3899
        %3902 = vst [vmem:[#allocation1] sm:$0xff] %v3767
        %s3903 = scalar_lea.vmem [#allocation1], 6
        %v3904 = vld [vmem:[%s3903] ss:$9 sm:$0xff]
        %3906 = vst.msk [vmem:[#allocation4 + $0xb] sm:$0x1] %vm3775, %v3904
        %3907 = vst [vmem:[#allocation1] sm:$0xff] %v3767
        %s3908 = scalar_lea.vmem [#allocation1], 7
        %v3909 = vld [vmem:[%s3908] ss:$9 sm:$0xff]
        %3910 = vrot.lane.b32.xlu0 %v3909, 64
        %v3911 = vpop.permute.xlu0 %3910
        %3913 = vst.msk [vmem:[#allocation4 + $0xb] sm:$0x1] %vm3786, %v3911
        %3914 = vst.msk [vmem:[#allocation4 + $0xc] sm:$0x1] %vm3775, %v3768
        %3916 = vst [vmem:[#allocation1] sm:$0xff] %v3768
        %s3917 = scalar_lea.vmem [#allocation1], 1
        %v3918 = vld [vmem:[%s3917] ss:$9 sm:$0xff]
        %3919 = vrot.lane.b32.xlu0 %v3918, 64
        %v3920 = vpop.permute.xlu0 %3919
        %3922 = vst.msk [vmem:[#allocation4 + $0xc] sm:$0x1] %vm3786, %v3920
        %3923 = vst [vmem:[#allocation1] sm:$0xff] %v3768
        %s3924 = scalar_lea.vmem [#allocation1], 2
        %v3925 = vld [vmem:[%s3924] ss:$9 sm:$0xff]
        %3927 = vst.msk [vmem:[#allocation4 + $0xd] sm:$0x1] %vm3775, %v3925
        %3928 = vst [vmem:[#allocation1] sm:$0xff] %v3768
        %s3929 = scalar_lea.vmem [#allocation1], 3
        %v3930 = vld [vmem:[%s3929] ss:$9 sm:$0xff]
        %3931 = vrot.lane.b32.xlu0 %v3930, 64
        %v3932 = vpop.permute.xlu0 %3931
        %3934 = vst.msk [vmem:[#allocation4 + $0xd] sm:$0x1] %vm3786, %v3932
        %3935 = vst [vmem:[#allocation1] sm:$0xff] %v3768
        %s3936 = scalar_lea.vmem [#allocation1], 4
        %v3937 = vld [vmem:[%s3936] ss:$9 sm:$0xff]
        %3939 = vst.msk [vmem:[#allocation4 + $0xe] sm:$0x1] %vm3775, %v3937
        %3940 = vst [vmem:[#allocation1] sm:$0xff] %v3768
        %s3941 = scalar_lea.vmem [#allocation1], 5
        %v3942 = vld [vmem:[%s3941] ss:$9 sm:$0xff]
        %3943 = vrot.lane.b32.xlu0 %v3942, 64
        %v3944 = vpop.permute.xlu0 %3943
        %3946 = vst.msk [vmem:[#allocation4 + $0xe] sm:$0x1] %vm3786, %v3944
        %3947 = vst [vmem:[#allocation1] sm:$0xff] %v3768
        %s3948 = scalar_lea.vmem [#allocation1], 6
        %v3949 = vld [vmem:[%s3948] ss:$9 sm:$0xff]
        %3951 = vst.msk [vmem:[#allocation4 + $0xf] sm:$0x1] %vm3775, %v3949
        %3952 = vst [vmem:[#allocation1] sm:$0xff] %v3768
        %s3953 = scalar_lea.vmem [#allocation1], 7
        %v3954 = vld [vmem:[%s3953] ss:$9 sm:$0xff]
        %3955 = vrot.lane.b32.xlu0 %v3954, 64
        %v3956 = vpop.permute.xlu0 %3955
        %3958 = vst.msk [vmem:[#allocation4 + $0xf] sm:$0x1] %vm3786, %v3956
        %3959 = vst.msk [vmem:[#allocation4 + $0x10] sm:$0x1] %vm3775, %v3769
        %3961 = vst [vmem:[#allocation1] sm:$0xff] %v3769
        %s3962 = scalar_lea.vmem [#allocation1], 1
        %v3963 = vld [vmem:[%s3962] ss:$9 sm:$0xff]
        %3964 = vrot.lane.b32.xlu0 %v3963, 64
        %v3965 = vpop.permute.xlu0 %3964
        %3967 = vst.msk [vmem:[#allocation4 + $0x10] sm:$0x1] %vm3786, %v3965
        %3968 = vst [vmem:[#allocation1] sm:$0xff] %v3769
        %s3969 = scalar_lea.vmem [#allocation1], 2
        %v3970 = vld [vmem:[%s3969] ss:$9 sm:$0xff]
        %3972 = vst.msk [vmem:[#allocation4 + $0x11] sm:$0x1] %vm3775, %v3970
        %3973 = vst [vmem:[#allocation1] sm:$0xff] %v3769
        %s3974 = scalar_lea.vmem [#allocation1], 3
        %v3975 = vld [vmem:[%s3974] ss:$9 sm:$0xff]
        %3976 = vrot.lane.b32.xlu0 %v3975, 64
        %v3977 = vpop.permute.xlu0 %3976
        %3979 = vst.msk [vmem:[#allocation4 + $0x11] sm:$0x1] %vm3786, %v3977
        %3980 = vst [vmem:[#allocation1] sm:$0xff] %v3769
        %s3981 = scalar_lea.vmem [#allocation1], 4
        %v3982 = vld [vmem:[%s3981] ss:$9 sm:$0xff]
        %3984 = vst.msk [vmem:[#allocation4 + $0x12] sm:$0x1] %vm3775, %v3982
        %3985 = vst [vmem:[#allocation1] sm:$0xff] %v3769
        %s3986 = scalar_lea.vmem [#allocation1], 5
        %v3987 = vld [vmem:[%s3986] ss:$9 sm:$0xff]
        %3988 = vrot.lane.b32.xlu0 %v3987, 64
        %v3989 = vpop.permute.xlu0 %3988
        %3991 = vst.msk [vmem:[#allocation4 + $0x12] sm:$0x1] %vm3786, %v3989
        %3992 = vst [vmem:[#allocation1] sm:$0xff] %v3769
        %s3993 = scalar_lea.vmem [#allocation1], 6
        %v3994 = vld [vmem:[%s3993] ss:$9 sm:$0xff]
        %3996 = vst.msk [vmem:[#allocation4 + $0x13] sm:$0x1] %vm3775, %v3994
        %3997 = vst [vmem:[#allocation1] sm:$0xff] %v3769
        %s3998 = scalar_lea.vmem [#allocation1], 7
        %v3999 = vld [vmem:[%s3998] ss:$9 sm:$0xff]
        %4000 = vrot.lane.b32.xlu0 %v3999, 64
        %v4001 = vpop.permute.xlu0 %4000
        %4003 = vst.msk [vmem:[#allocation4 + $0x13] sm:$0x1] %vm3786, %v4001
        %4004 = vst.msk [vmem:[#allocation4 + $0x14] sm:$0x1] %vm3775, %v3770
        %4006 = vst [vmem:[#allocation1] sm:$0xff] %v3770
        %s4007 = scalar_lea.vmem [#allocation1], 1
        %v4008 = vld [vmem:[%s4007] ss:$9 sm:$0xff]
        %4009 = vrot.lane.b32.xlu0 %v4008, 64
        %v4010 = vpop.permute.xlu0 %4009
        %4012 = vst.msk [vmem:[#allocation4 + $0x14] sm:$0x1] %vm3786, %v4010
        %4013 = vst [vmem:[#allocation1] sm:$0xff] %v3770
        %s4014 = scalar_lea.vmem [#allocation1], 2
        %v4015 = vld [vmem:[%s4014] ss:$9 sm:$0xff]
        %4017 = vst.msk [vmem:[#allocation4 + $0x15] sm:$0x1] %vm3775, %v4015
        %4018 = vst [vmem:[#allocation1] sm:$0xff] %v3770
        %s4019 = scalar_lea.vmem [#allocation1], 3
        %v4020 = vld [vmem:[%s4019] ss:$9 sm:$0xff]
        %4021 = vrot.lane.b32.xlu0 %v4020, 64
        %v4022 = vpop.permute.xlu0 %4021
        %4024 = vst.msk [vmem:[#allocation4 + $0x15] sm:$0x1] %vm3786, %v4022
        %4025 = vst [vmem:[#allocation1] sm:$0xff] %v3770
        %s4026 = scalar_lea.vmem [#allocation1], 4
        %v4027 = vld [vmem:[%s4026] ss:$9 sm:$0xff]
        %4029 = vst.msk [vmem:[#allocation4 + $0x16] sm:$0x1] %vm3775, %v4027
        %4030 = vst [vmem:[#allocation1] sm:$0xff] %v3770
        %s4031 = scalar_lea.vmem [#allocation1], 5
        %v4032 = vld [vmem:[%s4031] ss:$9 sm:$0xff]
        %4033 = vrot.lane.b32.xlu0 %v4032, 64
        %v4034 = vpop.permute.xlu0 %4033
        %4036 = vst.msk [vmem:[#allocation4 + $0x16] sm:$0x1] %vm3786, %v4034
        %4037 = vst [vmem:[#allocation1] sm:$0xff] %v3770
        %s4038 = scalar_lea.vmem [#allocation1], 6
        %v4039 = vld [vmem:[%s4038] ss:$9 sm:$0xff]
        %4041 = vst.msk [vmem:[#allocation4 + $0x17] sm:$0x1] %vm3775, %v4039
        %4042 = vst [vmem:[#allocation1] sm:$0xff] %v3770
        %s4043 = scalar_lea.vmem [#allocation1], 7
        %v4044 = vld [vmem:[%s4043] ss:$9 sm:$0xff]
        %4045 = vrot.lane.b32.xlu0 %v4044, 64
        %v4046 = vpop.permute.xlu0 %4045
        %4048 = vst.msk [vmem:[#allocation4 + $0x17] sm:$0x1] %vm3786, %v4046
        %4049 = vst.msk [vmem:[#allocation4 + $0x18] sm:$0x1] %vm3775, %v3771
        %v4050 = vld [vmem:[#allocation4] sm:$0xff]
        %v4051 = vld [vmem:[#allocation4 + $0x8] sm:$0xff]
        %v4052 = vld [vmem:[#allocation4 + $0x10] sm:$0xff]
        %v4053 = vld [vmem:[#allocation4 + $0x18] sm:$0x1]
        %v4058 = vperm.slane %v4050, 0
        %v4059 = vperm.slane %v4050, 1
        %v4060 = vperm.slane %v4050, 2
        %v4061 = vperm.slane %v4050, 3
        %v4062 = vperm.slane %v4050, 4
        %v4063 = vperm.slane %v4050, 5
        %v4064 = vperm.slane %v4050, 6
        %v4065 = vperm.slane %v4050, 7
        %v4066 = vperm.slane %v4051, 0
        %v4067 = vperm.slane %v4051, 1
        %v4068 = vperm.slane %v4051, 2
        %v4069 = vperm.slane %v4051, 3
        %v4070 = vperm.slane %v4051, 4
        %v4071 = vperm.slane %v4051, 5
        %v4072 = vperm.slane %v4051, 6
        %v4073 = vperm.slane %v4051, 7
        %v4074 = vperm.slane %v4052, 0
        %v4075 = vperm.slane %v4052, 1
        %v4076 = vperm.slane %v4052, 2
        %v4077 = vperm.slane %v4052, 3
        %v4078 = vperm.slane %v4052, 4
        %v4079 = vperm.slane %v4052, 5
        %v4080 = vperm.slane %v4052, 6
        %v4081 = vperm.slane %v4052, 7
        %v4082 = vperm.slane %v4053, 0
        %v4108 = vpack.c.bf16 %v4058, %v4058
        %v4109 = vpack.c.bf16 %v4059, %v4059
        %v4110 = vpack.c.bf16 %v4060, %v4060
        %v4111 = vpack.c.bf16 %v4061, %v4061
        %v4112 = vpack.c.bf16 %v4062, %v4062
        %v4113 = vpack.c.bf16 %v4063, %v4063
        %v4114 = vpack.c.bf16 %v4064, %v4064
        %v4115 = vpack.c.bf16 %v4065, %v4065
        %v4116 = vpack.c.bf16 %v4066, %v4066
        %v4117 = vpack.c.bf16 %v4067, %v4067
        %v4118 = vpack.c.bf16 %v4068, %v4068
        %v4119 = vpack.c.bf16 %v4069, %v4069
        %v4120 = vpack.c.bf16 %v4070, %v4070
        %v4121 = vpack.c.bf16 %v4071, %v4071
        %v4122 = vpack.c.bf16 %v4072, %v4072
        %v4123 = vpack.c.bf16 %v4073, %v4073
        %v4124 = vpack.c.bf16 %v4074, %v4074
        %v4125 = vpack.c.bf16 %v4075, %v4075
        %v4126 = vpack.c.bf16 %v4076, %v4076
        %v4127 = vpack.c.bf16 %v4077, %v4077
        %v4128 = vpack.c.bf16 %v4078, %v4078
        %v4129 = vpack.c.bf16 %v4079, %v4079
        %v4130 = vpack.c.bf16 %v4080, %v4080
        %v4131 = vpack.c.bf16 %v4081, %v4081
        %v4132 = vpack.c.bf16 %v4082, %v4082
        %v4133 = vld [vmem:[%s5] sm:$0xf]
        %v4134 = vld [vmem:[%s5 + $0x4] sm:$0xf]
        %v4135 = vld [vmem:[%s5 + $0x8] sm:$0xf]
        %v4136 = vld [vmem:[%s5 + $0xc] sm:$0xf]
        %v4137 = vld [vmem:[%s5 + $0x10] sm:$0xf]
        %v4138 = vld [vmem:[%s5 + $0x14] sm:$0xf]
        %v4139 = vld [vmem:[%s5 + $0x18] sm:$0xf]
        %v4140 = vld [vmem:[%s5 + $0x1c] sm:$0xf]
        %v4141 = vld [vmem:[%s5 + $0x20] sm:$0xf]
        %v4142 = vld [vmem:[%s5 + $0x24] sm:$0xf]
        %v4143 = vld [vmem:[%s5 + $0x28] sm:$0xf]
        %v4144 = vld [vmem:[%s5 + $0x2c] sm:$0xf]
        %v4145 = vld [vmem:[%s5 + $0x30] sm:$0xf]
        %v4146 = vld [vmem:[%s5 + $0x34] sm:$0xf]
        %v4147 = vld [vmem:[%s5 + $0x38] sm:$0xf]
        %v4148 = vld [vmem:[%s5 + $0x3c] sm:$0xf]
        %v4149 = vld [vmem:[%s5 + $0x40] sm:$0xf]
        %v4150 = vld [vmem:[%s5 + $0x44] sm:$0xf]
        %v4151 = vld [vmem:[%s5 + $0x48] sm:$0xf]
        %v4152 = vld [vmem:[%s5 + $0x4c] sm:$0xf]
        %v4153 = vld [vmem:[%s5 + $0x50] sm:$0xf]
        %v4154 = vld [vmem:[%s5 + $0x54] sm:$0xf]
        %v4155 = vld [vmem:[%s5 + $0x58] sm:$0xf]
        %v4156 = vld [vmem:[%s5 + $0x5c] sm:$0xf]
        %v4157 = vld [vmem:[%s5 + $0x60] sm:$0xf]
        %v4158 = vld [vmem:[%s5 + $0x64] sm:$0xf]
        %v4159 = vld [vmem:[%s5 + $0x68] sm:$0xf]
        %v4160 = vld [vmem:[%s5 + $0x6c] sm:$0xf]
        %v4161 = vld [vmem:[%s5 + $0x70] sm:$0xf]
        %v4162 = vld [vmem:[%s5 + $0x74] sm:$0xf]
        %v4163 = vld [vmem:[%s5 + $0x78] sm:$0xf]
        %v4164 = vld [vmem:[%s5 + $0x7c] sm:$0xf]
        %v4165 = vld [vmem:[%s5 + $0x80] sm:$0xf]
        %v4166 = vld [vmem:[%s5 + $0x84] sm:$0xf]
        %v4167 = vld [vmem:[%s5 + $0x88] sm:$0xf]
        %v4168 = vld [vmem:[%s5 + $0x8c] sm:$0xf]
        %v4169 = vld [vmem:[%s5 + $0x90] sm:$0xf]
        %v4170 = vld [vmem:[%s5 + $0x94] sm:$0xf]
        %v4171 = vld [vmem:[%s5 + $0x98] sm:$0xf]
        %v4172 = vld [vmem:[%s5 + $0x9c] sm:$0xf]
        %v4173 = vld [vmem:[%s5 + $0xa0] sm:$0xf]
        %v4174 = vld [vmem:[%s5 + $0xa4] sm:$0xf]
        %v4175 = vld [vmem:[%s5 + $0xa8] sm:$0xf]
        %v4176 = vld [vmem:[%s5 + $0xac] sm:$0xf]
        %v4177 = vld [vmem:[%s5 + $0xb0] sm:$0xf]
        %v4178 = vld [vmem:[%s5 + $0xb4] sm:$0xf]
        %v4179 = vld [vmem:[%s5 + $0xb8] sm:$0xf]
        %v4180 = vld [vmem:[%s5 + $0xbc] sm:$0xf]
        %v4181 = vld [vmem:[%s5 + $0xc0] sm:$0xf]
        %v4182 = vld [vmem:[%s5 + $0xc4] sm:$0xf]
        %v4183 = vld [vmem:[%s5 + $0xc8] sm:$0xf]
        %v4184 = vld [vmem:[%s5 + $0xcc] sm:$0xf]
        %v4185 = vld [vmem:[%s5 + $0xd0] sm:$0xf]
        %v4186 = vld [vmem:[%s5 + $0xd4] sm:$0xf]
        %v4187 = vld [vmem:[%s5 + $0xd8] sm:$0xf]
        %v4188 = vld [vmem:[%s5 + $0xdc] sm:$0xf]
        %v4189 = vld [vmem:[%s5 + $0xe0] sm:$0xf]
        %v4190 = vld [vmem:[%s5 + $0xe4] sm:$0xf]
        %v4191 = vld [vmem:[%s5 + $0xe8] sm:$0xf]
        %v4192 = vld [vmem:[%s5 + $0xec] sm:$0xf]
        %v4193 = vld [vmem:[%s5 + $0xf0] sm:$0xf]
        %v4194 = vld [vmem:[%s5 + $0xf4] sm:$0xf]
        %v4195 = vld [vmem:[%s5 + $0xf8] sm:$0xf]
        %v4196 = vld [vmem:[%s5 + $0xfc] sm:$0xf]
        %v4197 = vld [vmem:[%s5 + $0x100] sm:$0xf]
        %v4198 = vld [vmem:[%s5 + $0x104] sm:$0xf]
        %v4199 = vld [vmem:[%s5 + $0x108] sm:$0xf]
        %v4200 = vld [vmem:[%s5 + $0x10c] sm:$0xf]
        %v4201 = vld [vmem:[%s5 + $0x110] sm:$0xf]
        %v4202 = vld [vmem:[%s5 + $0x114] sm:$0xf]
        %v4203 = vld [vmem:[%s5 + $0x118] sm:$0xf]
        %v4204 = vld [vmem:[%s5 + $0x11c] sm:$0xf]
        %v4205 = vld [vmem:[%s5 + $0x120] sm:$0xf]
        %v4206 = vld [vmem:[%s5 + $0x124] sm:$0xf]
        %v4207 = vld [vmem:[%s5 + $0x128] sm:$0xf]
        %v4208 = vld [vmem:[%s5 + $0x12c] sm:$0xf]
        %v4209 = vld [vmem:[%s5 + $0x130] sm:$0xf]
        %v4210 = vld [vmem:[%s5 + $0x134] sm:$0xf]
        %v4211 = vld [vmem:[%s5 + $0x138] sm:$0xf]
        %v4212 = vld [vmem:[%s5 + $0x13c] sm:$0xf]
        %v4213 = vld [vmem:[%s5 + $0x140] sm:$0xf]
        %v4214 = vld [vmem:[%s5 + $0x144] sm:$0xf]
        %v4215 = vld [vmem:[%s5 + $0x148] sm:$0xf]
        %v4216 = vld [vmem:[%s5 + $0x14c] sm:$0xf]
        %v4217 = vld [vmem:[%s5 + $0x150] sm:$0xf]
        %v4218 = vld [vmem:[%s5 + $0x154] sm:$0xf]
        %v4219 = vld [vmem:[%s5 + $0x158] sm:$0xf]
        %v4220 = vld [vmem:[%s5 + $0x15c] sm:$0xf]
        %v4221 = vld [vmem:[%s5 + $0x160] sm:$0xf]
        %v4222 = vld [vmem:[%s5 + $0x164] sm:$0xf]
        %v4223 = vld [vmem:[%s5 + $0x168] sm:$0xf]
        %v4224 = vld [vmem:[%s5 + $0x16c] sm:$0xf]
        %v4225 = vld [vmem:[%s5 + $0x170] sm:$0xf]
        %v4226 = vld [vmem:[%s5 + $0x174] sm:$0xf]
        %v4227 = vld [vmem:[%s5 + $0x178] sm:$0xf]
        %v4228 = vld [vmem:[%s5 + $0x17c] sm:$0xf]
        %v4229 = vld [vmem:[%s5 + $0x180] sm:$0xf]
        %v4230 = vld [vmem:[%s5 + $0x184] sm:$0xf]
        %v4231 = vld [vmem:[%s5 + $0x188] sm:$0xf]
        %v4232 = vld [vmem:[%s5 + $0x18c] sm:$0xf]
        %v4233 = vld [vmem:[%s5 + $0x190] sm:$0xf]
        %v4234 = vld [vmem:[%s5 + $0x194] sm:$0xf]
        %v4235 = vld [vmem:[%s5 + $0x198] sm:$0xf]
        %v4236 = vld [vmem:[%s5 + $0x19c] sm:$0xf]
        %v4237 = vld [vmem:[%s5 + $0x1a0] sm:$0xf]
        %v4238 = vld [vmem:[%s5 + $0x1a4] sm:$0xf]
        %v4239 = vld [vmem:[%s5 + $0x1a8] sm:$0xf]
        %v4240 = vld [vmem:[%s5 + $0x1ac] sm:$0xf]
        %v4241 = vld [vmem:[%s5 + $0x1b0] sm:$0xf]
        %v4242 = vld [vmem:[%s5 + $0x1b4] sm:$0xf]
        %v4243 = vld [vmem:[%s5 + $0x1b8] sm:$0xf]
        %v4244 = vld [vmem:[%s5 + $0x1bc] sm:$0xf]
        %v4245 = vld [vmem:[%s5 + $0x1c0] sm:$0xf]
        %v4246 = vld [vmem:[%s5 + $0x1c4] sm:$0xf]
        %v4247 = vld [vmem:[%s5 + $0x1c8] sm:$0xf]
        %v4248 = vld [vmem:[%s5 + $0x1cc] sm:$0xf]
        %v4249 = vld [vmem:[%s5 + $0x1d0] sm:$0xf]
        %v4250 = vld [vmem:[%s5 + $0x1d4] sm:$0xf]
        %v4251 = vld [vmem:[%s5 + $0x1d8] sm:$0xf]
        %v4252 = vld [vmem:[%s5 + $0x1dc] sm:$0xf]
        %v4253 = vld [vmem:[%s5 + $0x1e0] sm:$0xf]
        %v4254 = vld [vmem:[%s5 + $0x1e4] sm:$0xf]
        %v4255 = vld [vmem:[%s5 + $0x1e8] sm:$0xf]
        %v4256 = vld [vmem:[%s5 + $0x1ec] sm:$0xf]
        %v4257 = vld [vmem:[%s5 + $0x1f0] sm:$0xf]
        %v4258 = vld [vmem:[%s5 + $0x1f4] sm:$0xf]
        %v4259 = vld [vmem:[%s5 + $0x1f8] sm:$0xf]
        %v4260 = vld [vmem:[%s5 + $0x1fc] sm:$0xf]
        %v4261 = vld [vmem:[%s5 + $0x200] sm:$0xf]
        %v4262 = vld [vmem:[%s5 + $0x204] sm:$0xf]
        %v4263 = vld [vmem:[%s5 + $0x208] sm:$0xf]
        %v4264 = vld [vmem:[%s5 + $0x20c] sm:$0xf]
        %v4265 = vld [vmem:[%s5 + $0x210] sm:$0xf]
        %v4266 = vld [vmem:[%s5 + $0x214] sm:$0xf]
        %v4267 = vld [vmem:[%s5 + $0x218] sm:$0xf]
        %v4268 = vld [vmem:[%s5 + $0x21c] sm:$0xf]
        %v4269 = vld [vmem:[%s5 + $0x220] sm:$0xf]
        %v4270 = vld [vmem:[%s5 + $0x224] sm:$0xf]
        %v4271 = vld [vmem:[%s5 + $0x228] sm:$0xf]
        %v4272 = vld [vmem:[%s5 + $0x22c] sm:$0xf]
        %v4273 = vld [vmem:[%s5 + $0x230] sm:$0xf]
        %v4274 = vld [vmem:[%s5 + $0x234] sm:$0xf]
        %v4275 = vld [vmem:[%s5 + $0x238] sm:$0xf]
        %v4276 = vld [vmem:[%s5 + $0x23c] sm:$0xf]
        %v4277 = vld [vmem:[%s5 + $0x240] sm:$0xf]
        %v4278 = vld [vmem:[%s5 + $0x244] sm:$0xf]
        %v4279 = vld [vmem:[%s5 + $0x248] sm:$0xf]
        %v4280 = vld [vmem:[%s5 + $0x24c] sm:$0xf]
        %v4281 = vld [vmem:[%s5 + $0x250] sm:$0xf]
        %v4282 = vld [vmem:[%s5 + $0x254] sm:$0xf]
        %v4283 = vld [vmem:[%s5 + $0x258] sm:$0xf]
        %v4284 = vld [vmem:[%s5 + $0x25c] sm:$0xf]
        %v4285 = vld [vmem:[%s5 + $0x260] sm:$0xf]
        %v4286 = vld [vmem:[%s5 + $0x264] sm:$0xf]
        %v4287 = vld [vmem:[%s5 + $0x268] sm:$0xf]
        %v4288 = vld [vmem:[%s5 + $0x26c] sm:$0xf]
        %v4289 = vld [vmem:[%s5 + $0x270] sm:$0xf]
        %v4290 = vld [vmem:[%s5 + $0x274] sm:$0xf]
        %v4291 = vld [vmem:[%s5 + $0x278] sm:$0xf]
        %v4292 = vld [vmem:[%s5 + $0x27c] sm:$0xf]
        %v4293 = vld [vmem:[%s5 + $0x280] sm:$0xf]
        %v4294 = vld [vmem:[%s5 + $0x284] sm:$0xf]
        %v4295 = vld [vmem:[%s5 + $0x288] sm:$0xf]
        %v4296 = vld [vmem:[%s5 + $0x28c] sm:$0xf]
        %v4297 = vld [vmem:[%s5 + $0x290] sm:$0xf]
        %v4298 = vld [vmem:[%s5 + $0x294] sm:$0xf]
        %v4299 = vld [vmem:[%s5 + $0x298] sm:$0xf]
        %v4300 = vld [vmem:[%s5 + $0x29c] sm:$0xf]
        %v4301 = vld [vmem:[%s5 + $0x2a0] sm:$0xf]
        %v4302 = vld [vmem:[%s5 + $0x2a4] sm:$0xf]
        %v4303 = vld [vmem:[%s5 + $0x2a8] sm:$0xf]
        %v4304 = vld [vmem:[%s5 + $0x2ac] sm:$0xf]
        %v4305 = vld [vmem:[%s5 + $0x2b0] sm:$0xf]
        %v4306 = vld [vmem:[%s5 + $0x2b4] sm:$0xf]
        %v4307 = vld [vmem:[%s5 + $0x2b8] sm:$0xf]
        %v4308 = vld [vmem:[%s5 + $0x2bc] sm:$0xf]
        %v4309 = vld [vmem:[%s5 + $0x2c0] sm:$0xf]
        %v4310 = vld [vmem:[%s5 + $0x2c4] sm:$0xf]
        %v4311 = vld [vmem:[%s5 + $0x2c8] sm:$0xf]
        %v4312 = vld [vmem:[%s5 + $0x2cc] sm:$0xf]
        %v4313 = vld [vmem:[%s5 + $0x2d0] sm:$0xf]
        %v4314 = vld [vmem:[%s5 + $0x2d4] sm:$0xf]
        %v4315 = vld [vmem:[%s5 + $0x2d8] sm:$0xf]
        %v4316 = vld [vmem:[%s5 + $0x2dc] sm:$0xf]
        %v4317 = vld [vmem:[%s5 + $0x2e0] sm:$0xf]
        %v4318 = vld [vmem:[%s5 + $0x2e4] sm:$0xf]
        %v4319 = vld [vmem:[%s5 + $0x2e8] sm:$0xf]
        %v4320 = vld [vmem:[%s5 + $0x2ec] sm:$0xf]
        %v4321 = vld [vmem:[%s5 + $0x2f0] sm:$0xf]
        %v4322 = vld [vmem:[%s5 + $0x2f4] sm:$0xf]
        %v4323 = vld [vmem:[%s5 + $0x2f8] sm:$0xf]
        %v4324 = vld [vmem:[%s5 + $0x2fc] sm:$0xf]
        %v4325 = vld [vmem:[%s5 + $0x300] sm:$0xf]
        %v4326 = vld [vmem:[%s5 + $0x304] sm:$0xf]
        %v4327 = vld [vmem:[%s5 + $0x308] sm:$0xf]
        %v4328 = vld [vmem:[%s5 + $0x30c] sm:$0xf]
        %v4329 = vld [vmem:[%s5 + $0x310] sm:$0xf]
        %v4330 = vld [vmem:[%s5 + $0x314] sm:$0xf]
        %v4331 = vld [vmem:[%s5 + $0x318] sm:$0xf]
        %v4332 = vld [vmem:[%s5 + $0x31c] sm:$0xf]
        %v4333 = vld [vmem:[%s5 + $0x320] sm:$0xf]
        %v4334 = vld [vmem:[%s5 + $0x324] sm:$0xf]
        %v4335 = vld [vmem:[%s5 + $0x328] sm:$0xf]
        %v4336 = vld [vmem:[%s5 + $0x32c] sm:$0xf]
        %v4337 = vld [vmem:[%s5 + $0x330] sm:$0xf]
        %v4338 = vld [vmem:[%s5 + $0x334] sm:$0xf]
        %v4339 = vld [vmem:[%s5 + $0x338] sm:$0xf]
        %v4340 = vld [vmem:[%s5 + $0x33c] sm:$0xf]
        %v4341 = vld [vmem:[%s5 + $0x340] sm:$0xf]
        %v4342 = vld [vmem:[%s5 + $0x344] sm:$0xf]
        %v4343 = vld [vmem:[%s5 + $0x348] sm:$0xf]
        %v4344 = vld [vmem:[%s5 + $0x34c] sm:$0xf]
        %v4345 = vld [vmem:[%s5 + $0x350] sm:$0xf]
        %v4346 = vld [vmem:[%s5 + $0x354] sm:$0xf]
        %v4347 = vld [vmem:[%s5 + $0x358] sm:$0xf]
        %v4348 = vld [vmem:[%s5 + $0x35c] sm:$0xf]
        %v4349 = vld [vmem:[%s5 + $0x360] sm:$0xf]
        %v4350 = vld [vmem:[%s5 + $0x364] sm:$0xf]
        %v4351 = vld [vmem:[%s5 + $0x368] sm:$0xf]
        %v4352 = vld [vmem:[%s5 + $0x36c] sm:$0xf]
        %v4353 = vld [vmem:[%s5 + $0x370] sm:$0xf]
        %v4354 = vld [vmem:[%s5 + $0x374] sm:$0xf]
        %v4355 = vld [vmem:[%s5 + $0x378] sm:$0xf]
        %v4356 = vld [vmem:[%s5 + $0x37c] sm:$0xf]
        %v4357 = vld [vmem:[%s5 + $0x380] sm:$0xf]
        %v4358 = vld [vmem:[%s5 + $0x384] sm:$0xf]
        %v4359 = vld [vmem:[%s5 + $0x388] sm:$0xf]
        %v4360 = vld [vmem:[%s5 + $0x38c] sm:$0xf]
        %v4361 = vld [vmem:[%s5 + $0x390] sm:$0xf]
        %v4362 = vld [vmem:[%s5 + $0x394] sm:$0xf]
        %v4363 = vld [vmem:[%s5 + $0x398] sm:$0xf]
        %v4364 = vld [vmem:[%s5 + $0x39c] sm:$0xf]
        %v4365 = vld [vmem:[%s5 + $0x3a0] sm:$0xf]
        %v4366 = vld [vmem:[%s5 + $0x3a4] sm:$0xf]
        %v4367 = vld [vmem:[%s5 + $0x3a8] sm:$0xf]
        %v4368 = vld [vmem:[%s5 + $0x3ac] sm:$0xf]
        %v4369 = vld [vmem:[%s5 + $0x3b0] sm:$0xf]
        %v4370 = vld [vmem:[%s5 + $0x3b4] sm:$0xf]
        %v4371 = vld [vmem:[%s5 + $0x3b8] sm:$0xf]
        %v4372 = vld [vmem:[%s5 + $0x3bc] sm:$0xf]
        %v4373 = vld [vmem:[%s5 + $0x3c0] sm:$0xf]
        %v4374 = vld [vmem:[%s5 + $0x3c4] sm:$0xf]
        %v4375 = vld [vmem:[%s5 + $0x3c8] sm:$0xf]
        %v4376 = vld [vmem:[%s5 + $0x3cc] sm:$0xf]
        %v4377 = vld [vmem:[%s5 + $0x3d0] sm:$0xf]
        %v4378 = vld [vmem:[%s5 + $0x3d4] sm:$0xf]
        %v4379 = vld [vmem:[%s5 + $0x3d8] sm:$0xf]
        %v4380 = vld [vmem:[%s5 + $0x3dc] sm:$0xf]
        %v4381 = vld [vmem:[%s5 + $0x3e0] sm:$0xf]
        %v4382 = vld [vmem:[%s5 + $0x3e4] sm:$0xf]
        %v4383 = vld [vmem:[%s5 + $0x3e8] sm:$0xf]
        %v4384 = vld [vmem:[%s5 + $0x3ec] sm:$0xf]
        %v4385 = vld [vmem:[%s5 + $0x3f0] sm:$0xf]
        %v4386 = vld [vmem:[%s5 + $0x3f4] sm:$0xf]
        %v4387 = vld [vmem:[%s5 + $0x3f8] sm:$0xf]
        %v4388 = vld [vmem:[%s5 + $0x3fc] sm:$0xf]
        %v4389 = vld [vmem:[%s5 + $0x400] sm:$0xf]
        %v4390 = vld [vmem:[%s5 + $0x404] sm:$0xf]
        %v4391 = vld [vmem:[%s5 + $0x408] sm:$0xf]
        %v4392 = vld [vmem:[%s5 + $0x40c] sm:$0xf]
        %v4393 = vld [vmem:[%s5 + $0x410] sm:$0xf]
        %v4394 = vld [vmem:[%s5 + $0x414] sm:$0xf]
        %v4395 = vld [vmem:[%s5 + $0x418] sm:$0xf]
        %v4396 = vld [vmem:[%s5 + $0x41c] sm:$0xf]
        %v4397 = vld [vmem:[%s5 + $0x420] sm:$0xf]
        %v4398 = vld [vmem:[%s5 + $0x424] sm:$0xf]
        %v4399 = vld [vmem:[%s5 + $0x428] sm:$0xf]
        %v4400 = vld [vmem:[%s5 + $0x42c] sm:$0xf]
        %v4401 = vld [vmem:[%s5 + $0x430] sm:$0xf]
        %v4402 = vld [vmem:[%s5 + $0x434] sm:$0xf]
        %v4403 = vld [vmem:[%s5 + $0x438] sm:$0xf]
        %v4404 = vld [vmem:[%s5 + $0x43c] sm:$0xf]
        %v4405 = vld [vmem:[%s5 + $0x440] sm:$0xf]
        %v4406 = vld [vmem:[%s5 + $0x444] sm:$0xf]
        %v4407 = vld [vmem:[%s5 + $0x448] sm:$0xf]
        %v4408 = vld [vmem:[%s5 + $0x44c] sm:$0xf]
        %v4409 = vld [vmem:[%s5 + $0x450] sm:$0xf]
        %v4410 = vld [vmem:[%s5 + $0x454] sm:$0xf]
        %v4411 = vld [vmem:[%s5 + $0x458] sm:$0xf]
        %v4412 = vld [vmem:[%s5 + $0x45c] sm:$0xf]
        %v4413 = vld [vmem:[%s5 + $0x460] sm:$0xf]
        %v4414 = vld [vmem:[%s5 + $0x464] sm:$0xf]
        %v4415 = vld [vmem:[%s5 + $0x468] sm:$0xf]
        %v4416 = vld [vmem:[%s5 + $0x46c] sm:$0xf]
        %v4417 = vld [vmem:[%s5 + $0x470] sm:$0xf]
        %v4418 = vld [vmem:[%s5 + $0x474] sm:$0xf]
        %v4419 = vld [vmem:[%s5 + $0x478] sm:$0xf]
        %v4420 = vld [vmem:[%s5 + $0x47c] sm:$0xf]
        %v4421 = vld [vmem:[%s5 + $0x480] sm:$0xf]
        %v4422 = vld [vmem:[%s5 + $0x484] sm:$0xf]
        %v4423 = vld [vmem:[%s5 + $0x488] sm:$0xf]
        %v4424 = vld [vmem:[%s5 + $0x48c] sm:$0xf]
        %v4425 = vld [vmem:[%s5 + $0x490] sm:$0xf]
        %v4426 = vld [vmem:[%s5 + $0x494] sm:$0xf]
        %v4427 = vld [vmem:[%s5 + $0x498] sm:$0xf]
        %v4428 = vld [vmem:[%s5 + $0x49c] sm:$0xf]
        %v4429 = vld [vmem:[%s5 + $0x4a0] sm:$0xf]
        %v4430 = vld [vmem:[%s5 + $0x4a4] sm:$0xf]
        %v4431 = vld [vmem:[%s5 + $0x4a8] sm:$0xf]
        %v4432 = vld [vmem:[%s5 + $0x4ac] sm:$0xf]
        %v4433 = vld [vmem:[%s5 + $0x4b0] sm:$0xf]
        %v4434 = vld [vmem:[%s5 + $0x4b4] sm:$0xf]
        %v4435 = vld [vmem:[%s5 + $0x4b8] sm:$0xf]
        %v4436 = vld [vmem:[%s5 + $0x4bc] sm:$0xf]
        %v4437 = vld [vmem:[%s5 + $0x4c0] sm:$0xf]
        %v4438 = vld [vmem:[%s5 + $0x4c4] sm:$0xf]
        %v4439 = vld [vmem:[%s5 + $0x4c8] sm:$0xf]
        %v4440 = vld [vmem:[%s5 + $0x4cc] sm:$0xf]
        %v4441 = vld [vmem:[%s5 + $0x4d0] sm:$0xf]
        %v4442 = vld [vmem:[%s5 + $0x4d4] sm:$0xf]
        %v4443 = vld [vmem:[%s5 + $0x4d8] sm:$0xf]
        %v4444 = vld [vmem:[%s5 + $0x4dc] sm:$0xf]
        %v4445 = vld [vmem:[%s5 + $0x4e0] sm:$0xf]
        %v4446 = vld [vmem:[%s5 + $0x4e4] sm:$0xf]
        %v4447 = vld [vmem:[%s5 + $0x4e8] sm:$0xf]
        %v4448 = vld [vmem:[%s5 + $0x4ec] sm:$0xf]
        %v4449 = vld [vmem:[%s5 + $0x4f0] sm:$0xf]
        %v4450 = vld [vmem:[%s5 + $0x4f4] sm:$0xf]
        %v4451 = vld [vmem:[%s5 + $0x4f8] sm:$0xf]
        %v4452 = vld [vmem:[%s5 + $0x4fc] sm:$0xf]
        %v4453 = vld [vmem:[%s5 + $0x500] sm:$0xf]
        %v4454 = vld [vmem:[%s5 + $0x504] sm:$0xf]
        %v4455 = vld [vmem:[%s5 + $0x508] sm:$0xf]
        %v4456 = vld [vmem:[%s5 + $0x50c] sm:$0xf]
        %v4457 = vld [vmem:[%s5 + $0x510] sm:$0xf]
        %v4458 = vld [vmem:[%s5 + $0x514] sm:$0xf]
        %v4459 = vld [vmem:[%s5 + $0x518] sm:$0xf]
        %v4460 = vld [vmem:[%s5 + $0x51c] sm:$0xf]
        %v4461 = vld [vmem:[%s5 + $0x520] sm:$0xf]
        %v4462 = vld [vmem:[%s5 + $0x524] sm:$0xf]
        %v4463 = vld [vmem:[%s5 + $0x528] sm:$0xf]
        %v4464 = vld [vmem:[%s5 + $0x52c] sm:$0xf]
        %v4465 = vld [vmem:[%s5 + $0x530] sm:$0xf]
        %v4466 = vld [vmem:[%s5 + $0x534] sm:$0xf]
        %v4467 = vld [vmem:[%s5 + $0x538] sm:$0xf]
        %v4468 = vld [vmem:[%s5 + $0x53c] sm:$0xf]
        %v4469 = vld [vmem:[%s5 + $0x540] sm:$0xf]
        %v4470 = vld [vmem:[%s5 + $0x544] sm:$0xf]
        %v4471 = vld [vmem:[%s5 + $0x548] sm:$0xf]
        %v4472 = vld [vmem:[%s5 + $0x54c] sm:$0xf]
        %v4473 = vld [vmem:[%s5 + $0x550] sm:$0xf]
        %v4474 = vld [vmem:[%s5 + $0x554] sm:$0xf]
        %v4475 = vld [vmem:[%s5 + $0x558] sm:$0xf]
        %v4476 = vld [vmem:[%s5 + $0x55c] sm:$0xf]
        %v4477 = vld [vmem:[%s5 + $0x560] sm:$0xf]
        %v4478 = vld [vmem:[%s5 + $0x564] sm:$0xf]
        %v4479 = vld [vmem:[%s5 + $0x568] sm:$0xf]
        %v4480 = vld [vmem:[%s5 + $0x56c] sm:$0xf]
        %v4481 = vld [vmem:[%s5 + $0x570] sm:$0xf]
        %v4482 = vld [vmem:[%s5 + $0x574] sm:$0xf]
        %v4483 = vld [vmem:[%s5 + $0x578] sm:$0xf]
        %v4484 = vld [vmem:[%s5 + $0x57c] sm:$0xf]
        %v4485 = vld [vmem:[%s5 + $0x580] sm:$0xf]
        %v4486 = vld [vmem:[%s5 + $0x584] sm:$0xf]
        %v4487 = vld [vmem:[%s5 + $0x588] sm:$0xf]
        %v4488 = vld [vmem:[%s5 + $0x58c] sm:$0xf]
        %v4489 = vld [vmem:[%s5 + $0x590] sm:$0xf]
        %v4490 = vld [vmem:[%s5 + $0x594] sm:$0xf]
        %v4491 = vld [vmem:[%s5 + $0x598] sm:$0xf]
        %v4492 = vld [vmem:[%s5 + $0x59c] sm:$0xf]
        %v4493 = vld [vmem:[%s5 + $0x5a0] sm:$0xf]
        %v4494 = vld [vmem:[%s5 + $0x5a4] sm:$0xf]
        %v4495 = vld [vmem:[%s5 + $0x5a8] sm:$0xf]
        %v4496 = vld [vmem:[%s5 + $0x5ac] sm:$0xf]
        %v4497 = vld [vmem:[%s5 + $0x5b0] sm:$0xf]
        %v4498 = vld [vmem:[%s5 + $0x5b4] sm:$0xf]
        %v4499 = vld [vmem:[%s5 + $0x5b8] sm:$0xf]
        %v4500 = vld [vmem:[%s5 + $0x5bc] sm:$0xf]
        %v4501 = vld [vmem:[%s5 + $0x5c0] sm:$0xf]
        %v4502 = vld [vmem:[%s5 + $0x5c4] sm:$0xf]
        %v4503 = vld [vmem:[%s5 + $0x5c8] sm:$0xf]
        %v4504 = vld [vmem:[%s5 + $0x5cc] sm:$0xf]
        %v4505 = vld [vmem:[%s5 + $0x5d0] sm:$0xf]
        %v4506 = vld [vmem:[%s5 + $0x5d4] sm:$0xf]
        %v4507 = vld [vmem:[%s5 + $0x5d8] sm:$0xf]
        %v4508 = vld [vmem:[%s5 + $0x5dc] sm:$0xf]
        %v4509 = vld [vmem:[%s5 + $0x5e0] sm:$0xf]
        %v4510 = vld [vmem:[%s5 + $0x5e4] sm:$0xf]
        %v4511 = vld [vmem:[%s5 + $0x5e8] sm:$0xf]
        %v4512 = vld [vmem:[%s5 + $0x5ec] sm:$0xf]
        %v4513 = vld [vmem:[%s5 + $0x5f0] sm:$0xf]
        %v4514 = vld [vmem:[%s5 + $0x5f4] sm:$0xf]
        %v4515 = vld [vmem:[%s5 + $0x5f8] sm:$0xf]
        %v4516 = vld [vmem:[%s5 + $0x5fc] sm:$0xf]
        %v4517 = vld [vmem:[%s5 + $0x600] sm:$0xf]
        %v4518 = vld [vmem:[%s5 + $0x604] sm:$0xf]
        %v4519 = vld [vmem:[%s5 + $0x608] sm:$0xf]
        %v4520 = vld [vmem:[%s5 + $0x60c] sm:$0xf]
        %v4521 = vld [vmem:[%s5 + $0x610] sm:$0xf]
        %v4522 = vld [vmem:[%s5 + $0x614] sm:$0xf]
        %v4523 = vld [vmem:[%s5 + $0x618] sm:$0xf]
        %v4524 = vld [vmem:[%s5 + $0x61c] sm:$0xf]
        %v4525 = vld [vmem:[%s6] sm:$0x1]
        %v4918 = vunpack.c.l.b16 %v4133
        %v4919 = vunpack.c.l.b16 %v4134
        %v4920 = vunpack.c.l.b16 %v4135
        %v4921 = vunpack.c.l.b16 %v4136
        %v4922 = vunpack.c.l.b16 %v4137
        %v4923 = vunpack.c.l.b16 %v4138
        %v4924 = vunpack.c.l.b16 %v4139
        %v4925 = vunpack.c.l.b16 %v4140
        %v4926 = vunpack.c.l.b16 %v4141
        %v4927 = vunpack.c.l.b16 %v4142
        %v4928 = vunpack.c.l.b16 %v4143
        %v4929 = vunpack.c.l.b16 %v4144
        %v4930 = vunpack.c.l.b16 %v4145
        %v4931 = vunpack.c.l.b16 %v4146
        %v4932 = vunpack.c.l.b16 %v4147
        %v4933 = vunpack.c.l.b16 %v4148
        %v4934 = vunpack.c.l.b16 %v4149
        %v4935 = vunpack.c.l.b16 %v4150
        %v4936 = vunpack.c.l.b16 %v4151
        %v4937 = vunpack.c.l.b16 %v4152
        %v4938 = vunpack.c.l.b16 %v4153
        %v4939 = vunpack.c.l.b16 %v4154
        %v4940 = vunpack.c.l.b16 %v4155
        %v4941 = vunpack.c.l.b16 %v4156
        %v4942 = vunpack.c.l.b16 %v4157
        %v4943 = vunpack.c.l.b16 %v4158
        %v4944 = vunpack.c.l.b16 %v4159
        %v4945 = vunpack.c.l.b16 %v4160
        %v4946 = vunpack.c.l.b16 %v4161
        %v4947 = vunpack.c.l.b16 %v4162
        %v4948 = vunpack.c.l.b16 %v4163
        %v4949 = vunpack.c.l.b16 %v4164
        %v4950 = vunpack.c.l.b16 %v4165
        %v4951 = vunpack.c.l.b16 %v4166
        %v4952 = vunpack.c.l.b16 %v4167
        %v4953 = vunpack.c.l.b16 %v4168
        %v4954 = vunpack.c.l.b16 %v4169
        %v4955 = vunpack.c.l.b16 %v4170
        %v4956 = vunpack.c.l.b16 %v4171
        %v4957 = vunpack.c.l.b16 %v4172
        %v4958 = vunpack.c.l.b16 %v4173
        %v4959 = vunpack.c.l.b16 %v4174
        %v4960 = vunpack.c.l.b16 %v4175
        %v4961 = vunpack.c.l.b16 %v4176
        %v4962 = vunpack.c.l.b16 %v4177
        %v4963 = vunpack.c.l.b16 %v4178
        %v4964 = vunpack.c.l.b16 %v4179
        %v4965 = vunpack.c.l.b16 %v4180
        %v4966 = vunpack.c.l.b16 %v4181
        %v4967 = vunpack.c.l.b16 %v4182
        %v4968 = vunpack.c.l.b16 %v4183
        %v4969 = vunpack.c.l.b16 %v4184
        %v4970 = vunpack.c.l.b16 %v4185
        %v4971 = vunpack.c.l.b16 %v4186
        %v4972 = vunpack.c.l.b16 %v4187
        %v4973 = vunpack.c.l.b16 %v4188
        %v4974 = vunpack.c.l.b16 %v4189
        %v4975 = vunpack.c.l.b16 %v4190
        %v4976 = vunpack.c.l.b16 %v4191
        %v4977 = vunpack.c.l.b16 %v4192
        %v4978 = vunpack.c.l.b16 %v4193
        %v4979 = vunpack.c.l.b16 %v4194
        %v4980 = vunpack.c.l.b16 %v4195
        %v4981 = vunpack.c.l.b16 %v4196
        %v4982 = vunpack.c.l.b16 %v4197
        %v4983 = vunpack.c.l.b16 %v4198
        %v4984 = vunpack.c.l.b16 %v4199
        %v4985 = vunpack.c.l.b16 %v4200
        %v4986 = vunpack.c.l.b16 %v4201
        %v4987 = vunpack.c.l.b16 %v4202
        %v4988 = vunpack.c.l.b16 %v4203
        %v4989 = vunpack.c.l.b16 %v4204
        %v4990 = vunpack.c.l.b16 %v4205
        %v4991 = vunpack.c.l.b16 %v4206
        %v4992 = vunpack.c.l.b16 %v4207
        %v4993 = vunpack.c.l.b16 %v4208
        %v4994 = vunpack.c.l.b16 %v4209
        %v4995 = vunpack.c.l.b16 %v4210
        %v4996 = vunpack.c.l.b16 %v4211
        %v4997 = vunpack.c.l.b16 %v4212
        %v4998 = vunpack.c.l.b16 %v4213
        %v4999 = vunpack.c.l.b16 %v4214
        %v5000 = vunpack.c.l.b16 %v4215
        %v5001 = vunpack.c.l.b16 %v4216
        %v5002 = vunpack.c.l.b16 %v4217
        %v5003 = vunpack.c.l.b16 %v4218
        %v5004 = vunpack.c.l.b16 %v4219
        %v5005 = vunpack.c.l.b16 %v4220
        %v5006 = vunpack.c.l.b16 %v4221
        %v5007 = vunpack.c.l.b16 %v4222
        %v5008 = vunpack.c.l.b16 %v4223
        %v5009 = vunpack.c.l.b16 %v4224
        %v5010 = vunpack.c.l.b16 %v4225
        %v5011 = vunpack.c.l.b16 %v4226
        %v5012 = vunpack.c.l.b16 %v4227
        %v5013 = vunpack.c.l.b16 %v4228
        %v5014 = vunpack.c.l.b16 %v4229
        %v5015 = vunpack.c.l.b16 %v4230
        %v5016 = vunpack.c.l.b16 %v4231
        %v5017 = vunpack.c.l.b16 %v4232
        %v5018 = vunpack.c.l.b16 %v4233
        %v5019 = vunpack.c.l.b16 %v4234
        %v5020 = vunpack.c.l.b16 %v4235
        %v5021 = vunpack.c.l.b16 %v4236
        %v5022 = vunpack.c.l.b16 %v4237
        %v5023 = vunpack.c.l.b16 %v4238
        %v5024 = vunpack.c.l.b16 %v4239
        %v5025 = vunpack.c.l.b16 %v4240
        %v5026 = vunpack.c.l.b16 %v4241
        %v5027 = vunpack.c.l.b16 %v4242
        %v5028 = vunpack.c.l.b16 %v4243
        %v5029 = vunpack.c.l.b16 %v4244
        %v5030 = vunpack.c.l.b16 %v4245
        %v5031 = vunpack.c.l.b16 %v4246
        %v5032 = vunpack.c.l.b16 %v4247
        %v5033 = vunpack.c.l.b16 %v4248
        %v5034 = vunpack.c.l.b16 %v4249
        %v5035 = vunpack.c.l.b16 %v4250
        %v5036 = vunpack.c.l.b16 %v4251
        %v5037 = vunpack.c.l.b16 %v4252
        %v5038 = vunpack.c.l.b16 %v4253
        %v5039 = vunpack.c.l.b16 %v4254
        %v5040 = vunpack.c.l.b16 %v4255
        %v5041 = vunpack.c.l.b16 %v4256
        %v5042 = vunpack.c.l.b16 %v4257
        %v5043 = vunpack.c.l.b16 %v4258
        %v5044 = vunpack.c.l.b16 %v4259
        %v5045 = vunpack.c.l.b16 %v4260
        %v5046 = vunpack.c.l.b16 %v4261
        %v5047 = vunpack.c.l.b16 %v4262
        %v5048 = vunpack.c.l.b16 %v4263
        %v5049 = vunpack.c.l.b16 %v4264
        %v5050 = vunpack.c.l.b16 %v4265
        %v5051 = vunpack.c.l.b16 %v4266
        %v5052 = vunpack.c.l.b16 %v4267
        %v5053 = vunpack.c.l.b16 %v4268
        %v5054 = vunpack.c.l.b16 %v4269
        %v5055 = vunpack.c.l.b16 %v4270
        %v5056 = vunpack.c.l.b16 %v4271
        %v5057 = vunpack.c.l.b16 %v4272
        %v5058 = vunpack.c.l.b16 %v4273
        %v5059 = vunpack.c.l.b16 %v4274
        %v5060 = vunpack.c.l.b16 %v4275
        %v5061 = vunpack.c.l.b16 %v4276
        %v5062 = vunpack.c.l.b16 %v4277
        %v5063 = vunpack.c.l.b16 %v4278
        %v5064 = vunpack.c.l.b16 %v4279
        %v5065 = vunpack.c.l.b16 %v4280
        %v5066 = vunpack.c.l.b16 %v4281
        %v5067 = vunpack.c.l.b16 %v4282
        %v5068 = vunpack.c.l.b16 %v4283
        %v5069 = vunpack.c.l.b16 %v4284
        %v5070 = vunpack.c.l.b16 %v4285
        %v5071 = vunpack.c.l.b16 %v4286
        %v5072 = vunpack.c.l.b16 %v4287
        %v5073 = vunpack.c.l.b16 %v4288
        %v5074 = vunpack.c.l.b16 %v4289
        %v5075 = vunpack.c.l.b16 %v4290
        %v5076 = vunpack.c.l.b16 %v4291
        %v5077 = vunpack.c.l.b16 %v4292
        %v5078 = vunpack.c.l.b16 %v4293
        %v5079 = vunpack.c.l.b16 %v4294
        %v5080 = vunpack.c.l.b16 %v4295
        %v5081 = vunpack.c.l.b16 %v4296
        %v5082 = vunpack.c.l.b16 %v4297
        %v5083 = vunpack.c.l.b16 %v4298
        %v5084 = vunpack.c.l.b16 %v4299
        %v5085 = vunpack.c.l.b16 %v4300
        %v5086 = vunpack.c.l.b16 %v4301
        %v5087 = vunpack.c.l.b16 %v4302
        %v5088 = vunpack.c.l.b16 %v4303
        %v5089 = vunpack.c.l.b16 %v4304
        %v5090 = vunpack.c.l.b16 %v4305
        %v5091 = vunpack.c.l.b16 %v4306
        %v5092 = vunpack.c.l.b16 %v4307
        %v5093 = vunpack.c.l.b16 %v4308
        %v5094 = vunpack.c.l.b16 %v4309
        %v5095 = vunpack.c.l.b16 %v4310
        %v5096 = vunpack.c.l.b16 %v4311
        %v5097 = vunpack.c.l.b16 %v4312
        %v5098 = vunpack.c.l.b16 %v4313
        %v5099 = vunpack.c.l.b16 %v4314
        %v5100 = vunpack.c.l.b16 %v4315
        %v5101 = vunpack.c.l.b16 %v4316
        %v5102 = vunpack.c.l.b16 %v4317
        %v5103 = vunpack.c.l.b16 %v4318
        %v5104 = vunpack.c.l.b16 %v4319
        %v5105 = vunpack.c.l.b16 %v4320
        %v5106 = vunpack.c.l.b16 %v4321
        %v5107 = vunpack.c.l.b16 %v4322
        %v5108 = vunpack.c.l.b16 %v4323
        %v5109 = vunpack.c.l.b16 %v4324
        %v5110 = vunpack.c.l.b16 %v4325
        %v5111 = vunpack.c.l.b16 %v4326
        %v5112 = vunpack.c.l.b16 %v4327
        %v5113 = vunpack.c.l.b16 %v4328
        %v5114 = vunpack.c.l.b16 %v4329
        %v5115 = vunpack.c.l.b16 %v4330
        %v5116 = vunpack.c.l.b16 %v4331
        %v5117 = vunpack.c.l.b16 %v4332
        %v5118 = vunpack.c.l.b16 %v4333
        %v5119 = vunpack.c.l.b16 %v4334
        %v5120 = vunpack.c.l.b16 %v4335
        %v5121 = vunpack.c.l.b16 %v4336
        %v5122 = vunpack.c.l.b16 %v4337
        %v5123 = vunpack.c.l.b16 %v4338
        %v5124 = vunpack.c.l.b16 %v4339
        %v5125 = vunpack.c.l.b16 %v4340
        %v5126 = vunpack.c.l.b16 %v4341
        %v5127 = vunpack.c.l.b16 %v4342
        %v5128 = vunpack.c.l.b16 %v4343
        %v5129 = vunpack.c.l.b16 %v4344
        %v5130 = vunpack.c.l.b16 %v4345
        %v5131 = vunpack.c.l.b16 %v4346
        %v5132 = vunpack.c.l.b16 %v4347
        %v5133 = vunpack.c.l.b16 %v4348
        %v5134 = vunpack.c.l.b16 %v4349
        %v5135 = vunpack.c.l.b16 %v4350
        %v5136 = vunpack.c.l.b16 %v4351
        %v5137 = vunpack.c.l.b16 %v4352
        %v5138 = vunpack.c.l.b16 %v4353
        %v5139 = vunpack.c.l.b16 %v4354
        %v5140 = vunpack.c.l.b16 %v4355
        %v5141 = vunpack.c.l.b16 %v4356
        %v5142 = vunpack.c.l.b16 %v4357
        %v5143 = vunpack.c.l.b16 %v4358
        %v5144 = vunpack.c.l.b16 %v4359
        %v5145 = vunpack.c.l.b16 %v4360
        %v5146 = vunpack.c.l.b16 %v4361
        %v5147 = vunpack.c.l.b16 %v4362
        %v5148 = vunpack.c.l.b16 %v4363
        %v5149 = vunpack.c.l.b16 %v4364
        %v5150 = vunpack.c.l.b16 %v4365
        %v5151 = vunpack.c.l.b16 %v4366
        %v5152 = vunpack.c.l.b16 %v4367
        %v5153 = vunpack.c.l.b16 %v4368
        %v5154 = vunpack.c.l.b16 %v4369
        %v5155 = vunpack.c.l.b16 %v4370
        %v5156 = vunpack.c.l.b16 %v4371
        %v5157 = vunpack.c.l.b16 %v4372
        %v5158 = vunpack.c.l.b16 %v4373
        %v5159 = vunpack.c.l.b16 %v4374
        %v5160 = vunpack.c.l.b16 %v4375
        %v5161 = vunpack.c.l.b16 %v4376
        %v5162 = vunpack.c.l.b16 %v4377
        %v5163 = vunpack.c.l.b16 %v4378
        %v5164 = vunpack.c.l.b16 %v4379
        %v5165 = vunpack.c.l.b16 %v4380
        %v5166 = vunpack.c.l.b16 %v4381
        %v5167 = vunpack.c.l.b16 %v4382
        %v5168 = vunpack.c.l.b16 %v4383
        %v5169 = vunpack.c.l.b16 %v4384
        %v5170 = vunpack.c.l.b16 %v4385
        %v5171 = vunpack.c.l.b16 %v4386
        %v5172 = vunpack.c.l.b16 %v4387
        %v5173 = vunpack.c.l.b16 %v4388
        %v5174 = vunpack.c.l.b16 %v4389
        %v5175 = vunpack.c.l.b16 %v4390
        %v5176 = vunpack.c.l.b16 %v4391
        %v5177 = vunpack.c.l.b16 %v4392
        %v5178 = vunpack.c.l.b16 %v4393
        %v5179 = vunpack.c.l.b16 %v4394
        %v5180 = vunpack.c.l.b16 %v4395
        %v5181 = vunpack.c.l.b16 %v4396
        %v5182 = vunpack.c.l.b16 %v4397
        %v5183 = vunpack.c.l.b16 %v4398
        %v5184 = vunpack.c.l.b16 %v4399
        %v5185 = vunpack.c.l.b16 %v4400
        %v5186 = vunpack.c.l.b16 %v4401
        %v5187 = vunpack.c.l.b16 %v4402
        %v5188 = vunpack.c.l.b16 %v4403
        %v5189 = vunpack.c.l.b16 %v4404
        %v5190 = vunpack.c.l.b16 %v4405
        %v5191 = vunpack.c.l.b16 %v4406
        %v5192 = vunpack.c.l.b16 %v4407
        %v5193 = vunpack.c.l.b16 %v4408
        %v5194 = vunpack.c.l.b16 %v4409
        %v5195 = vunpack.c.l.b16 %v4410
        %v5196 = vunpack.c.l.b16 %v4411
        %v5197 = vunpack.c.l.b16 %v4412
        %v5198 = vunpack.c.l.b16 %v4413
        %v5199 = vunpack.c.l.b16 %v4414
        %v5200 = vunpack.c.l.b16 %v4415
        %v5201 = vunpack.c.l.b16 %v4416
        %v5202 = vunpack.c.l.b16 %v4417
        %v5203 = vunpack.c.l.b16 %v4418
        %v5204 = vunpack.c.l.b16 %v4419
        %v5205 = vunpack.c.l.b16 %v4420
        %v5206 = vunpack.c.l.b16 %v4421
        %v5207 = vunpack.c.l.b16 %v4422
        %v5208 = vunpack.c.l.b16 %v4423
        %v5209 = vunpack.c.l.b16 %v4424
        %v5210 = vunpack.c.l.b16 %v4425
        %v5211 = vunpack.c.l.b16 %v4426
        %v5212 = vunpack.c.l.b16 %v4427
        %v5213 = vunpack.c.l.b16 %v4428
        %v5214 = vunpack.c.l.b16 %v4429
        %v5215 = vunpack.c.l.b16 %v4430
        %v5216 = vunpack.c.l.b16 %v4431
        %v5217 = vunpack.c.l.b16 %v4432
        %v5218 = vunpack.c.l.b16 %v4433
        %v5219 = vunpack.c.l.b16 %v4434
        %v5220 = vunpack.c.l.b16 %v4435
        %v5221 = vunpack.c.l.b16 %v4436
        %v5222 = vunpack.c.l.b16 %v4437
        %v5223 = vunpack.c.l.b16 %v4438
        %v5224 = vunpack.c.l.b16 %v4439
        %v5225 = vunpack.c.l.b16 %v4440
        %v5226 = vunpack.c.l.b16 %v4441
        %v5227 = vunpack.c.l.b16 %v4442
        %v5228 = vunpack.c.l.b16 %v4443
        %v5229 = vunpack.c.l.b16 %v4444
        %v5230 = vunpack.c.l.b16 %v4445
        %v5231 = vunpack.c.l.b16 %v4446
        %v5232 = vunpack.c.l.b16 %v4447
        %v5233 = vunpack.c.l.b16 %v4448
        %v5234 = vunpack.c.l.b16 %v4449
        %v5235 = vunpack.c.l.b16 %v4450
        %v5236 = vunpack.c.l.b16 %v4451
        %v5237 = vunpack.c.l.b16 %v4452
        %v5238 = vunpack.c.l.b16 %v4453
        %v5239 = vunpack.c.l.b16 %v4454
        %v5240 = vunpack.c.l.b16 %v4455
        %v5241 = vunpack.c.l.b16 %v4456
        %v5242 = vunpack.c.l.b16 %v4457
        %v5243 = vunpack.c.l.b16 %v4458
        %v5244 = vunpack.c.l.b16 %v4459
        %v5245 = vunpack.c.l.b16 %v4460
        %v5246 = vunpack.c.l.b16 %v4461
        %v5247 = vunpack.c.l.b16 %v4462
        %v5248 = vunpack.c.l.b16 %v4463
        %v5249 = vunpack.c.l.b16 %v4464
        %v5250 = vunpack.c.l.b16 %v4465
        %v5251 = vunpack.c.l.b16 %v4466
        %v5252 = vunpack.c.l.b16 %v4467
        %v5253 = vunpack.c.l.b16 %v4468
        %v5254 = vunpack.c.l.b16 %v4469
        %v5255 = vunpack.c.l.b16 %v4470
        %v5256 = vunpack.c.l.b16 %v4471
        %v5257 = vunpack.c.l.b16 %v4472
        %v5258 = vunpack.c.l.b16 %v4473
        %v5259 = vunpack.c.l.b16 %v4474
        %v5260 = vunpack.c.l.b16 %v4475
        %v5261 = vunpack.c.l.b16 %v4476
        %v5262 = vunpack.c.l.b16 %v4477
        %v5263 = vunpack.c.l.b16 %v4478
        %v5264 = vunpack.c.l.b16 %v4479
        %v5265 = vunpack.c.l.b16 %v4480
        %v5266 = vunpack.c.l.b16 %v4481
        %v5267 = vunpack.c.l.b16 %v4482
        %v5268 = vunpack.c.l.b16 %v4483
        %v5269 = vunpack.c.l.b16 %v4484
        %v5270 = vunpack.c.l.b16 %v4485
        %v5271 = vunpack.c.l.b16 %v4486
        %v5272 = vunpack.c.l.b16 %v4487
        %v5273 = vunpack.c.l.b16 %v4488
        %v5274 = vunpack.c.l.b16 %v4489
        %v5275 = vunpack.c.l.b16 %v4490
        %v5276 = vunpack.c.l.b16 %v4491
        %v5277 = vunpack.c.l.b16 %v4492
        %v5278 = vunpack.c.l.b16 %v4493
        %v5279 = vunpack.c.l.b16 %v4494
        %v5280 = vunpack.c.l.b16 %v4495
        %v5281 = vunpack.c.l.b16 %v4496
        %v5282 = vunpack.c.l.b16 %v4497
        %v5283 = vunpack.c.l.b16 %v4498
        %v5284 = vunpack.c.l.b16 %v4499
        %v5285 = vunpack.c.l.b16 %v4500
        %v5286 = vunpack.c.l.b16 %v4501
        %v5287 = vunpack.c.l.b16 %v4502
        %v5288 = vunpack.c.l.b16 %v4503
        %v5289 = vunpack.c.l.b16 %v4504
        %v5290 = vunpack.c.l.b16 %v4505
        %v5291 = vunpack.c.l.b16 %v4506
        %v5292 = vunpack.c.l.b16 %v4507
        %v5293 = vunpack.c.l.b16 %v4508
        %v5294 = vunpack.c.l.b16 %v4509
        %v5295 = vunpack.c.l.b16 %v4510
        %v5296 = vunpack.c.l.b16 %v4511
        %v5297 = vunpack.c.l.b16 %v4512
        %v5298 = vunpack.c.l.b16 %v4513
        %v5299 = vunpack.c.l.b16 %v4514
        %v5300 = vunpack.c.l.b16 %v4515
        %v5301 = vunpack.c.l.b16 %v4516
        %v5302 = vunpack.c.l.b16 %v4517
        %v5303 = vunpack.c.l.b16 %v4518
        %v5304 = vunpack.c.l.b16 %v4519
        %v5305 = vunpack.c.l.b16 %v4520
        %v5306 = vunpack.c.l.b16 %v4521
        %v5307 = vunpack.c.l.b16 %v4522
        %v5308 = vunpack.c.l.b16 %v4523
        %v5309 = vunpack.c.l.b16 %v4524
        %v5310 = vpack.c.b16 %v4919, %v4918
        %v5311 = vpack.c.b16 %v4921, %v4920
        %v5312 = vpack.c.b16 %v4923, %v4922
        %v5313 = vpack.c.b16 %v4925, %v4924
        %v5314 = vpack.c.b16 %v4927, %v4926
        %v5315 = vpack.c.b16 %v4929, %v4928
        %v5316 = vpack.c.b16 %v4931, %v4930
        %v5317 = vpack.c.b16 %v4933, %v4932
        %v5318 = vpack.c.b16 %v4935, %v4934
        %v5319 = vpack.c.b16 %v4937, %v4936
        %v5320 = vpack.c.b16 %v4939, %v4938
        %v5321 = vpack.c.b16 %v4941, %v4940
        %v5322 = vpack.c.b16 %v4943, %v4942
        %v5323 = vpack.c.b16 %v4945, %v4944
        %v5324 = vpack.c.b16 %v4947, %v4946
        %v5325 = vpack.c.b16 %v4949, %v4948
        %v5326 = vpack.c.b16 %v4951, %v4950
        %v5327 = vpack.c.b16 %v4953, %v4952
        %v5328 = vpack.c.b16 %v4955, %v4954
        %v5329 = vpack.c.b16 %v4957, %v4956
        %v5330 = vpack.c.b16 %v4959, %v4958
        %v5331 = vpack.c.b16 %v4961, %v4960
        %v5332 = vpack.c.b16 %v4963, %v4962
        %v5333 = vpack.c.b16 %v4965, %v4964
        %v5334 = vpack.c.b16 %v4967, %v4966
        %v5335 = vpack.c.b16 %v4969, %v4968
        %v5336 = vpack.c.b16 %v4971, %v4970
        %v5337 = vpack.c.b16 %v4973, %v4972
        %v5338 = vpack.c.b16 %v4975, %v4974
        %v5339 = vpack.c.b16 %v4977, %v4976
        %v5340 = vpack.c.b16 %v4979, %v4978
        %v5341 = vpack.c.b16 %v4981, %v4980
        %v5342 = vpack.c.b16 %v4983, %v4982
        %v5343 = vpack.c.b16 %v4985, %v4984
        %v5344 = vpack.c.b16 %v4987, %v4986
        %v5345 = vpack.c.b16 %v4989, %v4988
        %v5346 = vpack.c.b16 %v4991, %v4990
        %v5347 = vpack.c.b16 %v4993, %v4992
        %v5348 = vpack.c.b16 %v4995, %v4994
        %v5349 = vpack.c.b16 %v4997, %v4996
        %v5350 = vpack.c.b16 %v4999, %v4998
        %v5351 = vpack.c.b16 %v5001, %v5000
        %v5352 = vpack.c.b16 %v5003, %v5002
        %v5353 = vpack.c.b16 %v5005, %v5004
        %v5354 = vpack.c.b16 %v5007, %v5006
        %v5355 = vpack.c.b16 %v5009, %v5008
        %v5356 = vpack.c.b16 %v5011, %v5010
        %v5357 = vpack.c.b16 %v5013, %v5012
        %v5358 = vpack.c.b16 %v5015, %v5014
        %v5359 = vpack.c.b16 %v5017, %v5016
        %v5360 = vpack.c.b16 %v5019, %v5018
        %v5361 = vpack.c.b16 %v5021, %v5020
        %v5362 = vpack.c.b16 %v5023, %v5022
        %v5363 = vpack.c.b16 %v5025, %v5024
        %v5364 = vpack.c.b16 %v5027, %v5026
        %v5365 = vpack.c.b16 %v5029, %v5028
        %v5366 = vpack.c.b16 %v5031, %v5030
        %v5367 = vpack.c.b16 %v5033, %v5032
        %v5368 = vpack.c.b16 %v5035, %v5034
        %v5369 = vpack.c.b16 %v5037, %v5036
        %v5370 = vpack.c.b16 %v5039, %v5038
        %v5371 = vpack.c.b16 %v5041, %v5040
        %v5372 = vpack.c.b16 %v5043, %v5042
        %v5373 = vpack.c.b16 %v5045, %v5044
        %v5374 = vpack.c.b16 %v5047, %v5046
        %v5375 = vpack.c.b16 %v5049, %v5048
        %v5376 = vpack.c.b16 %v5051, %v5050
        %v5377 = vpack.c.b16 %v5053, %v5052
        %v5378 = vpack.c.b16 %v5055, %v5054
        %v5379 = vpack.c.b16 %v5057, %v5056
        %v5380 = vpack.c.b16 %v5059, %v5058
        %v5381 = vpack.c.b16 %v5061, %v5060
        %v5382 = vpack.c.b16 %v5063, %v5062
        %v5383 = vpack.c.b16 %v5065, %v5064
        %v5384 = vpack.c.b16 %v5067, %v5066
        %v5385 = vpack.c.b16 %v5069, %v5068
        %v5386 = vpack.c.b16 %v5071, %v5070
        %v5387 = vpack.c.b16 %v5073, %v5072
        %v5388 = vpack.c.b16 %v5075, %v5074
        %v5389 = vpack.c.b16 %v5077, %v5076
        %v5390 = vpack.c.b16 %v5079, %v5078
        %v5391 = vpack.c.b16 %v5081, %v5080
        %v5392 = vpack.c.b16 %v5083, %v5082
        %v5393 = vpack.c.b16 %v5085, %v5084
        %v5394 = vpack.c.b16 %v5087, %v5086
        %v5395 = vpack.c.b16 %v5089, %v5088
        %v5396 = vpack.c.b16 %v5091, %v5090
        %v5397 = vpack.c.b16 %v5093, %v5092
        %v5398 = vpack.c.b16 %v5095, %v5094
        %v5399 = vpack.c.b16 %v5097, %v5096
        %v5400 = vpack.c.b16 %v5099, %v5098
        %v5401 = vpack.c.b16 %v5101, %v5100
        %v5402 = vpack.c.b16 %v5103, %v5102
        %v5403 = vpack.c.b16 %v5105, %v5104
        %v5404 = vpack.c.b16 %v5107, %v5106
        %v5405 = vpack.c.b16 %v5109, %v5108
        %v5406 = vpack.c.b16 %v5111, %v5110
        %v5407 = vpack.c.b16 %v5113, %v5112
        %v5408 = vpack.c.b16 %v5115, %v5114
        %v5409 = vpack.c.b16 %v5117, %v5116
        %v5410 = vpack.c.b16 %v5119, %v5118
        %v5411 = vpack.c.b16 %v5121, %v5120
        %v5412 = vpack.c.b16 %v5123, %v5122
        %v5413 = vpack.c.b16 %v5125, %v5124
        %v5414 = vpack.c.b16 %v5127, %v5126
        %v5415 = vpack.c.b16 %v5129, %v5128
        %v5416 = vpack.c.b16 %v5131, %v5130
        %v5417 = vpack.c.b16 %v5133, %v5132
        %v5418 = vpack.c.b16 %v5135, %v5134
        %v5419 = vpack.c.b16 %v5137, %v5136
        %v5420 = vpack.c.b16 %v5139, %v5138
        %v5421 = vpack.c.b16 %v5141, %v5140
        %v5422 = vpack.c.b16 %v5143, %v5142
        %v5423 = vpack.c.b16 %v5145, %v5144
        %v5424 = vpack.c.b16 %v5147, %v5146
        %v5425 = vpack.c.b16 %v5149, %v5148
        %v5426 = vpack.c.b16 %v5151, %v5150
        %v5427 = vpack.c.b16 %v5153, %v5152
        %v5428 = vpack.c.b16 %v5155, %v5154
        %v5429 = vpack.c.b16 %v5157, %v5156
        %v5430 = vpack.c.b16 %v5159, %v5158
        %v5431 = vpack.c.b16 %v5161, %v5160
        %v5432 = vpack.c.b16 %v5163, %v5162
        %v5433 = vpack.c.b16 %v5165, %v5164
        %v5434 = vpack.c.b16 %v5167, %v5166
        %v5435 = vpack.c.b16 %v5169, %v5168
        %v5436 = vpack.c.b16 %v5171, %v5170
        %v5437 = vpack.c.b16 %v5173, %v5172
        %v5438 = vpack.c.b16 %v5175, %v5174
        %v5439 = vpack.c.b16 %v5177, %v5176
        %v5440 = vpack.c.b16 %v5179, %v5178
        %v5441 = vpack.c.b16 %v5181, %v5180
        %v5442 = vpack.c.b16 %v5183, %v5182
        %v5443 = vpack.c.b16 %v5185, %v5184
        %v5444 = vpack.c.b16 %v5187, %v5186
        %v5445 = vpack.c.b16 %v5189, %v5188
        %v5446 = vpack.c.b16 %v5191, %v5190
        %v5447 = vpack.c.b16 %v5193, %v5192
        %v5448 = vpack.c.b16 %v5195, %v5194
        %v5449 = vpack.c.b16 %v5197, %v5196
        %v5450 = vpack.c.b16 %v5199, %v5198
        %v5451 = vpack.c.b16 %v5201, %v5200
        %v5452 = vpack.c.b16 %v5203, %v5202
        %v5453 = vpack.c.b16 %v5205, %v5204
        %v5454 = vpack.c.b16 %v5207, %v5206
        %v5455 = vpack.c.b16 %v5209, %v5208
        %v5456 = vpack.c.b16 %v5211, %v5210
        %v5457 = vpack.c.b16 %v5213, %v5212
        %v5458 = vpack.c.b16 %v5215, %v5214
        %v5459 = vpack.c.b16 %v5217, %v5216
        %v5460 = vpack.c.b16 %v5219, %v5218
        %v5461 = vpack.c.b16 %v5221, %v5220
        %v5462 = vpack.c.b16 %v5223, %v5222
        %v5463 = vpack.c.b16 %v5225, %v5224
        %v5464 = vpack.c.b16 %v5227, %v5226
        %v5465 = vpack.c.b16 %v5229, %v5228
        %v5466 = vpack.c.b16 %v5231, %v5230
        %v5467 = vpack.c.b16 %v5233, %v5232
        %v5468 = vpack.c.b16 %v5235, %v5234
        %v5469 = vpack.c.b16 %v5237, %v5236
        %v5470 = vpack.c.b16 %v5239, %v5238
        %v5471 = vpack.c.b16 %v5241, %v5240
        %v5472 = vpack.c.b16 %v5243, %v5242
        %v5473 = vpack.c.b16 %v5245, %v5244
        %v5474 = vpack.c.b16 %v5247, %v5246
        %v5475 = vpack.c.b16 %v5249, %v5248
        %v5476 = vpack.c.b16 %v5251, %v5250
        %v5477 = vpack.c.b16 %v5253, %v5252
        %v5478 = vpack.c.b16 %v5255, %v5254
        %v5479 = vpack.c.b16 %v5257, %v5256
        %v5480 = vpack.c.b16 %v5259, %v5258
        %v5481 = vpack.c.b16 %v5261, %v5260
        %v5482 = vpack.c.b16 %v5263, %v5262
        %v5483 = vpack.c.b16 %v5265, %v5264
        %v5484 = vpack.c.b16 %v5267, %v5266
        %v5485 = vpack.c.b16 %v5269, %v5268
        %v5486 = vpack.c.b16 %v5271, %v5270
        %v5487 = vpack.c.b16 %v5273, %v5272
        %v5488 = vpack.c.b16 %v5275, %v5274
        %v5489 = vpack.c.b16 %v5277, %v5276
        %v5490 = vpack.c.b16 %v5279, %v5278
        %v5491 = vpack.c.b16 %v5281, %v5280
        %v5492 = vpack.c.b16 %v5283, %v5282
        %v5493 = vpack.c.b16 %v5285, %v5284
        %v5494 = vpack.c.b16 %v5287, %v5286
        %v5495 = vpack.c.b16 %v5289, %v5288
        %v5496 = vpack.c.b16 %v5291, %v5290
        %v5497 = vpack.c.b16 %v5293, %v5292
        %v5498 = vpack.c.b16 %v5295, %v5294
        %v5499 = vpack.c.b16 %v5297, %v5296
        %v5500 = vpack.c.b16 %v5299, %v5298
        %v5501 = vpack.c.b16 %v5301, %v5300
        %v5502 = vpack.c.b16 %v5303, %v5302
        %v5503 = vpack.c.b16 %v5305, %v5304
        %v5504 = vpack.c.b16 %v5307, %v5306
        %v5505 = vpack.c.b16 %v5309, %v5308
        %v5703 = vsel %vm1953, %v4132, 0
        %5705 = vmatpush.bf16.msra.mxu0 %v5317
        %5706 = vmatpush.bf16.msra.mxu0 %v5316
        %5707 = vmatpush.bf16.msra.mxu0 %v5315
        %5708 = vmatpush.bf16.msra.mxu0 %v5314
        %5709 = vmatpush.bf16.msra.mxu0 %v5313
        %5710 = vmatpush.bf16.msra.mxu0 %v5312
        %5711 = vmatpush.bf16.msra.mxu0 %v5311
        %5712 = vmatpush.bf16.msra.mxu0 %v5310
        %5713 = vmatmul.bf16.gmra.mxu0 %v4108
        %v5714 = vpop.f32.mrf.mxu0
        %v5715 = vadd.f32 %v4525, %v5714
        %v5716 = vpop.f32.mrf.mxu0
        %5717 = vdwg.mxu0
        %5718 = vmatpush.bf16.msra.mxu0 %v5325
        %5719 = vmatpush.bf16.msra.mxu0 %v5324
        %5720 = vmatpush.bf16.msra.mxu0 %v5323
        %5721 = vmatpush.bf16.msra.mxu0 %v5322
        %5722 = vmatpush.bf16.msra.mxu0 %v5321
        %5723 = vmatpush.bf16.msra.mxu0 %v5320
        %5724 = vmatpush.bf16.msra.mxu0 %v5319
        %5725 = vmatpush.bf16.msra.mxu0 %v5318
        %5726 = vmatmul.bf16.gmra.mxu0 %v4109
        %v5727 = vpop.f32.mrf.mxu0
        %v5728 = vadd.f32 %v5715, %v5727
        %v5729 = vpop.f32.mrf.mxu0
        %5730 = vdwg.mxu0
        %5731 = vmatpush.bf16.msra.mxu0 %v5333
        %5732 = vmatpush.bf16.msra.mxu0 %v5332
        %5733 = vmatpush.bf16.msra.mxu0 %v5331
        %5734 = vmatpush.bf16.msra.mxu0 %v5330
        %5735 = vmatpush.bf16.msra.mxu0 %v5329
        %5736 = vmatpush.bf16.msra.mxu0 %v5328
        %5737 = vmatpush.bf16.msra.mxu0 %v5327
        %5738 = vmatpush.bf16.msra.mxu0 %v5326
        %5739 = vmatmul.bf16.gmra.mxu0 %v4110
        %v5740 = vpop.f32.mrf.mxu0
        %v5741 = vadd.f32 %v5728, %v5740
        %v5742 = vpop.f32.mrf.mxu0
        %5743 = vdwg.mxu0
        %5744 = vmatpush.bf16.msra.mxu0 %v5341
        %5745 = vmatpush.bf16.msra.mxu0 %v5340
        %5746 = vmatpush.bf16.msra.mxu0 %v5339
        %5747 = vmatpush.bf16.msra.mxu0 %v5338
        %5748 = vmatpush.bf16.msra.mxu0 %v5337
        %5749 = vmatpush.bf16.msra.mxu0 %v5336
        %5750 = vmatpush.bf16.msra.mxu0 %v5335
        %5751 = vmatpush.bf16.msra.mxu0 %v5334
        %5752 = vmatmul.bf16.gmra.mxu0 %v4111
        %v5753 = vpop.f32.mrf.mxu0
        %v5754 = vadd.f32 %v5741, %v5753
        %v5755 = vpop.f32.mrf.mxu0
        %5756 = vdwg.mxu0
        %5757 = vmatpush.bf16.msra.mxu0 %v5349
        %5758 = vmatpush.bf16.msra.mxu0 %v5348
        %5759 = vmatpush.bf16.msra.mxu0 %v5347
        %5760 = vmatpush.bf16.msra.mxu0 %v5346
        %5761 = vmatpush.bf16.msra.mxu0 %v5345
        %5762 = vmatpush.bf16.msra.mxu0 %v5344
        %5763 = vmatpush.bf16.msra.mxu0 %v5343
        %5764 = vmatpush.bf16.msra.mxu0 %v5342
        %5765 = vmatmul.bf16.gmra.mxu0 %v4112
        %v5766 = vpop.f32.mrf.mxu0
        %v5767 = vadd.f32 %v5754, %v5766
        %v5768 = vpop.f32.mrf.mxu0
        %5769 = vdwg.mxu0
        %5770 = vmatpush.bf16.msra.mxu0 %v5357
        %5771 = vmatpush.bf16.msra.mxu0 %v5356
        %5772 = vmatpush.bf16.msra.mxu0 %v5355
        %5773 = vmatpush.bf16.msra.mxu0 %v5354
        %5774 = vmatpush.bf16.msra.mxu0 %v5353
        %5775 = vmatpush.bf16.msra.mxu0 %v5352
        %5776 = vmatpush.bf16.msra.mxu0 %v5351
        %5777 = vmatpush.bf16.msra.mxu0 %v5350
        %5778 = vmatmul.bf16.gmra.mxu0 %v4113
        %v5779 = vpop.f32.mrf.mxu0
        %v5780 = vadd.f32 %v5767, %v5779
        %v5781 = vpop.f32.mrf.mxu0
        %5782 = vdwg.mxu0
        %5783 = vmatpush.bf16.msra.mxu0 %v5365
        %5784 = vmatpush.bf16.msra.mxu0 %v5364
        %5785 = vmatpush.bf16.msra.mxu0 %v5363
        %5786 = vmatpush.bf16.msra.mxu0 %v5362
        %5787 = vmatpush.bf16.msra.mxu0 %v5361
        %5788 = vmatpush.bf16.msra.mxu0 %v5360
        %5789 = vmatpush.bf16.msra.mxu0 %v5359
        %5790 = vmatpush.bf16.msra.mxu0 %v5358
        %5791 = vmatmul.bf16.gmra.mxu0 %v4114
        %v5792 = vpop.f32.mrf.mxu0
        %v5793 = vadd.f32 %v5780, %v5792
        %v5794 = vpop.f32.mrf.mxu0
        %5795 = vdwg.mxu0
        %5796 = vmatpush.bf16.msra.mxu0 %v5373
        %5797 = vmatpush.bf16.msra.mxu0 %v5372
        %5798 = vmatpush.bf16.msra.mxu0 %v5371
        %5799 = vmatpush.bf16.msra.mxu0 %v5370
        %5800 = vmatpush.bf16.msra.mxu0 %v5369
        %5801 = vmatpush.bf16.msra.mxu0 %v5368
        %5802 = vmatpush.bf16.msra.mxu0 %v5367
        %5803 = vmatpush.bf16.msra.mxu0 %v5366
        %5804 = vmatmul.bf16.gmra.mxu0 %v4115
        %v5805 = vpop.f32.mrf.mxu0
        %v5806 = vadd.f32 %v5793, %v5805
        %v5807 = vpop.f32.mrf.mxu0
        %5808 = vdwg.mxu0
        %5809 = vmatpush.bf16.msra.mxu0 %v5381
        %5810 = vmatpush.bf16.msra.mxu0 %v5380
        %5811 = vmatpush.bf16.msra.mxu0 %v5379
        %5812 = vmatpush.bf16.msra.mxu0 %v5378
        %5813 = vmatpush.bf16.msra.mxu0 %v5377
        %5814 = vmatpush.bf16.msra.mxu0 %v5376
        %5815 = vmatpush.bf16.msra.mxu0 %v5375
        %5816 = vmatpush.bf16.msra.mxu0 %v5374
        %5817 = vmatmul.bf16.gmra.mxu0 %v4116
        %v5818 = vpop.f32.mrf.mxu0
        %v5819 = vadd.f32 %v5806, %v5818
        %v5820 = vpop.f32.mrf.mxu0
        %5821 = vdwg.mxu0
        %5822 = vmatpush.bf16.msra.mxu0 %v5389
        %5823 = vmatpush.bf16.msra.mxu0 %v5388
        %5824 = vmatpush.bf16.msra.mxu0 %v5387
        %5825 = vmatpush.bf16.msra.mxu0 %v5386
        %5826 = vmatpush.bf16.msra.mxu0 %v5385
        %5827 = vmatpush.bf16.msra.mxu0 %v5384
        %5828 = vmatpush.bf16.msra.mxu0 %v5383
        %5829 = vmatpush.bf16.msra.mxu0 %v5382
        %5830 = vmatmul.bf16.gmra.mxu0 %v4117
        %v5831 = vpop.f32.mrf.mxu0
        %v5832 = vadd.f32 %v5819, %v5831
        %v5833 = vpop.f32.mrf.mxu0
        %5834 = vdwg.mxu0
        %5835 = vmatpush.bf16.msra.mxu0 %v5397
        %5836 = vmatpush.bf16.msra.mxu0 %v5396
        %5837 = vmatpush.bf16.msra.mxu0 %v5395
        %5838 = vmatpush.bf16.msra.mxu0 %v5394
        %5839 = vmatpush.bf16.msra.mxu0 %v5393
        %5840 = vmatpush.bf16.msra.mxu0 %v5392
        %5841 = vmatpush.bf16.msra.mxu0 %v5391
        %5842 = vmatpush.bf16.msra.mxu0 %v5390
        %5843 = vmatmul.bf16.gmra.mxu0 %v4118
        %v5844 = vpop.f32.mrf.mxu0
        %v5845 = vadd.f32 %v5832, %v5844
        %v5846 = vpop.f32.mrf.mxu0
        %5847 = vdwg.mxu0
        %5848 = vmatpush.bf16.msra.mxu0 %v5405
        %5849 = vmatpush.bf16.msra.mxu0 %v5404
        %5850 = vmatpush.bf16.msra.mxu0 %v5403
        %5851 = vmatpush.bf16.msra.mxu0 %v5402
        %5852 = vmatpush.bf16.msra.mxu0 %v5401
        %5853 = vmatpush.bf16.msra.mxu0 %v5400
        %5854 = vmatpush.bf16.msra.mxu0 %v5399
        %5855 = vmatpush.bf16.msra.mxu0 %v5398
        %5856 = vmatmul.bf16.gmra.mxu0 %v4119
        %v5857 = vpop.f32.mrf.mxu0
        %v5858 = vadd.f32 %v5845, %v5857
        %v5859 = vpop.f32.mrf.mxu0
        %5860 = vdwg.mxu0
        %5861 = vmatpush.bf16.msra.mxu0 %v5413
        %5862 = vmatpush.bf16.msra.mxu0 %v5412
        %5863 = vmatpush.bf16.msra.mxu0 %v5411
        %5864 = vmatpush.bf16.msra.mxu0 %v5410
        %5865 = vmatpush.bf16.msra.mxu0 %v5409
        %5866 = vmatpush.bf16.msra.mxu0 %v5408
        %5867 = vmatpush.bf16.msra.mxu0 %v5407
        %5868 = vmatpush.bf16.msra.mxu0 %v5406
        %5869 = vmatmul.bf16.gmra.mxu0 %v4120
        %v5870 = vpop.f32.mrf.mxu0
        %v5871 = vadd.f32 %v5858, %v5870
        %v5872 = vpop.f32.mrf.mxu0
        %5873 = vdwg.mxu0
        %5874 = vmatpush.bf16.msra.mxu0 %v5421
        %5875 = vmatpush.bf16.msra.mxu0 %v5420
        %5876 = vmatpush.bf16.msra.mxu0 %v5419
        %5877 = vmatpush.bf16.msra.mxu0 %v5418
        %5878 = vmatpush.bf16.msra.mxu0 %v5417
        %5879 = vmatpush.bf16.msra.mxu0 %v5416
        %5880 = vmatpush.bf16.msra.mxu0 %v5415
        %5881 = vmatpush.bf16.msra.mxu0 %v5414
        %5882 = vmatmul.bf16.gmra.mxu0 %v4121
        %v5883 = vpop.f32.mrf.mxu0
        %v5884 = vadd.f32 %v5871, %v5883
        %v5885 = vpop.f32.mrf.mxu0
        %5886 = vdwg.mxu0
        %5887 = vmatpush.bf16.msra.mxu0 %v5429
        %5888 = vmatpush.bf16.msra.mxu0 %v5428
        %5889 = vmatpush.bf16.msra.mxu0 %v5427
        %5890 = vmatpush.bf16.msra.mxu0 %v5426
        %5891 = vmatpush.bf16.msra.mxu0 %v5425
        %5892 = vmatpush.bf16.msra.mxu0 %v5424
        %5893 = vmatpush.bf16.msra.mxu0 %v5423
        %5894 = vmatpush.bf16.msra.mxu0 %v5422
        %5895 = vmatmul.bf16.gmra.mxu0 %v4122
        %v5896 = vpop.f32.mrf.mxu0
        %v5897 = vadd.f32 %v5884, %v5896
        %v5898 = vpop.f32.mrf.mxu0
        %5899 = vdwg.mxu0
        %5900 = vmatpush.bf16.msra.mxu0 %v5437
        %5901 = vmatpush.bf16.msra.mxu0 %v5436
        %5902 = vmatpush.bf16.msra.mxu0 %v5435
        %5903 = vmatpush.bf16.msra.mxu0 %v5434
        %5904 = vmatpush.bf16.msra.mxu0 %v5433
        %5905 = vmatpush.bf16.msra.mxu0 %v5432
        %5906 = vmatpush.bf16.msra.mxu0 %v5431
        %5907 = vmatpush.bf16.msra.mxu0 %v5430
        %5908 = vmatmul.bf16.gmra.mxu0 %v4123
        %v5909 = vpop.f32.mrf.mxu0
        %v5910 = vadd.f32 %v5897, %v5909
        %v5911 = vpop.f32.mrf.mxu0
        %5912 = vdwg.mxu0
        %5913 = vmatpush.bf16.msra.mxu0 %v5445
        %5914 = vmatpush.bf16.msra.mxu0 %v5444
        %5915 = vmatpush.bf16.msra.mxu0 %v5443
        %5916 = vmatpush.bf16.msra.mxu0 %v5442
        %5917 = vmatpush.bf16.msra.mxu0 %v5441
        %5918 = vmatpush.bf16.msra.mxu0 %v5440
        %5919 = vmatpush.bf16.msra.mxu0 %v5439
        %5920 = vmatpush.bf16.msra.mxu0 %v5438
        %5921 = vmatmul.bf16.gmra.mxu0 %v4124
        %v5922 = vpop.f32.mrf.mxu0
        %v5923 = vadd.f32 %v5910, %v5922
        %v5924 = vpop.f32.mrf.mxu0
        %5925 = vdwg.mxu0
        %5926 = vmatpush.bf16.msra.mxu0 %v5453
        %5927 = vmatpush.bf16.msra.mxu0 %v5452
        %5928 = vmatpush.bf16.msra.mxu0 %v5451
        %5929 = vmatpush.bf16.msra.mxu0 %v5450
        %5930 = vmatpush.bf16.msra.mxu0 %v5449
        %5931 = vmatpush.bf16.msra.mxu0 %v5448
        %5932 = vmatpush.bf16.msra.mxu0 %v5447
        %5933 = vmatpush.bf16.msra.mxu0 %v5446
        %5934 = vmatmul.bf16.gmra.mxu0 %v4125
        %v5935 = vpop.f32.mrf.mxu0
        %v5936 = vadd.f32 %v5923, %v5935
        %v5937 = vpop.f32.mrf.mxu0
        %5938 = vdwg.mxu0
        %5939 = vmatpush.bf16.msra.mxu0 %v5461
        %5940 = vmatpush.bf16.msra.mxu0 %v5460
        %5941 = vmatpush.bf16.msra.mxu0 %v5459
        %5942 = vmatpush.bf16.msra.mxu0 %v5458
        %5943 = vmatpush.bf16.msra.mxu0 %v5457
        %5944 = vmatpush.bf16.msra.mxu0 %v5456
        %5945 = vmatpush.bf16.msra.mxu0 %v5455
        %5946 = vmatpush.bf16.msra.mxu0 %v5454
        %5947 = vmatmul.bf16.gmra.mxu0 %v4126
        %v5948 = vpop.f32.mrf.mxu0
        %v5949 = vadd.f32 %v5936, %v5948
        %v5950 = vpop.f32.mrf.mxu0
        %5951 = vdwg.mxu0
        %5952 = vmatpush.bf16.msra.mxu0 %v5469
        %5953 = vmatpush.bf16.msra.mxu0 %v5468
        %5954 = vmatpush.bf16.msra.mxu0 %v5467
        %5955 = vmatpush.bf16.msra.mxu0 %v5466
        %5956 = vmatpush.bf16.msra.mxu0 %v5465
        %5957 = vmatpush.bf16.msra.mxu0 %v5464
        %5958 = vmatpush.bf16.msra.mxu0 %v5463
        %5959 = vmatpush.bf16.msra.mxu0 %v5462
        %5960 = vmatmul.bf16.gmra.mxu0 %v4127
        %v5961 = vpop.f32.mrf.mxu0
        %v5962 = vadd.f32 %v5949, %v5961
        %v5963 = vpop.f32.mrf.mxu0
        %5964 = vdwg.mxu0
        %5965 = vmatpush.bf16.msra.mxu0 %v5477
        %5966 = vmatpush.bf16.msra.mxu0 %v5476
        %5967 = vmatpush.bf16.msra.mxu0 %v5475
        %5968 = vmatpush.bf16.msra.mxu0 %v5474
        %5969 = vmatpush.bf16.msra.mxu0 %v5473
        %5970 = vmatpush.bf16.msra.mxu0 %v5472
        %5971 = vmatpush.bf16.msra.mxu0 %v5471
        %5972 = vmatpush.bf16.msra.mxu0 %v5470
        %5973 = vmatmul.bf16.gmra.mxu0 %v4128
        %v5974 = vpop.f32.mrf.mxu0
        %v5975 = vadd.f32 %v5962, %v5974
        %v5976 = vpop.f32.mrf.mxu0
        %5977 = vdwg.mxu0
        %5978 = vmatpush.bf16.msra.mxu0 %v5485
        %5979 = vmatpush.bf16.msra.mxu0 %v5484
        %5980 = vmatpush.bf16.msra.mxu0 %v5483
        %5981 = vmatpush.bf16.msra.mxu0 %v5482
        %5982 = vmatpush.bf16.msra.mxu0 %v5481
        %5983 = vmatpush.bf16.msra.mxu0 %v5480
        %5984 = vmatpush.bf16.msra.mxu0 %v5479
        %5985 = vmatpush.bf16.msra.mxu0 %v5478
        %5986 = vmatmul.bf16.gmra.mxu0 %v4129
        %v5987 = vpop.f32.mrf.mxu0
        %v5988 = vadd.f32 %v5975, %v5987
        %v5989 = vpop.f32.mrf.mxu0
        %5990 = vdwg.mxu0
        %5991 = vmatpush.bf16.msra.mxu0 %v5493
        %5992 = vmatpush.bf16.msra.mxu0 %v5492
        %5993 = vmatpush.bf16.msra.mxu0 %v5491
        %5994 = vmatpush.bf16.msra.mxu0 %v5490
        %5995 = vmatpush.bf16.msra.mxu0 %v5489
        %5996 = vmatpush.bf16.msra.mxu0 %v5488
        %5997 = vmatpush.bf16.msra.mxu0 %v5487
        %5998 = vmatpush.bf16.msra.mxu0 %v5486
        %5999 = vmatmul.bf16.gmra.mxu0 %v4130
        %v6000 = vpop.f32.mrf.mxu0
        %v6001 = vadd.f32 %v5988, %v6000
        %v6002 = vpop.f32.mrf.mxu0
        %6003 = vdwg.mxu0
        %6004 = vmatpush.bf16.msra.mxu0 %v5501
        %6005 = vmatpush.bf16.msra.mxu0 %v5500
        %6006 = vmatpush.bf16.msra.mxu0 %v5499
        %6007 = vmatpush.bf16.msra.mxu0 %v5498
        %6008 = vmatpush.bf16.msra.mxu0 %v5497
        %6009 = vmatpush.bf16.msra.mxu0 %v5496
        %6010 = vmatpush.bf16.msra.mxu0 %v5495
        %6011 = vmatpush.bf16.msra.mxu0 %v5494
        %6012 = vmatmul.bf16.gmra.mxu0 %v4131
        %v6013 = vpop.f32.mrf.mxu0
        %v6014 = vadd.f32 %v6001, %v6013
        %v6015 = vpop.f32.mrf.mxu0
        %6016 = vdwg.mxu0
        %6017 = vmatpush.bf16.msra.mxu0 0
        %6018 = vmatpush.bf16.msra.mxu0 0
        %6019 = vmatpush.bf16.msra.mxu0 0
        %6020 = vmatpush.bf16.msra.mxu0 0
        %6021 = vmatpush.bf16.msra.mxu0 %v5505
        %6022 = vmatpush.bf16.msra.mxu0 %v5504
        %6023 = vmatpush.bf16.msra.mxu0 %v5503
        %6024 = vmatpush.bf16.msra.mxu0 %v5502
        %6025 = vmatmul.bf16.gmra.mxu0 %v5703
        %v6026 = vpop.f32.mrf.mxu0
        %v6027 = vadd.f32 %v6014, %v6026
        %v6028 = vpop.f32.mrf.mxu0
        %6029 = vdwg.mxu0
        %v6030 = vmax.f32 %v6027, 0.0
        %v6031 = vpack.c.bf16 %v6030, %v6030
        %v6032 = vld [vmem:[%s7] sm:$0xf]
        %v6033 = vld [vmem:[%s7 + $0x4] sm:$0xf]
        %v6034 = vld [vmem:[%s7 + $0x8] sm:$0xf]
        %v6035 = vld [vmem:[%s7 + $0xc] sm:$0xf]
        %v6036 = vld [vmem:[%s7 + $0x10] sm:$0xf]
        %v6037 = vld [vmem:[%s7 + $0x14] sm:$0xf]
        %v6038 = vld [vmem:[%s7 + $0x18] sm:$0xf]
        %v6039 = vld [vmem:[%s7 + $0x1c] sm:$0xf]
        %v6040 = vld [vmem:[%s7 + $0x20] sm:$0xf]
        %v6041 = vld [vmem:[%s7 + $0x24] sm:$0xf]
        %v6042 = vld [vmem:[%s7 + $0x28] sm:$0xf]
        %v6043 = vld [vmem:[%s7 + $0x2c] sm:$0xf]
        %v6044 = vld [vmem:[%s7 + $0x30] sm:$0xf]
        %v6045 = vld [vmem:[%s7 + $0x34] sm:$0xf]
        %v6046 = vld [vmem:[%s7 + $0x38] sm:$0xf]
        %v6047 = vld [vmem:[%s7 + $0x3c] sm:$0xf]
        %v6048 = vld [vmem:[%s8] sm:$0x1]
        %v6065 = vunpack.c.l.b16 %v6032
        %v6066 = vunpack.c.l.b16 %v6033
        %v6067 = vunpack.c.l.b16 %v6034
        %v6068 = vunpack.c.l.b16 %v6035
        %v6069 = vunpack.c.l.b16 %v6036
        %v6070 = vunpack.c.l.b16 %v6037
        %v6071 = vunpack.c.l.b16 %v6038
        %v6072 = vunpack.c.l.b16 %v6039
        %v6073 = vunpack.c.l.b16 %v6040
        %v6074 = vunpack.c.l.b16 %v6041
        %v6075 = vunpack.c.l.b16 %v6042
        %v6076 = vunpack.c.l.b16 %v6043
        %v6077 = vunpack.c.l.b16 %v6044
        %v6078 = vunpack.c.l.b16 %v6045
        %v6079 = vunpack.c.l.b16 %v6046
        %v6080 = vunpack.c.l.b16 %v6047
        %v6081 = vpack.c.b16 %v6066, %v6065
        %v6082 = vpack.c.b16 %v6068, %v6067
        %v6083 = vpack.c.b16 %v6070, %v6069
        %v6084 = vpack.c.b16 %v6072, %v6071
        %v6085 = vpack.c.b16 %v6074, %v6073
        %v6086 = vpack.c.b16 %v6076, %v6075
        %v6087 = vpack.c.b16 %v6078, %v6077
        %v6088 = vpack.c.b16 %v6080, %v6079
        %6097 = vmatpush.bf16.msra.mxu0 %v6088
        %6098 = vmatpush.bf16.msra.mxu0 %v6087
        %6099 = vmatpush.bf16.msra.mxu0 %v6086
        %6100 = vmatpush.bf16.msra.mxu0 %v6085
        %6101 = vmatpush.bf16.msra.mxu0 %v6084
        %6102 = vmatpush.bf16.msra.mxu0 %v6083
        %6103 = vmatpush.bf16.msra.mxu0 %v6082
        %6104 = vmatpush.bf16.msra.mxu0 %v6081
        %6105 = vmatmul.bf16.gmra.mxu0 %v6031
        %v6106 = vpop.f32.mrf.mxu0
        %v6107 = vadd.f32 %v6048, %v6106
        %v6108 = vpop.f32.mrf.mxu0
        %6109 = vdwg.mxu0
        %vm6110 = vcmask 1040384
        %v6111 = vsel %vm6110, %v6107, -inf
        %6112 = vmax.xlane.f32.xlu0 %v6111
        %v6113 = vpop.xlane.xlu0 %6112
        %v6114 = vsub.f32 %v6107, %v6113
        %v6115 = vmul.f32 %v6114, 1.442695
        %v6116 = vpow.pop %v6115
        %v6117 = vsel %vm6110, %v6116, 0.0
        %6118 = vadd.xlane.f32.xlu0 %v6117
        %v6119 = vpop.xlane.xlu0 %6118
        %v6120 = vlog2.pop %v6119
        %v6121 = vmul.f32 %v6120, 0.6931472
        %v6122 = vsub.f32 %v6114, %v6121
        %6123 = vst [vmem:[%s324] sm:$0x1] %v6122
        %s6124 = sand.u32 %s225, 1
        %s6125 = scalar_lea.sflag [#allocation6], %s6124
        %s6126 = sand.u32 %s225, 1
        %s6127 = scalar_lea.vmem [#allocation5], %s6126
        // Predicated region
        $region57: #{cnn_forward.1} parent=55 // pred_check
          %p6128 = pneg %p235
        $region58: #{cnn_forward.1} parent=55 // pred_check_branch
          %6130 = sbr.rel (%p6128) target = $region60
        $region59: #{cnn_forward.1} parent=55 // pred_region
          %6132 = vsyncadd %s6125, 0
          %s6133 = scalar_lea.hbm %s9, %s23
          %s6135 = sshll.u32 %s6127, 4
          %s6136 = int_to_ptr.vmem [resolvable:$true] %s6135
          %s6137 = sshll.u32 %s6133, 4
          %s6138 = int_to_ptr.hbm [resolvable:$true] %s6137
          %6140 = dma.vmem_to_hbm [thread:$0]  %s6136, 16, %s6138, %s6125
        $region60: #{cnn_forward.1} parent=55 // pred_fallthru
          _
      $region56: #{cnn_forward.1} parent=5 // pred_fallthru
        _
      %p6141 = scmp.le.s32.totalorder 2, %s18
      // Predicated region
      $region61: #{cnn_forward.1} parent=5 // pred_check
        %p6142 = pneg %p6141
      $region62: #{cnn_forward.1} parent=5 // pred_check_branch
        %6144 = sbr.rel (%p6142) target = $region64
      $region63: #{cnn_forward.1} parent=5 // pred_region
        %s6145 = ssub.s32 %s18, 2
        // Predicated region
        $region65: #{cnn_forward.1} parent=63 // pred_check
          %p6146 = pneg %p241
        $region66: #{cnn_forward.1} parent=63 // pred_check_branch
          %6148 = sbr.rel (%p6146) target = $region68
        $region67: #{cnn_forward.1} parent=63 // pred_region
          %s6149 = sand.u32 %s226, 1
          %s6150 = scalar_lea.sflag [#allocation6], %s6149
          %s6151 = sand.u32 %s226, 1
          %s6152 = scalar_lea.vmem [#allocation5], %s6151
          %6154 = dma.done %s6150, 16
        $region68: #{cnn_forward.1} parent=63 // pred_fallthru
          _
      $region64: #{cnn_forward.1} parent=5 // pred_fallthru
        _
    $region6: #{cnn_forward.1} parent=1 // loop_footer
      %s22 = sadd.s32 1, %s18
    $region7: #{cnn_forward.1} parent=1 // loop_footer_branch
      %17 = sbr.rel target = $region3
    $region8: #{cnn_forward.1} parent=1 // loop_exit
      _
    %6155 = vsyncpa [#allocation6], 1
    %s6156 = scalar_lea.sflag [#allocation6], 1
    %6157 = vsyncpa %s6156, 1

</llo_original>
